<compile_context>
chip_gen: v5e
topology: v5e:2x2
jax: 0.10.0
libtpu: 0.0.40
codegen_flags: <defaults>
</compile_context>

<pallas_src>
import functools

import numpy as np

import jax
import jax.numpy as jnp
from jax.experimental import pallas as pl
from jax.experimental.pallas import tpu as pltpu

# ----- synthetic cfg ---------------------------------------------------------
REG_MAX = 7                    # cfg.TRAIN.REG_MAX
STRIDE = 8.0                   # cfg.TRACK.STRIDE
C1 = 16                        # backbone conv1 output channels
C_BACKBONE = 32                # backbone conv2 output channels
C_ADJUST = 32                  # neck (AdjustLayer) output channels
HEAD_HID = 32                  # BAN head tower hidden channels
CLS_CH = 2                     # cls head output channels
K1_PAD = 32                    # conv1 im2col K (3*3*3 = 27) padded to 32
NL = 4 * (REG_MAX + 1)         # loc logits per position per batch element


# ============================ fused kernel ===================================
def _backbone_neck(p1, w1, b1, w2, b2, wn, bn, *, wo1):
    """conv1(3x3 s2, matmul over precomputed patches) -> relu ->
    conv2(3x3 s1 pad 1, 9 accumulated tap matmuls over in-VMEM row shifts) -> relu
    -> fused neck pair (1x1 convs).  Batch elements occupy disjoint lane blocks,
    so the sublane row-shifts never mix batches."""
    m1 = p1.shape[0]
    c1 = w1.shape[1]                                        # nb * C1
    y1 = jnp.dot(p1, w1, preferred_element_type=jnp.float32)
    y1 = jnp.maximum(y1 + b1, 0.0)                          # (m1, nb*C1) f32

    # horizontal edge-validity masks built in-kernel (no HBM mask input / DMA)
    col = jax.lax.broadcasted_iota(jnp.int32, (m1, 1), 0) % wo1
    mask_l = (col > 0).astype(jnp.float32)
    mask_r = (col < wo1 - 1).astype(jnp.float32)

    # conv2 patches via flat row shifts of the zero-extended conv1 output:
    # output position m = h*wo1 + w needs y1_flat[m + di*wo1 + dj]; vertical
    # out-of-bounds lands in the zero extension, horizontal wrap is masked.
    zpad = jnp.zeros((wo1 + 1, c1), jnp.float32)
    y1e = jnp.concatenate([zpad, y1, zpad], axis=0)

    acc = jnp.zeros((m1, w2.shape[1]), jnp.float32)
    k = 0
    for di in (-1, 0, 1):
        for dj in (-1, 0, 1):
            off = (wo1 + 1) + di * wo1 + dj
            s = y1e[off:off + m1, :]
            if dj == -1:
                s = s * mask_l
            elif dj == 1:
                s = s * mask_r
            # 9 small bf16 matmuls accumulated in f32: no 144-lane im2col concat
            acc = acc + jnp.dot(s.astype(jnp.bfloat16), w2[k * c1:(k + 1) * c1, :],
                                preferred_element_type=jnp.float32)
            k += 1
    y2 = jnp.maximum(acc + b2, 0.0)                         # (m1, nb*C_BACKBONE)

    # fused neck pair (two 1x1 convs lane-concatenated, block-diag over batch)
    return jnp.dot(y2.astype(jnp.bfloat16), wn,
                   preferred_element_type=jnp.float32) + bn  # (m1, nb*2*C_ADJUST)


def _siamese_kernel(p1z_ref, p1x_ref, w1_ref, b1_ref, w2_ref, b2_ref,
                    wnt_ref, bnt_ref, wns_ref, bns_ref,
                    whh_ref, bhh_ref, who_ref, bho_ref,
                    shift_ref, proj_ref, o_ref, *,
                    hz, wz, wx, ho, nb):
    w1, b1 = w1_ref[...], b1_ref[...]
    w2, b2 = w2_ref[...], b2_ref[...]

    # ---- template branch (ModelBuilder.template): zf = [neck_ct|neck_rt](backbone(z))
    zf = _backbone_neck(p1z_ref[...], w1, b1, w2, b2,
                        wnt_ref[...], bnt_ref[...], wo1=wz)       # (hz*wz, nb*64)
    # ---- search branch: xf = [neck_cs|neck_rs](backbone(x)); never leaves VMEM
    xf = _backbone_neck(p1x_ref[...], w1, b1, w2, b2,
                        wns_ref[...], bns_ref[...], wo1=wx)       # (hx*wx, nb*64)

    # ---- depthwise cross-correlation (cls/reg/batch all independent lanes) --
    # Flat-shift formulation over the FULL search width wx; columns w >= wo are
    # garbage and dropped for free in the XLA wrapper, so the kernel writes one
    # dense slab with no in-kernel epilogue relayout.
    lx = ho * wx
    need = (wz - 1) + (hz - 1) * wx + lx
    pad = need - xf.shape[0]
    if pad > 0:
        pad = ((pad + 7) // 8) * 8
        xf = jnp.concatenate([xf, jnp.zeros((pad, xf.shape[1]), jnp.float32)], axis=0)
    # hoist the column (dj) shifts: wz misaligned sublane slices instead of hz*wz
    span = (hz - 1) * wx + lx
    xcols = [xf[j:j + span, :] for j in range(wz)]
    acc = jnp.zeros((lx, zf.shape[1]), jnp.float32)
    # TODO(synk): switch to lax.fori_loop(..., unroll=4) + VMEM scratch refs at real
    # template sizes (hundreds of taps) to bound live ranges.
    for i in range(hz):
        for j in range(wz):
            t = i * wz + j
            acc = acc + xcols[j][i * wx:i * wx + lx, :] * zf[t:t + 1, :]

    # ---- BAN head towers: block-diag({cls,loc} x batch) matmuls -------------
    th = jnp.dot(acc.astype(jnp.bfloat16), whh_ref[...],
                 preferred_element_type=jnp.float32)
    th = jnp.maximum(th + bhh_ref[...], 0.0)                      # (lx, nb*64)
    co = jnp.dot(th.astype(jnp.bfloat16), who_ref[...],
                 preferred_element_type=jnp.float32) + bho_ref[...]
    nl = nb * NL
    loc_raw = co[:, :nl]                                          # (lx, nb*32) f32
    cls = co[:, nl:]                                              # (lx, nb*2)  f32

    # ---- DFL (Project): softmax expectation per 8-logit group ---------------
    # Per-group shift via a block-diagonal group-mean matmul (no lane-splitting
    # reshape, no cross-group underflow like a global row max); clamped denom;
    # *STRIDE folded into the projection numerators; exact f32 divide.
    gmean = jnp.dot(loc_raw, shift_ref[...], preferred_element_type=jnp.float32)
    e = jnp.exp(loc_raw - gmean)
    pd = jnp.dot(e, proj_ref[...], preferred_element_type=jnp.float32)  # (lx, 2*nb*4)
    loc = pd[:, :nb * 4] / jnp.maximum(pd[:, nb * 4:], 1e-20)           # (lx, nb*4)

    # one dense store: [loc(b0..) | cls(b0..)] per row, no row slicing in-kernel
    o_ref[...] = jnp.concatenate([loc, cls], axis=-1)


# ============================ XLA-side glue ==================================
def _conv1_patches_lanefold(x_nchw):
    """3x3/s2/p1 im2col with the batch folded into lanes: (Ho*Wo, B*K1_PAD) bf16."""
    x = jnp.transpose(x_nchw, (0, 2, 3, 1)).astype(jnp.float32)
    b, h, w, c = x.shape
    xp = jnp.pad(x, ((0, 0), (1, 1), (1, 1), (0, 0)))
    ho = (h + 2 - 3) // 2 + 1
    wo = (w + 2 - 3) // 2 + 1
    cols = []
    for i in range(3):
        for j in range(3):
            cols.append(xp[:, i:i + 2 * ho:2, j:j + 2 * wo:2, :])
    p = jnp.concatenate(cols, axis=-1).reshape(b, ho * wo, 9 * c)
    p = jnp.pad(p, ((0, 0), (0, 0), (0, K1_PAD - 9 * c)))
    p = jnp.transpose(p, (1, 0, 2)).reshape(ho * wo, b * K1_PAD)
    return p.astype(jnp.bfloat16), ho, wo


def _bdiag_list(ws):
    rows = sum(w.shape[0] for w in ws)
    cols = sum(w.shape[1] for w in ws)
    out = jnp.zeros((rows, cols), ws[0].dtype)
    r = c = 0
    for w in ws:
        out = out.at[r:r + w.shape[0], c:c + w.shape[1]].set(w)
        r += w.shape[0]
        c += w.shape[1]
    return out


def _bdiag(w, n):
    return _bdiag_list([w] * n)


def _fuse_operands(p, nb):
    """Build the kernel-ready fused (branch- and batch-block-diagonal) operands."""
    bf16 = jnp.bfloat16
    ops = {}
    w1 = jnp.pad(p["conv1_w"], ((0, K1_PAD - p["conv1_w"].shape[0]), (0, 0)))
    ops["w1"] = _bdiag(w1, nb).astype(bf16)                                  # (nb*32, nb*16)
    ops["b1"] = jnp.tile(p["conv1_b"].reshape(1, -1), (1, nb))
    ops["w2"] = jnp.concatenate(
        [_bdiag(p["conv2_w"][k * C1:(k + 1) * C1, :], nb) for k in range(9)],
        axis=0).astype(bf16)                                                 # (9*nb*16, nb*32)
    ops["b2"] = jnp.tile(p["conv2_b"].reshape(1, -1), (1, nb))
    # necks: lane-concat the branch pair (template: ct|rt, search: cs|rs), then batch
    wn_t = jnp.concatenate([p["neck_ct_w"], p["neck_rt_w"]], axis=1)
    wn_s = jnp.concatenate([p["neck_cs_w"], p["neck_rs_w"]], axis=1)
    ops["wn_t"] = _bdiag(wn_t, nb).astype(bf16)                              # (nb*32, nb*64)
    ops["bn_t"] = jnp.tile(jnp.concatenate([p["neck_ct_b"], p["neck_rt_b"]]).reshape(1, -1), (1, nb))
    ops["wn_s"] = _bdiag(wn_s, nb).astype(bf16)
    ops["bn_s"] = jnp.tile(jnp.concatenate([p["neck_cs_b"], p["neck_rs_b"]]).reshape(1, -1), (1, nb))
    # BAN head hidden tower: block-diag(cls, loc) per element, then over batch
    whh_b = _bdiag_list([p["cls_h_w"], p["loc_h_w"]])                        # (64, 64)
    ops["whh"] = _bdiag(whh_b, nb).astype(bf16)                              # (nb*64, nb*64)
    ops["bhh"] = jnp.tile(jnp.concatenate([p["cls_h_b"], p["loc_h_b"]]).reshape(1, -1), (1, nb))
    # head output tower: fused output lane layout [loc(b0)..loc(b_{nb-1}) | cls(b0)..]
    hw = 2 * HEAD_HID
    who = jnp.zeros((nb * hw, nb * (NL + CLS_CH)), jnp.float32)
    bho = jnp.zeros((1, nb * (NL + CLS_CH)), jnp.float32)
    for i in range(nb):
        who = who.at[i * hw + HEAD_HID:(i + 1) * hw, i * NL:(i + 1) * NL].set(p["loc_o_w"])
        who = who.at[i * hw:i * hw + HEAD_HID,
                     nb * NL + i * CLS_CH:nb * NL + (i + 1) * CLS_CH].set(p["cls_o_w"])
        bho = bho.at[0, i * NL:(i + 1) * NL].set(p["loc_o_b"])
        bho = bho.at[0, nb * NL + i * CLS_CH:nb * NL + (i + 1) * CLS_CH].set(p["cls_o_b"])
    ops["who"] = who.astype(bf16)
    ops["bho"] = bho
    # DFL constants: block-diag per-group mean matrix + [linspace*STRIDE | ones] projection
    r1 = REG_MAX + 1
    ngroups = nb * 4
    shift = np.kron(np.eye(ngroups, dtype=np.float32),
                    np.full((r1, r1), 1.0 / r1, np.float32))
    ops["shift"] = jnp.asarray(shift)                                        # (nb*NL, nb*NL)
    proj = np.zeros((nb * NL, 2 * nb * 4), np.float32)
    lin = np.linspace(0.0, REG_MAX, r1).astype(np.float32) * STRIDE
    for i in range(nb):
        for g in range(4):
            rows = slice(i * NL + g * r1, i * NL + (g + 1) * r1)
            proj[rows, i * 4 + g] = lin
            proj[rows, nb * 4 + i * 4 + g] = 1.0
    ops["proj"] = jnp.asarray(proj)                                          # (nb*NL, 2*nb*4)
    return ops


@jax.jit
def siamese_forward(params, z_nchw, x_nchw):
    """ModelBuilder.template(z) followed by ModelBuilder.track(x), fused into a
    single pallas_call (launch-bound workload; zf never touches HBM)."""
    nb = z_nchw.shape[0]
    p1z, hz, wz = _conv1_patches_lanefold(z_nchw)
    p1x, hx, wx = _conv1_patches_lanefold(x_nchw)
    ho, wo = hx - hz + 1, wx - wz + 1
    lx = ho * wx
    n_out = nb * (4 + CLS_CH)
    ops = _fuse_operands(params, nb)

    operands = (p1z, p1x, ops["w1"], ops["b1"], ops["w2"], ops["b2"],
                ops["wn_t"], ops["bn_t"], ops["wn_s"], ops["bn_s"],
                ops["whh"], ops["bhh"], ops["who"], ops["bho"],
                ops["shift"], ops["proj"])

    m_all = hz * wz + hx * wx
    flops = 2 * (m_all * (nb * K1_PAD) * (nb * C1)
                 + 9 * m_all * (nb * C1) * (nb * C_BACKBONE)
                 + m_all * (nb * C_BACKBONE) * (nb * 2 * C_ADJUST)
                 + hz * wz * lx * nb * 2 * C_ADJUST
                 + lx * (nb * 2 * HEAD_HID) * (nb * 2 * HEAD_HID)
                 + lx * (nb * 2 * HEAD_HID) * (nb * (NL + CLS_CH))
                 + lx * (nb * NL) * (nb * NL)
                 + lx * (nb * NL) * (2 * nb * 4))
    bytes_accessed = int(sum(int(np.prod(a.shape)) * a.dtype.itemsize for a in operands)
                         + lx * n_out * 4)

    out = pl.pallas_call(
        functools.partial(_siamese_kernel, hz=hz, wz=wz, wx=wx, ho=ho, nb=nb),
        out_shape=jax.ShapeDtypeStruct((lx, n_out), jnp.float32),
        cost_estimate=pl.CostEstimate(flops=int(flops),
                                      transcendentals=int(lx * nb * NL),
                                      bytes_accessed=bytes_accessed),
        compiler_params=pltpu.CompilerParams(vmem_limit_bytes=32 * 1024 * 1024),
    )(*operands)

    # wrapper-side epilogue (free layout plumbing): drop the garbage xcorr
    # columns (w >= wo) and unfold the batch from the lanes.
    grid_out = out.reshape(ho, wx, n_out)[:, :wo, :]                  # (ho, wo, nb*6)
    loc_hw = jnp.stack([grid_out[..., i * 4:(i + 1) * 4] for i in range(nb)], axis=0)
    cls_hw = jnp.stack([grid_out[..., nb * 4 + i * CLS_CH:nb * 4 + (i + 1) * CLS_CH]
                        for i in range(nb)], axis=0)
    cls = jnp.transpose(cls_hw, (0, 3, 1, 2))                         # (B, 2, Ho, Wo)
    # mirror the torch quirk: loc.view(b, w, h, 4).permute(0, 3, 1, 2) -- rows are
    # produced in (h, w) order but reinterpreted as (w, h); only valid because
    # ho == wo, kept verbatim to match the reference semantics.
    loc = loc_hw.reshape(nb, ho * wo, 4).reshape(nb, wo, ho, 4).transpose(0, 3, 1, 2)
    return {"cls": cls, "loc": loc}


# ============================ parameters =====================================
def init_params(key):
    """Per-module weights mirroring the torch ModelBuilder layout."""
    ks = jax.random.split(key, 10)

    def nrm(k, shape, scale):
        return jax.random.normal(k, shape, jnp.float32) * scale

    p = {}
    # backbone: 3x3 s2 (3->16), 3x3 s1 (16->32); im2col layout (kh*kw*Cin, Cout)
    p["conv1_w"] = nrm(ks[0], (27, C1), 0.10)
    p["conv1_b"] = jnp.zeros((C1,), jnp.float32)
    p["conv2_w"] = nrm(ks[1], (9 * C1, C_BACKBONE), 0.05)
    p["conv2_b"] = jnp.zeros((C_BACKBONE,), jnp.float32)
    # four AdjustLayer necks (ct, cs, rt, rs): 1x1 conv 32->32 (BN folded into bias)
    for i, name in enumerate(["ct", "cs", "rt", "rs"]):
        p[f"neck_{name}_w"] = nrm(ks[2 + i], (C_BACKBONE, C_ADJUST), 0.10)
        p[f"neck_{name}_b"] = jnp.zeros((C_ADJUST,), jnp.float32)
    # BAN head towers (1x1 convs after depthwise xcorr)
    p["cls_h_w"] = nrm(ks[6], (C_ADJUST, HEAD_HID), 0.10)
    p["cls_h_b"] = jnp.zeros((HEAD_HID,), jnp.float32)
    p["cls_o_w"] = nrm(ks[7], (HEAD_HID, CLS_CH), 0.10)
    p["cls_o_b"] = jnp.zeros((CLS_CH,), jnp.float32)
    p["loc_h_w"] = nrm(ks[8], (C_ADJUST, HEAD_HID), 0.10)
    p["loc_h_b"] = jnp.zeros((HEAD_HID,), jnp.float32)
    p["loc_o_w"] = nrm(ks[9], (HEAD_HID, NL), 0.10)
    p["loc_o_b"] = jnp.zeros((NL,), jnp.float32)
    return p


# ============================ main ===========================================
if __name__ == "__main__":
    key = jax.random.PRNGKey(0)
    kp, kz, kx = jax.random.split(key, 3)
    params = init_params(kp)

    # torch-style NCHW inputs (small): template 8x8, search 32x32
    z = jax.random.normal(kz, (2, 3, 8, 8), jnp.float32)
    x = jax.random.normal(kx, (2, 3, 32, 32), jnp.float32)

    out = siamese_forward(params, z, x)
    jax.block_until_ready(out["cls"])
    jax.block_until_ready(out["loc"])

    assert out["cls"].shape == (2, CLS_CH, 13, 13), out["cls"].shape
    assert out["loc"].shape == (2, 4, 13, 13), out["loc"].shape
    assert bool(jnp.isfinite(out["cls"]).all()) and bool(jnp.isfinite(out["loc"]).all())
    print("KERNEL_OK")
</pallas_src>

<mosaic_0001>
module attributes {stable_mosaic.version = 11 : i64} {
  func.func @_siamese_kernel(%arg0: memref<16x64xbf16, #tpu.memory_space<vmem>>, %arg1: memref<256x64xbf16, #tpu.memory_space<vmem>>, %arg2: memref<64x32xbf16, #tpu.memory_space<vmem>>, %arg3: memref<1x32xf32, #tpu.memory_space<vmem>>, %arg4: memref<288x64xbf16, #tpu.memory_space<vmem>>, %arg5: memref<1x64xf32, #tpu.memory_space<vmem>>, %arg6: memref<64x128xbf16, #tpu.memory_space<vmem>>, %arg7: memref<1x128xf32, #tpu.memory_space<vmem>>, %arg8: memref<64x128xbf16, #tpu.memory_space<vmem>>, %arg9: memref<1x128xf32, #tpu.memory_space<vmem>>, %arg10: memref<128x128xbf16, #tpu.memory_space<vmem>>, %arg11: memref<1x128xf32, #tpu.memory_space<vmem>>, %arg12: memref<128x68xbf16, #tpu.memory_space<vmem>>, %arg13: memref<1x68xf32, #tpu.memory_space<vmem>>, %arg14: memref<64x64xf32, #tpu.memory_space<vmem>>, %arg15: memref<64x16xf32, #tpu.memory_space<vmem>>, %arg16: memref<208x12xf32, #tpu.memory_space<vmem>>) attributes {dimension_semantics = [], scalar_prefetch = 0 : i64, scratch_operands = 0 : i64, tpu.core_type = #tpu.core_type<tc>} {
    %c0 = arith.constant 0 : index
    %c0_0 = arith.constant 0 : index
    %0 = vector.load %arg2[%c0, %c0_0] : memref<64x32xbf16, #tpu.memory_space<vmem>>, vector<64x32xbf16>
    %c0_1 = arith.constant 0 : index
    %c0_2 = arith.constant 0 : index
    %1 = vector.load %arg3[%c0_1, %c0_2] : memref<1x32xf32, #tpu.memory_space<vmem>>, vector<1x32xf32>
    %c0_3 = arith.constant 0 : index
    %c0_4 = arith.constant 0 : index
    %2 = vector.load %arg4[%c0_3, %c0_4] : memref<288x64xbf16, #tpu.memory_space<vmem>>, vector<288x64xbf16>
    %c0_5 = arith.constant 0 : index
    %c0_6 = arith.constant 0 : index
    %3 = vector.load %arg5[%c0_5, %c0_6] : memref<1x64xf32, #tpu.memory_space<vmem>>, vector<1x64xf32>
    %c0_7 = arith.constant 0 : index
    %c0_8 = arith.constant 0 : index
    %4 = vector.load %arg0[%c0_7, %c0_8] : memref<16x64xbf16, #tpu.memory_space<vmem>>, vector<16x64xbf16>
    %c0_9 = arith.constant 0 : index
    %c0_10 = arith.constant 0 : index
    %5 = vector.load %arg6[%c0_9, %c0_10] : memref<64x128xbf16, #tpu.memory_space<vmem>>, vector<64x128xbf16>
    %c0_11 = arith.constant 0 : index
    %c0_12 = arith.constant 0 : index
    %6 = vector.load %arg7[%c0_11, %c0_12] : memref<1x128xf32, #tpu.memory_space<vmem>>, vector<1x128xf32>
    %cst = arith.constant dense<0.000000e+00> : vector<16x32xf32>
    %7 = tpu.matmul %4, %0, %cst {dimension_numbers = #tpu.dot_dimension_numbers<[1], [0], [0], [1], [0, 0, 1, 1], [], []>} : vector<16x64xbf16>, vector<64x32xbf16>, vector<16x32xf32> -> vector<16x32xf32>
    %8 = vector.broadcast %1 : vector<1x32xf32> to vector<16x32xf32>
    %9 = arith.addf %7, %8 : vector<16x32xf32>
    %cst_13 = arith.constant 0.000000e+00 : f32
    %10 = vector.broadcast %cst_13 : f32 to vector<16x32xf32>
    %11 = arith.maximumf %9, %10 : vector<16x32xf32>
    %12 = tpu.iota {dimensions = array<i32: 0>} : vector<16x1xi32>
    %c4_i32 = arith.constant 4 : i32
    %c0_i32 = arith.constant 0 : i32
    %13 = arith.cmpi eq, %c4_i32, %c0_i32 : i32
    %c1_i32 = arith.constant 1 : i32
    %14 = arith.select %13, %c1_i32, %c4_i32 : i32
    %15 = vector.broadcast %14 : i32 to vector<16x1xi32>
    %16 = arith.remsi %12, %15 : vector<16x1xi32>
    %c0_i32_14 = arith.constant 0 : i32
    %17 = vector.broadcast %c0_i32_14 : i32 to vector<16x1xi32>
    %18 = arith.cmpi ne, %16, %17 : vector<16x1xi32>
    %c0_i32_15 = arith.constant 0 : i32
    %19 = vector.broadcast %c0_i32_15 : i32 to vector<16x1xi32>
    %20 = arith.cmpi slt, %16, %19 : vector<16x1xi32>
    %c0_i32_16 = arith.constant 0 : i32
    %21 = arith.cmpi slt, %14, %c0_i32_16 : i32
    %22 = vector.broadcast %21 : i1 to vector<16x1xi1>
    %23 = vector.broadcast %22 : vector<16x1xi1> to vector<16x1xi1>
    %24 = arith.xori %20, %23 : vector<16x1xi1>
    %25 = arith.andi %24, %18 : vector<16x1xi1>
    %26 = vector.broadcast %14 : i32 to vector<16x1xi32>
    %27 = arith.addi %16, %26 : vector<16x1xi32>
    %28 = arith.select %25, %27, %16 : vector<16x1xi1>, vector<16x1xi32>
    %c0_i32_17 = arith.constant 0 : i32
    %29 = vector.broadcast %c0_i32_17 : i32 to vector<16x1xi32>
    %30 = arith.cmpi sgt, %28, %29 : vector<16x1xi32>
    %31 = arith.extui %30 : vector<16x1xi1> to vector<16x1xi32>
    %32 = arith.sitofp %31 : vector<16x1xi32> to vector<16x1xf32>
    %c3_i32 = arith.constant 3 : i32
    %33 = vector.broadcast %c3_i32 : i32 to vector<16x1xi32>
    %34 = arith.cmpi slt, %28, %33 : vector<16x1xi32>
    %35 = arith.extui %34 : vector<16x1xi1> to vector<16x1xi32>
    %36 = arith.sitofp %35 : vector<16x1xi32> to vector<16x1xf32>
    %cst_18 = arith.constant 0.000000e+00 : f32
    %37 = vector.broadcast %cst_18 : f32 to vector<5x32xf32>
    %38 = tpu.concatenate %37, %11, %37 in 0 : vector<5x32xf32>, vector<16x32xf32>, vector<5x32xf32> -> vector<26x32xf32>
    %cst_19 = arith.constant 0.000000e+00 : f32
    %39 = vector.broadcast %cst_19 : f32 to vector<16x64xf32>
    %40 = vector.extract_strided_slice %38 {offsets = [0, 0], sizes = [16, 32], strides = [1, 1]} : vector<26x32xf32> to vector<16x32xf32>
    %41 = vector.broadcast %32 : vector<16x1xf32> to vector<16x32xf32>
    %42 = arith.mulf %40, %41 : vector<16x32xf32>
    %43 = arith.truncf %42 : vector<16x32xf32> to vector<16x32xbf16>
    %44 = vector.extract_strided_slice %2 {offsets = [0, 0], sizes = [32, 64], strides = [1, 1]} : vector<288x64xbf16> to vector<32x64xbf16>
    %cst_20 = arith.constant dense<0.000000e+00> : vector<16x64xf32>
    %45 = tpu.matmul %43, %44, %cst_20 {dimension_numbers = #tpu.dot_dimension_numbers<[1], [0], [0], [1], [0, 0, 1, 1], [], []>} : vector<16x32xbf16>, vector<32x64xbf16>, vector<16x64xf32> -> vector<16x64xf32>
    %46 = arith.addf %39, %45 : vector<16x64xf32>
    %47 = vector.extract_strided_slice %38 {offsets = [1, 0], sizes = [16, 32], strides = [1, 1]} : vector<26x32xf32> to vector<16x32xf32>
    %48 = arith.truncf %47 : vector<16x32xf32> to vector<16x32xbf16>
    %49 = vector.extract_strided_slice %2 {offsets = [32, 0], sizes = [32, 64], strides = [1, 1]} : vector<288x64xbf16> to vector<32x64xbf16>
    %cst_21 = arith.constant dense<0.000000e+00> : vector<16x64xf32>
    %50 = tpu.matmul %48, %49, %cst_21 {dimension_numbers = #tpu.dot_dimension_numbers<[1], [0], [0], [1], [0, 0, 1, 1], [], []>} : vector<16x32xbf16>, vector<32x64xbf16>, vector<16x64xf32> -> vector<16x64xf32>
    %51 = arith.addf %46, %50 : vector<16x64xf32>
    %52 = vector.extract_strided_slice %38 {offsets = [2, 0], sizes = [16, 32], strides = [1, 1]} : vector<26x32xf32> to vector<16x32xf32>
    %53 = vector.broadcast %36 : vector<16x1xf32> to vector<16x32xf32>
    %54 = arith.mulf %52, %53 : vector<16x32xf32>
    %55 = arith.truncf %54 : vector<16x32xf32> to vector<16x32xbf16>
    %56 = vector.extract_strided_slice %2 {offsets = [64, 0], sizes = [32, 64], strides = [1, 1]} : vector<288x64xbf16> to vector<32x64xbf16>
    %cst_22 = arith.constant dense<0.000000e+00> : vector<16x64xf32>
    %57 = tpu.matmul %55, %56, %cst_22 {dimension_numbers = #tpu.dot_dimension_numbers<[1], [0], [0], [1], [0, 0, 1, 1], [], []>} : vector<16x32xbf16>, vector<32x64xbf16>, vector<16x64xf32> -> vector<16x64xf32>
    %58 = arith.addf %51, %57 : vector<16x64xf32>
    %59 = vector.extract_strided_slice %38 {offsets = [4, 0], sizes = [16, 32], strides = [1, 1]} : vector<26x32xf32> to vector<16x32xf32>
    %60 = vector.broadcast %32 : vector<16x1xf32> to vector<16x32xf32>
    %61 = arith.mulf %59, %60 : vector<16x32xf32>
    %62 = arith.truncf %61 : vector<16x32xf32> to vector<16x32xbf16>
    %63 = vector.extract_strided_slice %2 {offsets = [96, 0], sizes = [32, 64], strides = [1, 1]} : vector<288x64xbf16> to vector<32x64xbf16>
    %cst_23 = arith.constant dense<0.000000e+00> : vector<16x64xf32>
    %64 = tpu.matmul %62, %63, %cst_23 {dimension_numbers = #tpu.dot_dimension_numbers<[1], [0], [0], [1], [0, 0, 1, 1], [], []>} : vector<16x32xbf16>, vector<32x64xbf16>, vector<16x64xf32> -> vector<16x64xf32>
    %65 = arith.addf %58, %64 : vector<16x64xf32>
    %66 = vector.extract_strided_slice %38 {offsets = [5, 0], sizes = [16, 32], strides = [1, 1]} : vector<26x32xf32> to vector<16x32xf32>
    %67 = arith.truncf %66 : vector<16x32xf32> to vector<16x32xbf16>
    %68 = vector.extract_strided_slice %2 {offsets = [128, 0], sizes = [32, 64], strides = [1, 1]} : vector<288x64xbf16> to vector<32x64xbf16>
    %cst_24 = arith.constant dense<0.000000e+00> : vector<16x64xf32>
    %69 = tpu.matmul %67, %68, %cst_24 {dimension_numbers = #tpu.dot_dimension_numbers<[1], [0], [0], [1], [0, 0, 1, 1], [], []>} : vector<16x32xbf16>, vector<32x64xbf16>, vector<16x64xf32> -> vector<16x64xf32>
    %70 = arith.addf %65, %69 : vector<16x64xf32>
    %71 = vector.extract_strided_slice %38 {offsets = [6, 0], sizes = [16, 32], strides = [1, 1]} : vector<26x32xf32> to vector<16x32xf32>
    %72 = vector.broadcast %36 : vector<16x1xf32> to vector<16x32xf32>
    %73 = arith.mulf %71, %72 : vector<16x32xf32>
    %74 = arith.truncf %73 : vector<16x32xf32> to vector<16x32xbf16>
    %75 = vector.extract_strided_slice %2 {offsets = [160, 0], sizes = [32, 64], strides = [1, 1]} : vector<288x64xbf16> to vector<32x64xbf16>
    %cst_25 = arith.constant dense<0.000000e+00> : vector<16x64xf32>
    %76 = tpu.matmul %74, %75, %cst_25 {dimension_numbers = #tpu.dot_dimension_numbers<[1], [0], [0], [1], [0, 0, 1, 1], [], []>} : vector<16x32xbf16>, vector<32x64xbf16>, vector<16x64xf32> -> vector<16x64xf32>
    %77 = arith.addf %70, %76 : vector<16x64xf32>
    %78 = vector.extract_strided_slice %38 {offsets = [8, 0], sizes = [16, 32], strides = [1, 1]} : vector<26x32xf32> to vector<16x32xf32>
    %79 = vector.broadcast %32 : vector<16x1xf32> to vector<16x32xf32>
    %80 = arith.mulf %78, %79 : vector<16x32xf32>
    %81 = arith.truncf %80 : vector<16x32xf32> to vector<16x32xbf16>
    %82 = vector.extract_strided_slice %2 {offsets = [192, 0], sizes = [32, 64], strides = [1, 1]} : vector<288x64xbf16> to vector<32x64xbf16>
    %cst_26 = arith.constant dense<0.000000e+00> : vector<16x64xf32>
    %83 = tpu.matmul %81, %82, %cst_26 {dimension_numbers = #tpu.dot_dimension_numbers<[1], [0], [0], [1], [0, 0, 1, 1], [], []>} : vector<16x32xbf16>, vector<32x64xbf16>, vector<16x64xf32> -> vector<16x64xf32>
    %84 = arith.addf %77, %83 : vector<16x64xf32>
    %85 = vector.extract_strided_slice %38 {offsets = [9, 0], sizes = [16, 32], strides = [1, 1]} : vector<26x32xf32> to vector<16x32xf32>
    %86 = arith.truncf %85 : vector<16x32xf32> to vector<16x32xbf16>
    %87 = vector.extract_strided_slice %2 {offsets = [224, 0], sizes = [32, 64], strides = [1, 1]} : vector<288x64xbf16> to vector<32x64xbf16>
    %cst_27 = arith.constant dense<0.000000e+00> : vector<16x64xf32>
    %88 = tpu.matmul %86, %87, %cst_27 {dimension_numbers = #tpu.dot_dimension_numbers<[1], [0], [0], [1], [0, 0, 1, 1], [], []>} : vector<16x32xbf16>, vector<32x64xbf16>, vector<16x64xf32> -> vector<16x64xf32>
    %89 = arith.addf %84, %88 : vector<16x64xf32>
    %90 = vector.extract_strided_slice %38 {offsets = [10, 0], sizes = [16, 32], strides = [1, 1]} : vector<26x32xf32> to vector<16x32xf32>
    %91 = vector.broadcast %36 : vector<16x1xf32> to vector<16x32xf32>
    %92 = arith.mulf %90, %91 : vector<16x32xf32>
    %93 = arith.truncf %92 : vector<16x32xf32> to vector<16x32xbf16>
    %94 = vector.extract_strided_slice %2 {offsets = [256, 0], sizes = [32, 64], strides = [1, 1]} : vector<288x64xbf16> to vector<32x64xbf16>
    %cst_28 = arith.constant dense<0.000000e+00> : vector<16x64xf32>
    %95 = tpu.matmul %93, %94, %cst_28 {dimension_numbers = #tpu.dot_dimension_numbers<[1], [0], [0], [1], [0, 0, 1, 1], [], []>} : vector<16x32xbf16>, vector<32x64xbf16>, vector<16x64xf32> -> vector<16x64xf32>
    %96 = arith.addf %89, %95 : vector<16x64xf32>
    %97 = vector.broadcast %3 : vector<1x64xf32> to vector<16x64xf32>
    %98 = arith.addf %96, %97 : vector<16x64xf32>
    %cst_29 = arith.constant 0.000000e+00 : f32
    %99 = vector.broadcast %cst_29 : f32 to vector<16x64xf32>
    %100 = arith.maximumf %98, %99 : vector<16x64xf32>
    %101 = arith.truncf %100 : vector<16x64xf32> to vector<16x64xbf16>
    %cst_30 = arith.constant dense<0.000000e+00> : vector<16x128xf32>
    %102 = tpu.matmul %101, %5, %cst_30 {dimension_numbers = #tpu.dot_dimension_numbers<[1], [0], [0], [1], [0, 0, 1, 1], [], []>} : vector<16x64xbf16>, vector<64x128xbf16>, vector<16x128xf32> -> vector<16x128xf32>
    %103 = vector.broadcast %6 : vector<1x128xf32> to vector<16x128xf32>
    %104 = arith.addf %102, %103 : vector<16x128xf32>
    %c0_31 = arith.constant 0 : index
    %c0_32 = arith.constant 0 : index
    %105 = vector.load %arg1[%c0_31, %c0_32] : memref<256x64xbf16, #tpu.memory_space<vmem>>, vector<256x64xbf16>
    %c0_33 = arith.constant 0 : index
    %c0_34 = arith.constant 0 : index
    %106 = vector.load %arg8[%c0_33, %c0_34] : memref<64x128xbf16, #tpu.memory_space<vmem>>, vector<64x128xbf16>
    %c0_35 = arith.constant 0 : index
    %c0_36 = arith.constant 0 : index
    %107 = vector.load %arg9[%c0_35, %c0_36] : memref<1x128xf32, #tpu.memory_space<vmem>>, vector<1x128xf32>
    %cst_37 = arith.constant dense<0.000000e+00> : vector<256x32xf32>
    %108 = tpu.matmul %105, %0, %cst_37 {dimension_numbers = #tpu.dot_dimension_numbers<[1], [0], [0], [1], [0, 0, 1, 1], [], []>} : vector<256x64xbf16>, vector<64x32xbf16>, vector<256x32xf32> -> vector<256x32xf32>
    %109 = vector.broadcast %1 : vector<1x32xf32> to vector<256x32xf32>
    %110 = arith.addf %108, %109 : vector<256x32xf32>
    %cst_38 = arith.constant 0.000000e+00 : f32
    %111 = vector.broadcast %cst_38 : f32 to vector<256x32xf32>
    %112 = arith.maximumf %110, %111 : vector<256x32xf32>
    %113 = tpu.iota {dimensions = array<i32: 0>} : vector<256x1xi32>
    %c16_i32 = arith.constant 16 : i32
    %c0_i32_39 = arith.constant 0 : i32
    %114 = arith.cmpi eq, %c16_i32, %c0_i32_39 : i32
    %c1_i32_40 = arith.constant 1 : i32
    %115 = arith.select %114, %c1_i32_40, %c16_i32 : i32
    %116 = vector.broadcast %115 : i32 to vector<256x1xi32>
    %117 = arith.remsi %113, %116 : vector<256x1xi32>
    %c0_i32_41 = arith.constant 0 : i32
    %118 = vector.broadcast %c0_i32_41 : i32 to vector<256x1xi32>
    %119 = arith.cmpi ne, %117, %118 : vector<256x1xi32>
    %c0_i32_42 = arith.constant 0 : i32
    %120 = vector.broadcast %c0_i32_42 : i32 to vector<256x1xi32>
    %121 = arith.cmpi slt, %117, %120 : vector<256x1xi32>
    %c0_i32_43 = arith.constant 0 : i32
    %122 = arith.cmpi slt, %115, %c0_i32_43 : i32
    %123 = vector.broadcast %122 : i1 to vector<256x1xi1>
    %124 = vector.broadcast %123 : vector<256x1xi1> to vector<256x1xi1>
    %125 = arith.xori %121, %124 : vector<256x1xi1>
    %126 = arith.andi %125, %119 : vector<256x1xi1>
    %127 = vector.broadcast %115 : i32 to vector<256x1xi32>
    %128 = arith.addi %117, %127 : vector<256x1xi32>
    %129 = arith.select %126, %128, %117 : vector<256x1xi1>, vector<256x1xi32>
    %c0_i32_44 = arith.constant 0 : i32
    %130 = vector.broadcast %c0_i32_44 : i32 to vector<256x1xi32>
    %131 = arith.cmpi sgt, %129, %130 : vector<256x1xi32>
    %132 = arith.extui %131 : vector<256x1xi1> to vector<256x1xi32>
    %133 = arith.sitofp %132 : vector<256x1xi32> to vector<256x1xf32>
    %c15_i32 = arith.constant 15 : i32
    %134 = vector.broadcast %c15_i32 : i32 to vector<256x1xi32>
    %135 = arith.cmpi slt, %129, %134 : vector<256x1xi32>
    %136 = arith.extui %135 : vector<256x1xi1> to vector<256x1xi32>
    %137 = arith.sitofp %136 : vector<256x1xi32> to vector<256x1xf32>
    %cst_45 = arith.constant 0.000000e+00 : f32
    %138 = vector.broadcast %cst_45 : f32 to vector<17x32xf32>
    %139 = tpu.concatenate %138, %112, %138 in 0 : vector<17x32xf32>, vector<256x32xf32>, vector<17x32xf32> -> vector<290x32xf32>
    %cst_46 = arith.constant 0.000000e+00 : f32
    %140 = vector.broadcast %cst_46 : f32 to vector<256x64xf32>
    %141 = vector.extract_strided_slice %139 {offsets = [0, 0], sizes = [256, 32], strides = [1, 1]} : vector<290x32xf32> to vector<256x32xf32>
    %142 = vector.broadcast %133 : vector<256x1xf32> to vector<256x32xf32>
    %143 = arith.mulf %141, %142 : vector<256x32xf32>
    %144 = arith.truncf %143 : vector<256x32xf32> to vector<256x32xbf16>
    %145 = vector.extract_strided_slice %2 {offsets = [0, 0], sizes = [32, 64], strides = [1, 1]} : vector<288x64xbf16> to vector<32x64xbf16>
    %cst_47 = arith.constant dense<0.000000e+00> : vector<256x64xf32>
    %146 = tpu.matmul %144, %145, %cst_47 {dimension_numbers = #tpu.dot_dimension_numbers<[1], [0], [0], [1], [0, 0, 1, 1], [], []>} : vector<256x32xbf16>, vector<32x64xbf16>, vector<256x64xf32> -> vector<256x64xf32>
    %147 = arith.addf %140, %146 : vector<256x64xf32>
    %148 = vector.extract_strided_slice %139 {offsets = [1, 0], sizes = [256, 32], strides = [1, 1]} : vector<290x32xf32> to vector<256x32xf32>
    %149 = arith.truncf %148 : vector<256x32xf32> to vector<256x32xbf16>
    %150 = vector.extract_strided_slice %2 {offsets = [32, 0], sizes = [32, 64], strides = [1, 1]} : vector<288x64xbf16> to vector<32x64xbf16>
    %cst_48 = arith.constant dense<0.000000e+00> : vector<256x64xf32>
    %151 = tpu.matmul %149, %150, %cst_48 {dimension_numbers = #tpu.dot_dimension_numbers<[1], [0], [0], [1], [0, 0, 1, 1], [], []>} : vector<256x32xbf16>, vector<32x64xbf16>, vector<256x64xf32> -> vector<256x64xf32>
    %152 = arith.addf %147, %151 : vector<256x64xf32>
    %153 = vector.extract_strided_slice %139 {offsets = [2, 0], sizes = [256, 32], strides = [1, 1]} : vector<290x32xf32> to vector<256x32xf32>
    %154 = vector.broadcast %137 : vector<256x1xf32> to vector<256x32xf32>
    %155 = arith.mulf %153, %154 : vector<256x32xf32>
    %156 = arith.truncf %155 : vector<256x32xf32> to vector<256x32xbf16>
    %157 = vector.extract_strided_slice %2 {offsets = [64, 0], sizes = [32, 64], strides = [1, 1]} : vector<288x64xbf16> to vector<32x64xbf16>
    %cst_49 = arith.constant dense<0.000000e+00> : vector<256x64xf32>
    %158 = tpu.matmul %156, %157, %cst_49 {dimension_numbers = #tpu.dot_dimension_numbers<[1], [0], [0], [1], [0, 0, 1, 1], [], []>} : vector<256x32xbf16>, vector<32x64xbf16>, vector<256x64xf32> -> vector<256x64xf32>
    %159 = arith.addf %152, %158 : vector<256x64xf32>
    %160 = vector.extract_strided_slice %139 {offsets = [16, 0], sizes = [256, 32], strides = [1, 1]} : vector<290x32xf32> to vector<256x32xf32>
    %161 = vector.broadcast %133 : vector<256x1xf32> to vector<256x32xf32>
    %162 = arith.mulf %160, %161 : vector<256x32xf32>
    %163 = arith.truncf %162 : vector<256x32xf32> to vector<256x32xbf16>
    %164 = vector.extract_strided_slice %2 {offsets = [96, 0], sizes = [32, 64], strides = [1, 1]} : vector<288x64xbf16> to vector<32x64xbf16>
    %cst_50 = arith.constant dense<0.000000e+00> : vector<256x64xf32>
    %165 = tpu.matmul %163, %164, %cst_50 {dimension_numbers = #tpu.dot_dimension_numbers<[1], [0], [0], [1], [0, 0, 1, 1], [], []>} : vector<256x32xbf16>, vector<32x64xbf16>, vector<256x64xf32> -> vector<256x64xf32>
    %166 = arith.addf %159, %165 : vector<256x64xf32>
    %167 = vector.extract_strided_slice %139 {offsets = [17, 0], sizes = [256, 32], strides = [1, 1]} : vector<290x32xf32> to vector<256x32xf32>
    %168 = arith.truncf %167 : vector<256x32xf32> to vector<256x32xbf16>
    %169 = vector.extract_strided_slice %2 {offsets = [128, 0], sizes = [32, 64], strides = [1, 1]} : vector<288x64xbf16> to vector<32x64xbf16>
    %cst_51 = arith.constant dense<0.000000e+00> : vector<256x64xf32>
    %170 = tpu.matmul %168, %169, %cst_51 {dimension_numbers = #tpu.dot_dimension_numbers<[1], [0], [0], [1], [0, 0, 1, 1], [], []>} : vector<256x32xbf16>, vector<32x64xbf16>, vector<256x64xf32> -> vector<256x64xf32>
    %171 = arith.addf %166, %170 : vector<256x64xf32>
    %172 = vector.extract_strided_slice %139 {offsets = [18, 0], sizes = [256, 32], strides = [1, 1]} : vector<290x32xf32> to vector<256x32xf32>
    %173 = vector.broadcast %137 : vector<256x1xf32> to vector<256x32xf32>
    %174 = arith.mulf %172, %173 : vector<256x32xf32>
    %175 = arith.truncf %174 : vector<256x32xf32> to vector<256x32xbf16>
    %176 = vector.extract_strided_slice %2 {offsets = [160, 0], sizes = [32, 64], strides = [1, 1]} : vector<288x64xbf16> to vector<32x64xbf16>
    %cst_52 = arith.constant dense<0.000000e+00> : vector<256x64xf32>
    %177 = tpu.matmul %175, %176, %cst_52 {dimension_numbers = #tpu.dot_dimension_numbers<[1], [0], [0], [1], [0, 0, 1, 1], [], []>} : vector<256x32xbf16>, vector<32x64xbf16>, vector<256x64xf32> -> vector<256x64xf32>
    %178 = arith.addf %171, %177 : vector<256x64xf32>
    %179 = vector.extract_strided_slice %139 {offsets = [32, 0], sizes = [256, 32], strides = [1, 1]} : vector<290x32xf32> to vector<256x32xf32>
    %180 = vector.broadcast %133 : vector<256x1xf32> to vector<256x32xf32>
    %181 = arith.mulf %179, %180 : vector<256x32xf32>
    %182 = arith.truncf %181 : vector<256x32xf32> to vector<256x32xbf16>
    %183 = vector.extract_strided_slice %2 {offsets = [192, 0], sizes = [32, 64], strides = [1, 1]} : vector<288x64xbf16> to vector<32x64xbf16>
    %cst_53 = arith.constant dense<0.000000e+00> : vector<256x64xf32>
    %184 = tpu.matmul %182, %183, %cst_53 {dimension_numbers = #tpu.dot_dimension_numbers<[1], [0], [0], [1], [0, 0, 1, 1], [], []>} : vector<256x32xbf16>, vector<32x64xbf16>, vector<256x64xf32> -> vector<256x64xf32>
    %185 = arith.addf %178, %184 : vector<256x64xf32>
    %186 = vector.extract_strided_slice %139 {offsets = [33, 0], sizes = [256, 32], strides = [1, 1]} : vector<290x32xf32> to vector<256x32xf32>
    %187 = arith.truncf %186 : vector<256x32xf32> to vector<256x32xbf16>
    %188 = vector.extract_strided_slice %2 {offsets = [224, 0], sizes = [32, 64], strides = [1, 1]} : vector<288x64xbf16> to vector<32x64xbf16>
    %cst_54 = arith.constant dense<0.000000e+00> : vector<256x64xf32>
    %189 = tpu.matmul %187, %188, %cst_54 {dimension_numbers = #tpu.dot_dimension_numbers<[1], [0], [0], [1], [0, 0, 1, 1], [], []>} : vector<256x32xbf16>, vector<32x64xbf16>, vector<256x64xf32> -> vector<256x64xf32>
    %190 = arith.addf %185, %189 : vector<256x64xf32>
    %191 = vector.extract_strided_slice %139 {offsets = [34, 0], sizes = [256, 32], strides = [1, 1]} : vector<290x32xf32> to vector<256x32xf32>
    %192 = vector.broadcast %137 : vector<256x1xf32> to vector<256x32xf32>
    %193 = arith.mulf %191, %192 : vector<256x32xf32>
    %194 = arith.truncf %193 : vector<256x32xf32> to vector<256x32xbf16>
    %195 = vector.extract_strided_slice %2 {offsets = [256, 0], sizes = [32, 64], strides = [1, 1]} : vector<288x64xbf16> to vector<32x64xbf16>
    %cst_55 = arith.constant dense<0.000000e+00> : vector<256x64xf32>
    %196 = tpu.matmul %194, %195, %cst_55 {dimension_numbers = #tpu.dot_dimension_numbers<[1], [0], [0], [1], [0, 0, 1, 1], [], []>} : vector<256x32xbf16>, vector<32x64xbf16>, vector<256x64xf32> -> vector<256x64xf32>
    %197 = arith.addf %190, %196 : vector<256x64xf32>
    %198 = vector.broadcast %3 : vector<1x64xf32> to vector<256x64xf32>
    %199 = arith.addf %197, %198 : vector<256x64xf32>
    %cst_56 = arith.constant 0.000000e+00 : f32
    %200 = vector.broadcast %cst_56 : f32 to vector<256x64xf32>
    %201 = arith.maximumf %199, %200 : vector<256x64xf32>
    %202 = arith.truncf %201 : vector<256x64xf32> to vector<256x64xbf16>
    %cst_57 = arith.constant dense<0.000000e+00> : vector<256x128xf32>
    %203 = tpu.matmul %202, %106, %cst_57 {dimension_numbers = #tpu.dot_dimension_numbers<[1], [0], [0], [1], [0, 0, 1, 1], [], []>} : vector<256x64xbf16>, vector<64x128xbf16>, vector<256x128xf32> -> vector<256x128xf32>
    %204 = vector.broadcast %107 : vector<1x128xf32> to vector<256x128xf32>
    %205 = arith.addf %203, %204 : vector<256x128xf32>
    %cst_58 = arith.constant 0.000000e+00 : f32
    %206 = vector.broadcast %cst_58 : f32 to vector<8x128xf32>
    %207 = tpu.concatenate %205, %206 in 0 : vector<256x128xf32>, vector<8x128xf32> -> vector<264x128xf32>
    %208 = vector.extract_strided_slice %207 {offsets = [0, 0], sizes = [256, 128], strides = [1, 1]} : vector<264x128xf32> to vector<256x128xf32>
    %209 = vector.extract_strided_slice %207 {offsets = [1, 0], sizes = [256, 128], strides = [1, 1]} : vector<264x128xf32> to vector<256x128xf32>
    %210 = vector.extract_strided_slice %207 {offsets = [2, 0], sizes = [256, 128], strides = [1, 1]} : vector<264x128xf32> to vector<256x128xf32>
    %211 = vector.extract_strided_slice %207 {offsets = [3, 0], sizes = [256, 128], strides = [1, 1]} : vector<264x128xf32> to vector<256x128xf32>
    %cst_59 = arith.constant 0.000000e+00 : f32
    %212 = vector.broadcast %cst_59 : f32 to vector<208x128xf32>
    %213 = vector.extract_strided_slice %208 {offsets = [0, 0], sizes = [208, 128], strides = [1, 1]} : vector<256x128xf32> to vector<208x128xf32>
    %214 = vector.extract_strided_slice %104 {offsets = [0, 0], sizes = [1, 128], strides = [1, 1]} : vector<16x128xf32> to vector<1x128xf32>
    %215 = vector.broadcast %214 : vector<1x128xf32> to vector<208x128xf32>
    %216 = arith.mulf %213, %215 : vector<208x128xf32>
    %217 = arith.addf %212, %216 : vector<208x128xf32>
    %218 = vector.extract_strided_slice %209 {offsets = [0, 0], sizes = [208, 128], strides = [1, 1]} : vector<256x128xf32> to vector<208x128xf32>
    %219 = vector.extract_strided_slice %104 {offsets = [1, 0], sizes = [1, 128], strides = [1, 1]} : vector<16x128xf32> to vector<1x128xf32>
    %220 = vector.broadcast %219 : vector<1x128xf32> to vector<208x128xf32>
    %221 = arith.mulf %218, %220 : vector<208x128xf32>
    %222 = arith.addf %217, %221 : vector<208x128xf32>
    %223 = vector.extract_strided_slice %210 {offsets = [0, 0], sizes = [208, 128], strides = [1, 1]} : vector<256x128xf32> to vector<208x128xf32>
    %224 = vector.extract_strided_slice %104 {offsets = [2, 0], sizes = [1, 128], strides = [1, 1]} : vector<16x128xf32> to vector<1x128xf32>
    %225 = vector.broadcast %224 : vector<1x128xf32> to vector<208x128xf32>
    %226 = arith.mulf %223, %225 : vector<208x128xf32>
    %227 = arith.addf %222, %226 : vector<208x128xf32>
    %228 = vector.extract_strided_slice %211 {offsets = [0, 0], sizes = [208, 128], strides = [1, 1]} : vector<256x128xf32> to vector<208x128xf32>
    %229 = vector.extract_strided_slice %104 {offsets = [3, 0], sizes = [1, 128], strides = [1, 1]} : vector<16x128xf32> to vector<1x128xf32>
    %230 = vector.broadcast %229 : vector<1x128xf32> to vector<208x128xf32>
    %231 = arith.mulf %228, %230 : vector<208x128xf32>
    %232 = arith.addf %227, %231 : vector<208x128xf32>
    %233 = vector.extract_strided_slice %208 {offsets = [16, 0], sizes = [208, 128], strides = [1, 1]} : vector<256x128xf32> to vector<208x128xf32>
    %234 = vector.extract_strided_slice %104 {offsets = [4, 0], sizes = [1, 128], strides = [1, 1]} : vector<16x128xf32> to vector<1x128xf32>
    %235 = vector.broadcast %234 : vector<1x128xf32> to vector<208x128xf32>
    %236 = arith.mulf %233, %235 : vector<208x128xf32>
    %237 = arith.addf %232, %236 : vector<208x128xf32>
    %238 = vector.extract_strided_slice %209 {offsets = [16, 0], sizes = [208, 128], strides = [1, 1]} : vector<256x128xf32> to vector<208x128xf32>
    %239 = vector.extract_strided_slice %104 {offsets = [5, 0], sizes = [1, 128], strides = [1, 1]} : vector<16x128xf32> to vector<1x128xf32>
    %240 = vector.broadcast %239 : vector<1x128xf32> to vector<208x128xf32>
    %241 = arith.mulf %238, %240 : vector<208x128xf32>
    %242 = arith.addf %237, %241 : vector<208x128xf32>
    %243 = vector.extract_strided_slice %210 {offsets = [16, 0], sizes = [208, 128], strides = [1, 1]} : vector<256x128xf32> to vector<208x128xf32>
    %244 = vector.extract_strided_slice %104 {offsets = [6, 0], sizes = [1, 128], strides = [1, 1]} : vector<16x128xf32> to vector<1x128xf32>
    %245 = vector.broadcast %244 : vector<1x128xf32> to vector<208x128xf32>
    %246 = arith.mulf %243, %245 : vector<208x128xf32>
    %247 = arith.addf %242, %246 : vector<208x128xf32>
    %248 = vector.extract_strided_slice %211 {offsets = [16, 0], sizes = [208, 128], strides = [1, 1]} : vector<256x128xf32> to vector<208x128xf32>
    %249 = vector.extract_strided_slice %104 {offsets = [7, 0], sizes = [1, 128], strides = [1, 1]} : vector<16x128xf32> to vector<1x128xf32>
    %250 = vector.broadcast %249 : vector<1x128xf32> to vector<208x128xf32>
    %251 = arith.mulf %248, %250 : vector<208x128xf32>
    %252 = arith.addf %247, %251 : vector<208x128xf32>
    %253 = vector.extract_strided_slice %208 {offsets = [32, 0], sizes = [208, 128], strides = [1, 1]} : vector<256x128xf32> to vector<208x128xf32>
    %254 = vector.extract_strided_slice %104 {offsets = [8, 0], sizes = [1, 128], strides = [1, 1]} : vector<16x128xf32> to vector<1x128xf32>
    %255 = vector.broadcast %254 : vector<1x128xf32> to vector<208x128xf32>
    %256 = arith.mulf %253, %255 : vector<208x128xf32>
    %257 = arith.addf %252, %256 : vector<208x128xf32>
    %258 = vector.extract_strided_slice %209 {offsets = [32, 0], sizes = [208, 128], strides = [1, 1]} : vector<256x128xf32> to vector<208x128xf32>
    %259 = vector.extract_strided_slice %104 {offsets = [9, 0], sizes = [1, 128], strides = [1, 1]} : vector<16x128xf32> to vector<1x128xf32>
    %260 = vector.broadcast %259 : vector<1x128xf32> to vector<208x128xf32>
    %261 = arith.mulf %258, %260 : vector<208x128xf32>
    %262 = arith.addf %257, %261 : vector<208x128xf32>
    %263 = vector.extract_strided_slice %210 {offsets = [32, 0], sizes = [208, 128], strides = [1, 1]} : vector<256x128xf32> to vector<208x128xf32>
    %264 = vector.extract_strided_slice %104 {offsets = [10, 0], sizes = [1, 128], strides = [1, 1]} : vector<16x128xf32> to vector<1x128xf32>
    %265 = vector.broadcast %264 : vector<1x128xf32> to vector<208x128xf32>
    %266 = arith.mulf %263, %265 : vector<208x128xf32>
    %267 = arith.addf %262, %266 : vector<208x128xf32>
    %268 = vector.extract_strided_slice %211 {offsets = [32, 0], sizes = [208, 128], strides = [1, 1]} : vector<256x128xf32> to vector<208x128xf32>
    %269 = vector.extract_strided_slice %104 {offsets = [11, 0], sizes = [1, 128], strides = [1, 1]} : vector<16x128xf32> to vector<1x128xf32>
    %270 = vector.broadcast %269 : vector<1x128xf32> to vector<208x128xf32>
    %271 = arith.mulf %268, %270 : vector<208x128xf32>
    %272 = arith.addf %267, %271 : vector<208x128xf32>
    %273 = vector.extract_strided_slice %208 {offsets = [48, 0], sizes = [208, 128], strides = [1, 1]} : vector<256x128xf32> to vector<208x128xf32>
    %274 = vector.extract_strided_slice %104 {offsets = [12, 0], sizes = [1, 128], strides = [1, 1]} : vector<16x128xf32> to vector<1x128xf32>
    %275 = vector.broadcast %274 : vector<1x128xf32> to vector<208x128xf32>
    %276 = arith.mulf %273, %275 : vector<208x128xf32>
    %277 = arith.addf %272, %276 : vector<208x128xf32>
    %278 = vector.extract_strided_slice %209 {offsets = [48, 0], sizes = [208, 128], strides = [1, 1]} : vector<256x128xf32> to vector<208x128xf32>
    %279 = vector.extract_strided_slice %104 {offsets = [13, 0], sizes = [1, 128], strides = [1, 1]} : vector<16x128xf32> to vector<1x128xf32>
    %280 = vector.broadcast %279 : vector<1x128xf32> to vector<208x128xf32>
    %281 = arith.mulf %278, %280 : vector<208x128xf32>
    %282 = arith.addf %277, %281 : vector<208x128xf32>
    %283 = vector.extract_strided_slice %210 {offsets = [48, 0], sizes = [208, 128], strides = [1, 1]} : vector<256x128xf32> to vector<208x128xf32>
    %284 = vector.extract_strided_slice %104 {offsets = [14, 0], sizes = [1, 128], strides = [1, 1]} : vector<16x128xf32> to vector<1x128xf32>
    %285 = vector.broadcast %284 : vector<1x128xf32> to vector<208x128xf32>
    %286 = arith.mulf %283, %285 : vector<208x128xf32>
    %287 = arith.addf %282, %286 : vector<208x128xf32>
    %288 = vector.extract_strided_slice %211 {offsets = [48, 0], sizes = [208, 128], strides = [1, 1]} : vector<256x128xf32> to vector<208x128xf32>
    %289 = vector.extract_strided_slice %104 {offsets = [15, 0], sizes = [1, 128], strides = [1, 1]} : vector<16x128xf32> to vector<1x128xf32>
    %290 = vector.broadcast %289 : vector<1x128xf32> to vector<208x128xf32>
    %291 = arith.mulf %288, %290 : vector<208x128xf32>
    %292 = arith.addf %287, %291 : vector<208x128xf32>
    %293 = arith.truncf %292 : vector<208x128xf32> to vector<208x128xbf16>
    %c0_60 = arith.constant 0 : index
    %c0_61 = arith.constant 0 : index
    %294 = vector.load %arg10[%c0_60, %c0_61] : memref<128x128xbf16, #tpu.memory_space<vmem>>, vector<128x128xbf16>
    %cst_62 = arith.constant dense<0.000000e+00> : vector<208x128xf32>
    %295 = tpu.matmul %293, %294, %cst_62 {dimension_numbers = #tpu.dot_dimension_numbers<[1], [0], [0], [1], [0, 0, 1, 1], [], []>} : vector<208x128xbf16>, vector<128x128xbf16>, vector<208x128xf32> -> vector<208x128xf32>
    %c0_63 = arith.constant 0 : index
    %c0_64 = arith.constant 0 : index
    %296 = vector.load %arg11[%c0_63, %c0_64] : memref<1x128xf32, #tpu.memory_space<vmem>>, vector<1x128xf32>
    %297 = vector.broadcast %296 : vector<1x128xf32> to vector<208x128xf32>
    %298 = arith.addf %295, %297 : vector<208x128xf32>
    %cst_65 = arith.constant 0.000000e+00 : f32
    %299 = vector.broadcast %cst_65 : f32 to vector<208x128xf32>
    %300 = arith.maximumf %298, %299 : vector<208x128xf32>
    %301 = arith.truncf %300 : vector<208x128xf32> to vector<208x128xbf16>
    %c0_66 = arith.constant 0 : index
    %c0_67 = arith.constant 0 : index
    %302 = vector.load %arg12[%c0_66, %c0_67] : memref<128x68xbf16, #tpu.memory_space<vmem>>, vector<128x68xbf16>
    %cst_68 = arith.constant dense<0.000000e+00> : vector<208x68xf32>
    %303 = tpu.matmul %301, %302, %cst_68 {dimension_numbers = #tpu.dot_dimension_numbers<[1], [0], [0], [1], [0, 0, 1, 1], [], []>} : vector<208x128xbf16>, vector<128x68xbf16>, vector<208x68xf32> -> vector<208x68xf32>
    %c0_69 = arith.constant 0 : index
    %c0_70 = arith.constant 0 : index
    %304 = vector.load %arg13[%c0_69, %c0_70] : memref<1x68xf32, #tpu.memory_space<vmem>>, vector<1x68xf32>
    %305 = vector.broadcast %304 : vector<1x68xf32> to vector<208x68xf32>
    %306 = arith.addf %303, %305 : vector<208x68xf32>
    %307 = vector.extract_strided_slice %306 {offsets = [0, 0], sizes = [208, 64], strides = [1, 1]} : vector<208x68xf32> to vector<208x64xf32>
    %308 = vector.extract_strided_slice %306 {offsets = [0, 64], sizes = [208, 4], strides = [1, 1]} : vector<208x68xf32> to vector<208x4xf32>
    %c0_71 = arith.constant 0 : index
    %c0_72 = arith.constant 0 : index
    %309 = vector.load %arg14[%c0_71, %c0_72] : memref<64x64xf32, #tpu.memory_space<vmem>>, vector<64x64xf32>
    %cst_73 = arith.constant dense<0.000000e+00> : vector<208x64xf32>
    %310 = tpu.matmul %307, %309, %cst_73 {dimension_numbers = #tpu.dot_dimension_numbers<[1], [0], [0], [1], [0, 0, 1, 1], [], []>} : vector<208x64xf32>, vector<64x64xf32>, vector<208x64xf32> -> vector<208x64xf32>
    %311 = arith.subf %307, %310 : vector<208x64xf32>
    %312 = math.exp %311 : vector<208x64xf32>
    %c0_74 = arith.constant 0 : index
    %c0_75 = arith.constant 0 : index
    %313 = vector.load %arg15[%c0_74, %c0_75] : memref<64x16xf32, #tpu.memory_space<vmem>>, vector<64x16xf32>
    %cst_76 = arith.constant dense<0.000000e+00> : vector<208x16xf32>
    %314 = tpu.matmul %312, %313, %cst_76 {dimension_numbers = #tpu.dot_dimension_numbers<[1], [0], [0], [1], [0, 0, 1, 1], [], []>} : vector<208x64xf32>, vector<64x16xf32>, vector<208x16xf32> -> vector<208x16xf32>
    %315 = vector.extract_strided_slice %314 {offsets = [0, 0], sizes = [208, 8], strides = [1, 1]} : vector<208x16xf32> to vector<208x8xf32>
    %316 = vector.extract_strided_slice %314 {offsets = [0, 8], sizes = [208, 8], strides = [1, 1]} : vector<208x16xf32> to vector<208x8xf32>
    %cst_77 = arith.constant 9.99999968E-21 : f32
    %317 = vector.broadcast %cst_77 : f32 to vector<208x8xf32>
    %318 = arith.maximumf %316, %317 : vector<208x8xf32>
    %319 = arith.divf %315, %318 : vector<208x8xf32>
    %320 = tpu.concatenate %319, %308 in 1 : vector<208x8xf32>, vector<208x4xf32> -> vector<208x12xf32>
    %c0_78 = arith.constant 0 : index
    %c0_79 = arith.constant 0 : index
    %321 = vector.load %arg16[%c0_78, %c0_79] : memref<208x12xf32, #tpu.memory_space<vmem>>, vector<208x12xf32>
    tpu.vector_store %arg16[%c0_78, %c0_79], %320 {strides = array<i32>} : memref<208x12xf32, #tpu.memory_space<vmem>>, vector<208x12xf32>,
    return
  }
}

</mosaic_0001>

<llo_original>
// kernel: siamese_forward.1
$region0: #{siamese_forward.1}
  #allocation0 [shape = 'u32[]', space=smem, size = 0x4, offset = 0x4, fixed_abs, tag = 'smem constant byte address 0x4 - core index']
  #allocation1 [shape = 'u32[72,128]{1,0:T(1,128)}', space=vmem, size = 0x9000, scoped, tag = 'internal scratch']
  %s0 = inlined_call_operand.vmem [shape: bf16[16,64], index: 0, kind: input, shape index: {}]
  %s1 = inlined_call_operand.vmem [shape: bf16[256,64], index: 1, kind: input, shape index: {}]
  %s2 = inlined_call_operand.vmem [shape: bf16[64,32], index: 2, kind: input, shape index: {}]
  %s3 = inlined_call_operand.vmem [shape: f32[1,32], index: 3, kind: input, shape index: {}]
  %s4 = inlined_call_operand.vmem [shape: bf16[288,64], index: 4, kind: input, shape index: {}]
  %s5 = inlined_call_operand.vmem [shape: f32[1,64], index: 5, kind: input, shape index: {}]
  %s6 = inlined_call_operand.vmem [shape: bf16[64,128], index: 6, kind: input, shape index: {}]
  %s7 = inlined_call_operand.vmem [shape: f32[1,128], index: 7, kind: input, shape index: {}]
  %s8 = inlined_call_operand.vmem [shape: bf16[64,128], index: 8, kind: input, shape index: {}]
  %s9 = inlined_call_operand.vmem [shape: f32[1,128], index: 9, kind: input, shape index: {}]
  %s10 = inlined_call_operand.vmem [shape: bf16[128,128], index: 10, kind: input, shape index: {}]
  %s11 = inlined_call_operand.vmem [shape: f32[1,128], index: 11, kind: input, shape index: {}]
  %s12 = inlined_call_operand.vmem [shape: bf16[128,68], index: 12, kind: input, shape index: {}]
  %s13 = inlined_call_operand.vmem [shape: f32[1,68], index: 13, kind: input, shape index: {}]
  %s14 = inlined_call_operand.vmem [shape: f32[64,64], index: 14, kind: input, shape index: {}]
  %s15 = inlined_call_operand.vmem [shape: f32[64,16], index: 15, kind: input, shape index: {}]
  %s16 = inlined_call_operand.vmem [shape: f32[208,12], index: 16, kind: output, shape index: {}]
  %s17 = sld [smem:[#allocation0]]
  $region74: #{siamese_forward.1} parent=0
    _
  %s19 = ssub.s32 1, %s17
  %s20 = scalar_select 0, %s19, %s17
  // Predicated region
  $region2: #{siamese_forward.1} parent=0 // pred_check
    _
  $region3: #{siamese_forward.1} parent=0 // pred_check_branch
    %22 = sbr.rel (0) target = $region5
  $region4: #{siamese_forward.1} parent=0 // pred_region
    _
  $region5: #{siamese_forward.1} parent=0 // pred_fallthru
    _
  // Predicated region
  $region6: #{siamese_forward.1} parent=0 // pred_check
    _
  $region7: #{siamese_forward.1} parent=0 // pred_check_branch
    %24 = sbr.rel (0) target = $region9
  $region8: #{siamese_forward.1} parent=0 // pred_region
    _
  $region9: #{siamese_forward.1} parent=0 // pred_fallthru
    _
  // Predicated region
  $region10: #{siamese_forward.1} parent=0 // pred_check
    _
  $region11: #{siamese_forward.1} parent=0 // pred_check_branch
    %26 = sbr.rel (0) target = $region13
  $region12: #{siamese_forward.1} parent=0 // pred_region
    _
  $region13: #{siamese_forward.1} parent=0 // pred_fallthru
    _
  // Predicated region
  $region14: #{siamese_forward.1} parent=0 // pred_check
    _
  $region15: #{siamese_forward.1} parent=0 // pred_check_branch
    %28 = sbr.rel (0) target = $region17
  $region16: #{siamese_forward.1} parent=0 // pred_region
    _
  $region17: #{siamese_forward.1} parent=0 // pred_fallthru
    _
  // Predicated region
  $region18: #{siamese_forward.1} parent=0 // pred_check
    _
  $region19: #{siamese_forward.1} parent=0 // pred_check_branch
    %30 = sbr.rel (0) target = $region21
  $region20: #{siamese_forward.1} parent=0 // pred_region
    _
  $region21: #{siamese_forward.1} parent=0 // pred_fallthru
    _
  // Predicated region
  $region22: #{siamese_forward.1} parent=0 // pred_check
    _
  $region23: #{siamese_forward.1} parent=0 // pred_check_branch
    %32 = sbr.rel (0) target = $region25
  $region24: #{siamese_forward.1} parent=0 // pred_region
    _
  $region25: #{siamese_forward.1} parent=0 // pred_fallthru
    _
  // Predicated region
  $region26: #{siamese_forward.1} parent=0 // pred_check
    _
  $region27: #{siamese_forward.1} parent=0 // pred_check_branch
    %34 = sbr.rel (0) target = $region29
  $region28: #{siamese_forward.1} parent=0 // pred_region
    _
  $region29: #{siamese_forward.1} parent=0 // pred_fallthru
    _
  // Predicated region
  $region30: #{siamese_forward.1} parent=0 // pred_check
    _
  $region31: #{siamese_forward.1} parent=0 // pred_check_branch
    %36 = sbr.rel (0) target = $region33
  $region32: #{siamese_forward.1} parent=0 // pred_region
    _
  $region33: #{siamese_forward.1} parent=0 // pred_fallthru
    _
  // Predicated region
  $region34: #{siamese_forward.1} parent=0 // pred_check
    _
  $region35: #{siamese_forward.1} parent=0 // pred_check_branch
    %38 = sbr.rel (0) target = $region37
  $region36: #{siamese_forward.1} parent=0 // pred_region
    _
  $region37: #{siamese_forward.1} parent=0 // pred_fallthru
    _
  // Predicated region
  $region38: #{siamese_forward.1} parent=0 // pred_check
    _
  $region39: #{siamese_forward.1} parent=0 // pred_check_branch
    %40 = sbr.rel (0) target = $region41
  $region40: #{siamese_forward.1} parent=0 // pred_region
    _
  $region41: #{siamese_forward.1} parent=0 // pred_fallthru
    _
  // Predicated region
  $region42: #{siamese_forward.1} parent=0 // pred_check
    _
  $region43: #{siamese_forward.1} parent=0 // pred_check_branch
    %42 = sbr.rel (0) target = $region45
  $region44: #{siamese_forward.1} parent=0 // pred_region
    _
  $region45: #{siamese_forward.1} parent=0 // pred_fallthru
    _
  // Predicated region
  $region46: #{siamese_forward.1} parent=0 // pred_check
    _
  $region47: #{siamese_forward.1} parent=0 // pred_check_branch
    %44 = sbr.rel (0) target = $region49
  $region48: #{siamese_forward.1} parent=0 // pred_region
    _
  $region49: #{siamese_forward.1} parent=0 // pred_fallthru
    _
  // Predicated region
  $region50: #{siamese_forward.1} parent=0 // pred_check
    _
  $region51: #{siamese_forward.1} parent=0 // pred_check_branch
    %46 = sbr.rel (0) target = $region53
  $region52: #{siamese_forward.1} parent=0 // pred_region
    _
  $region53: #{siamese_forward.1} parent=0 // pred_fallthru
    _
  // Predicated region
  $region54: #{siamese_forward.1} parent=0 // pred_check
    _
  $region55: #{siamese_forward.1} parent=0 // pred_check_branch
    %48 = sbr.rel (0) target = $region57
  $region56: #{siamese_forward.1} parent=0 // pred_region
    _
  $region57: #{siamese_forward.1} parent=0 // pred_fallthru
    _
  // Predicated region
  $region58: #{siamese_forward.1} parent=0 // pred_check
    _
  $region59: #{siamese_forward.1} parent=0 // pred_check_branch
    %50 = sbr.rel (0) target = $region61
  $region60: #{siamese_forward.1} parent=0 // pred_region
    _
  $region61: #{siamese_forward.1} parent=0 // pred_fallthru
    _
  // Predicated region
  $region62: #{siamese_forward.1} parent=0 // pred_check
    _
  $region63: #{siamese_forward.1} parent=0 // pred_check_branch
    %52 = sbr.rel (0) target = $region65
  $region64: #{siamese_forward.1} parent=0 // pred_region
    _
  $region65: #{siamese_forward.1} parent=0 // pred_fallthru
    _
  %v54 = vld [vmem:[%s2] sm:$0xf]
  %v55 = vld [vmem:[%s2 + $0x4] sm:$0xf]
  %v56 = vld [vmem:[%s2 + $0x8] sm:$0xf]
  %v57 = vld [vmem:[%s2 + $0xc] sm:$0xf]
  %v58 = vld [vmem:[%s2 + $0x10] sm:$0xf]
  %v59 = vld [vmem:[%s2 + $0x14] sm:$0xf]
  %v60 = vld [vmem:[%s2 + $0x18] sm:$0xf]
  %v61 = vld [vmem:[%s2 + $0x1c] sm:$0xf]
  %v62 = vld [vmem:[%s3] sm:$0x1]
  %v63 = vld [vmem:[%s4] sm:$0xf]
  %v64 = vld [vmem:[%s4 + $0x4] sm:$0xf]
  %v65 = vld [vmem:[%s4 + $0x8] sm:$0xf]
  %v66 = vld [vmem:[%s4 + $0xc] sm:$0xf]
  %v67 = vld [vmem:[%s4 + $0x10] sm:$0xf]
  %v68 = vld [vmem:[%s4 + $0x14] sm:$0xf]
  %v69 = vld [vmem:[%s4 + $0x18] sm:$0xf]
  %v70 = vld [vmem:[%s4 + $0x1c] sm:$0xf]
  %v71 = vld [vmem:[%s4 + $0x20] sm:$0xf]
  %v72 = vld [vmem:[%s4 + $0x24] sm:$0xf]
  %v73 = vld [vmem:[%s4 + $0x28] sm:$0xf]
  %v74 = vld [vmem:[%s4 + $0x2c] sm:$0xf]
  %v75 = vld [vmem:[%s4 + $0x30] sm:$0xf]
  %v76 = vld [vmem:[%s4 + $0x34] sm:$0xf]
  %v77 = vld [vmem:[%s4 + $0x38] sm:$0xf]
  %v78 = vld [vmem:[%s4 + $0x3c] sm:$0xf]
  %v79 = vld [vmem:[%s4 + $0x40] sm:$0xf]
  %v80 = vld [vmem:[%s4 + $0x44] sm:$0xf]
  %v81 = vld [vmem:[%s4 + $0x48] sm:$0xf]
  %v82 = vld [vmem:[%s4 + $0x4c] sm:$0xf]
  %v83 = vld [vmem:[%s4 + $0x50] sm:$0xf]
  %v84 = vld [vmem:[%s4 + $0x54] sm:$0xf]
  %v85 = vld [vmem:[%s4 + $0x58] sm:$0xf]
  %v86 = vld [vmem:[%s4 + $0x5c] sm:$0xf]
  %v87 = vld [vmem:[%s4 + $0x60] sm:$0xf]
  %v88 = vld [vmem:[%s4 + $0x64] sm:$0xf]
  %v89 = vld [vmem:[%s4 + $0x68] sm:$0xf]
  %v90 = vld [vmem:[%s4 + $0x6c] sm:$0xf]
  %v91 = vld [vmem:[%s4 + $0x70] sm:$0xf]
  %v92 = vld [vmem:[%s4 + $0x74] sm:$0xf]
  %v93 = vld [vmem:[%s4 + $0x78] sm:$0xf]
  %v94 = vld [vmem:[%s4 + $0x7c] sm:$0xf]
  %v95 = vld [vmem:[%s4 + $0x80] sm:$0xf]
  %v96 = vld [vmem:[%s4 + $0x84] sm:$0xf]
  %v97 = vld [vmem:[%s4 + $0x88] sm:$0xf]
  %v98 = vld [vmem:[%s4 + $0x8c] sm:$0xf]
  %v99 = vld [vmem:[%s5] sm:$0x1]
  %v100 = vld [vmem:[%s0] sm:$0xf]
  %v101 = vld [vmem:[%s0 + $0x4] sm:$0xf]
  %v102 = vld [vmem:[%s6] sm:$0xf]
  %v103 = vld [vmem:[%s6 + $0x4] sm:$0xf]
  %v104 = vld [vmem:[%s6 + $0x8] sm:$0xf]
  %v105 = vld [vmem:[%s6 + $0xc] sm:$0xf]
  %v106 = vld [vmem:[%s6 + $0x10] sm:$0xf]
  %v107 = vld [vmem:[%s6 + $0x14] sm:$0xf]
  %v108 = vld [vmem:[%s6 + $0x18] sm:$0xf]
  %v109 = vld [vmem:[%s6 + $0x1c] sm:$0xf]
  %v110 = vld [vmem:[%s7] sm:$0x1]
  %v112 = vperm.slane %v62, 0
  %v116 = vunpack.c.l.b16 %v100
  %v117 = vunpack.c.l.b16 %v101
  %v118 = vpack.c.b16 %v117, %v116
  %v127 = vunpack.c.l.b16 %v54
  %v128 = vunpack.c.l.b16 %v55
  %v129 = vunpack.c.l.b16 %v56
  %v130 = vunpack.c.l.b16 %v57
  %v131 = vunpack.c.l.b16 %v58
  %v132 = vunpack.c.l.b16 %v59
  %v133 = vunpack.c.l.b16 %v60
  %v134 = vunpack.c.l.b16 %v61
  %v135 = vpack.c.b16 %v128, %v127
  %v136 = vpack.c.b16 %v130, %v129
  %v137 = vpack.c.b16 %v132, %v131
  %v138 = vpack.c.b16 %v134, %v133
  %vm143 = vcmask 523264
  %v145 = vsel %vm143, %v118, 0
  %147 = vmatpush.bf16.msra.mxu0 0
  %148 = vmatpush.bf16.msra.mxu0 0
  %149 = vmatpush.bf16.msra.mxu0 0
  %150 = vmatpush.bf16.msra.mxu0 0
  %151 = vmatpush.bf16.msra.mxu0 %v138
  %152 = vmatpush.bf16.msra.mxu0 %v137
  %153 = vmatpush.bf16.msra.mxu0 %v136
  %154 = vmatpush.bf16.msra.mxu0 %v135
  %155 = vmatmul.bf16.gmra.mxu0 %v145
  %v156 = vpop.f32.mrf.mxu0
  %v157 = vadd.f32 %v112, %v156
  %v158 = vpop.f32.mrf.mxu0
  %v159 = vadd.f32 %v112, %v158
  %160 = vdwg.mxu0
  %v161 = vmax.f32 %v157, 0.0
  %v162 = vmax.f32 %v159, 0.0
  %v163 = vlaneseq
  %v164 = vshrl.u32 %v163, 7
  %v165 = vadd.s32 %v164, 8
  %vm166 = vcmp.lt.s32.totalorder %v164, 0
  %v167 = vsub.s32 0, %v164
  %v168 = vsel %vm166, %v167, %v164
  %v169 = vshrl.u32 %v168, 2
  %v170 = vand.u32 %v168, 3
  %v171 = vsub.s32 0, %v170
  %v172 = vsel %vm166, %v171, %v170
  %vm173 = vcmp.lt.s32.totalorder %v165, 0
  %v174 = vsub.s32 0, %v165
  %v175 = vsel %vm173, %v174, %v165
  %v176 = vshrl.u32 %v175, 2
  %v177 = vand.u32 %v175, 3
  %v178 = vsub.s32 0, %v177
  %v179 = vsel %vm173, %v178, %v177
  %vm180 = vcmp.ne.s32.totalorder %v172, 0
  %vm181 = vcmp.ne.s32.totalorder %v179, 0
  %vm182 = vcmp.lt.s32.totalorder %v172, 0
  %vm183 = vcmp.lt.s32.totalorder %v179, 0
  %vm184 = vmand %vm182, %vm180
  %vm185 = vmand %vm183, %vm181
  %v186 = vadd.s32 %v172, 4
  %v187 = vadd.s32 %v179, 4
  %v188 = vsel %vm184, %v186, %v172
  %v189 = vsel %vm185, %v187, %v179
  %vm190 = vcmp.gt.s32.totalorder %v188, 0
  %vm191 = vcmp.gt.s32.totalorder %v189, 0
  %v192 = vsel %vm190, 1, 0
  %v193 = vsel %vm191, 1, 0
  %v194 = vcvt.s32.f32 %v192
  %v195 = vcvt.s32.f32 %v193
  %vm196 = vcmp.lt.s32.totalorder %v188, 3
  %vm197 = vcmp.lt.s32.totalorder %v189, 3
  %v198 = vsel %vm196, 1, 0
  %v199 = vsel %vm197, 1, 0
  %v200 = vcvt.s32.f32 %v198
  %v201 = vcvt.s32.f32 %v199
  %vm204 = vcmask 1044480
  %v205 = vrot.slane %v161, 3
  %v206 = vrot.slane %v162, 3
  %v207 = vsel %vm204, %v205, %v206
  %v211 = vsel %vm204, 0.0, %v205
  %v212 = vsel %vm204, %v206, 0.0
  %v213 = vmul.f32 %v211, %v194
  %v214 = vmul.f32 %v207, %v195
  %v215 = vpack.c.bf16 %v214, %v213
  %v216 = vpack.c.bf16 %v207, %v211
  %v217 = vpack.c.bf16 %v212, %v212
  %vm218 = vsmask.f32 7424
  %v220 = vshrl.u32 %v216, 16
  %v222 = vshll.u32 %v216, 16
  %v224 = vrot.slane %v222, 1
  %v225 = vor.u32 %v220, %v224
  %v227 = vshll.u32 %v217, 16
  %v229 = vrot.slane %v227, 1
  %v230 = vsel %vm218, %v225, %v229
  %v235 = vunpack.c.l.b16 %v67
  %v236 = vunpack.c.l.b16 %v68
  %v237 = vunpack.c.l.b16 %v69
  %v238 = vunpack.c.l.b16 %v70
  %v239 = vpack.c.b16 %v236, %v235
  %v240 = vpack.c.b16 %v238, %v237
  %vm243 = vcmask 261120
  %v245 = vsel %vm243, %v230, 0
  %247 = vmatpush.bf16.msra.mxu0 0
  %248 = vmatpush.bf16.msra.mxu0 0
  %249 = vmatpush.bf16.msra.mxu0 0
  %250 = vmatpush.bf16.msra.mxu0 0
  %251 = vmatpush.bf16.msra.mxu0 0
  %252 = vmatpush.bf16.msra.mxu0 0
  %253 = vmatpush.bf16.msra.mxu0 %v240
  %254 = vmatpush.bf16.msra.mxu0 %v239
  %255 = vmatmul.bf16.gmra.mxu0 %v245
  %v256 = vpop.f32.mrf.mxu0
  %v257 = vadd.f32 0.0, %v256
  %v258 = vpop.f32.mrf.mxu0
  %v259 = vadd.f32 0.0, %v258
  %260 = vdwg.mxu0
  %v265 = vunpack.c.l.b16 %v63
  %v266 = vunpack.c.l.b16 %v64
  %v267 = vunpack.c.l.b16 %v65
  %v268 = vunpack.c.l.b16 %v66
  %v269 = vpack.c.b16 %v266, %v265
  %v270 = vpack.c.b16 %v268, %v267
  %v274 = vsel %vm243, %v215, 0
  %276 = vmatpush.bf16.msra.mxu0 0
  %277 = vmatpush.bf16.msra.mxu0 0
  %278 = vmatpush.bf16.msra.mxu0 0
  %279 = vmatpush.bf16.msra.mxu0 0
  %280 = vmatpush.bf16.msra.mxu0 0
  %281 = vmatpush.bf16.msra.mxu0 0
  %282 = vmatpush.bf16.msra.mxu0 %v270
  %283 = vmatpush.bf16.msra.mxu0 %v269
  %284 = vmatmul.bf16.gmra.mxu0 %v274
  %v285 = vpop.f32.mrf.mxu0
  %v286 = vadd.f32 %v257, %v285
  %v287 = vpop.f32.mrf.mxu0
  %v288 = vadd.f32 %v259, %v287
  %289 = vdwg.mxu0
  %vm292 = vcmask 1041408
  %v293 = vrot.slane %v200, 6
  %v294 = vrot.slane %v201, 6
  %v295 = vsel %vm292, %v293, %v294
  %v299 = vmul.f32 %v211, %v293
  %v300 = vmul.f32 %v207, %v295
  %v301 = vmul.f32 %v212, %v294
  %v302 = vpack.c.bf16 %v300, %v299
  %v303 = vpack.c.bf16 %v301, %v301
  %vm306 = vcmask 1046528
  %v307 = vrot.slane %v302, 1
  %v308 = vrot.slane %v303, 1
  %v309 = vsel %vm306, %v307, %v308
  %v314 = vunpack.c.l.b16 %v71
  %v315 = vunpack.c.l.b16 %v72
  %v316 = vunpack.c.l.b16 %v73
  %v317 = vunpack.c.l.b16 %v74
  %v318 = vpack.c.b16 %v315, %v314
  %v319 = vpack.c.b16 %v317, %v316
  %v323 = vsel %vm243, %v309, 0
  %325 = vmatpush.bf16.msra.mxu0 0
  %326 = vmatpush.bf16.msra.mxu0 0
  %327 = vmatpush.bf16.msra.mxu0 0
  %328 = vmatpush.bf16.msra.mxu0 0
  %329 = vmatpush.bf16.msra.mxu0 0
  %330 = vmatpush.bf16.msra.mxu0 0
  %331 = vmatpush.bf16.msra.mxu0 %v319
  %332 = vmatpush.bf16.msra.mxu0 %v318
  %333 = vmatmul.bf16.gmra.mxu0 %v323
  %v334 = vpop.f32.mrf.mxu0
  %v335 = vadd.f32 0.0, %v334
  %v336 = vpop.f32.mrf.mxu0
  %v337 = vadd.f32 0.0, %v336
  %338 = vdwg.mxu0
  %v339 = vadd.f32 %v286, %v335
  %v340 = vadd.f32 %v288, %v337
  %vm343 = vcmask 1043456
  %v344 = vrot.slane %v194, 4
  %v345 = vrot.slane %v195, 4
  %v346 = vsel %vm343, %v344, %v345
  %v350 = vmul.f32 %v211, %v344
  %v351 = vmul.f32 %v207, %v346
  %v352 = vmul.f32 %v212, %v345
  %v353 = vpack.c.bf16 %v351, %v350
  %v354 = vpack.c.bf16 %v352, %v352
  %vm357 = vcmask 1045504
  %v358 = vrot.slane %v353, 2
  %v359 = vrot.slane %v354, 2
  %v360 = vsel %vm357, %v358, %v359
  %v365 = vunpack.c.l.b16 %v75
  %v366 = vunpack.c.l.b16 %v76
  %v367 = vunpack.c.l.b16 %v77
  %v368 = vunpack.c.l.b16 %v78
  %v369 = vpack.c.b16 %v366, %v365
  %v370 = vpack.c.b16 %v368, %v367
  %v374 = vsel %vm243, %v360, 0
  %376 = vmatpush.bf16.msra.mxu0 0
  %377 = vmatpush.bf16.msra.mxu0 0
  %378 = vmatpush.bf16.msra.mxu0 0
  %379 = vmatpush.bf16.msra.mxu0 0
  %380 = vmatpush.bf16.msra.mxu0 0
  %381 = vmatpush.bf16.msra.mxu0 0
  %382 = vmatpush.bf16.msra.mxu0 %v370
  %383 = vmatpush.bf16.msra.mxu0 %v369
  %384 = vmatmul.bf16.gmra.mxu0 %v374
  %v385 = vpop.f32.mrf.mxu0
  %v386 = vadd.f32 0.0, %v385
  %v387 = vpop.f32.mrf.mxu0
  %v388 = vadd.f32 0.0, %v387
  %389 = vdwg.mxu0
  %v390 = vadd.f32 %v339, %v386
  %v391 = vadd.f32 %v340, %v388
  %vm392 = vsmask.f32 5376
  %v393 = vrot.slane %v220, 2
  %v394 = vrot.slane %v222, 3
  %v395 = vor.u32 %v393, %v394
  %v396 = vshrl.u32 %v217, 16
  %v398 = vrot.slane %v396, 2
  %v399 = vrot.slane %v227, 3
  %v400 = vor.u32 %v398, %v399
  %v401 = vsel %vm392, %v395, %v400
  %v406 = vunpack.c.l.b16 %v79
  %v407 = vunpack.c.l.b16 %v80
  %v408 = vunpack.c.l.b16 %v81
  %v409 = vunpack.c.l.b16 %v82
  %v410 = vpack.c.b16 %v407, %v406
  %v411 = vpack.c.b16 %v409, %v408
  %v415 = vsel %vm243, %v401, 0
  %417 = vmatpush.bf16.msra.mxu0 0
  %418 = vmatpush.bf16.msra.mxu0 0
  %419 = vmatpush.bf16.msra.mxu0 0
  %420 = vmatpush.bf16.msra.mxu0 0
  %421 = vmatpush.bf16.msra.mxu0 0
  %422 = vmatpush.bf16.msra.mxu0 0
  %423 = vmatpush.bf16.msra.mxu0 %v411
  %424 = vmatpush.bf16.msra.mxu0 %v410
  %425 = vmatmul.bf16.gmra.mxu0 %v415
  %v426 = vpop.f32.mrf.mxu0
  %v427 = vadd.f32 0.0, %v426
  %v428 = vpop.f32.mrf.mxu0
  %v429 = vadd.f32 0.0, %v428
  %430 = vdwg.mxu0
  %v431 = vadd.f32 %v390, %v427
  %v432 = vadd.f32 %v391, %v429
  %vm433 = vcmask 1045504
  %v434 = vrot.slane %v200, 2
  %v435 = vrot.slane %v201, 2
  %v436 = vsel %vm433, %v434, %v435
  %v440 = vmul.f32 %v211, %v434
  %v441 = vmul.f32 %v207, %v436
  %v442 = vmul.f32 %v212, %v435
  %v443 = vpack.c.bf16 %v441, %v440
  %v444 = vpack.c.bf16 %v442, %v442
  %vm447 = vcmask 1044480
  %v448 = vrot.slane %v443, 3
  %v449 = vrot.slane %v444, 3
  %v450 = vsel %vm447, %v448, %v449
  %v455 = vunpack.c.l.b16 %v83
  %v456 = vunpack.c.l.b16 %v84
  %v457 = vunpack.c.l.b16 %v85
  %v458 = vunpack.c.l.b16 %v86
  %v459 = vpack.c.b16 %v456, %v455
  %v460 = vpack.c.b16 %v458, %v457
  %v464 = vsel %vm243, %v450, 0
  %466 = vmatpush.bf16.msra.mxu0 0
  %467 = vmatpush.bf16.msra.mxu0 0
  %468 = vmatpush.bf16.msra.mxu0 0
  %469 = vmatpush.bf16.msra.mxu0 0
  %470 = vmatpush.bf16.msra.mxu0 0
  %471 = vmatpush.bf16.msra.mxu0 0
  %472 = vmatpush.bf16.msra.mxu0 %v460
  %473 = vmatpush.bf16.msra.mxu0 %v459
  %474 = vmatmul.bf16.gmra.mxu0 %v464
  %v475 = vpop.f32.mrf.mxu0
  %v476 = vadd.f32 0.0, %v475
  %v477 = vpop.f32.mrf.mxu0
  %v478 = vadd.f32 0.0, %v477
  %479 = vdwg.mxu0
  %v480 = vadd.f32 %v431, %v476
  %v481 = vadd.f32 %v432, %v478
  %v482 = vmul.f32 %v207, %v194
  %v483 = vmul.f32 %v212, %v195
  %v484 = vpack.c.bf16 %v483, %v482
  %v489 = vunpack.c.l.b16 %v87
  %v490 = vunpack.c.l.b16 %v88
  %v491 = vunpack.c.l.b16 %v89
  %v492 = vunpack.c.l.b16 %v90
  %v493 = vpack.c.b16 %v490, %v489
  %v494 = vpack.c.b16 %v492, %v491
  %v498 = vsel %vm243, %v484, 0
  %500 = vmatpush.bf16.msra.mxu0 0
  %501 = vmatpush.bf16.msra.mxu0 0
  %502 = vmatpush.bf16.msra.mxu0 0
  %503 = vmatpush.bf16.msra.mxu0 0
  %504 = vmatpush.bf16.msra.mxu0 0
  %505 = vmatpush.bf16.msra.mxu0 0
  %506 = vmatpush.bf16.msra.mxu0 %v494
  %507 = vmatpush.bf16.msra.mxu0 %v493
  %508 = vmatmul.bf16.gmra.mxu0 %v498
  %v509 = vpop.f32.mrf.mxu0
  %v510 = vadd.f32 0.0, %v509
  %v511 = vpop.f32.mrf.mxu0
  %v512 = vadd.f32 0.0, %v511
  %513 = vdwg.mxu0
  %v514 = vadd.f32 %v480, %v510
  %v515 = vadd.f32 %v481, %v512
  %v516 = vpack.c.bf16 %v212, %v207
  %v517 = vpack.c.bf16 0.0, 0.0
  %v519 = vshrl.u32 %v516, 16
  %v521 = vshll.u32 %v516, 16
  %v523 = vrot.slane %v521, 1
  %v524 = vor.u32 %v519, %v523
  %v526 = vshll.u32 %v517, 16
  %v528 = vrot.slane %v526, 1
  %v529 = vsel %vm218, %v524, %v528
  %v534 = vunpack.c.l.b16 %v91
  %v535 = vunpack.c.l.b16 %v92
  %v536 = vunpack.c.l.b16 %v93
  %v537 = vunpack.c.l.b16 %v94
  %v538 = vpack.c.b16 %v535, %v534
  %v539 = vpack.c.b16 %v537, %v536
  %v543 = vsel %vm243, %v529, 0
  %545 = vmatpush.bf16.msra.mxu0 0
  %546 = vmatpush.bf16.msra.mxu0 0
  %547 = vmatpush.bf16.msra.mxu0 0
  %548 = vmatpush.bf16.msra.mxu0 0
  %549 = vmatpush.bf16.msra.mxu0 0
  %550 = vmatpush.bf16.msra.mxu0 0
  %551 = vmatpush.bf16.msra.mxu0 %v539
  %552 = vmatpush.bf16.msra.mxu0 %v538
  %553 = vmatmul.bf16.gmra.mxu0 %v543
  %v554 = vpop.f32.mrf.mxu0
  %v555 = vadd.f32 0.0, %v554
  %v556 = vpop.f32.mrf.mxu0
  %v557 = vadd.f32 0.0, %v556
  %558 = vdwg.mxu0
  %v559 = vadd.f32 %v514, %v555
  %v560 = vadd.f32 %v515, %v557
  %v561 = vmul.f32 %v207, %v293
  %v562 = vmul.f32 %v212, %v295
  %v563 = vmul.f32 %v294, 0.0
  %v564 = vpack.c.bf16 %v562, %v561
  %v565 = vpack.c.bf16 %v563, %v563
  %v568 = vrot.slane %v564, 1
  %v569 = vrot.slane %v565, 1
  %v570 = vsel %vm306, %v568, %v569
  %v575 = vunpack.c.l.b16 %v95
  %v576 = vunpack.c.l.b16 %v96
  %v577 = vunpack.c.l.b16 %v97
  %v578 = vunpack.c.l.b16 %v98
  %v579 = vpack.c.b16 %v576, %v575
  %v580 = vpack.c.b16 %v578, %v577
  %v584 = vsel %vm243, %v570, 0
  %586 = vmatpush.bf16.msra.mxu0 0
  %587 = vmatpush.bf16.msra.mxu0 0
  %588 = vmatpush.bf16.msra.mxu0 0
  %589 = vmatpush.bf16.msra.mxu0 0
  %590 = vmatpush.bf16.msra.mxu0 0
  %591 = vmatpush.bf16.msra.mxu0 0
  %592 = vmatpush.bf16.msra.mxu0 %v580
  %593 = vmatpush.bf16.msra.mxu0 %v579
  %594 = vmatmul.bf16.gmra.mxu0 %v584
  %v595 = vpop.f32.mrf.mxu0
  %v596 = vadd.f32 0.0, %v595
  %v597 = vpop.f32.mrf.mxu0
  %v598 = vadd.f32 0.0, %v597
  %599 = vdwg.mxu0
  %v600 = vadd.f32 %v559, %v596
  %v601 = vadd.f32 %v560, %v598
  %v603 = vperm.slane %v99, 0
  %v605 = vadd.f32 %v600, %v603
  %v606 = vadd.f32 %v601, %v603
  %v607 = vmax.f32 %v605, 0.0
  %v608 = vmax.f32 %v606, 0.0
  %v609 = vpack.c.bf16 %v608, %v607
  %v611 = vperm.slane %v110, 0
  %v621 = vunpack.c.l.b16 %v102
  %v622 = vunpack.c.l.b16 %v103
  %v623 = vunpack.c.l.b16 %v104
  %v624 = vunpack.c.l.b16 %v105
  %v625 = vunpack.c.l.b16 %v106
  %v626 = vunpack.c.l.b16 %v107
  %v627 = vunpack.c.l.b16 %v108
  %v628 = vunpack.c.l.b16 %v109
  %v629 = vpack.c.b16 %v622, %v621
  %v630 = vpack.c.b16 %v624, %v623
  %v631 = vpack.c.b16 %v626, %v625
  %v632 = vpack.c.b16 %v628, %v627
  %v638 = vsel %vm143, %v609, 0
  %640 = vmatpush.bf16.msra.mxu0 0
  %641 = vmatpush.bf16.msra.mxu0 0
  %642 = vmatpush.bf16.msra.mxu0 0
  %643 = vmatpush.bf16.msra.mxu0 0
  %644 = vmatpush.bf16.msra.mxu0 %v632
  %645 = vmatpush.bf16.msra.mxu0 %v631
  %646 = vmatpush.bf16.msra.mxu0 %v630
  %647 = vmatpush.bf16.msra.mxu0 %v629
  %648 = vmatmul.bf16.gmra.mxu0 %v638
  %v649 = vpop.f32.mrf.mxu0
  %v650 = vadd.f32 %v611, %v649
  %v651 = vpop.f32.mrf.mxu0
  %v652 = vadd.f32 %v611, %v651
  %653 = vdwg.mxu0
  %v654 = vld [vmem:[%s1] sm:$0xf]
  %v655 = vld [vmem:[%s1 + $0x4] sm:$0xf]
  %v656 = vld [vmem:[%s1 + $0x8] sm:$0xf]
  %v657 = vld [vmem:[%s1 + $0xc] sm:$0xf]
  %v658 = vld [vmem:[%s1 + $0x10] sm:$0xf]
  %v659 = vld [vmem:[%s1 + $0x14] sm:$0xf]
  %v660 = vld [vmem:[%s1 + $0x18] sm:$0xf]
  %v661 = vld [vmem:[%s1 + $0x1c] sm:$0xf]
  %v662 = vld [vmem:[%s1 + $0x20] sm:$0xf]
  %v663 = vld [vmem:[%s1 + $0x24] sm:$0xf]
  %v664 = vld [vmem:[%s1 + $0x28] sm:$0xf]
  %v665 = vld [vmem:[%s1 + $0x2c] sm:$0xf]
  %v666 = vld [vmem:[%s1 + $0x30] sm:$0xf]
  %v667 = vld [vmem:[%s1 + $0x34] sm:$0xf]
  %v668 = vld [vmem:[%s1 + $0x38] sm:$0xf]
  %v669 = vld [vmem:[%s1 + $0x3c] sm:$0xf]
  %v670 = vld [vmem:[%s1 + $0x40] sm:$0xf]
  %v671 = vld [vmem:[%s1 + $0x44] sm:$0xf]
  %v672 = vld [vmem:[%s1 + $0x48] sm:$0xf]
  %v673 = vld [vmem:[%s1 + $0x4c] sm:$0xf]
  %v674 = vld [vmem:[%s1 + $0x50] sm:$0xf]
  %v675 = vld [vmem:[%s1 + $0x54] sm:$0xf]
  %v676 = vld [vmem:[%s1 + $0x58] sm:$0xf]
  %v677 = vld [vmem:[%s1 + $0x5c] sm:$0xf]
  %v678 = vld [vmem:[%s1 + $0x60] sm:$0xf]
  %v679 = vld [vmem:[%s1 + $0x64] sm:$0xf]
  %v680 = vld [vmem:[%s1 + $0x68] sm:$0xf]
  %v681 = vld [vmem:[%s1 + $0x6c] sm:$0xf]
  %v682 = vld [vmem:[%s1 + $0x70] sm:$0xf]
  %v683 = vld [vmem:[%s1 + $0x74] sm:$0xf]
  %v684 = vld [vmem:[%s1 + $0x78] sm:$0xf]
  %v685 = vld [vmem:[%s1 + $0x7c] sm:$0xf]
  %v686 = vld [vmem:[%s8] sm:$0xf]
  %v687 = vld [vmem:[%s8 + $0x4] sm:$0xf]
  %v688 = vld [vmem:[%s8 + $0x8] sm:$0xf]
  %v689 = vld [vmem:[%s8 + $0xc] sm:$0xf]
  %v690 = vld [vmem:[%s8 + $0x10] sm:$0xf]
  %v691 = vld [vmem:[%s8 + $0x14] sm:$0xf]
  %v692 = vld [vmem:[%s8 + $0x18] sm:$0xf]
  %v693 = vld [vmem:[%s8 + $0x1c] sm:$0xf]
  %v694 = vld [vmem:[%s9] sm:$0x1]
  %v727 = vunpack.c.l.b16 %v654
  %v728 = vunpack.c.l.b16 %v655
  %v729 = vunpack.c.l.b16 %v656
  %v730 = vunpack.c.l.b16 %v657
  %v731 = vunpack.c.l.b16 %v658
  %v732 = vunpack.c.l.b16 %v659
  %v733 = vunpack.c.l.b16 %v660
  %v734 = vunpack.c.l.b16 %v661
  %v735 = vunpack.c.l.b16 %v662
  %v736 = vunpack.c.l.b16 %v663
  %v737 = vunpack.c.l.b16 %v664
  %v738 = vunpack.c.l.b16 %v665
  %v739 = vunpack.c.l.b16 %v666
  %v740 = vunpack.c.l.b16 %v667
  %v741 = vunpack.c.l.b16 %v668
  %v742 = vunpack.c.l.b16 %v669
  %v743 = vunpack.c.l.b16 %v670
  %v744 = vunpack.c.l.b16 %v671
  %v745 = vunpack.c.l.b16 %v672
  %v746 = vunpack.c.l.b16 %v673
  %v747 = vunpack.c.l.b16 %v674
  %v748 = vunpack.c.l.b16 %v675
  %v749 = vunpack.c.l.b16 %v676
  %v750 = vunpack.c.l.b16 %v677
  %v751 = vunpack.c.l.b16 %v678
  %v752 = vunpack.c.l.b16 %v679
  %v753 = vunpack.c.l.b16 %v680
  %v754 = vunpack.c.l.b16 %v681
  %v755 = vunpack.c.l.b16 %v682
  %v756 = vunpack.c.l.b16 %v683
  %v757 = vunpack.c.l.b16 %v684
  %v758 = vunpack.c.l.b16 %v685
  %v759 = vpack.c.b16 %v728, %v727
  %v760 = vpack.c.b16 %v730, %v729
  %v761 = vpack.c.b16 %v732, %v731
  %v762 = vpack.c.b16 %v734, %v733
  %v763 = vpack.c.b16 %v736, %v735
  %v764 = vpack.c.b16 %v738, %v737
  %v765 = vpack.c.b16 %v740, %v739
  %v766 = vpack.c.b16 %v742, %v741
  %v767 = vpack.c.b16 %v744, %v743
  %v768 = vpack.c.b16 %v746, %v745
  %v769 = vpack.c.b16 %v748, %v747
  %v770 = vpack.c.b16 %v750, %v749
  %v771 = vpack.c.b16 %v752, %v751
  %v772 = vpack.c.b16 %v754, %v753
  %v773 = vpack.c.b16 %v756, %v755
  %v774 = vpack.c.b16 %v758, %v757
  %v776 = vsel %vm143, %v759, 0
  %v779 = vsel %vm143, %v760, 0
  %v782 = vsel %vm143, %v761, 0
  %v785 = vsel %vm143, %v762, 0
  %v788 = vsel %vm143, %v763, 0
  %v791 = vsel %vm143, %v764, 0
  %v794 = vsel %vm143, %v765, 0
  %v797 = vsel %vm143, %v766, 0
  %v800 = vsel %vm143, %v767, 0
  %v803 = vsel %vm143, %v768, 0
  %v806 = vsel %vm143, %v769, 0
  %v809 = vsel %vm143, %v770, 0
  %v812 = vsel %vm143, %v771, 0
  %v815 = vsel %vm143, %v772, 0
  %v818 = vsel %vm143, %v773, 0
  %v821 = vsel %vm143, %v774, 0
  %823 = vmatpush.bf16.msra.mxu0 0
  %824 = vmatpush.bf16.msra.mxu0 0
  %825 = vmatpush.bf16.msra.mxu0 0
  %826 = vmatpush.bf16.msra.mxu0 0
  %827 = vmatpush.bf16.msra.mxu0 %v138
  %828 = vmatpush.bf16.msra.mxu0 %v137
  %829 = vmatpush.bf16.msra.mxu0 %v136
  %830 = vmatpush.bf16.msra.mxu0 %v135
  %831 = vmatmul.bf16.gmra.mxu0 %v776
  %v832 = vpop.f32.mrf.mxu0
  %v833 = vadd.f32 %v112, %v832
  %v834 = vpop.f32.mrf.mxu0
  %v835 = vadd.f32 %v112, %v834
  %836 = vmatmul.bf16.gmra.mxu0 %v779
  %v837 = vpop.f32.mrf.mxu0
  %v838 = vadd.f32 %v112, %v837
  %v839 = vpop.f32.mrf.mxu0
  %v840 = vadd.f32 %v112, %v839
  %841 = vmatmul.bf16.gmra.mxu0 %v782
  %v842 = vpop.f32.mrf.mxu0
  %v843 = vadd.f32 %v112, %v842
  %v844 = vpop.f32.mrf.mxu0
  %v845 = vadd.f32 %v112, %v844
  %846 = vmatmul.bf16.gmra.mxu0 %v785
  %v847 = vpop.f32.mrf.mxu0
  %v848 = vadd.f32 %v112, %v847
  %v849 = vpop.f32.mrf.mxu0
  %v850 = vadd.f32 %v112, %v849
  %851 = vmatmul.bf16.gmra.mxu0 %v788
  %v852 = vpop.f32.mrf.mxu0
  %v853 = vadd.f32 %v112, %v852
  %v854 = vpop.f32.mrf.mxu0
  %v855 = vadd.f32 %v112, %v854
  %856 = vmatmul.bf16.gmra.mxu0 %v791
  %v857 = vpop.f32.mrf.mxu0
  %v858 = vadd.f32 %v112, %v857
  %v859 = vpop.f32.mrf.mxu0
  %v860 = vadd.f32 %v112, %v859
  %861 = vmatmul.bf16.gmra.mxu0 %v794
  %v862 = vpop.f32.mrf.mxu0
  %v863 = vadd.f32 %v112, %v862
  %v864 = vpop.f32.mrf.mxu0
  %v865 = vadd.f32 %v112, %v864
  %866 = vmatmul.bf16.gmra.mxu0 %v797
  %v867 = vpop.f32.mrf.mxu0
  %v868 = vadd.f32 %v112, %v867
  %v869 = vpop.f32.mrf.mxu0
  %v870 = vadd.f32 %v112, %v869
  %871 = vmatmul.bf16.gmra.mxu0 %v800
  %v872 = vpop.f32.mrf.mxu0
  %v873 = vadd.f32 %v112, %v872
  %v874 = vpop.f32.mrf.mxu0
  %v875 = vadd.f32 %v112, %v874
  %876 = vmatmul.bf16.gmra.mxu0 %v803
  %v877 = vpop.f32.mrf.mxu0
  %v878 = vadd.f32 %v112, %v877
  %v879 = vpop.f32.mrf.mxu0
  %v880 = vadd.f32 %v112, %v879
  %881 = vmatmul.bf16.gmra.mxu0 %v806
  %v882 = vpop.f32.mrf.mxu0
  %v883 = vadd.f32 %v112, %v882
  %v884 = vpop.f32.mrf.mxu0
  %v885 = vadd.f32 %v112, %v884
  %886 = vmatmul.bf16.gmra.mxu0 %v809
  %v887 = vpop.f32.mrf.mxu0
  %v888 = vadd.f32 %v112, %v887
  %v889 = vpop.f32.mrf.mxu0
  %v890 = vadd.f32 %v112, %v889
  %891 = vmatmul.bf16.gmra.mxu0 %v812
  %v892 = vpop.f32.mrf.mxu0
  %v893 = vadd.f32 %v112, %v892
  %v894 = vpop.f32.mrf.mxu0
  %v895 = vadd.f32 %v112, %v894
  %896 = vmatmul.bf16.gmra.mxu0 %v815
  %v897 = vpop.f32.mrf.mxu0
  %v898 = vadd.f32 %v112, %v897
  %v899 = vpop.f32.mrf.mxu0
  %v900 = vadd.f32 %v112, %v899
  %901 = vmatmul.bf16.gmra.mxu0 %v818
  %v902 = vpop.f32.mrf.mxu0
  %v903 = vadd.f32 %v112, %v902
  %v904 = vpop.f32.mrf.mxu0
  %v905 = vadd.f32 %v112, %v904
  %906 = vmatmul.bf16.gmra.mxu0 %v821
  %v907 = vpop.f32.mrf.mxu0
  %v908 = vadd.f32 %v112, %v907
  %v909 = vpop.f32.mrf.mxu0
  %v910 = vadd.f32 %v112, %v909
  %911 = vdwg.mxu0
  %v912 = vmax.f32 %v833, 0.0
  %v913 = vmax.f32 %v835, 0.0
  %v914 = vmax.f32 %v838, 0.0
  %v915 = vmax.f32 %v840, 0.0
  %v916 = vmax.f32 %v843, 0.0
  %v917 = vmax.f32 %v845, 0.0
  %v918 = vmax.f32 %v848, 0.0
  %v919 = vmax.f32 %v850, 0.0
  %v920 = vmax.f32 %v853, 0.0
  %v921 = vmax.f32 %v855, 0.0
  %v922 = vmax.f32 %v858, 0.0
  %v923 = vmax.f32 %v860, 0.0
  %v924 = vmax.f32 %v863, 0.0
  %v925 = vmax.f32 %v865, 0.0
  %v926 = vmax.f32 %v868, 0.0
  %v927 = vmax.f32 %v870, 0.0
  %v928 = vmax.f32 %v873, 0.0
  %v929 = vmax.f32 %v875, 0.0
  %v930 = vmax.f32 %v878, 0.0
  %v931 = vmax.f32 %v880, 0.0
  %v932 = vmax.f32 %v883, 0.0
  %v933 = vmax.f32 %v885, 0.0
  %v934 = vmax.f32 %v888, 0.0
  %v935 = vmax.f32 %v890, 0.0
  %v936 = vmax.f32 %v893, 0.0
  %v937 = vmax.f32 %v895, 0.0
  %v938 = vmax.f32 %v898, 0.0
  %v939 = vmax.f32 %v900, 0.0
  %v940 = vmax.f32 %v903, 0.0
  %v941 = vmax.f32 %v905, 0.0
  %v942 = vmax.f32 %v908, 0.0
  %v943 = vmax.f32 %v910, 0.0
  %v944 = vadd.s32 %v164, 16
  %v945 = vadd.s32 %v164, 24
  %v946 = vadd.s32 %v164, 32
  %v947 = vadd.s32 %v164, 40
  %v948 = vadd.s32 %v164, 48
  %v949 = vadd.s32 %v164, 56
  %v950 = vadd.s32 %v164, 64
  %v951 = vadd.s32 %v164, 72
  %v952 = vadd.s32 %v164, 80
  %v953 = vadd.s32 %v164, 88
  %v954 = vadd.s32 %v164, 96
  %v955 = vadd.s32 %v164, 104
  %v956 = vadd.s32 %v164, 112
  %v957 = vadd.s32 %v164, 120
  %v958 = vadd.s32 %v164, 128
  %v959 = vadd.s32 %v164, 136
  %v960 = vadd.s32 %v164, 144
  %v961 = vadd.s32 %v164, 152
  %v962 = vadd.s32 %v164, 160
  %v963 = vadd.s32 %v164, 168
  %v964 = vadd.s32 %v164, 176
  %v965 = vadd.s32 %v164, 184
  %v966 = vadd.s32 %v164, 192
  %v967 = vadd.s32 %v164, 200
  %v968 = vadd.s32 %v164, 208
  %v969 = vadd.s32 %v164, 216
  %v970 = vadd.s32 %v164, 224
  %v971 = vadd.s32 %v164, 232
  %v972 = vadd.s32 %v164, 240
  %v973 = vadd.s32 %v164, 248
  %vm974 = vcmp.lt.s32.totalorder %v164, 0
  %v975 = vsub.s32 0, %v164
  %v976 = vsel %vm974, %v975, %v164
  %v977 = vshrl.u32 %v976, 4
  %v978 = vand.u32 %v976, 15
  %v979 = vsub.s32 0, %v978
  %v980 = vsel %vm974, %v979, %v978
  %vm981 = vcmp.lt.s32.totalorder %v165, 0
  %v982 = vsub.s32 0, %v165
  %v983 = vsel %vm981, %v982, %v165
  %v984 = vshrl.u32 %v983, 4
  %v985 = vand.u32 %v983, 15
  %v986 = vsub.s32 0, %v985
  %v987 = vsel %vm981, %v986, %v985
  %vm988 = vcmp.lt.s32.totalorder %v944, 0
  %v989 = vsub.s32 0, %v944
  %v990 = vsel %vm988, %v989, %v944
  %v991 = vshrl.u32 %v990, 4
  %v992 = vand.u32 %v990, 15
  %v993 = vsub.s32 0, %v992
  %v994 = vsel %vm988, %v993, %v992
  %vm995 = vcmp.lt.s32.totalorder %v945, 0
  %v996 = vsub.s32 0, %v945
  %v997 = vsel %vm995, %v996, %v945
  %v998 = vshrl.u32 %v997, 4
  %v999 = vand.u32 %v997, 15
  %v1000 = vsub.s32 0, %v999
  %v1001 = vsel %vm995, %v1000, %v999
  %vm1002 = vcmp.lt.s32.totalorder %v946, 0
  %v1003 = vsub.s32 0, %v946
  %v1004 = vsel %vm1002, %v1003, %v946
  %v1005 = vshrl.u32 %v1004, 4
  %v1006 = vand.u32 %v1004, 15
  %v1007 = vsub.s32 0, %v1006
  %v1008 = vsel %vm1002, %v1007, %v1006
  %vm1009 = vcmp.lt.s32.totalorder %v947, 0
  %v1010 = vsub.s32 0, %v947
  %v1011 = vsel %vm1009, %v1010, %v947
  %v1012 = vshrl.u32 %v1011, 4
  %v1013 = vand.u32 %v1011, 15
  %v1014 = vsub.s32 0, %v1013
  %v1015 = vsel %vm1009, %v1014, %v1013
  %vm1016 = vcmp.lt.s32.totalorder %v948, 0
  %v1017 = vsub.s32 0, %v948
  %v1018 = vsel %vm1016, %v1017, %v948
  %v1019 = vshrl.u32 %v1018, 4
  %v1020 = vand.u32 %v1018, 15
  %v1021 = vsub.s32 0, %v1020
  %v1022 = vsel %vm1016, %v1021, %v1020
  %vm1023 = vcmp.lt.s32.totalorder %v949, 0
  %v1024 = vsub.s32 0, %v949
  %v1025 = vsel %vm1023, %v1024, %v949
  %v1026 = vshrl.u32 %v1025, 4
  %v1027 = vand.u32 %v1025, 15
  %v1028 = vsub.s32 0, %v1027
  %v1029 = vsel %vm1023, %v1028, %v1027
  %vm1030 = vcmp.lt.s32.totalorder %v950, 0
  %v1031 = vsub.s32 0, %v950
  %v1032 = vsel %vm1030, %v1031, %v950
  %v1033 = vshrl.u32 %v1032, 4
  %v1034 = vand.u32 %v1032, 15
  %v1035 = vsub.s32 0, %v1034
  %v1036 = vsel %vm1030, %v1035, %v1034
  %vm1037 = vcmp.lt.s32.totalorder %v951, 0
  %v1038 = vsub.s32 0, %v951
  %v1039 = vsel %vm1037, %v1038, %v951
  %v1040 = vshrl.u32 %v1039, 4
  %v1041 = vand.u32 %v1039, 15
  %v1042 = vsub.s32 0, %v1041
  %v1043 = vsel %vm1037, %v1042, %v1041
  %vm1044 = vcmp.lt.s32.totalorder %v952, 0
  %v1045 = vsub.s32 0, %v952
  %v1046 = vsel %vm1044, %v1045, %v952
  %v1047 = vshrl.u32 %v1046, 4
  %v1048 = vand.u32 %v1046, 15
  %v1049 = vsub.s32 0, %v1048
  %v1050 = vsel %vm1044, %v1049, %v1048
  %vm1051 = vcmp.lt.s32.totalorder %v953, 0
  %v1052 = vsub.s32 0, %v953
  %v1053 = vsel %vm1051, %v1052, %v953
  %v1054 = vshrl.u32 %v1053, 4
  %v1055 = vand.u32 %v1053, 15
  %v1056 = vsub.s32 0, %v1055
  %v1057 = vsel %vm1051, %v1056, %v1055
  %vm1058 = vcmp.lt.s32.totalorder %v954, 0
  %v1059 = vsub.s32 0, %v954
  %v1060 = vsel %vm1058, %v1059, %v954
  %v1061 = vshrl.u32 %v1060, 4
  %v1062 = vand.u32 %v1060, 15
  %v1063 = vsub.s32 0, %v1062
  %v1064 = vsel %vm1058, %v1063, %v1062
  %vm1065 = vcmp.lt.s32.totalorder %v955, 0
  %v1066 = vsub.s32 0, %v955
  %v1067 = vsel %vm1065, %v1066, %v955
  %v1068 = vshrl.u32 %v1067, 4
  %v1069 = vand.u32 %v1067, 15
  %v1070 = vsub.s32 0, %v1069
  %v1071 = vsel %vm1065, %v1070, %v1069
  %vm1072 = vcmp.lt.s32.totalorder %v956, 0
  %v1073 = vsub.s32 0, %v956
  %v1074 = vsel %vm1072, %v1073, %v956
  %v1075 = vshrl.u32 %v1074, 4
  %v1076 = vand.u32 %v1074, 15
  %v1077 = vsub.s32 0, %v1076
  %v1078 = vsel %vm1072, %v1077, %v1076
  %vm1079 = vcmp.lt.s32.totalorder %v957, 0
  %v1080 = vsub.s32 0, %v957
  %v1081 = vsel %vm1079, %v1080, %v957
  %v1082 = vshrl.u32 %v1081, 4
  %v1083 = vand.u32 %v1081, 15
  %v1084 = vsub.s32 0, %v1083
  %v1085 = vsel %vm1079, %v1084, %v1083
  %vm1086 = vcmp.lt.s32.totalorder %v958, 0
  %v1087 = vsub.s32 0, %v958
  %v1088 = vsel %vm1086, %v1087, %v958
  %v1089 = vshrl.u32 %v1088, 4
  %v1090 = vand.u32 %v1088, 15
  %v1091 = vsub.s32 0, %v1090
  %v1092 = vsel %vm1086, %v1091, %v1090
  %vm1093 = vcmp.lt.s32.totalorder %v959, 0
  %v1094 = vsub.s32 0, %v959
  %v1095 = vsel %vm1093, %v1094, %v959
  %v1096 = vshrl.u32 %v1095, 4
  %v1097 = vand.u32 %v1095, 15
  %v1098 = vsub.s32 0, %v1097
  %v1099 = vsel %vm1093, %v1098, %v1097
  %vm1100 = vcmp.lt.s32.totalorder %v960, 0
  %v1101 = vsub.s32 0, %v960
  %v1102 = vsel %vm1100, %v1101, %v960
  %v1103 = vshrl.u32 %v1102, 4
  %v1104 = vand.u32 %v1102, 15
  %v1105 = vsub.s32 0, %v1104
  %v1106 = vsel %vm1100, %v1105, %v1104
  %vm1107 = vcmp.lt.s32.totalorder %v961, 0
  %v1108 = vsub.s32 0, %v961
  %v1109 = vsel %vm1107, %v1108, %v961
  %v1110 = vshrl.u32 %v1109, 4
  %v1111 = vand.u32 %v1109, 15
  %v1112 = vsub.s32 0, %v1111
  %v1113 = vsel %vm1107, %v1112, %v1111
  %vm1114 = vcmp.lt.s32.totalorder %v962, 0
  %v1115 = vsub.s32 0, %v962
  %v1116 = vsel %vm1114, %v1115, %v962
  %v1117 = vshrl.u32 %v1116, 4
  %v1118 = vand.u32 %v1116, 15
  %v1119 = vsub.s32 0, %v1118
  %v1120 = vsel %vm1114, %v1119, %v1118
  %vm1121 = vcmp.lt.s32.totalorder %v963, 0
  %v1122 = vsub.s32 0, %v963
  %v1123 = vsel %vm1121, %v1122, %v963
  %v1124 = vshrl.u32 %v1123, 4
  %v1125 = vand.u32 %v1123, 15
  %v1126 = vsub.s32 0, %v1125
  %v1127 = vsel %vm1121, %v1126, %v1125
  %vm1128 = vcmp.lt.s32.totalorder %v964, 0
  %v1129 = vsub.s32 0, %v964
  %v1130 = vsel %vm1128, %v1129, %v964
  %v1131 = vshrl.u32 %v1130, 4
  %v1132 = vand.u32 %v1130, 15
  %v1133 = vsub.s32 0, %v1132
  %v1134 = vsel %vm1128, %v1133, %v1132
  %vm1135 = vcmp.lt.s32.totalorder %v965, 0
  %v1136 = vsub.s32 0, %v965
  %v1137 = vsel %vm1135, %v1136, %v965
  %v1138 = vshrl.u32 %v1137, 4
  %v1139 = vand.u32 %v1137, 15
  %v1140 = vsub.s32 0, %v1139
  %v1141 = vsel %vm1135, %v1140, %v1139
  %vm1142 = vcmp.lt.s32.totalorder %v966, 0
  %v1143 = vsub.s32 0, %v966
  %v1144 = vsel %vm1142, %v1143, %v966
  %v1145 = vshrl.u32 %v1144, 4
  %v1146 = vand.u32 %v1144, 15
  %v1147 = vsub.s32 0, %v1146
  %v1148 = vsel %vm1142, %v1147, %v1146
  %vm1149 = vcmp.lt.s32.totalorder %v967, 0
  %v1150 = vsub.s32 0, %v967
  %v1151 = vsel %vm1149, %v1150, %v967
  %v1152 = vshrl.u32 %v1151, 4
  %v1153 = vand.u32 %v1151, 15
  %v1154 = vsub.s32 0, %v1153
  %v1155 = vsel %vm1149, %v1154, %v1153
  %vm1156 = vcmp.lt.s32.totalorder %v968, 0
  %v1157 = vsub.s32 0, %v968
  %v1158 = vsel %vm1156, %v1157, %v968
  %v1159 = vshrl.u32 %v1158, 4
  %v1160 = vand.u32 %v1158, 15
  %v1161 = vsub.s32 0, %v1160
  %v1162 = vsel %vm1156, %v1161, %v1160
  %vm1163 = vcmp.lt.s32.totalorder %v969, 0
  %v1164 = vsub.s32 0, %v969
  %v1165 = vsel %vm1163, %v1164, %v969
  %v1166 = vshrl.u32 %v1165, 4
  %v1167 = vand.u32 %v1165, 15
  %v1168 = vsub.s32 0, %v1167
  %v1169 = vsel %vm1163, %v1168, %v1167
  %vm1170 = vcmp.lt.s32.totalorder %v970, 0
  %v1171 = vsub.s32 0, %v970
  %v1172 = vsel %vm1170, %v1171, %v970
  %v1173 = vshrl.u32 %v1172, 4
  %v1174 = vand.u32 %v1172, 15
  %v1175 = vsub.s32 0, %v1174
  %v1176 = vsel %vm1170, %v1175, %v1174
  %vm1177 = vcmp.lt.s32.totalorder %v971, 0
  %v1178 = vsub.s32 0, %v971
  %v1179 = vsel %vm1177, %v1178, %v971
  %v1180 = vshrl.u32 %v1179, 4
  %v1181 = vand.u32 %v1179, 15
  %v1182 = vsub.s32 0, %v1181
  %v1183 = vsel %vm1177, %v1182, %v1181
  %vm1184 = vcmp.lt.s32.totalorder %v972, 0
  %v1185 = vsub.s32 0, %v972
  %v1186 = vsel %vm1184, %v1185, %v972
  %v1187 = vshrl.u32 %v1186, 4
  %v1188 = vand.u32 %v1186, 15
  %v1189 = vsub.s32 0, %v1188
  %v1190 = vsel %vm1184, %v1189, %v1188
  %vm1191 = vcmp.lt.s32.totalorder %v973, 0
  %v1192 = vsub.s32 0, %v973
  %v1193 = vsel %vm1191, %v1192, %v973
  %v1194 = vshrl.u32 %v1193, 4
  %v1195 = vand.u32 %v1193, 15
  %v1196 = vsub.s32 0, %v1195
  %v1197 = vsel %vm1191, %v1196, %v1195
  %vm1198 = vcmp.ne.s32.totalorder %v980, 0
  %vm1199 = vcmp.ne.s32.totalorder %v987, 0
  %vm1200 = vcmp.ne.s32.totalorder %v994, 0
  %vm1201 = vcmp.ne.s32.totalorder %v1001, 0
  %vm1202 = vcmp.ne.s32.totalorder %v1008, 0
  %vm1203 = vcmp.ne.s32.totalorder %v1015, 0
  %vm1204 = vcmp.ne.s32.totalorder %v1022, 0
  %vm1205 = vcmp.ne.s32.totalorder %v1029, 0
  %vm1206 = vcmp.ne.s32.totalorder %v1036, 0
  %vm1207 = vcmp.ne.s32.totalorder %v1043, 0
  %vm1208 = vcmp.ne.s32.totalorder %v1050, 0
  %vm1209 = vcmp.ne.s32.totalorder %v1057, 0
  %vm1210 = vcmp.ne.s32.totalorder %v1064, 0
  %vm1211 = vcmp.ne.s32.totalorder %v1071, 0
  %vm1212 = vcmp.ne.s32.totalorder %v1078, 0
  %vm1213 = vcmp.ne.s32.totalorder %v1085, 0
  %vm1214 = vcmp.ne.s32.totalorder %v1092, 0
  %vm1215 = vcmp.ne.s32.totalorder %v1099, 0
  %vm1216 = vcmp.ne.s32.totalorder %v1106, 0
  %vm1217 = vcmp.ne.s32.totalorder %v1113, 0
  %vm1218 = vcmp.ne.s32.totalorder %v1120, 0
  %vm1219 = vcmp.ne.s32.totalorder %v1127, 0
  %vm1220 = vcmp.ne.s32.totalorder %v1134, 0
  %vm1221 = vcmp.ne.s32.totalorder %v1141, 0
  %vm1222 = vcmp.ne.s32.totalorder %v1148, 0
  %vm1223 = vcmp.ne.s32.totalorder %v1155, 0
  %vm1224 = vcmp.ne.s32.totalorder %v1162, 0
  %vm1225 = vcmp.ne.s32.totalorder %v1169, 0
  %vm1226 = vcmp.ne.s32.totalorder %v1176, 0
  %vm1227 = vcmp.ne.s32.totalorder %v1183, 0
  %vm1228 = vcmp.ne.s32.totalorder %v1190, 0
  %vm1229 = vcmp.ne.s32.totalorder %v1197, 0
  %vm1230 = vcmp.lt.s32.totalorder %v980, 0
  %vm1231 = vcmp.lt.s32.totalorder %v987, 0
  %vm1232 = vcmp.lt.s32.totalorder %v994, 0
  %vm1233 = vcmp.lt.s32.totalorder %v1001, 0
  %vm1234 = vcmp.lt.s32.totalorder %v1008, 0
  %vm1235 = vcmp.lt.s32.totalorder %v1015, 0
  %vm1236 = vcmp.lt.s32.totalorder %v1022, 0
  %vm1237 = vcmp.lt.s32.totalorder %v1029, 0
  %vm1238 = vcmp.lt.s32.totalorder %v1036, 0
  %vm1239 = vcmp.lt.s32.totalorder %v1043, 0
  %vm1240 = vcmp.lt.s32.totalorder %v1050, 0
  %vm1241 = vcmp.lt.s32.totalorder %v1057, 0
  %vm1242 = vcmp.lt.s32.totalorder %v1064, 0
  %vm1243 = vcmp.lt.s32.totalorder %v1071, 0
  %vm1244 = vcmp.lt.s32.totalorder %v1078, 0
  %vm1245 = vcmp.lt.s32.totalorder %v1085, 0
  %vm1246 = vcmp.lt.s32.totalorder %v1092, 0
  %vm1247 = vcmp.lt.s32.totalorder %v1099, 0
  %vm1248 = vcmp.lt.s32.totalorder %v1106, 0
  %vm1249 = vcmp.lt.s32.totalorder %v1113, 0
  %vm1250 = vcmp.lt.s32.totalorder %v1120, 0
  %vm1251 = vcmp.lt.s32.totalorder %v1127, 0
  %vm1252 = vcmp.lt.s32.totalorder %v1134, 0
  %vm1253 = vcmp.lt.s32.totalorder %v1141, 0
  %vm1254 = vcmp.lt.s32.totalorder %v1148, 0
  %vm1255 = vcmp.lt.s32.totalorder %v1155, 0
  %vm1256 = vcmp.lt.s32.totalorder %v1162, 0
  %vm1257 = vcmp.lt.s32.totalorder %v1169, 0
  %vm1258 = vcmp.lt.s32.totalorder %v1176, 0
  %vm1259 = vcmp.lt.s32.totalorder %v1183, 0
  %vm1260 = vcmp.lt.s32.totalorder %v1190, 0
  %vm1261 = vcmp.lt.s32.totalorder %v1197, 0
  %vm1262 = vmand %vm1230, %vm1198
  %vm1263 = vmand %vm1231, %vm1199
  %vm1264 = vmand %vm1232, %vm1200
  %vm1265 = vmand %vm1233, %vm1201
  %vm1266 = vmand %vm1234, %vm1202
  %vm1267 = vmand %vm1235, %vm1203
  %vm1268 = vmand %vm1236, %vm1204
  %vm1269 = vmand %vm1237, %vm1205
  %vm1270 = vmand %vm1238, %vm1206
  %vm1271 = vmand %vm1239, %vm1207
  %vm1272 = vmand %vm1240, %vm1208
  %vm1273 = vmand %vm1241, %vm1209
  %vm1274 = vmand %vm1242, %vm1210
  %vm1275 = vmand %vm1243, %vm1211
  %vm1276 = vmand %vm1244, %vm1212
  %vm1277 = vmand %vm1245, %vm1213
  %vm1278 = vmand %vm1246, %vm1214
  %vm1279 = vmand %vm1247, %vm1215
  %vm1280 = vmand %vm1248, %vm1216
  %vm1281 = vmand %vm1249, %vm1217
  %vm1282 = vmand %vm1250, %vm1218
  %vm1283 = vmand %vm1251, %vm1219
  %vm1284 = vmand %vm1252, %vm1220
  %vm1285 = vmand %vm1253, %vm1221
  %vm1286 = vmand %vm1254, %vm1222
  %vm1287 = vmand %vm1255, %vm1223
  %vm1288 = vmand %vm1256, %vm1224
  %vm1289 = vmand %vm1257, %vm1225
  %vm1290 = vmand %vm1258, %vm1226
  %vm1291 = vmand %vm1259, %vm1227
  %vm1292 = vmand %vm1260, %vm1228
  %vm1293 = vmand %vm1261, %vm1229
  %v1294 = vadd.s32 %v980, 16
  %v1295 = vadd.s32 %v987, 16
  %v1296 = vadd.s32 %v994, 16
  %v1297 = vadd.s32 %v1001, 16
  %v1298 = vadd.s32 %v1008, 16
  %v1299 = vadd.s32 %v1015, 16
  %v1300 = vadd.s32 %v1022, 16
  %v1301 = vadd.s32 %v1029, 16
  %v1302 = vadd.s32 %v1036, 16
  %v1303 = vadd.s32 %v1043, 16
  %v1304 = vadd.s32 %v1050, 16
  %v1305 = vadd.s32 %v1057, 16
  %v1306 = vadd.s32 %v1064, 16
  %v1307 = vadd.s32 %v1071, 16
  %v1308 = vadd.s32 %v1078, 16
  %v1309 = vadd.s32 %v1085, 16
  %v1310 = vadd.s32 %v1092, 16
  %v1311 = vadd.s32 %v1099, 16
  %v1312 = vadd.s32 %v1106, 16
  %v1313 = vadd.s32 %v1113, 16
  %v1314 = vadd.s32 %v1120, 16
  %v1315 = vadd.s32 %v1127, 16
  %v1316 = vadd.s32 %v1134, 16
  %v1317 = vadd.s32 %v1141, 16
  %v1318 = vadd.s32 %v1148, 16
  %v1319 = vadd.s32 %v1155, 16
  %v1320 = vadd.s32 %v1162, 16
  %v1321 = vadd.s32 %v1169, 16
  %v1322 = vadd.s32 %v1176, 16
  %v1323 = vadd.s32 %v1183, 16
  %v1324 = vadd.s32 %v1190, 16
  %v1325 = vadd.s32 %v1197, 16
  %v1326 = vsel %vm1262, %v1294, %v980
  %v1327 = vsel %vm1263, %v1295, %v987
  %v1328 = vsel %vm1264, %v1296, %v994
  %v1329 = vsel %vm1265, %v1297, %v1001
  %v1330 = vsel %vm1266, %v1298, %v1008
  %v1331 = vsel %vm1267, %v1299, %v1015
  %v1332 = vsel %vm1268, %v1300, %v1022
  %v1333 = vsel %vm1269, %v1301, %v1029
  %v1334 = vsel %vm1270, %v1302, %v1036
  %v1335 = vsel %vm1271, %v1303, %v1043
  %v1336 = vsel %vm1272, %v1304, %v1050
  %v1337 = vsel %vm1273, %v1305, %v1057
  %v1338 = vsel %vm1274, %v1306, %v1064
  %v1339 = vsel %vm1275, %v1307, %v1071
  %v1340 = vsel %vm1276, %v1308, %v1078
  %v1341 = vsel %vm1277, %v1309, %v1085
  %v1342 = vsel %vm1278, %v1310, %v1092
  %v1343 = vsel %vm1279, %v1311, %v1099
  %v1344 = vsel %vm1280, %v1312, %v1106
  %v1345 = vsel %vm1281, %v1313, %v1113
  %v1346 = vsel %vm1282, %v1314, %v1120
  %v1347 = vsel %vm1283, %v1315, %v1127
  %v1348 = vsel %vm1284, %v1316, %v1134
  %v1349 = vsel %vm1285, %v1317, %v1141
  %v1350 = vsel %vm1286, %v1318, %v1148
  %v1351 = vsel %vm1287, %v1319, %v1155
  %v1352 = vsel %vm1288, %v1320, %v1162
  %v1353 = vsel %vm1289, %v1321, %v1169
  %v1354 = vsel %vm1290, %v1322, %v1176
  %v1355 = vsel %vm1291, %v1323, %v1183
  %v1356 = vsel %vm1292, %v1324, %v1190
  %v1357 = vsel %vm1293, %v1325, %v1197
  %vm1358 = vcmp.gt.s32.totalorder %v1326, 0
  %vm1359 = vcmp.gt.s32.totalorder %v1327, 0
  %vm1360 = vcmp.gt.s32.totalorder %v1328, 0
  %vm1361 = vcmp.gt.s32.totalorder %v1329, 0
  %vm1362 = vcmp.gt.s32.totalorder %v1330, 0
  %vm1363 = vcmp.gt.s32.totalorder %v1331, 0
  %vm1364 = vcmp.gt.s32.totalorder %v1332, 0
  %vm1365 = vcmp.gt.s32.totalorder %v1333, 0
  %vm1366 = vcmp.gt.s32.totalorder %v1334, 0
  %vm1367 = vcmp.gt.s32.totalorder %v1335, 0
  %vm1368 = vcmp.gt.s32.totalorder %v1336, 0
  %vm1369 = vcmp.gt.s32.totalorder %v1337, 0
  %vm1370 = vcmp.gt.s32.totalorder %v1338, 0
  %vm1371 = vcmp.gt.s32.totalorder %v1339, 0
  %vm1372 = vcmp.gt.s32.totalorder %v1340, 0
  %vm1373 = vcmp.gt.s32.totalorder %v1341, 0
  %vm1374 = vcmp.gt.s32.totalorder %v1342, 0
  %vm1375 = vcmp.gt.s32.totalorder %v1343, 0
  %vm1376 = vcmp.gt.s32.totalorder %v1344, 0
  %vm1377 = vcmp.gt.s32.totalorder %v1345, 0
  %vm1378 = vcmp.gt.s32.totalorder %v1346, 0
  %vm1379 = vcmp.gt.s32.totalorder %v1347, 0
  %vm1380 = vcmp.gt.s32.totalorder %v1348, 0
  %vm1381 = vcmp.gt.s32.totalorder %v1349, 0
  %vm1382 = vcmp.gt.s32.totalorder %v1350, 0
  %vm1383 = vcmp.gt.s32.totalorder %v1351, 0
  %vm1384 = vcmp.gt.s32.totalorder %v1352, 0
  %vm1385 = vcmp.gt.s32.totalorder %v1353, 0
  %vm1386 = vcmp.gt.s32.totalorder %v1354, 0
  %vm1387 = vcmp.gt.s32.totalorder %v1355, 0
  %vm1388 = vcmp.gt.s32.totalorder %v1356, 0
  %vm1389 = vcmp.gt.s32.totalorder %v1357, 0
  %v1390 = vsel %vm1358, 1, 0
  %v1391 = vsel %vm1359, 1, 0
  %v1392 = vsel %vm1360, 1, 0
  %v1393 = vsel %vm1361, 1, 0
  %v1394 = vsel %vm1362, 1, 0
  %v1395 = vsel %vm1363, 1, 0
  %v1396 = vsel %vm1364, 1, 0
  %v1397 = vsel %vm1365, 1, 0
  %v1398 = vsel %vm1366, 1, 0
  %v1399 = vsel %vm1367, 1, 0
  %v1400 = vsel %vm1368, 1, 0
  %v1401 = vsel %vm1369, 1, 0
  %v1402 = vsel %vm1370, 1, 0
  %v1403 = vsel %vm1371, 1, 0
  %v1404 = vsel %vm1372, 1, 0
  %v1405 = vsel %vm1373, 1, 0
  %v1406 = vsel %vm1374, 1, 0
  %v1407 = vsel %vm1375, 1, 0
  %v1408 = vsel %vm1376, 1, 0
  %v1409 = vsel %vm1377, 1, 0
  %v1410 = vsel %vm1378, 1, 0
  %v1411 = vsel %vm1379, 1, 0
  %v1412 = vsel %vm1380, 1, 0
  %v1413 = vsel %vm1381, 1, 0
  %v1414 = vsel %vm1382, 1, 0
  %v1415 = vsel %vm1383, 1, 0
  %v1416 = vsel %vm1384, 1, 0
  %v1417 = vsel %vm1385, 1, 0
  %v1418 = vsel %vm1386, 1, 0
  %v1419 = vsel %vm1387, 1, 0
  %v1420 = vsel %vm1388, 1, 0
  %v1421 = vsel %vm1389, 1, 0
  %v1422 = vcvt.s32.f32 %v1390
  %v1423 = vcvt.s32.f32 %v1391
  %v1424 = vcvt.s32.f32 %v1392
  %v1425 = vcvt.s32.f32 %v1393
  %v1426 = vcvt.s32.f32 %v1394
  %v1427 = vcvt.s32.f32 %v1395
  %v1428 = vcvt.s32.f32 %v1396
  %v1429 = vcvt.s32.f32 %v1397
  %v1430 = vcvt.s32.f32 %v1398
  %v1431 = vcvt.s32.f32 %v1399
  %v1432 = vcvt.s32.f32 %v1400
  %v1433 = vcvt.s32.f32 %v1401
  %v1434 = vcvt.s32.f32 %v1402
  %v1435 = vcvt.s32.f32 %v1403
  %v1436 = vcvt.s32.f32 %v1404
  %v1437 = vcvt.s32.f32 %v1405
  %v1438 = vcvt.s32.f32 %v1406
  %v1439 = vcvt.s32.f32 %v1407
  %v1440 = vcvt.s32.f32 %v1408
  %v1441 = vcvt.s32.f32 %v1409
  %v1442 = vcvt.s32.f32 %v1410
  %v1443 = vcvt.s32.f32 %v1411
  %v1444 = vcvt.s32.f32 %v1412
  %v1445 = vcvt.s32.f32 %v1413
  %v1446 = vcvt.s32.f32 %v1414
  %v1447 = vcvt.s32.f32 %v1415
  %v1448 = vcvt.s32.f32 %v1416
  %v1449 = vcvt.s32.f32 %v1417
  %v1450 = vcvt.s32.f32 %v1418
  %v1451 = vcvt.s32.f32 %v1419
  %v1452 = vcvt.s32.f32 %v1420
  %v1453 = vcvt.s32.f32 %v1421
  %vm1454 = vcmp.lt.s32.totalorder %v1326, 15
  %vm1455 = vcmp.lt.s32.totalorder %v1327, 15
  %vm1456 = vcmp.lt.s32.totalorder %v1328, 15
  %vm1457 = vcmp.lt.s32.totalorder %v1329, 15
  %vm1458 = vcmp.lt.s32.totalorder %v1330, 15
  %vm1459 = vcmp.lt.s32.totalorder %v1331, 15
  %vm1460 = vcmp.lt.s32.totalorder %v1332, 15
  %vm1461 = vcmp.lt.s32.totalorder %v1333, 15
  %vm1462 = vcmp.lt.s32.totalorder %v1334, 15
  %vm1463 = vcmp.lt.s32.totalorder %v1335, 15
  %vm1464 = vcmp.lt.s32.totalorder %v1336, 15
  %vm1465 = vcmp.lt.s32.totalorder %v1337, 15
  %vm1466 = vcmp.lt.s32.totalorder %v1338, 15
  %vm1467 = vcmp.lt.s32.totalorder %v1339, 15
  %vm1468 = vcmp.lt.s32.totalorder %v1340, 15
  %vm1469 = vcmp.lt.s32.totalorder %v1341, 15
  %vm1470 = vcmp.lt.s32.totalorder %v1342, 15
  %vm1471 = vcmp.lt.s32.totalorder %v1343, 15
  %vm1472 = vcmp.lt.s32.totalorder %v1344, 15
  %vm1473 = vcmp.lt.s32.totalorder %v1345, 15
  %vm1474 = vcmp.lt.s32.totalorder %v1346, 15
  %vm1475 = vcmp.lt.s32.totalorder %v1347, 15
  %vm1476 = vcmp.lt.s32.totalorder %v1348, 15
  %vm1477 = vcmp.lt.s32.totalorder %v1349, 15
  %vm1478 = vcmp.lt.s32.totalorder %v1350, 15
  %vm1479 = vcmp.lt.s32.totalorder %v1351, 15
  %vm1480 = vcmp.lt.s32.totalorder %v1352, 15
  %vm1481 = vcmp.lt.s32.totalorder %v1353, 15
  %vm1482 = vcmp.lt.s32.totalorder %v1354, 15
  %vm1483 = vcmp.lt.s32.totalorder %v1355, 15
  %vm1484 = vcmp.lt.s32.totalorder %v1356, 15
  %vm1485 = vcmp.lt.s32.totalorder %v1357, 15
  %v1486 = vsel %vm1454, 1, 0
  %v1487 = vsel %vm1455, 1, 0
  %v1488 = vsel %vm1456, 1, 0
  %v1489 = vsel %vm1457, 1, 0
  %v1490 = vsel %vm1458, 1, 0
  %v1491 = vsel %vm1459, 1, 0
  %v1492 = vsel %vm1460, 1, 0
  %v1493 = vsel %vm1461, 1, 0
  %v1494 = vsel %vm1462, 1, 0
  %v1495 = vsel %vm1463, 1, 0
  %v1496 = vsel %vm1464, 1, 0
  %v1497 = vsel %vm1465, 1, 0
  %v1498 = vsel %vm1466, 1, 0
  %v1499 = vsel %vm1467, 1, 0
  %v1500 = vsel %vm1468, 1, 0
  %v1501 = vsel %vm1469, 1, 0
  %v1502 = vsel %vm1470, 1, 0
  %v1503 = vsel %vm1471, 1, 0
  %v1504 = vsel %vm1472, 1, 0
  %v1505 = vsel %vm1473, 1, 0
  %v1506 = vsel %vm1474, 1, 0
  %v1507 = vsel %vm1475, 1, 0
  %v1508 = vsel %vm1476, 1, 0
  %v1509 = vsel %vm1477, 1, 0
  %v1510 = vsel %vm1478, 1, 0
  %v1511 = vsel %vm1479, 1, 0
  %v1512 = vsel %vm1480, 1, 0
  %v1513 = vsel %vm1481, 1, 0
  %v1514 = vsel %vm1482, 1, 0
  %v1515 = vsel %vm1483, 1, 0
  %v1516 = vsel %vm1484, 1, 0
  %v1517 = vsel %vm1485, 1, 0
  %v1518 = vcvt.s32.f32 %v1486
  %v1519 = vcvt.s32.f32 %v1487
  %v1520 = vcvt.s32.f32 %v1488
  %v1521 = vcvt.s32.f32 %v1489
  %v1522 = vcvt.s32.f32 %v1490
  %v1523 = vcvt.s32.f32 %v1491
  %v1524 = vcvt.s32.f32 %v1492
  %v1525 = vcvt.s32.f32 %v1493
  %v1526 = vcvt.s32.f32 %v1494
  %v1527 = vcvt.s32.f32 %v1495
  %v1528 = vcvt.s32.f32 %v1496
  %v1529 = vcvt.s32.f32 %v1497
  %v1530 = vcvt.s32.f32 %v1498
  %v1531 = vcvt.s32.f32 %v1499
  %v1532 = vcvt.s32.f32 %v1500
  %v1533 = vcvt.s32.f32 %v1501
  %v1534 = vcvt.s32.f32 %v1502
  %v1535 = vcvt.s32.f32 %v1503
  %v1536 = vcvt.s32.f32 %v1504
  %v1537 = vcvt.s32.f32 %v1505
  %v1538 = vcvt.s32.f32 %v1506
  %v1539 = vcvt.s32.f32 %v1507
  %v1540 = vcvt.s32.f32 %v1508
  %v1541 = vcvt.s32.f32 %v1509
  %v1542 = vcvt.s32.f32 %v1510
  %v1543 = vcvt.s32.f32 %v1511
  %v1544 = vcvt.s32.f32 %v1512
  %v1545 = vcvt.s32.f32 %v1513
  %v1546 = vcvt.s32.f32 %v1514
  %v1547 = vcvt.s32.f32 %v1515
  %v1548 = vcvt.s32.f32 %v1516
  %v1549 = vcvt.s32.f32 %v1517
  %vm1582 = vcmask 1040384
  %v1583 = vrot.slane %v912, 7
  %v1584 = vrot.slane %v913, 7
  %v1585 = vsel %vm1582, %v1583, %v1584
  %v1586 = vrot.slane %v914, 7
  %v1587 = vsel %vm1582, %v1584, %v1586
  %v1588 = vrot.slane %v915, 7
  %v1589 = vsel %vm1582, %v1586, %v1588
  %v1590 = vrot.slane %v916, 7
  %v1591 = vsel %vm1582, %v1588, %v1590
  %v1592 = vrot.slane %v917, 7
  %v1593 = vsel %vm1582, %v1590, %v1592
  %v1594 = vrot.slane %v918, 7
  %v1595 = vsel %vm1582, %v1592, %v1594
  %v1596 = vrot.slane %v919, 7
  %v1597 = vsel %vm1582, %v1594, %v1596
  %v1598 = vrot.slane %v920, 7
  %v1599 = vsel %vm1582, %v1596, %v1598
  %v1600 = vrot.slane %v921, 7
  %v1601 = vsel %vm1582, %v1598, %v1600
  %v1602 = vrot.slane %v922, 7
  %v1603 = vsel %vm1582, %v1600, %v1602
  %v1604 = vrot.slane %v923, 7
  %v1605 = vsel %vm1582, %v1602, %v1604
  %v1606 = vrot.slane %v924, 7
  %v1607 = vsel %vm1582, %v1604, %v1606
  %v1608 = vrot.slane %v925, 7
  %v1609 = vsel %vm1582, %v1606, %v1608
  %v1610 = vrot.slane %v926, 7
  %v1611 = vsel %vm1582, %v1608, %v1610
  %v1612 = vrot.slane %v927, 7
  %v1613 = vsel %vm1582, %v1610, %v1612
  %v1614 = vrot.slane %v928, 7
  %v1615 = vsel %vm1582, %v1612, %v1614
  %v1616 = vrot.slane %v929, 7
  %v1617 = vsel %vm1582, %v1614, %v1616
  %v1618 = vrot.slane %v930, 7
  %v1619 = vsel %vm1582, %v1616, %v1618
  %v1620 = vrot.slane %v931, 7
  %v1621 = vsel %vm1582, %v1618, %v1620
  %v1622 = vrot.slane %v932, 7
  %v1623 = vsel %vm1582, %v1620, %v1622
  %v1624 = vrot.slane %v933, 7
  %v1625 = vsel %vm1582, %v1622, %v1624
  %v1626 = vrot.slane %v934, 7
  %v1627 = vsel %vm1582, %v1624, %v1626
  %v1628 = vrot.slane %v935, 7
  %v1629 = vsel %vm1582, %v1626, %v1628
  %v1630 = vrot.slane %v936, 7
  %v1631 = vsel %vm1582, %v1628, %v1630
  %v1632 = vrot.slane %v937, 7
  %v1633 = vsel %vm1582, %v1630, %v1632
  %v1634 = vrot.slane %v938, 7
  %v1635 = vsel %vm1582, %v1632, %v1634
  %v1636 = vrot.slane %v939, 7
  %v1637 = vsel %vm1582, %v1634, %v1636
  %v1638 = vrot.slane %v940, 7
  %v1639 = vsel %vm1582, %v1636, %v1638
  %v1640 = vrot.slane %v941, 7
  %v1641 = vsel %vm1582, %v1638, %v1640
  %v1642 = vrot.slane %v942, 7
  %v1643 = vsel %vm1582, %v1640, %v1642
  %v1644 = vrot.slane %v943, 7
  %v1645 = vsel %vm1582, %v1642, %v1644
  %v1679 = vsel %vm1582, 0.0, %v1583
  %v1680 = vsel %vm1582, %v1644, 0.0
  %v1681 = vmul.f32 %v1422, 0.0
  %v1682 = vmul.f32 %v1423, 0.0
  %v1683 = vmul.f32 %v1679, %v1424
  %v1684 = vmul.f32 %v1585, %v1425
  %v1685 = vmul.f32 %v1587, %v1426
  %v1686 = vmul.f32 %v1589, %v1427
  %v1687 = vmul.f32 %v1591, %v1428
  %v1688 = vmul.f32 %v1593, %v1429
  %v1689 = vmul.f32 %v1595, %v1430
  %v1690 = vmul.f32 %v1597, %v1431
  %v1691 = vmul.f32 %v1599, %v1432
  %v1692 = vmul.f32 %v1601, %v1433
  %v1693 = vmul.f32 %v1603, %v1434
  %v1694 = vmul.f32 %v1605, %v1435
  %v1695 = vmul.f32 %v1607, %v1436
  %v1696 = vmul.f32 %v1609, %v1437
  %v1697 = vmul.f32 %v1611, %v1438
  %v1698 = vmul.f32 %v1613, %v1439
  %v1699 = vmul.f32 %v1615, %v1440
  %v1700 = vmul.f32 %v1617, %v1441
  %v1701 = vmul.f32 %v1619, %v1442
  %v1702 = vmul.f32 %v1621, %v1443
  %v1703 = vmul.f32 %v1623, %v1444
  %v1704 = vmul.f32 %v1625, %v1445
  %v1705 = vmul.f32 %v1627, %v1446
  %v1706 = vmul.f32 %v1629, %v1447
  %v1707 = vmul.f32 %v1631, %v1448
  %v1708 = vmul.f32 %v1633, %v1449
  %v1709 = vmul.f32 %v1635, %v1450
  %v1710 = vmul.f32 %v1637, %v1451
  %v1711 = vmul.f32 %v1639, %v1452
  %v1712 = vmul.f32 %v1641, %v1453
  %v1713 = vpack.c.bf16 %v1682, %v1681
  %v1714 = vpack.c.bf16 %v1684, %v1683
  %v1715 = vpack.c.bf16 %v1686, %v1685
  %v1716 = vpack.c.bf16 %v1688, %v1687
  %v1717 = vpack.c.bf16 %v1690, %v1689
  %v1718 = vpack.c.bf16 %v1692, %v1691
  %v1719 = vpack.c.bf16 %v1694, %v1693
  %v1720 = vpack.c.bf16 %v1696, %v1695
  %v1721 = vpack.c.bf16 %v1698, %v1697
  %v1722 = vpack.c.bf16 %v1700, %v1699
  %v1723 = vpack.c.bf16 %v1702, %v1701
  %v1724 = vpack.c.bf16 %v1704, %v1703
  %v1725 = vpack.c.bf16 %v1706, %v1705
  %v1726 = vpack.c.bf16 %v1708, %v1707
  %v1727 = vpack.c.bf16 %v1710, %v1709
  %v1728 = vpack.c.bf16 %v1712, %v1711
  %v1729 = vpack.c.bf16 %v1585, %v1679
  %v1730 = vpack.c.bf16 %v1589, %v1587
  %v1731 = vpack.c.bf16 %v1593, %v1591
  %v1732 = vpack.c.bf16 %v1597, %v1595
  %v1733 = vpack.c.bf16 %v1601, %v1599
  %v1734 = vpack.c.bf16 %v1605, %v1603
  %v1735 = vpack.c.bf16 %v1609, %v1607
  %v1736 = vpack.c.bf16 %v1613, %v1611
  %v1737 = vpack.c.bf16 %v1617, %v1615
  %v1738 = vpack.c.bf16 %v1621, %v1619
  %v1739 = vpack.c.bf16 %v1625, %v1623
  %v1740 = vpack.c.bf16 %v1629, %v1627
  %v1741 = vpack.c.bf16 %v1633, %v1631
  %v1742 = vpack.c.bf16 %v1637, %v1635
  %v1743 = vpack.c.bf16 %v1641, %v1639
  %v1744 = vpack.c.bf16 %v1643, %v1643
  %v1745 = vshrl.u32 %v517, 16
  %v1747 = vor.u32 %v1745, %v528
  %v1749 = vshll.u32 %v1729, 16
  %v1751 = vrot.slane %v1749, 1
  %v1752 = vsel %vm218, %v1747, %v1751
  %v1753 = vshrl.u32 %v1729, 16
  %v1755 = vor.u32 %v1753, %v1751
  %v1757 = vshll.u32 %v1730, 16
  %v1759 = vrot.slane %v1757, 1
  %v1760 = vsel %vm218, %v1755, %v1759
  %v1761 = vshrl.u32 %v1730, 16
  %v1763 = vor.u32 %v1761, %v1759
  %v1765 = vshll.u32 %v1731, 16
  %v1767 = vrot.slane %v1765, 1
  %v1768 = vsel %vm218, %v1763, %v1767
  %v1769 = vshrl.u32 %v1731, 16
  %v1771 = vor.u32 %v1769, %v1767
  %v1773 = vshll.u32 %v1732, 16
  %v1775 = vrot.slane %v1773, 1
  %v1776 = vsel %vm218, %v1771, %v1775
  %v1777 = vshrl.u32 %v1732, 16
  %v1779 = vor.u32 %v1777, %v1775
  %v1781 = vshll.u32 %v1733, 16
  %v1783 = vrot.slane %v1781, 1
  %v1784 = vsel %vm218, %v1779, %v1783
  %v1785 = vshrl.u32 %v1733, 16
  %v1787 = vor.u32 %v1785, %v1783
  %v1789 = vshll.u32 %v1734, 16
  %v1791 = vrot.slane %v1789, 1
  %v1792 = vsel %vm218, %v1787, %v1791
  %v1793 = vshrl.u32 %v1734, 16
  %v1795 = vor.u32 %v1793, %v1791
  %v1797 = vshll.u32 %v1735, 16
  %v1799 = vrot.slane %v1797, 1
  %v1800 = vsel %vm218, %v1795, %v1799
  %v1801 = vshrl.u32 %v1735, 16
  %v1803 = vor.u32 %v1801, %v1799
  %v1805 = vshll.u32 %v1736, 16
  %v1807 = vrot.slane %v1805, 1
  %v1808 = vsel %vm218, %v1803, %v1807
  %v1809 = vshrl.u32 %v1736, 16
  %v1811 = vor.u32 %v1809, %v1807
  %v1813 = vshll.u32 %v1737, 16
  %v1815 = vrot.slane %v1813, 1
  %v1816 = vsel %vm218, %v1811, %v1815
  %v1817 = vshrl.u32 %v1737, 16
  %v1819 = vor.u32 %v1817, %v1815
  %v1821 = vshll.u32 %v1738, 16
  %v1823 = vrot.slane %v1821, 1
  %v1824 = vsel %vm218, %v1819, %v1823
  %v1825 = vshrl.u32 %v1738, 16
  %v1827 = vor.u32 %v1825, %v1823
  %v1829 = vshll.u32 %v1739, 16
  %v1831 = vrot.slane %v1829, 1
  %v1832 = vsel %vm218, %v1827, %v1831
  %v1833 = vshrl.u32 %v1739, 16
  %v1835 = vor.u32 %v1833, %v1831
  %v1837 = vshll.u32 %v1740, 16
  %v1839 = vrot.slane %v1837, 1
  %v1840 = vsel %vm218, %v1835, %v1839
  %v1841 = vshrl.u32 %v1740, 16
  %v1843 = vor.u32 %v1841, %v1839
  %v1845 = vshll.u32 %v1741, 16
  %v1847 = vrot.slane %v1845, 1
  %v1848 = vsel %vm218, %v1843, %v1847
  %v1849 = vshrl.u32 %v1741, 16
  %v1851 = vor.u32 %v1849, %v1847
  %v1853 = vshll.u32 %v1742, 16
  %v1855 = vrot.slane %v1853, 1
  %v1856 = vsel %vm218, %v1851, %v1855
  %v1857 = vshrl.u32 %v1742, 16
  %v1859 = vor.u32 %v1857, %v1855
  %v1861 = vshll.u32 %v1743, 16
  %v1863 = vrot.slane %v1861, 1
  %v1864 = vsel %vm218, %v1859, %v1863
  %v1865 = vshrl.u32 %v1743, 16
  %v1867 = vor.u32 %v1865, %v1863
  %v1869 = vshll.u32 %v1744, 16
  %v1871 = vrot.slane %v1869, 1
  %v1872 = vsel %vm218, %v1867, %v1871
  %v1874 = vsel %vm243, %v1752, 0
  %v1877 = vsel %vm243, %v1760, 0
  %v1880 = vsel %vm243, %v1768, 0
  %v1883 = vsel %vm243, %v1776, 0
  %v1886 = vsel %vm243, %v1784, 0
  %v1889 = vsel %vm243, %v1792, 0
  %v1892 = vsel %vm243, %v1800, 0
  %v1895 = vsel %vm243, %v1808, 0
  %v1898 = vsel %vm243, %v1816, 0
  %v1901 = vsel %vm243, %v1824, 0
  %v1904 = vsel %vm243, %v1832, 0
  %v1907 = vsel %vm243, %v1840, 0
  %v1910 = vsel %vm243, %v1848, 0
  %v1913 = vsel %vm243, %v1856, 0
  %v1916 = vsel %vm243, %v1864, 0
  %v1919 = vsel %vm243, %v1872, 0
  %1921 = vmatpush.bf16.msra.mxu0 0
  %1922 = vmatpush.bf16.msra.mxu0 0
  %1923 = vmatpush.bf16.msra.mxu0 0
  %1924 = vmatpush.bf16.msra.mxu0 0
  %1925 = vmatpush.bf16.msra.mxu0 0
  %1926 = vmatpush.bf16.msra.mxu0 0
  %1927 = vmatpush.bf16.msra.mxu0 %v240
  %1928 = vmatpush.bf16.msra.mxu0 %v239
  %1929 = vmatmul.bf16.gmra.mxu0 %v1874
  %v1930 = vpop.f32.mrf.mxu0
  %v1931 = vadd.f32 0.0, %v1930
  %v1932 = vpop.f32.mrf.mxu0
  %v1933 = vadd.f32 0.0, %v1932
  %1934 = vmatmul.bf16.gmra.mxu0 %v1877
  %v1935 = vpop.f32.mrf.mxu0
  %v1936 = vadd.f32 0.0, %v1935
  %v1937 = vpop.f32.mrf.mxu0
  %v1938 = vadd.f32 0.0, %v1937
  %1939 = vmatmul.bf16.gmra.mxu0 %v1880
  %v1940 = vpop.f32.mrf.mxu0
  %v1941 = vadd.f32 0.0, %v1940
  %v1942 = vpop.f32.mrf.mxu0
  %v1943 = vadd.f32 0.0, %v1942
  %1944 = vmatmul.bf16.gmra.mxu0 %v1883
  %v1945 = vpop.f32.mrf.mxu0
  %v1946 = vadd.f32 0.0, %v1945
  %v1947 = vpop.f32.mrf.mxu0
  %v1948 = vadd.f32 0.0, %v1947
  %1949 = vmatmul.bf16.gmra.mxu0 %v1886
  %v1950 = vpop.f32.mrf.mxu0
  %v1951 = vadd.f32 0.0, %v1950
  %v1952 = vpop.f32.mrf.mxu0
  %v1953 = vadd.f32 0.0, %v1952
  %1954 = vmatmul.bf16.gmra.mxu0 %v1889
  %v1955 = vpop.f32.mrf.mxu0
  %v1956 = vadd.f32 0.0, %v1955
  %v1957 = vpop.f32.mrf.mxu0
  %v1958 = vadd.f32 0.0, %v1957
  %1959 = vmatmul.bf16.gmra.mxu0 %v1892
  %v1960 = vpop.f32.mrf.mxu0
  %v1961 = vadd.f32 0.0, %v1960
  %v1962 = vpop.f32.mrf.mxu0
  %v1963 = vadd.f32 0.0, %v1962
  %1964 = vmatmul.bf16.gmra.mxu0 %v1895
  %v1965 = vpop.f32.mrf.mxu0
  %v1966 = vadd.f32 0.0, %v1965
  %v1967 = vpop.f32.mrf.mxu0
  %v1968 = vadd.f32 0.0, %v1967
  %1969 = vmatmul.bf16.gmra.mxu0 %v1898
  %v1970 = vpop.f32.mrf.mxu0
  %v1971 = vadd.f32 0.0, %v1970
  %v1972 = vpop.f32.mrf.mxu0
  %v1973 = vadd.f32 0.0, %v1972
  %1974 = vmatmul.bf16.gmra.mxu0 %v1901
  %v1975 = vpop.f32.mrf.mxu0
  %v1976 = vadd.f32 0.0, %v1975
  %v1977 = vpop.f32.mrf.mxu0
  %v1978 = vadd.f32 0.0, %v1977
  %1979 = vmatmul.bf16.gmra.mxu0 %v1904
  %v1980 = vpop.f32.mrf.mxu0
  %v1981 = vadd.f32 0.0, %v1980
  %v1982 = vpop.f32.mrf.mxu0
  %v1983 = vadd.f32 0.0, %v1982
  %1984 = vmatmul.bf16.gmra.mxu0 %v1907
  %v1985 = vpop.f32.mrf.mxu0
  %v1986 = vadd.f32 0.0, %v1985
  %v1987 = vpop.f32.mrf.mxu0
  %v1988 = vadd.f32 0.0, %v1987
  %1989 = vmatmul.bf16.gmra.mxu0 %v1910
  %v1990 = vpop.f32.mrf.mxu0
  %v1991 = vadd.f32 0.0, %v1990
  %v1992 = vpop.f32.mrf.mxu0
  %v1993 = vadd.f32 0.0, %v1992
  %1994 = vmatmul.bf16.gmra.mxu0 %v1913
  %v1995 = vpop.f32.mrf.mxu0
  %v1996 = vadd.f32 0.0, %v1995
  %v1997 = vpop.f32.mrf.mxu0
  %v1998 = vadd.f32 0.0, %v1997
  %1999 = vmatmul.bf16.gmra.mxu0 %v1916
  %v2000 = vpop.f32.mrf.mxu0
  %v2001 = vadd.f32 0.0, %v2000
  %v2002 = vpop.f32.mrf.mxu0
  %v2003 = vadd.f32 0.0, %v2002
  %2004 = vmatmul.bf16.gmra.mxu0 %v1919
  %v2005 = vpop.f32.mrf.mxu0
  %v2006 = vadd.f32 0.0, %v2005
  %v2007 = vpop.f32.mrf.mxu0
  %v2008 = vadd.f32 0.0, %v2007
  %2009 = vdwg.mxu0
  %v2011 = vsel %vm243, %v1713, 0
  %v2014 = vsel %vm243, %v1714, 0
  %v2017 = vsel %vm243, %v1715, 0
  %v2020 = vsel %vm243, %v1716, 0
  %v2023 = vsel %vm243, %v1717, 0
  %v2026 = vsel %vm243, %v1718, 0
  %v2029 = vsel %vm243, %v1719, 0
  %v2032 = vsel %vm243, %v1720, 0
  %v2035 = vsel %vm243, %v1721, 0
  %v2038 = vsel %vm243, %v1722, 0
  %v2041 = vsel %vm243, %v1723, 0
  %v2044 = vsel %vm243, %v1724, 0
  %v2047 = vsel %vm243, %v1725, 0
  %v2050 = vsel %vm243, %v1726, 0
  %v2053 = vsel %vm243, %v1727, 0
  %v2056 = vsel %vm243, %v1728, 0
  %2058 = vmatpush.bf16.msra.mxu0 0
  %2059 = vmatpush.bf16.msra.mxu0 0
  %2060 = vmatpush.bf16.msra.mxu0 0
  %2061 = vmatpush.bf16.msra.mxu0 0
  %2062 = vmatpush.bf16.msra.mxu0 0
  %2063 = vmatpush.bf16.msra.mxu0 0
  %2064 = vmatpush.bf16.msra.mxu0 %v270
  %2065 = vmatpush.bf16.msra.mxu0 %v269
  %2066 = vmatmul.bf16.gmra.mxu0 %v2011
  %v2067 = vpop.f32.mrf.mxu0
  %v2068 = vadd.f32 %v1931, %v2067
  %v2069 = vpop.f32.mrf.mxu0
  %v2070 = vadd.f32 %v1933, %v2069
  %2071 = vmatmul.bf16.gmra.mxu0 %v2014
  %v2072 = vpop.f32.mrf.mxu0
  %v2073 = vadd.f32 %v1936, %v2072
  %v2074 = vpop.f32.mrf.mxu0
  %v2075 = vadd.f32 %v1938, %v2074
  %2076 = vmatmul.bf16.gmra.mxu0 %v2017
  %v2077 = vpop.f32.mrf.mxu0
  %v2078 = vadd.f32 %v1941, %v2077
  %v2079 = vpop.f32.mrf.mxu0
  %v2080 = vadd.f32 %v1943, %v2079
  %2081 = vmatmul.bf16.gmra.mxu0 %v2020
  %v2082 = vpop.f32.mrf.mxu0
  %v2083 = vadd.f32 %v1946, %v2082
  %v2084 = vpop.f32.mrf.mxu0
  %v2085 = vadd.f32 %v1948, %v2084
  %2086 = vmatmul.bf16.gmra.mxu0 %v2023
  %v2087 = vpop.f32.mrf.mxu0
  %v2088 = vadd.f32 %v1951, %v2087
  %v2089 = vpop.f32.mrf.mxu0
  %v2090 = vadd.f32 %v1953, %v2089
  %2091 = vmatmul.bf16.gmra.mxu0 %v2026
  %v2092 = vpop.f32.mrf.mxu0
  %v2093 = vadd.f32 %v1956, %v2092
  %v2094 = vpop.f32.mrf.mxu0
  %v2095 = vadd.f32 %v1958, %v2094
  %2096 = vmatmul.bf16.gmra.mxu0 %v2029
  %v2097 = vpop.f32.mrf.mxu0
  %v2098 = vadd.f32 %v1961, %v2097
  %v2099 = vpop.f32.mrf.mxu0
  %v2100 = vadd.f32 %v1963, %v2099
  %2101 = vmatmul.bf16.gmra.mxu0 %v2032
  %v2102 = vpop.f32.mrf.mxu0
  %v2103 = vadd.f32 %v1966, %v2102
  %v2104 = vpop.f32.mrf.mxu0
  %v2105 = vadd.f32 %v1968, %v2104
  %2106 = vmatmul.bf16.gmra.mxu0 %v2035
  %v2107 = vpop.f32.mrf.mxu0
  %v2108 = vadd.f32 %v1971, %v2107
  %v2109 = vpop.f32.mrf.mxu0
  %v2110 = vadd.f32 %v1973, %v2109
  %2111 = vmatmul.bf16.gmra.mxu0 %v2038
  %v2112 = vpop.f32.mrf.mxu0
  %v2113 = vadd.f32 %v1976, %v2112
  %v2114 = vpop.f32.mrf.mxu0
  %v2115 = vadd.f32 %v1978, %v2114
  %2116 = vmatmul.bf16.gmra.mxu0 %v2041
  %v2117 = vpop.f32.mrf.mxu0
  %v2118 = vadd.f32 %v1981, %v2117
  %v2119 = vpop.f32.mrf.mxu0
  %v2120 = vadd.f32 %v1983, %v2119
  %2121 = vmatmul.bf16.gmra.mxu0 %v2044
  %v2122 = vpop.f32.mrf.mxu0
  %v2123 = vadd.f32 %v1986, %v2122
  %v2124 = vpop.f32.mrf.mxu0
  %v2125 = vadd.f32 %v1988, %v2124
  %2126 = vmatmul.bf16.gmra.mxu0 %v2047
  %v2127 = vpop.f32.mrf.mxu0
  %v2128 = vadd.f32 %v1991, %v2127
  %v2129 = vpop.f32.mrf.mxu0
  %v2130 = vadd.f32 %v1993, %v2129
  %2131 = vmatmul.bf16.gmra.mxu0 %v2050
  %v2132 = vpop.f32.mrf.mxu0
  %v2133 = vadd.f32 %v1996, %v2132
  %v2134 = vpop.f32.mrf.mxu0
  %v2135 = vadd.f32 %v1998, %v2134
  %2136 = vmatmul.bf16.gmra.mxu0 %v2053
  %v2137 = vpop.f32.mrf.mxu0
  %v2138 = vadd.f32 %v2001, %v2137
  %v2139 = vpop.f32.mrf.mxu0
  %v2140 = vadd.f32 %v2003, %v2139
  %2141 = vmatmul.bf16.gmra.mxu0 %v2056
  %v2142 = vpop.f32.mrf.mxu0
  %v2143 = vadd.f32 %v2006, %v2142
  %v2144 = vpop.f32.mrf.mxu0
  %v2145 = vadd.f32 %v2008, %v2144
  %2146 = vdwg.mxu0
  %v2179 = vrot.slane %v1518, 6
  %v2180 = vrot.slane %v1519, 6
  %v2181 = vsel %vm292, %v2179, %v2180
  %v2182 = vrot.slane %v1520, 6
  %v2183 = vsel %vm292, %v2180, %v2182
  %v2184 = vrot.slane %v1521, 6
  %v2185 = vsel %vm292, %v2182, %v2184
  %v2186 = vrot.slane %v1522, 6
  %v2187 = vsel %vm292, %v2184, %v2186
  %v2188 = vrot.slane %v1523, 6
  %v2189 = vsel %vm292, %v2186, %v2188
  %v2190 = vrot.slane %v1524, 6
  %v2191 = vsel %vm292, %v2188, %v2190
  %v2192 = vrot.slane %v1525, 6
  %v2193 = vsel %vm292, %v2190, %v2192
  %v2194 = vrot.slane %v1526, 6
  %v2195 = vsel %vm292, %v2192, %v2194
  %v2196 = vrot.slane %v1527, 6
  %v2197 = vsel %vm292, %v2194, %v2196
  %v2198 = vrot.slane %v1528, 6
  %v2199 = vsel %vm292, %v2196, %v2198
  %v2200 = vrot.slane %v1529, 6
  %v2201 = vsel %vm292, %v2198, %v2200
  %v2202 = vrot.slane %v1530, 6
  %v2203 = vsel %vm292, %v2200, %v2202
  %v2204 = vrot.slane %v1531, 6
  %v2205 = vsel %vm292, %v2202, %v2204
  %v2206 = vrot.slane %v1532, 6
  %v2207 = vsel %vm292, %v2204, %v2206
  %v2208 = vrot.slane %v1533, 6
  %v2209 = vsel %vm292, %v2206, %v2208
  %v2210 = vrot.slane %v1534, 6
  %v2211 = vsel %vm292, %v2208, %v2210
  %v2212 = vrot.slane %v1535, 6
  %v2213 = vsel %vm292, %v2210, %v2212
  %v2214 = vrot.slane %v1536, 6
  %v2215 = vsel %vm292, %v2212, %v2214
  %v2216 = vrot.slane %v1537, 6
  %v2217 = vsel %vm292, %v2214, %v2216
  %v2218 = vrot.slane %v1538, 6
  %v2219 = vsel %vm292, %v2216, %v2218
  %v2220 = vrot.slane %v1539, 6
  %v2221 = vsel %vm292, %v2218, %v2220
  %v2222 = vrot.slane %v1540, 6
  %v2223 = vsel %vm292, %v2220, %v2222
  %v2224 = vrot.slane %v1541, 6
  %v2225 = vsel %vm292, %v2222, %v2224
  %v2226 = vrot.slane %v1542, 6
  %v2227 = vsel %vm292, %v2224, %v2226
  %v2228 = vrot.slane %v1543, 6
  %v2229 = vsel %vm292, %v2226, %v2228
  %v2230 = vrot.slane %v1544, 6
  %v2231 = vsel %vm292, %v2228, %v2230
  %v2232 = vrot.slane %v1545, 6
  %v2233 = vsel %vm292, %v2230, %v2232
  %v2234 = vrot.slane %v1546, 6
  %v2235 = vsel %vm292, %v2232, %v2234
  %v2236 = vrot.slane %v1547, 6
  %v2237 = vsel %vm292, %v2234, %v2236
  %v2238 = vrot.slane %v1548, 6
  %v2239 = vsel %vm292, %v2236, %v2238
  %v2240 = vrot.slane %v1549, 6
  %v2241 = vsel %vm292, %v2238, %v2240
  %v2275 = vmul.f32 %v2179, 0.0
  %v2276 = vmul.f32 %v2181, 0.0
  %v2277 = vmul.f32 %v1679, %v2183
  %v2278 = vmul.f32 %v1585, %v2185
  %v2279 = vmul.f32 %v1587, %v2187
  %v2280 = vmul.f32 %v1589, %v2189
  %v2281 = vmul.f32 %v1591, %v2191
  %v2282 = vmul.f32 %v1593, %v2193
  %v2283 = vmul.f32 %v1595, %v2195
  %v2284 = vmul.f32 %v1597, %v2197
  %v2285 = vmul.f32 %v1599, %v2199
  %v2286 = vmul.f32 %v1601, %v2201
  %v2287 = vmul.f32 %v1603, %v2203
  %v2288 = vmul.f32 %v1605, %v2205
  %v2289 = vmul.f32 %v1607, %v2207
  %v2290 = vmul.f32 %v1609, %v2209
  %v2291 = vmul.f32 %v1611, %v2211
  %v2292 = vmul.f32 %v1613, %v2213
  %v2293 = vmul.f32 %v1615, %v2215
  %v2294 = vmul.f32 %v1617, %v2217
  %v2295 = vmul.f32 %v1619, %v2219
  %v2296 = vmul.f32 %v1621, %v2221
  %v2297 = vmul.f32 %v1623, %v2223
  %v2298 = vmul.f32 %v1625, %v2225
  %v2299 = vmul.f32 %v1627, %v2227
  %v2300 = vmul.f32 %v1629, %v2229
  %v2301 = vmul.f32 %v1631, %v2231
  %v2302 = vmul.f32 %v1633, %v2233
  %v2303 = vmul.f32 %v1635, %v2235
  %v2304 = vmul.f32 %v1637, %v2237
  %v2305 = vmul.f32 %v1639, %v2239
  %v2306 = vmul.f32 %v1641, %v2241
  %v2307 = vmul.f32 %v1643, %v2240
  %v2308 = vpack.c.bf16 %v2276, %v2275
  %v2309 = vpack.c.bf16 %v2278, %v2277
  %v2310 = vpack.c.bf16 %v2280, %v2279
  %v2311 = vpack.c.bf16 %v2282, %v2281
  %v2312 = vpack.c.bf16 %v2284, %v2283
  %v2313 = vpack.c.bf16 %v2286, %v2285
  %v2314 = vpack.c.bf16 %v2288, %v2287
  %v2315 = vpack.c.bf16 %v2290, %v2289
  %v2316 = vpack.c.bf16 %v2292, %v2291
  %v2317 = vpack.c.bf16 %v2294, %v2293
  %v2318 = vpack.c.bf16 %v2296, %v2295
  %v2319 = vpack.c.bf16 %v2298, %v2297
  %v2320 = vpack.c.bf16 %v2300, %v2299
  %v2321 = vpack.c.bf16 %v2302, %v2301
  %v2322 = vpack.c.bf16 %v2304, %v2303
  %v2323 = vpack.c.bf16 %v2306, %v2305
  %v2324 = vpack.c.bf16 %v2307, %v2307
  %v2342 = vrot.slane %v2308, 1
  %v2343 = vrot.slane %v2309, 1
  %v2344 = vsel %vm306, %v2342, %v2343
  %v2345 = vrot.slane %v2310, 1
  %v2346 = vsel %vm306, %v2343, %v2345
  %v2347 = vrot.slane %v2311, 1
  %v2348 = vsel %vm306, %v2345, %v2347
  %v2349 = vrot.slane %v2312, 1
  %v2350 = vsel %vm306, %v2347, %v2349
  %v2351 = vrot.slane %v2313, 1
  %v2352 = vsel %vm306, %v2349, %v2351
  %v2353 = vrot.slane %v2314, 1
  %v2354 = vsel %vm306, %v2351, %v2353
  %v2355 = vrot.slane %v2315, 1
  %v2356 = vsel %vm306, %v2353, %v2355
  %v2357 = vrot.slane %v2316, 1
  %v2358 = vsel %vm306, %v2355, %v2357
  %v2359 = vrot.slane %v2317, 1
  %v2360 = vsel %vm306, %v2357, %v2359
  %v2361 = vrot.slane %v2318, 1
  %v2362 = vsel %vm306, %v2359, %v2361
  %v2363 = vrot.slane %v2319, 1
  %v2364 = vsel %vm306, %v2361, %v2363
  %v2365 = vrot.slane %v2320, 1
  %v2366 = vsel %vm306, %v2363, %v2365
  %v2367 = vrot.slane %v2321, 1
  %v2368 = vsel %vm306, %v2365, %v2367
  %v2369 = vrot.slane %v2322, 1
  %v2370 = vsel %vm306, %v2367, %v2369
  %v2371 = vrot.slane %v2323, 1
  %v2372 = vsel %vm306, %v2369, %v2371
  %v2373 = vrot.slane %v2324, 1
  %v2374 = vsel %vm306, %v2371, %v2373
  %v2376 = vsel %vm243, %v2344, 0
  %v2379 = vsel %vm243, %v2346, 0
  %v2382 = vsel %vm243, %v2348, 0
  %v2385 = vsel %vm243, %v2350, 0
  %v2388 = vsel %vm243, %v2352, 0
  %v2391 = vsel %vm243, %v2354, 0
  %v2394 = vsel %vm243, %v2356, 0
  %v2397 = vsel %vm243, %v2358, 0
  %v2400 = vsel %vm243, %v2360, 0
  %v2403 = vsel %vm243, %v2362, 0
  %v2406 = vsel %vm243, %v2364, 0
  %v2409 = vsel %vm243, %v2366, 0
  %v2412 = vsel %vm243, %v2368, 0
  %v2415 = vsel %vm243, %v2370, 0
  %v2418 = vsel %vm243, %v2372, 0
  %v2421 = vsel %vm243, %v2374, 0
  %2423 = vmatpush.bf16.msra.mxu0 0
  %2424 = vmatpush.bf16.msra.mxu0 0
  %2425 = vmatpush.bf16.msra.mxu0 0
  %2426 = vmatpush.bf16.msra.mxu0 0
  %2427 = vmatpush.bf16.msra.mxu0 0
  %2428 = vmatpush.bf16.msra.mxu0 0
  %2429 = vmatpush.bf16.msra.mxu0 %v319
  %2430 = vmatpush.bf16.msra.mxu0 %v318
  %2431 = vmatmul.bf16.gmra.mxu0 %v2376
  %v2432 = vpop.f32.mrf.mxu0
  %v2433 = vadd.f32 0.0, %v2432
  %v2434 = vpop.f32.mrf.mxu0
  %v2435 = vadd.f32 0.0, %v2434
  %2436 = vmatmul.bf16.gmra.mxu0 %v2379
  %v2437 = vpop.f32.mrf.mxu0
  %v2438 = vadd.f32 0.0, %v2437
  %v2439 = vpop.f32.mrf.mxu0
  %v2440 = vadd.f32 0.0, %v2439
  %2441 = vmatmul.bf16.gmra.mxu0 %v2382
  %v2442 = vpop.f32.mrf.mxu0
  %v2443 = vadd.f32 0.0, %v2442
  %v2444 = vpop.f32.mrf.mxu0
  %v2445 = vadd.f32 0.0, %v2444
  %2446 = vmatmul.bf16.gmra.mxu0 %v2385
  %v2447 = vpop.f32.mrf.mxu0
  %v2448 = vadd.f32 0.0, %v2447
  %v2449 = vpop.f32.mrf.mxu0
  %v2450 = vadd.f32 0.0, %v2449
  %2451 = vmatmul.bf16.gmra.mxu0 %v2388
  %v2452 = vpop.f32.mrf.mxu0
  %v2453 = vadd.f32 0.0, %v2452
  %v2454 = vpop.f32.mrf.mxu0
  %v2455 = vadd.f32 0.0, %v2454
  %2456 = vmatmul.bf16.gmra.mxu0 %v2391
  %v2457 = vpop.f32.mrf.mxu0
  %v2458 = vadd.f32 0.0, %v2457
  %v2459 = vpop.f32.mrf.mxu0
  %v2460 = vadd.f32 0.0, %v2459
  %2461 = vmatmul.bf16.gmra.mxu0 %v2394
  %v2462 = vpop.f32.mrf.mxu0
  %v2463 = vadd.f32 0.0, %v2462
  %v2464 = vpop.f32.mrf.mxu0
  %v2465 = vadd.f32 0.0, %v2464
  %2466 = vmatmul.bf16.gmra.mxu0 %v2397
  %v2467 = vpop.f32.mrf.mxu0
  %v2468 = vadd.f32 0.0, %v2467
  %v2469 = vpop.f32.mrf.mxu0
  %v2470 = vadd.f32 0.0, %v2469
  %2471 = vmatmul.bf16.gmra.mxu0 %v2400
  %v2472 = vpop.f32.mrf.mxu0
  %v2473 = vadd.f32 0.0, %v2472
  %v2474 = vpop.f32.mrf.mxu0
  %v2475 = vadd.f32 0.0, %v2474
  %2476 = vmatmul.bf16.gmra.mxu0 %v2403
  %v2477 = vpop.f32.mrf.mxu0
  %v2478 = vadd.f32 0.0, %v2477
  %v2479 = vpop.f32.mrf.mxu0
  %v2480 = vadd.f32 0.0, %v2479
  %2481 = vmatmul.bf16.gmra.mxu0 %v2406
  %v2482 = vpop.f32.mrf.mxu0
  %v2483 = vadd.f32 0.0, %v2482
  %v2484 = vpop.f32.mrf.mxu0
  %v2485 = vadd.f32 0.0, %v2484
  %2486 = vmatmul.bf16.gmra.mxu0 %v2409
  %v2487 = vpop.f32.mrf.mxu0
  %v2488 = vadd.f32 0.0, %v2487
  %v2489 = vpop.f32.mrf.mxu0
  %v2490 = vadd.f32 0.0, %v2489
  %2491 = vmatmul.bf16.gmra.mxu0 %v2412
  %v2492 = vpop.f32.mrf.mxu0
  %v2493 = vadd.f32 0.0, %v2492
  %v2494 = vpop.f32.mrf.mxu0
  %v2495 = vadd.f32 0.0, %v2494
  %2496 = vmatmul.bf16.gmra.mxu0 %v2415
  %v2497 = vpop.f32.mrf.mxu0
  %v2498 = vadd.f32 0.0, %v2497
  %v2499 = vpop.f32.mrf.mxu0
  %v2500 = vadd.f32 0.0, %v2499
  %2501 = vmatmul.bf16.gmra.mxu0 %v2418
  %v2502 = vpop.f32.mrf.mxu0
  %v2503 = vadd.f32 0.0, %v2502
  %v2504 = vpop.f32.mrf.mxu0
  %v2505 = vadd.f32 0.0, %v2504
  %2506 = vmatmul.bf16.gmra.mxu0 %v2421
  %v2507 = vpop.f32.mrf.mxu0
  %v2508 = vadd.f32 0.0, %v2507
  %v2509 = vpop.f32.mrf.mxu0
  %v2510 = vadd.f32 0.0, %v2509
  %2511 = vdwg.mxu0
  %v2512 = vadd.f32 %v2068, %v2433
  %v2513 = vadd.f32 %v2070, %v2435
  %v2514 = vadd.f32 %v2073, %v2438
  %v2515 = vadd.f32 %v2075, %v2440
  %v2516 = vadd.f32 %v2078, %v2443
  %v2517 = vadd.f32 %v2080, %v2445
  %v2518 = vadd.f32 %v2083, %v2448
  %v2519 = vadd.f32 %v2085, %v2450
  %v2520 = vadd.f32 %v2088, %v2453
  %v2521 = vadd.f32 %v2090, %v2455
  %v2522 = vadd.f32 %v2093, %v2458
  %v2523 = vadd.f32 %v2095, %v2460
  %v2524 = vadd.f32 %v2098, %v2463
  %v2525 = vadd.f32 %v2100, %v2465
  %v2526 = vadd.f32 %v2103, %v2468
  %v2527 = vadd.f32 %v2105, %v2470
  %v2528 = vadd.f32 %v2108, %v2473
  %v2529 = vadd.f32 %v2110, %v2475
  %v2530 = vadd.f32 %v2113, %v2478
  %v2531 = vadd.f32 %v2115, %v2480
  %v2532 = vadd.f32 %v2118, %v2483
  %v2533 = vadd.f32 %v2120, %v2485
  %v2534 = vadd.f32 %v2123, %v2488
  %v2535 = vadd.f32 %v2125, %v2490
  %v2536 = vadd.f32 %v2128, %v2493
  %v2537 = vadd.f32 %v2130, %v2495
  %v2538 = vadd.f32 %v2133, %v2498
  %v2539 = vadd.f32 %v2135, %v2500
  %v2540 = vadd.f32 %v2138, %v2503
  %v2541 = vadd.f32 %v2140, %v2505
  %v2542 = vadd.f32 %v2143, %v2508
  %v2543 = vadd.f32 %v2145, %v2510
  %v2544 = vmul.f32 %v1679, %v1422
  %v2545 = vmul.f32 %v1585, %v1423
  %v2546 = vmul.f32 %v1587, %v1424
  %v2547 = vmul.f32 %v1589, %v1425
  %v2548 = vmul.f32 %v1591, %v1426
  %v2549 = vmul.f32 %v1593, %v1427
  %v2550 = vmul.f32 %v1595, %v1428
  %v2551 = vmul.f32 %v1597, %v1429
  %v2552 = vmul.f32 %v1599, %v1430
  %v2553 = vmul.f32 %v1601, %v1431
  %v2554 = vmul.f32 %v1603, %v1432
  %v2555 = vmul.f32 %v1605, %v1433
  %v2556 = vmul.f32 %v1607, %v1434
  %v2557 = vmul.f32 %v1609, %v1435
  %v2558 = vmul.f32 %v1611, %v1436
  %v2559 = vmul.f32 %v1613, %v1437
  %v2560 = vmul.f32 %v1615, %v1438
  %v2561 = vmul.f32 %v1617, %v1439
  %v2562 = vmul.f32 %v1619, %v1440
  %v2563 = vmul.f32 %v1621, %v1441
  %v2564 = vmul.f32 %v1623, %v1442
  %v2565 = vmul.f32 %v1625, %v1443
  %v2566 = vmul.f32 %v1627, %v1444
  %v2567 = vmul.f32 %v1629, %v1445
  %v2568 = vmul.f32 %v1631, %v1446
  %v2569 = vmul.f32 %v1633, %v1447
  %v2570 = vmul.f32 %v1635, %v1448
  %v2571 = vmul.f32 %v1637, %v1449
  %v2572 = vmul.f32 %v1639, %v1450
  %v2573 = vmul.f32 %v1641, %v1451
  %v2574 = vmul.f32 %v1643, %v1452
  %v2575 = vmul.f32 %v1645, %v1453
  %v2576 = vpack.c.bf16 %v2545, %v2544
  %v2577 = vpack.c.bf16 %v2547, %v2546
  %v2578 = vpack.c.bf16 %v2549, %v2548
  %v2579 = vpack.c.bf16 %v2551, %v2550
  %v2580 = vpack.c.bf16 %v2553, %v2552
  %v2581 = vpack.c.bf16 %v2555, %v2554
  %v2582 = vpack.c.bf16 %v2557, %v2556
  %v2583 = vpack.c.bf16 %v2559, %v2558
  %v2584 = vpack.c.bf16 %v2561, %v2560
  %v2585 = vpack.c.bf16 %v2563, %v2562
  %v2586 = vpack.c.bf16 %v2565, %v2564
  %v2587 = vpack.c.bf16 %v2567, %v2566
  %v2588 = vpack.c.bf16 %v2569, %v2568
  %v2589 = vpack.c.bf16 %v2571, %v2570
  %v2590 = vpack.c.bf16 %v2573, %v2572
  %v2591 = vpack.c.bf16 %v2575, %v2574
  %v2593 = vsel %vm243, %v2576, 0
  %v2596 = vsel %vm243, %v2577, 0
  %v2599 = vsel %vm243, %v2578, 0
  %v2602 = vsel %vm243, %v2579, 0
  %v2605 = vsel %vm243, %v2580, 0
  %v2608 = vsel %vm243, %v2581, 0
  %v2611 = vsel %vm243, %v2582, 0
  %v2614 = vsel %vm243, %v2583, 0
  %v2617 = vsel %vm243, %v2584, 0
  %v2620 = vsel %vm243, %v2585, 0
  %v2623 = vsel %vm243, %v2586, 0
  %v2626 = vsel %vm243, %v2587, 0
  %v2629 = vsel %vm243, %v2588, 0
  %v2632 = vsel %vm243, %v2589, 0
  %v2635 = vsel %vm243, %v2590, 0
  %v2638 = vsel %vm243, %v2591, 0
  %2640 = vmatpush.bf16.msra.mxu0 0
  %2641 = vmatpush.bf16.msra.mxu0 0
  %2642 = vmatpush.bf16.msra.mxu0 0
  %2643 = vmatpush.bf16.msra.mxu0 0
  %2644 = vmatpush.bf16.msra.mxu0 0
  %2645 = vmatpush.bf16.msra.mxu0 0
  %2646 = vmatpush.bf16.msra.mxu0 %v370
  %2647 = vmatpush.bf16.msra.mxu0 %v369
  %2648 = vmatmul.bf16.gmra.mxu0 %v2593
  %v2649 = vpop.f32.mrf.mxu0
  %v2650 = vadd.f32 0.0, %v2649
  %v2651 = vpop.f32.mrf.mxu0
  %v2652 = vadd.f32 0.0, %v2651
  %2653 = vmatmul.bf16.gmra.mxu0 %v2596
  %v2654 = vpop.f32.mrf.mxu0
  %v2655 = vadd.f32 0.0, %v2654
  %v2656 = vpop.f32.mrf.mxu0
  %v2657 = vadd.f32 0.0, %v2656
  %2658 = vmatmul.bf16.gmra.mxu0 %v2599
  %v2659 = vpop.f32.mrf.mxu0
  %v2660 = vadd.f32 0.0, %v2659
  %v2661 = vpop.f32.mrf.mxu0
  %v2662 = vadd.f32 0.0, %v2661
  %2663 = vmatmul.bf16.gmra.mxu0 %v2602
  %v2664 = vpop.f32.mrf.mxu0
  %v2665 = vadd.f32 0.0, %v2664
  %v2666 = vpop.f32.mrf.mxu0
  %v2667 = vadd.f32 0.0, %v2666
  %2668 = vmatmul.bf16.gmra.mxu0 %v2605
  %v2669 = vpop.f32.mrf.mxu0
  %v2670 = vadd.f32 0.0, %v2669
  %v2671 = vpop.f32.mrf.mxu0
  %v2672 = vadd.f32 0.0, %v2671
  %2673 = vmatmul.bf16.gmra.mxu0 %v2608
  %v2674 = vpop.f32.mrf.mxu0
  %v2675 = vadd.f32 0.0, %v2674
  %v2676 = vpop.f32.mrf.mxu0
  %v2677 = vadd.f32 0.0, %v2676
  %2678 = vmatmul.bf16.gmra.mxu0 %v2611
  %v2679 = vpop.f32.mrf.mxu0
  %v2680 = vadd.f32 0.0, %v2679
  %v2681 = vpop.f32.mrf.mxu0
  %v2682 = vadd.f32 0.0, %v2681
  %2683 = vmatmul.bf16.gmra.mxu0 %v2614
  %v2684 = vpop.f32.mrf.mxu0
  %v2685 = vadd.f32 0.0, %v2684
  %v2686 = vpop.f32.mrf.mxu0
  %v2687 = vadd.f32 0.0, %v2686
  %2688 = vmatmul.bf16.gmra.mxu0 %v2617
  %v2689 = vpop.f32.mrf.mxu0
  %v2690 = vadd.f32 0.0, %v2689
  %v2691 = vpop.f32.mrf.mxu0
  %v2692 = vadd.f32 0.0, %v2691
  %2693 = vmatmul.bf16.gmra.mxu0 %v2620
  %v2694 = vpop.f32.mrf.mxu0
  %v2695 = vadd.f32 0.0, %v2694
  %v2696 = vpop.f32.mrf.mxu0
  %v2697 = vadd.f32 0.0, %v2696
  %2698 = vmatmul.bf16.gmra.mxu0 %v2623
  %v2699 = vpop.f32.mrf.mxu0
  %v2700 = vadd.f32 0.0, %v2699
  %v2701 = vpop.f32.mrf.mxu0
  %v2702 = vadd.f32 0.0, %v2701
  %2703 = vmatmul.bf16.gmra.mxu0 %v2626
  %v2704 = vpop.f32.mrf.mxu0
  %v2705 = vadd.f32 0.0, %v2704
  %v2706 = vpop.f32.mrf.mxu0
  %v2707 = vadd.f32 0.0, %v2706
  %2708 = vmatmul.bf16.gmra.mxu0 %v2629
  %v2709 = vpop.f32.mrf.mxu0
  %v2710 = vadd.f32 0.0, %v2709
  %v2711 = vpop.f32.mrf.mxu0
  %v2712 = vadd.f32 0.0, %v2711
  %2713 = vmatmul.bf16.gmra.mxu0 %v2632
  %v2714 = vpop.f32.mrf.mxu0
  %v2715 = vadd.f32 0.0, %v2714
  %v2716 = vpop.f32.mrf.mxu0
  %v2717 = vadd.f32 0.0, %v2716
  %2718 = vmatmul.bf16.gmra.mxu0 %v2635
  %v2719 = vpop.f32.mrf.mxu0
  %v2720 = vadd.f32 0.0, %v2719
  %v2721 = vpop.f32.mrf.mxu0
  %v2722 = vadd.f32 0.0, %v2721
  %2723 = vmatmul.bf16.gmra.mxu0 %v2638
  %v2724 = vpop.f32.mrf.mxu0
  %v2725 = vadd.f32 0.0, %v2724
  %v2726 = vpop.f32.mrf.mxu0
  %v2727 = vadd.f32 0.0, %v2726
  %2728 = vdwg.mxu0
  %v2729 = vadd.f32 %v2512, %v2650
  %v2730 = vadd.f32 %v2513, %v2652
  %v2731 = vadd.f32 %v2514, %v2655
  %v2732 = vadd.f32 %v2515, %v2657
  %v2733 = vadd.f32 %v2516, %v2660
  %v2734 = vadd.f32 %v2517, %v2662
  %v2735 = vadd.f32 %v2518, %v2665
  %v2736 = vadd.f32 %v2519, %v2667
  %v2737 = vadd.f32 %v2520, %v2670
  %v2738 = vadd.f32 %v2521, %v2672
  %v2739 = vadd.f32 %v2522, %v2675
  %v2740 = vadd.f32 %v2523, %v2677
  %v2741 = vadd.f32 %v2524, %v2680
  %v2742 = vadd.f32 %v2525, %v2682
  %v2743 = vadd.f32 %v2526, %v2685
  %v2744 = vadd.f32 %v2527, %v2687
  %v2745 = vadd.f32 %v2528, %v2690
  %v2746 = vadd.f32 %v2529, %v2692
  %v2747 = vadd.f32 %v2530, %v2695
  %v2748 = vadd.f32 %v2531, %v2697
  %v2749 = vadd.f32 %v2532, %v2700
  %v2750 = vadd.f32 %v2533, %v2702
  %v2751 = vadd.f32 %v2534, %v2705
  %v2752 = vadd.f32 %v2535, %v2707
  %v2753 = vadd.f32 %v2536, %v2710
  %v2754 = vadd.f32 %v2537, %v2712
  %v2755 = vadd.f32 %v2538, %v2715
  %v2756 = vadd.f32 %v2539, %v2717
  %v2757 = vadd.f32 %v2540, %v2720
  %v2758 = vadd.f32 %v2541, %v2722
  %v2759 = vadd.f32 %v2542, %v2725
  %v2760 = vadd.f32 %v2543, %v2727
  %v2761 = vpack.c.bf16 %v1645, %v1643
  %v2762 = vpack.c.bf16 %v1680, %v1680
  %v2764 = vshll.u32 %v2761, 16
  %v2766 = vrot.slane %v2764, 1
  %v2767 = vsel %vm218, %v1867, %v2766
  %v2768 = vshrl.u32 %v2761, 16
  %v2770 = vor.u32 %v2768, %v2766
  %v2772 = vshll.u32 %v2762, 16
  %v2774 = vrot.slane %v2772, 1
  %v2775 = vsel %vm218, %v2770, %v2774
  %v2777 = vsel %vm243, %v2767, 0
  %v2780 = vsel %vm243, %v2775, 0
  %2782 = vmatpush.bf16.msra.mxu0 0
  %2783 = vmatpush.bf16.msra.mxu0 0
  %2784 = vmatpush.bf16.msra.mxu0 0
  %2785 = vmatpush.bf16.msra.mxu0 0
  %2786 = vmatpush.bf16.msra.mxu0 0
  %2787 = vmatpush.bf16.msra.mxu0 0
  %2788 = vmatpush.bf16.msra.mxu0 %v411
  %2789 = vmatpush.bf16.msra.mxu0 %v410
  %2790 = vmatmul.bf16.gmra.mxu0 %v1877
  %v2791 = vpop.f32.mrf.mxu0
  %v2792 = vadd.f32 0.0, %v2791
  %v2793 = vpop.f32.mrf.mxu0
  %v2794 = vadd.f32 0.0, %v2793
  %2795 = vmatmul.bf16.gmra.mxu0 %v1880
  %v2796 = vpop.f32.mrf.mxu0
  %v2797 = vadd.f32 0.0, %v2796
  %v2798 = vpop.f32.mrf.mxu0
  %v2799 = vadd.f32 0.0, %v2798
  %2800 = vmatmul.bf16.gmra.mxu0 %v1883
  %v2801 = vpop.f32.mrf.mxu0
  %v2802 = vadd.f32 0.0, %v2801
  %v2803 = vpop.f32.mrf.mxu0
  %v2804 = vadd.f32 0.0, %v2803
  %2805 = vmatmul.bf16.gmra.mxu0 %v1886
  %v2806 = vpop.f32.mrf.mxu0
  %v2807 = vadd.f32 0.0, %v2806
  %v2808 = vpop.f32.mrf.mxu0
  %v2809 = vadd.f32 0.0, %v2808
  %2810 = vmatmul.bf16.gmra.mxu0 %v1889
  %v2811 = vpop.f32.mrf.mxu0
  %v2812 = vadd.f32 0.0, %v2811
  %v2813 = vpop.f32.mrf.mxu0
  %v2814 = vadd.f32 0.0, %v2813
  %2815 = vmatmul.bf16.gmra.mxu0 %v1892
  %v2816 = vpop.f32.mrf.mxu0
  %v2817 = vadd.f32 0.0, %v2816
  %v2818 = vpop.f32.mrf.mxu0
  %v2819 = vadd.f32 0.0, %v2818
  %2820 = vmatmul.bf16.gmra.mxu0 %v1895
  %v2821 = vpop.f32.mrf.mxu0
  %v2822 = vadd.f32 0.0, %v2821
  %v2823 = vpop.f32.mrf.mxu0
  %v2824 = vadd.f32 0.0, %v2823
  %2825 = vmatmul.bf16.gmra.mxu0 %v1898
  %v2826 = vpop.f32.mrf.mxu0
  %v2827 = vadd.f32 0.0, %v2826
  %v2828 = vpop.f32.mrf.mxu0
  %v2829 = vadd.f32 0.0, %v2828
  %2830 = vmatmul.bf16.gmra.mxu0 %v1901
  %v2831 = vpop.f32.mrf.mxu0
  %v2832 = vadd.f32 0.0, %v2831
  %v2833 = vpop.f32.mrf.mxu0
  %v2834 = vadd.f32 0.0, %v2833
  %2835 = vmatmul.bf16.gmra.mxu0 %v1904
  %v2836 = vpop.f32.mrf.mxu0
  %v2837 = vadd.f32 0.0, %v2836
  %v2838 = vpop.f32.mrf.mxu0
  %v2839 = vadd.f32 0.0, %v2838
  %2840 = vmatmul.bf16.gmra.mxu0 %v1907
  %v2841 = vpop.f32.mrf.mxu0
  %v2842 = vadd.f32 0.0, %v2841
  %v2843 = vpop.f32.mrf.mxu0
  %v2844 = vadd.f32 0.0, %v2843
  %2845 = vmatmul.bf16.gmra.mxu0 %v1910
  %v2846 = vpop.f32.mrf.mxu0
  %v2847 = vadd.f32 0.0, %v2846
  %v2848 = vpop.f32.mrf.mxu0
  %v2849 = vadd.f32 0.0, %v2848
  %2850 = vmatmul.bf16.gmra.mxu0 %v1913
  %v2851 = vpop.f32.mrf.mxu0
  %v2852 = vadd.f32 0.0, %v2851
  %v2853 = vpop.f32.mrf.mxu0
  %v2854 = vadd.f32 0.0, %v2853
  %2855 = vmatmul.bf16.gmra.mxu0 %v1916
  %v2856 = vpop.f32.mrf.mxu0
  %v2857 = vadd.f32 0.0, %v2856
  %v2858 = vpop.f32.mrf.mxu0
  %v2859 = vadd.f32 0.0, %v2858
  %2860 = vmatmul.bf16.gmra.mxu0 %v2777
  %v2861 = vpop.f32.mrf.mxu0
  %v2862 = vadd.f32 0.0, %v2861
  %v2863 = vpop.f32.mrf.mxu0
  %v2864 = vadd.f32 0.0, %v2863
  %2865 = vmatmul.bf16.gmra.mxu0 %v2780
  %v2866 = vpop.f32.mrf.mxu0
  %v2867 = vadd.f32 0.0, %v2866
  %v2868 = vpop.f32.mrf.mxu0
  %v2869 = vadd.f32 0.0, %v2868
  %2870 = vdwg.mxu0
  %v2871 = vadd.f32 %v2729, %v2792
  %v2872 = vadd.f32 %v2730, %v2794
  %v2873 = vadd.f32 %v2731, %v2797
  %v2874 = vadd.f32 %v2732, %v2799
  %v2875 = vadd.f32 %v2733, %v2802
  %v2876 = vadd.f32 %v2734, %v2804
  %v2877 = vadd.f32 %v2735, %v2807
  %v2878 = vadd.f32 %v2736, %v2809
  %v2879 = vadd.f32 %v2737, %v2812
  %v2880 = vadd.f32 %v2738, %v2814
  %v2881 = vadd.f32 %v2739, %v2817
  %v2882 = vadd.f32 %v2740, %v2819
  %v2883 = vadd.f32 %v2741, %v2822
  %v2884 = vadd.f32 %v2742, %v2824
  %v2885 = vadd.f32 %v2743, %v2827
  %v2886 = vadd.f32 %v2744, %v2829
  %v2887 = vadd.f32 %v2745, %v2832
  %v2888 = vadd.f32 %v2746, %v2834
  %v2889 = vadd.f32 %v2747, %v2837
  %v2890 = vadd.f32 %v2748, %v2839
  %v2891 = vadd.f32 %v2749, %v2842
  %v2892 = vadd.f32 %v2750, %v2844
  %v2893 = vadd.f32 %v2751, %v2847
  %v2894 = vadd.f32 %v2752, %v2849
  %v2895 = vadd.f32 %v2753, %v2852
  %v2896 = vadd.f32 %v2754, %v2854
  %v2897 = vadd.f32 %v2755, %v2857
  %v2898 = vadd.f32 %v2756, %v2859
  %v2899 = vadd.f32 %v2757, %v2862
  %v2900 = vadd.f32 %v2758, %v2864
  %v2901 = vadd.f32 %v2759, %v2867
  %v2902 = vadd.f32 %v2760, %v2869
  %v2903 = vmul.f32 %v1679, %v2179
  %v2904 = vmul.f32 %v1585, %v2181
  %v2905 = vmul.f32 %v1587, %v2183
  %v2906 = vmul.f32 %v1589, %v2185
  %v2907 = vmul.f32 %v1591, %v2187
  %v2908 = vmul.f32 %v1593, %v2189
  %v2909 = vmul.f32 %v1595, %v2191
  %v2910 = vmul.f32 %v1597, %v2193
  %v2911 = vmul.f32 %v1599, %v2195
  %v2912 = vmul.f32 %v1601, %v2197
  %v2913 = vmul.f32 %v1603, %v2199
  %v2914 = vmul.f32 %v1605, %v2201
  %v2915 = vmul.f32 %v1607, %v2203
  %v2916 = vmul.f32 %v1609, %v2205
  %v2917 = vmul.f32 %v1611, %v2207
  %v2918 = vmul.f32 %v1613, %v2209
  %v2919 = vmul.f32 %v1615, %v2211
  %v2920 = vmul.f32 %v1617, %v2213
  %v2921 = vmul.f32 %v1619, %v2215
  %v2922 = vmul.f32 %v1621, %v2217
  %v2923 = vmul.f32 %v1623, %v2219
  %v2924 = vmul.f32 %v1625, %v2221
  %v2925 = vmul.f32 %v1627, %v2223
  %v2926 = vmul.f32 %v1629, %v2225
  %v2927 = vmul.f32 %v1631, %v2227
  %v2928 = vmul.f32 %v1633, %v2229
  %v2929 = vmul.f32 %v1635, %v2231
  %v2930 = vmul.f32 %v1637, %v2233
  %v2931 = vmul.f32 %v1639, %v2235
  %v2932 = vmul.f32 %v1641, %v2237
  %v2933 = vmul.f32 %v1643, %v2239
  %v2934 = vmul.f32 %v1645, %v2241
  %v2935 = vmul.f32 %v1680, %v2240
  %v2936 = vpack.c.bf16 %v2904, %v2903
  %v2937 = vpack.c.bf16 %v2906, %v2905
  %v2938 = vpack.c.bf16 %v2908, %v2907
  %v2939 = vpack.c.bf16 %v2910, %v2909
  %v2940 = vpack.c.bf16 %v2912, %v2911
  %v2941 = vpack.c.bf16 %v2914, %v2913
  %v2942 = vpack.c.bf16 %v2916, %v2915
  %v2943 = vpack.c.bf16 %v2918, %v2917
  %v2944 = vpack.c.bf16 %v2920, %v2919
  %v2945 = vpack.c.bf16 %v2922, %v2921
  %v2946 = vpack.c.bf16 %v2924, %v2923
  %v2947 = vpack.c.bf16 %v2926, %v2925
  %v2948 = vpack.c.bf16 %v2928, %v2927
  %v2949 = vpack.c.bf16 %v2930, %v2929
  %v2950 = vpack.c.bf16 %v2932, %v2931
  %v2951 = vpack.c.bf16 %v2934, %v2933
  %v2952 = vpack.c.bf16 %v2935, %v2935
  %v2970 = vrot.slane %v2936, 1
  %v2971 = vrot.slane %v2937, 1
  %v2972 = vsel %vm306, %v2970, %v2971
  %v2973 = vrot.slane %v2938, 1
  %v2974 = vsel %vm306, %v2971, %v2973
  %v2975 = vrot.slane %v2939, 1
  %v2976 = vsel %vm306, %v2973, %v2975
  %v2977 = vrot.slane %v2940, 1
  %v2978 = vsel %vm306, %v2975, %v2977
  %v2979 = vrot.slane %v2941, 1
  %v2980 = vsel %vm306, %v2977, %v2979
  %v2981 = vrot.slane %v2942, 1
  %v2982 = vsel %vm306, %v2979, %v2981
  %v2983 = vrot.slane %v2943, 1
  %v2984 = vsel %vm306, %v2981, %v2983
  %v2985 = vrot.slane %v2944, 1
  %v2986 = vsel %vm306, %v2983, %v2985
  %v2987 = vrot.slane %v2945, 1
  %v2988 = vsel %vm306, %v2985, %v2987
  %v2989 = vrot.slane %v2946, 1
  %v2990 = vsel %vm306, %v2987, %v2989
  %v2991 = vrot.slane %v2947, 1
  %v2992 = vsel %vm306, %v2989, %v2991
  %v2993 = vrot.slane %v2948, 1
  %v2994 = vsel %vm306, %v2991, %v2993
  %v2995 = vrot.slane %v2949, 1
  %v2996 = vsel %vm306, %v2993, %v2995
  %v2997 = vrot.slane %v2950, 1
  %v2998 = vsel %vm306, %v2995, %v2997
  %v2999 = vrot.slane %v2951, 1
  %v3000 = vsel %vm306, %v2997, %v2999
  %v3001 = vrot.slane %v2952, 1
  %v3002 = vsel %vm306, %v2999, %v3001
  %v3004 = vsel %vm243, %v2972, 0
  %v3007 = vsel %vm243, %v2974, 0
  %v3010 = vsel %vm243, %v2976, 0
  %v3013 = vsel %vm243, %v2978, 0
  %v3016 = vsel %vm243, %v2980, 0
  %v3019 = vsel %vm243, %v2982, 0
  %v3022 = vsel %vm243, %v2984, 0
  %v3025 = vsel %vm243, %v2986, 0
  %v3028 = vsel %vm243, %v2988, 0
  %v3031 = vsel %vm243, %v2990, 0
  %v3034 = vsel %vm243, %v2992, 0
  %v3037 = vsel %vm243, %v2994, 0
  %v3040 = vsel %vm243, %v2996, 0
  %v3043 = vsel %vm243, %v2998, 0
  %v3046 = vsel %vm243, %v3000, 0
  %v3049 = vsel %vm243, %v3002, 0
  %3051 = vmatpush.bf16.msra.mxu0 0
  %3052 = vmatpush.bf16.msra.mxu0 0
  %3053 = vmatpush.bf16.msra.mxu0 0
  %3054 = vmatpush.bf16.msra.mxu0 0
  %3055 = vmatpush.bf16.msra.mxu0 0
  %3056 = vmatpush.bf16.msra.mxu0 0
  %3057 = vmatpush.bf16.msra.mxu0 %v460
  %3058 = vmatpush.bf16.msra.mxu0 %v459
  %3059 = vmatmul.bf16.gmra.mxu0 %v3004
  %v3060 = vpop.f32.mrf.mxu0
  %v3061 = vadd.f32 0.0, %v3060
  %v3062 = vpop.f32.mrf.mxu0
  %v3063 = vadd.f32 0.0, %v3062
  %3064 = vmatmul.bf16.gmra.mxu0 %v3007
  %v3065 = vpop.f32.mrf.mxu0
  %v3066 = vadd.f32 0.0, %v3065
  %v3067 = vpop.f32.mrf.mxu0
  %v3068 = vadd.f32 0.0, %v3067
  %3069 = vmatmul.bf16.gmra.mxu0 %v3010
  %v3070 = vpop.f32.mrf.mxu0
  %v3071 = vadd.f32 0.0, %v3070
  %v3072 = vpop.f32.mrf.mxu0
  %v3073 = vadd.f32 0.0, %v3072
  %3074 = vmatmul.bf16.gmra.mxu0 %v3013
  %v3075 = vpop.f32.mrf.mxu0
  %v3076 = vadd.f32 0.0, %v3075
  %v3077 = vpop.f32.mrf.mxu0
  %v3078 = vadd.f32 0.0, %v3077
  %3079 = vmatmul.bf16.gmra.mxu0 %v3016
  %v3080 = vpop.f32.mrf.mxu0
  %v3081 = vadd.f32 0.0, %v3080
  %v3082 = vpop.f32.mrf.mxu0
  %v3083 = vadd.f32 0.0, %v3082
  %3084 = vmatmul.bf16.gmra.mxu0 %v3019
  %v3085 = vpop.f32.mrf.mxu0
  %v3086 = vadd.f32 0.0, %v3085
  %v3087 = vpop.f32.mrf.mxu0
  %v3088 = vadd.f32 0.0, %v3087
  %3089 = vmatmul.bf16.gmra.mxu0 %v3022
  %v3090 = vpop.f32.mrf.mxu0
  %v3091 = vadd.f32 0.0, %v3090
  %v3092 = vpop.f32.mrf.mxu0
  %v3093 = vadd.f32 0.0, %v3092
  %3094 = vmatmul.bf16.gmra.mxu0 %v3025
  %v3095 = vpop.f32.mrf.mxu0
  %v3096 = vadd.f32 0.0, %v3095
  %v3097 = vpop.f32.mrf.mxu0
  %v3098 = vadd.f32 0.0, %v3097
  %3099 = vmatmul.bf16.gmra.mxu0 %v3028
  %v3100 = vpop.f32.mrf.mxu0
  %v3101 = vadd.f32 0.0, %v3100
  %v3102 = vpop.f32.mrf.mxu0
  %v3103 = vadd.f32 0.0, %v3102
  %3104 = vmatmul.bf16.gmra.mxu0 %v3031
  %v3105 = vpop.f32.mrf.mxu0
  %v3106 = vadd.f32 0.0, %v3105
  %v3107 = vpop.f32.mrf.mxu0
  %v3108 = vadd.f32 0.0, %v3107
  %3109 = vmatmul.bf16.gmra.mxu0 %v3034
  %v3110 = vpop.f32.mrf.mxu0
  %v3111 = vadd.f32 0.0, %v3110
  %v3112 = vpop.f32.mrf.mxu0
  %v3113 = vadd.f32 0.0, %v3112
  %3114 = vmatmul.bf16.gmra.mxu0 %v3037
  %v3115 = vpop.f32.mrf.mxu0
  %v3116 = vadd.f32 0.0, %v3115
  %v3117 = vpop.f32.mrf.mxu0
  %v3118 = vadd.f32 0.0, %v3117
  %3119 = vmatmul.bf16.gmra.mxu0 %v3040
  %v3120 = vpop.f32.mrf.mxu0
  %v3121 = vadd.f32 0.0, %v3120
  %v3122 = vpop.f32.mrf.mxu0
  %v3123 = vadd.f32 0.0, %v3122
  %3124 = vmatmul.bf16.gmra.mxu0 %v3043
  %v3125 = vpop.f32.mrf.mxu0
  %v3126 = vadd.f32 0.0, %v3125
  %v3127 = vpop.f32.mrf.mxu0
  %v3128 = vadd.f32 0.0, %v3127
  %3129 = vmatmul.bf16.gmra.mxu0 %v3046
  %v3130 = vpop.f32.mrf.mxu0
  %v3131 = vadd.f32 0.0, %v3130
  %v3132 = vpop.f32.mrf.mxu0
  %v3133 = vadd.f32 0.0, %v3132
  %3134 = vmatmul.bf16.gmra.mxu0 %v3049
  %v3135 = vpop.f32.mrf.mxu0
  %v3136 = vadd.f32 0.0, %v3135
  %v3137 = vpop.f32.mrf.mxu0
  %v3138 = vadd.f32 0.0, %v3137
  %3139 = vdwg.mxu0
  %v3140 = vadd.f32 %v2871, %v3061
  %v3141 = vadd.f32 %v2872, %v3063
  %v3142 = vadd.f32 %v2873, %v3066
  %v3143 = vadd.f32 %v2874, %v3068
  %v3144 = vadd.f32 %v2875, %v3071
  %v3145 = vadd.f32 %v2876, %v3073
  %v3146 = vadd.f32 %v2877, %v3076
  %v3147 = vadd.f32 %v2878, %v3078
  %v3148 = vadd.f32 %v2879, %v3081
  %v3149 = vadd.f32 %v2880, %v3083
  %v3150 = vadd.f32 %v2881, %v3086
  %v3151 = vadd.f32 %v2882, %v3088
  %v3152 = vadd.f32 %v2883, %v3091
  %v3153 = vadd.f32 %v2884, %v3093
  %v3154 = vadd.f32 %v2885, %v3096
  %v3155 = vadd.f32 %v2886, %v3098
  %v3156 = vadd.f32 %v2887, %v3101
  %v3157 = vadd.f32 %v2888, %v3103
  %v3158 = vadd.f32 %v2889, %v3106
  %v3159 = vadd.f32 %v2890, %v3108
  %v3160 = vadd.f32 %v2891, %v3111
  %v3161 = vadd.f32 %v2892, %v3113
  %v3162 = vadd.f32 %v2893, %v3116
  %v3163 = vadd.f32 %v2894, %v3118
  %v3164 = vadd.f32 %v2895, %v3121
  %v3165 = vadd.f32 %v2896, %v3123
  %v3166 = vadd.f32 %v2897, %v3126
  %v3167 = vadd.f32 %v2898, %v3128
  %v3168 = vadd.f32 %v2899, %v3131
  %v3169 = vadd.f32 %v2900, %v3133
  %v3170 = vadd.f32 %v2901, %v3136
  %v3171 = vadd.f32 %v2902, %v3138
  %v3172 = vmul.f32 %v1587, %v1422
  %v3173 = vmul.f32 %v1589, %v1423
  %v3174 = vmul.f32 %v1591, %v1424
  %v3175 = vmul.f32 %v1593, %v1425
  %v3176 = vmul.f32 %v1595, %v1426
  %v3177 = vmul.f32 %v1597, %v1427
  %v3178 = vmul.f32 %v1599, %v1428
  %v3179 = vmul.f32 %v1601, %v1429
  %v3180 = vmul.f32 %v1603, %v1430
  %v3181 = vmul.f32 %v1605, %v1431
  %v3182 = vmul.f32 %v1607, %v1432
  %v3183 = vmul.f32 %v1609, %v1433
  %v3184 = vmul.f32 %v1611, %v1434
  %v3185 = vmul.f32 %v1613, %v1435
  %v3186 = vmul.f32 %v1615, %v1436
  %v3187 = vmul.f32 %v1617, %v1437
  %v3188 = vmul.f32 %v1619, %v1438
  %v3189 = vmul.f32 %v1621, %v1439
  %v3190 = vmul.f32 %v1623, %v1440
  %v3191 = vmul.f32 %v1625, %v1441
  %v3192 = vmul.f32 %v1627, %v1442
  %v3193 = vmul.f32 %v1629, %v1443
  %v3194 = vmul.f32 %v1631, %v1444
  %v3195 = vmul.f32 %v1633, %v1445
  %v3196 = vmul.f32 %v1635, %v1446
  %v3197 = vmul.f32 %v1637, %v1447
  %v3198 = vmul.f32 %v1639, %v1448
  %v3199 = vmul.f32 %v1641, %v1449
  %v3200 = vmul.f32 %v1643, %v1450
  %v3201 = vmul.f32 %v1645, %v1451
  %v3202 = vmul.f32 %v1680, %v1452
  %v3203 = vmul.f32 %v1453, 0.0
  %v3204 = vpack.c.bf16 %v3173, %v3172
  %v3205 = vpack.c.bf16 %v3175, %v3174
  %v3206 = vpack.c.bf16 %v3177, %v3176
  %v3207 = vpack.c.bf16 %v3179, %v3178
  %v3208 = vpack.c.bf16 %v3181, %v3180
  %v3209 = vpack.c.bf16 %v3183, %v3182
  %v3210 = vpack.c.bf16 %v3185, %v3184
  %v3211 = vpack.c.bf16 %v3187, %v3186
  %v3212 = vpack.c.bf16 %v3189, %v3188
  %v3213 = vpack.c.bf16 %v3191, %v3190
  %v3214 = vpack.c.bf16 %v3193, %v3192
  %v3215 = vpack.c.bf16 %v3195, %v3194
  %v3216 = vpack.c.bf16 %v3197, %v3196
  %v3217 = vpack.c.bf16 %v3199, %v3198
  %v3218 = vpack.c.bf16 %v3201, %v3200
  %v3219 = vpack.c.bf16 %v3203, %v3202
  %v3221 = vsel %vm243, %v3204, 0
  %v3224 = vsel %vm243, %v3205, 0
  %v3227 = vsel %vm243, %v3206, 0
  %v3230 = vsel %vm243, %v3207, 0
  %v3233 = vsel %vm243, %v3208, 0
  %v3236 = vsel %vm243, %v3209, 0
  %v3239 = vsel %vm243, %v3210, 0
  %v3242 = vsel %vm243, %v3211, 0
  %v3245 = vsel %vm243, %v3212, 0
  %v3248 = vsel %vm243, %v3213, 0
  %v3251 = vsel %vm243, %v3214, 0
  %v3254 = vsel %vm243, %v3215, 0
  %v3257 = vsel %vm243, %v3216, 0
  %v3260 = vsel %vm243, %v3217, 0
  %v3263 = vsel %vm243, %v3218, 0
  %v3266 = vsel %vm243, %v3219, 0
  %3268 = vmatpush.bf16.msra.mxu0 0
  %3269 = vmatpush.bf16.msra.mxu0 0
  %3270 = vmatpush.bf16.msra.mxu0 0
  %3271 = vmatpush.bf16.msra.mxu0 0
  %3272 = vmatpush.bf16.msra.mxu0 0
  %3273 = vmatpush.bf16.msra.mxu0 0
  %3274 = vmatpush.bf16.msra.mxu0 %v494
  %3275 = vmatpush.bf16.msra.mxu0 %v493
  %3276 = vmatmul.bf16.gmra.mxu0 %v3221
  %v3277 = vpop.f32.mrf.mxu0
  %v3278 = vadd.f32 0.0, %v3277
  %v3279 = vpop.f32.mrf.mxu0
  %v3280 = vadd.f32 0.0, %v3279
  %3281 = vmatmul.bf16.gmra.mxu0 %v3224
  %v3282 = vpop.f32.mrf.mxu0
  %v3283 = vadd.f32 0.0, %v3282
  %v3284 = vpop.f32.mrf.mxu0
  %v3285 = vadd.f32 0.0, %v3284
  %3286 = vmatmul.bf16.gmra.mxu0 %v3227
  %v3287 = vpop.f32.mrf.mxu0
  %v3288 = vadd.f32 0.0, %v3287
  %v3289 = vpop.f32.mrf.mxu0
  %v3290 = vadd.f32 0.0, %v3289
  %3291 = vmatmul.bf16.gmra.mxu0 %v3230
  %v3292 = vpop.f32.mrf.mxu0
  %v3293 = vadd.f32 0.0, %v3292
  %v3294 = vpop.f32.mrf.mxu0
  %v3295 = vadd.f32 0.0, %v3294
  %3296 = vmatmul.bf16.gmra.mxu0 %v3233
  %v3297 = vpop.f32.mrf.mxu0
  %v3298 = vadd.f32 0.0, %v3297
  %v3299 = vpop.f32.mrf.mxu0
  %v3300 = vadd.f32 0.0, %v3299
  %3301 = vmatmul.bf16.gmra.mxu0 %v3236
  %v3302 = vpop.f32.mrf.mxu0
  %v3303 = vadd.f32 0.0, %v3302
  %v3304 = vpop.f32.mrf.mxu0
  %v3305 = vadd.f32 0.0, %v3304
  %3306 = vmatmul.bf16.gmra.mxu0 %v3239
  %v3307 = vpop.f32.mrf.mxu0
  %v3308 = vadd.f32 0.0, %v3307
  %v3309 = vpop.f32.mrf.mxu0
  %v3310 = vadd.f32 0.0, %v3309
  %3311 = vmatmul.bf16.gmra.mxu0 %v3242
  %v3312 = vpop.f32.mrf.mxu0
  %v3313 = vadd.f32 0.0, %v3312
  %v3314 = vpop.f32.mrf.mxu0
  %v3315 = vadd.f32 0.0, %v3314
  %3316 = vmatmul.bf16.gmra.mxu0 %v3245
  %v3317 = vpop.f32.mrf.mxu0
  %v3318 = vadd.f32 0.0, %v3317
  %v3319 = vpop.f32.mrf.mxu0
  %v3320 = vadd.f32 0.0, %v3319
  %3321 = vmatmul.bf16.gmra.mxu0 %v3248
  %v3322 = vpop.f32.mrf.mxu0
  %v3323 = vadd.f32 0.0, %v3322
  %v3324 = vpop.f32.mrf.mxu0
  %v3325 = vadd.f32 0.0, %v3324
  %3326 = vmatmul.bf16.gmra.mxu0 %v3251
  %v3327 = vpop.f32.mrf.mxu0
  %v3328 = vadd.f32 0.0, %v3327
  %v3329 = vpop.f32.mrf.mxu0
  %v3330 = vadd.f32 0.0, %v3329
  %3331 = vmatmul.bf16.gmra.mxu0 %v3254
  %v3332 = vpop.f32.mrf.mxu0
  %v3333 = vadd.f32 0.0, %v3332
  %v3334 = vpop.f32.mrf.mxu0
  %v3335 = vadd.f32 0.0, %v3334
  %3336 = vmatmul.bf16.gmra.mxu0 %v3257
  %v3337 = vpop.f32.mrf.mxu0
  %v3338 = vadd.f32 0.0, %v3337
  %v3339 = vpop.f32.mrf.mxu0
  %v3340 = vadd.f32 0.0, %v3339
  %3341 = vmatmul.bf16.gmra.mxu0 %v3260
  %v3342 = vpop.f32.mrf.mxu0
  %v3343 = vadd.f32 0.0, %v3342
  %v3344 = vpop.f32.mrf.mxu0
  %v3345 = vadd.f32 0.0, %v3344
  %3346 = vmatmul.bf16.gmra.mxu0 %v3263
  %v3347 = vpop.f32.mrf.mxu0
  %v3348 = vadd.f32 0.0, %v3347
  %v3349 = vpop.f32.mrf.mxu0
  %v3350 = vadd.f32 0.0, %v3349
  %3351 = vmatmul.bf16.gmra.mxu0 %v3266
  %v3352 = vpop.f32.mrf.mxu0
  %v3353 = vadd.f32 0.0, %v3352
  %v3354 = vpop.f32.mrf.mxu0
  %v3355 = vadd.f32 0.0, %v3354
  %3356 = vdwg.mxu0
  %v3357 = vadd.f32 %v3140, %v3278
  %v3358 = vadd.f32 %v3141, %v3280
  %v3359 = vadd.f32 %v3142, %v3283
  %v3360 = vadd.f32 %v3143, %v3285
  %v3361 = vadd.f32 %v3144, %v3288
  %v3362 = vadd.f32 %v3145, %v3290
  %v3363 = vadd.f32 %v3146, %v3293
  %v3364 = vadd.f32 %v3147, %v3295
  %v3365 = vadd.f32 %v3148, %v3298
  %v3366 = vadd.f32 %v3149, %v3300
  %v3367 = vadd.f32 %v3150, %v3303
  %v3368 = vadd.f32 %v3151, %v3305
  %v3369 = vadd.f32 %v3152, %v3308
  %v3370 = vadd.f32 %v3153, %v3310
  %v3371 = vadd.f32 %v3154, %v3313
  %v3372 = vadd.f32 %v3155, %v3315
  %v3373 = vadd.f32 %v3156, %v3318
  %v3374 = vadd.f32 %v3157, %v3320
  %v3375 = vadd.f32 %v3158, %v3323
  %v3376 = vadd.f32 %v3159, %v3325
  %v3377 = vadd.f32 %v3160, %v3328
  %v3378 = vadd.f32 %v3161, %v3330
  %v3379 = vadd.f32 %v3162, %v3333
  %v3380 = vadd.f32 %v3163, %v3335
  %v3381 = vadd.f32 %v3164, %v3338
  %v3382 = vadd.f32 %v3165, %v3340
  %v3383 = vadd.f32 %v3166, %v3343
  %v3384 = vadd.f32 %v3167, %v3345
  %v3385 = vadd.f32 %v3168, %v3348
  %v3386 = vadd.f32 %v3169, %v3350
  %v3387 = vadd.f32 %v3170, %v3353
  %v3388 = vadd.f32 %v3171, %v3355
  %v3389 = vpack.c.bf16 0.0, %v1680
  %v3391 = vshll.u32 %v3389, 16
  %v3393 = vrot.slane %v3391, 1
  %v3394 = vsel %vm218, %v2770, %v3393
  %v3395 = vshrl.u32 %v3389, 16
  %v3397 = vor.u32 %v3395, %v3393
  %v3398 = vsel %vm218, %v3397, %v528
  %v3400 = vsel %vm243, %v3394, 0
  %v3403 = vsel %vm243, %v3398, 0
  %3405 = vmatpush.bf16.msra.mxu0 0
  %3406 = vmatpush.bf16.msra.mxu0 0
  %3407 = vmatpush.bf16.msra.mxu0 0
  %3408 = vmatpush.bf16.msra.mxu0 0
  %3409 = vmatpush.bf16.msra.mxu0 0
  %3410 = vmatpush.bf16.msra.mxu0 0
  %3411 = vmatpush.bf16.msra.mxu0 %v539
  %3412 = vmatpush.bf16.msra.mxu0 %v538
  %3413 = vmatmul.bf16.gmra.mxu0 %v1880
  %v3414 = vpop.f32.mrf.mxu0
  %v3415 = vadd.f32 0.0, %v3414
  %v3416 = vpop.f32.mrf.mxu0
  %v3417 = vadd.f32 0.0, %v3416
  %3418 = vmatmul.bf16.gmra.mxu0 %v1883
  %v3419 = vpop.f32.mrf.mxu0
  %v3420 = vadd.f32 0.0, %v3419
  %v3421 = vpop.f32.mrf.mxu0
  %v3422 = vadd.f32 0.0, %v3421
  %3423 = vmatmul.bf16.gmra.mxu0 %v1886
  %v3424 = vpop.f32.mrf.mxu0
  %v3425 = vadd.f32 0.0, %v3424
  %v3426 = vpop.f32.mrf.mxu0
  %v3427 = vadd.f32 0.0, %v3426
  %3428 = vmatmul.bf16.gmra.mxu0 %v1889
  %v3429 = vpop.f32.mrf.mxu0
  %v3430 = vadd.f32 0.0, %v3429
  %v3431 = vpop.f32.mrf.mxu0
  %v3432 = vadd.f32 0.0, %v3431
  %3433 = vmatmul.bf16.gmra.mxu0 %v1892
  %v3434 = vpop.f32.mrf.mxu0
  %v3435 = vadd.f32 0.0, %v3434
  %v3436 = vpop.f32.mrf.mxu0
  %v3437 = vadd.f32 0.0, %v3436
  %3438 = vmatmul.bf16.gmra.mxu0 %v1895
  %v3439 = vpop.f32.mrf.mxu0
  %v3440 = vadd.f32 0.0, %v3439
  %v3441 = vpop.f32.mrf.mxu0
  %v3442 = vadd.f32 0.0, %v3441
  %3443 = vmatmul.bf16.gmra.mxu0 %v1898
  %v3444 = vpop.f32.mrf.mxu0
  %v3445 = vadd.f32 0.0, %v3444
  %v3446 = vpop.f32.mrf.mxu0
  %v3447 = vadd.f32 0.0, %v3446
  %3448 = vmatmul.bf16.gmra.mxu0 %v1901
  %v3449 = vpop.f32.mrf.mxu0
  %v3450 = vadd.f32 0.0, %v3449
  %v3451 = vpop.f32.mrf.mxu0
  %v3452 = vadd.f32 0.0, %v3451
  %3453 = vmatmul.bf16.gmra.mxu0 %v1904
  %v3454 = vpop.f32.mrf.mxu0
  %v3455 = vadd.f32 0.0, %v3454
  %v3456 = vpop.f32.mrf.mxu0
  %v3457 = vadd.f32 0.0, %v3456
  %3458 = vmatmul.bf16.gmra.mxu0 %v1907
  %v3459 = vpop.f32.mrf.mxu0
  %v3460 = vadd.f32 0.0, %v3459
  %v3461 = vpop.f32.mrf.mxu0
  %v3462 = vadd.f32 0.0, %v3461
  %3463 = vmatmul.bf16.gmra.mxu0 %v1910
  %v3464 = vpop.f32.mrf.mxu0
  %v3465 = vadd.f32 0.0, %v3464
  %v3466 = vpop.f32.mrf.mxu0
  %v3467 = vadd.f32 0.0, %v3466
  %3468 = vmatmul.bf16.gmra.mxu0 %v1913
  %v3469 = vpop.f32.mrf.mxu0
  %v3470 = vadd.f32 0.0, %v3469
  %v3471 = vpop.f32.mrf.mxu0
  %v3472 = vadd.f32 0.0, %v3471
  %3473 = vmatmul.bf16.gmra.mxu0 %v1916
  %v3474 = vpop.f32.mrf.mxu0
  %v3475 = vadd.f32 0.0, %v3474
  %v3476 = vpop.f32.mrf.mxu0
  %v3477 = vadd.f32 0.0, %v3476
  %3478 = vmatmul.bf16.gmra.mxu0 %v2777
  %v3479 = vpop.f32.mrf.mxu0
  %v3480 = vadd.f32 0.0, %v3479
  %v3481 = vpop.f32.mrf.mxu0
  %v3482 = vadd.f32 0.0, %v3481
  %3483 = vmatmul.bf16.gmra.mxu0 %v3400
  %v3484 = vpop.f32.mrf.mxu0
  %v3485 = vadd.f32 0.0, %v3484
  %v3486 = vpop.f32.mrf.mxu0
  %v3487 = vadd.f32 0.0, %v3486
  %3488 = vmatmul.bf16.gmra.mxu0 %v3403
  %v3489 = vpop.f32.mrf.mxu0
  %v3490 = vadd.f32 0.0, %v3489
  %v3491 = vpop.f32.mrf.mxu0
  %v3492 = vadd.f32 0.0, %v3491
  %3493 = vdwg.mxu0
  %v3494 = vadd.f32 %v3357, %v3415
  %v3495 = vadd.f32 %v3358, %v3417
  %v3496 = vadd.f32 %v3359, %v3420
  %v3497 = vadd.f32 %v3360, %v3422
  %v3498 = vadd.f32 %v3361, %v3425
  %v3499 = vadd.f32 %v3362, %v3427
  %v3500 = vadd.f32 %v3363, %v3430
  %v3501 = vadd.f32 %v3364, %v3432
  %v3502 = vadd.f32 %v3365, %v3435
  %v3503 = vadd.f32 %v3366, %v3437
  %v3504 = vadd.f32 %v3367, %v3440
  %v3505 = vadd.f32 %v3368, %v3442
  %v3506 = vadd.f32 %v3369, %v3445
  %v3507 = vadd.f32 %v3370, %v3447
  %v3508 = vadd.f32 %v3371, %v3450
  %v3509 = vadd.f32 %v3372, %v3452
  %v3510 = vadd.f32 %v3373, %v3455
  %v3511 = vadd.f32 %v3374, %v3457
  %v3512 = vadd.f32 %v3375, %v3460
  %v3513 = vadd.f32 %v3376, %v3462
  %v3514 = vadd.f32 %v3377, %v3465
  %v3515 = vadd.f32 %v3378, %v3467
  %v3516 = vadd.f32 %v3379, %v3470
  %v3517 = vadd.f32 %v3380, %v3472
  %v3518 = vadd.f32 %v3381, %v3475
  %v3519 = vadd.f32 %v3382, %v3477
  %v3520 = vadd.f32 %v3383, %v3480
  %v3521 = vadd.f32 %v3384, %v3482
  %v3522 = vadd.f32 %v3385, %v3485
  %v3523 = vadd.f32 %v3386, %v3487
  %v3524 = vadd.f32 %v3387, %v3490
  %v3525 = vadd.f32 %v3388, %v3492
  %v3526 = vmul.f32 %v1587, %v2179
  %v3527 = vmul.f32 %v1589, %v2181
  %v3528 = vmul.f32 %v1591, %v2183
  %v3529 = vmul.f32 %v1593, %v2185
  %v3530 = vmul.f32 %v1595, %v2187
  %v3531 = vmul.f32 %v1597, %v2189
  %v3532 = vmul.f32 %v1599, %v2191
  %v3533 = vmul.f32 %v1601, %v2193
  %v3534 = vmul.f32 %v1603, %v2195
  %v3535 = vmul.f32 %v1605, %v2197
  %v3536 = vmul.f32 %v1607, %v2199
  %v3537 = vmul.f32 %v1609, %v2201
  %v3538 = vmul.f32 %v1611, %v2203
  %v3539 = vmul.f32 %v1613, %v2205
  %v3540 = vmul.f32 %v1615, %v2207
  %v3541 = vmul.f32 %v1617, %v2209
  %v3542 = vmul.f32 %v1619, %v2211
  %v3543 = vmul.f32 %v1621, %v2213
  %v3544 = vmul.f32 %v1623, %v2215
  %v3545 = vmul.f32 %v1625, %v2217
  %v3546 = vmul.f32 %v1627, %v2219
  %v3547 = vmul.f32 %v1629, %v2221
  %v3548 = vmul.f32 %v1631, %v2223
  %v3549 = vmul.f32 %v1633, %v2225
  %v3550 = vmul.f32 %v1635, %v2227
  %v3551 = vmul.f32 %v1637, %v2229
  %v3552 = vmul.f32 %v1639, %v2231
  %v3553 = vmul.f32 %v1641, %v2233
  %v3554 = vmul.f32 %v1643, %v2235
  %v3555 = vmul.f32 %v1645, %v2237
  %v3556 = vmul.f32 %v1680, %v2239
  %v3557 = vmul.f32 %v2241, 0.0
  %v3558 = vmul.f32 %v2240, 0.0
  %v3559 = vpack.c.bf16 %v3527, %v3526
  %v3560 = vpack.c.bf16 %v3529, %v3528
  %v3561 = vpack.c.bf16 %v3531, %v3530
  %v3562 = vpack.c.bf16 %v3533, %v3532
  %v3563 = vpack.c.bf16 %v3535, %v3534
  %v3564 = vpack.c.bf16 %v3537, %v3536
  %v3565 = vpack.c.bf16 %v3539, %v3538
  %v3566 = vpack.c.bf16 %v3541, %v3540
  %v3567 = vpack.c.bf16 %v3543, %v3542
  %v3568 = vpack.c.bf16 %v3545, %v3544
  %v3569 = vpack.c.bf16 %v3547, %v3546
  %v3570 = vpack.c.bf16 %v3549, %v3548
  %v3571 = vpack.c.bf16 %v3551, %v3550
  %v3572 = vpack.c.bf16 %v3553, %v3552
  %v3573 = vpack.c.bf16 %v3555, %v3554
  %v3574 = vpack.c.bf16 %v3557, %v3556
  %v3575 = vpack.c.bf16 %v3558, %v3558
  %v3593 = vrot.slane %v3559, 1
  %v3594 = vrot.slane %v3560, 1
  %v3595 = vsel %vm306, %v3593, %v3594
  %v3596 = vrot.slane %v3561, 1
  %v3597 = vsel %vm306, %v3594, %v3596
  %v3598 = vrot.slane %v3562, 1
  %v3599 = vsel %vm306, %v3596, %v3598
  %v3600 = vrot.slane %v3563, 1
  %v3601 = vsel %vm306, %v3598, %v3600
  %v3602 = vrot.slane %v3564, 1
  %v3603 = vsel %vm306, %v3600, %v3602
  %v3604 = vrot.slane %v3565, 1
  %v3605 = vsel %vm306, %v3602, %v3604
  %v3606 = vrot.slane %v3566, 1
  %v3607 = vsel %vm306, %v3604, %v3606
  %v3608 = vrot.slane %v3567, 1
  %v3609 = vsel %vm306, %v3606, %v3608
  %v3610 = vrot.slane %v3568, 1
  %v3611 = vsel %vm306, %v3608, %v3610
  %v3612 = vrot.slane %v3569, 1
  %v3613 = vsel %vm306, %v3610, %v3612
  %v3614 = vrot.slane %v3570, 1
  %v3615 = vsel %vm306, %v3612, %v3614
  %v3616 = vrot.slane %v3571, 1
  %v3617 = vsel %vm306, %v3614, %v3616
  %v3618 = vrot.slane %v3572, 1
  %v3619 = vsel %vm306, %v3616, %v3618
  %v3620 = vrot.slane %v3573, 1
  %v3621 = vsel %vm306, %v3618, %v3620
  %v3622 = vrot.slane %v3574, 1
  %v3623 = vsel %vm306, %v3620, %v3622
  %v3624 = vrot.slane %v3575, 1
  %v3625 = vsel %vm306, %v3622, %v3624
  %v3627 = vsel %vm243, %v3595, 0
  %v3630 = vsel %vm243, %v3597, 0
  %v3633 = vsel %vm243, %v3599, 0
  %v3636 = vsel %vm243, %v3601, 0
  %v3639 = vsel %vm243, %v3603, 0
  %v3642 = vsel %vm243, %v3605, 0
  %v3645 = vsel %vm243, %v3607, 0
  %v3648 = vsel %vm243, %v3609, 0
  %v3651 = vsel %vm243, %v3611, 0
  %v3654 = vsel %vm243, %v3613, 0
  %v3657 = vsel %vm243, %v3615, 0
  %v3660 = vsel %vm243, %v3617, 0
  %v3663 = vsel %vm243, %v3619, 0
  %v3666 = vsel %vm243, %v3621, 0
  %v3669 = vsel %vm243, %v3623, 0
  %v3672 = vsel %vm243, %v3625, 0
  %3674 = vmatpush.bf16.msra.mxu0 0
  %3675 = vmatpush.bf16.msra.mxu0 0
  %3676 = vmatpush.bf16.msra.mxu0 0
  %3677 = vmatpush.bf16.msra.mxu0 0
  %3678 = vmatpush.bf16.msra.mxu0 0
  %3679 = vmatpush.bf16.msra.mxu0 0
  %3680 = vmatpush.bf16.msra.mxu0 %v580
  %3681 = vmatpush.bf16.msra.mxu0 %v579
  %3682 = vmatmul.bf16.gmra.mxu0 %v3627
  %v3683 = vpop.f32.mrf.mxu0
  %v3684 = vadd.f32 0.0, %v3683
  %v3685 = vpop.f32.mrf.mxu0
  %v3686 = vadd.f32 0.0, %v3685
  %3687 = vmatmul.bf16.gmra.mxu0 %v3630
  %v3688 = vpop.f32.mrf.mxu0
  %v3689 = vadd.f32 0.0, %v3688
  %v3690 = vpop.f32.mrf.mxu0
  %v3691 = vadd.f32 0.0, %v3690
  %3692 = vmatmul.bf16.gmra.mxu0 %v3633
  %v3693 = vpop.f32.mrf.mxu0
  %v3694 = vadd.f32 0.0, %v3693
  %v3695 = vpop.f32.mrf.mxu0
  %v3696 = vadd.f32 0.0, %v3695
  %3697 = vmatmul.bf16.gmra.mxu0 %v3636
  %v3698 = vpop.f32.mrf.mxu0
  %v3699 = vadd.f32 0.0, %v3698
  %v3700 = vpop.f32.mrf.mxu0
  %v3701 = vadd.f32 0.0, %v3700
  %3702 = vmatmul.bf16.gmra.mxu0 %v3639
  %v3703 = vpop.f32.mrf.mxu0
  %v3704 = vadd.f32 0.0, %v3703
  %v3705 = vpop.f32.mrf.mxu0
  %v3706 = vadd.f32 0.0, %v3705
  %3707 = vmatmul.bf16.gmra.mxu0 %v3642
  %v3708 = vpop.f32.mrf.mxu0
  %v3709 = vadd.f32 0.0, %v3708
  %v3710 = vpop.f32.mrf.mxu0
  %v3711 = vadd.f32 0.0, %v3710
  %3712 = vmatmul.bf16.gmra.mxu0 %v3645
  %v3713 = vpop.f32.mrf.mxu0
  %v3714 = vadd.f32 0.0, %v3713
  %v3715 = vpop.f32.mrf.mxu0
  %v3716 = vadd.f32 0.0, %v3715
  %3717 = vmatmul.bf16.gmra.mxu0 %v3648
  %v3718 = vpop.f32.mrf.mxu0
  %v3719 = vadd.f32 0.0, %v3718
  %v3720 = vpop.f32.mrf.mxu0
  %v3721 = vadd.f32 0.0, %v3720
  %3722 = vmatmul.bf16.gmra.mxu0 %v3651
  %v3723 = vpop.f32.mrf.mxu0
  %v3724 = vadd.f32 0.0, %v3723
  %v3725 = vpop.f32.mrf.mxu0
  %v3726 = vadd.f32 0.0, %v3725
  %3727 = vmatmul.bf16.gmra.mxu0 %v3654
  %v3728 = vpop.f32.mrf.mxu0
  %v3729 = vadd.f32 0.0, %v3728
  %v3730 = vpop.f32.mrf.mxu0
  %v3731 = vadd.f32 0.0, %v3730
  %3732 = vmatmul.bf16.gmra.mxu0 %v3657
  %v3733 = vpop.f32.mrf.mxu0
  %v3734 = vadd.f32 0.0, %v3733
  %v3735 = vpop.f32.mrf.mxu0
  %v3736 = vadd.f32 0.0, %v3735
  %3737 = vmatmul.bf16.gmra.mxu0 %v3660
  %v3738 = vpop.f32.mrf.mxu0
  %v3739 = vadd.f32 0.0, %v3738
  %v3740 = vpop.f32.mrf.mxu0
  %v3741 = vadd.f32 0.0, %v3740
  %3742 = vmatmul.bf16.gmra.mxu0 %v3663
  %v3743 = vpop.f32.mrf.mxu0
  %v3744 = vadd.f32 0.0, %v3743
  %v3745 = vpop.f32.mrf.mxu0
  %v3746 = vadd.f32 0.0, %v3745
  %3747 = vmatmul.bf16.gmra.mxu0 %v3666
  %v3748 = vpop.f32.mrf.mxu0
  %v3749 = vadd.f32 0.0, %v3748
  %v3750 = vpop.f32.mrf.mxu0
  %v3751 = vadd.f32 0.0, %v3750
  %3752 = vmatmul.bf16.gmra.mxu0 %v3669
  %v3753 = vpop.f32.mrf.mxu0
  %v3754 = vadd.f32 0.0, %v3753
  %v3755 = vpop.f32.mrf.mxu0
  %v3756 = vadd.f32 0.0, %v3755
  %3757 = vmatmul.bf16.gmra.mxu0 %v3672
  %v3758 = vpop.f32.mrf.mxu0
  %v3759 = vadd.f32 0.0, %v3758
  %v3760 = vpop.f32.mrf.mxu0
  %v3761 = vadd.f32 0.0, %v3760
  %3762 = vdwg.mxu0
  %v3763 = vadd.f32 %v3494, %v3684
  %v3764 = vadd.f32 %v3495, %v3686
  %v3765 = vadd.f32 %v3496, %v3689
  %v3766 = vadd.f32 %v3497, %v3691
  %v3767 = vadd.f32 %v3498, %v3694
  %v3768 = vadd.f32 %v3499, %v3696
  %v3769 = vadd.f32 %v3500, %v3699
  %v3770 = vadd.f32 %v3501, %v3701
  %v3771 = vadd.f32 %v3502, %v3704
  %v3772 = vadd.f32 %v3503, %v3706
  %v3773 = vadd.f32 %v3504, %v3709
  %v3774 = vadd.f32 %v3505, %v3711
  %v3775 = vadd.f32 %v3506, %v3714
  %v3776 = vadd.f32 %v3507, %v3716
  %v3777 = vadd.f32 %v3508, %v3719
  %v3778 = vadd.f32 %v3509, %v3721
  %v3779 = vadd.f32 %v3510, %v3724
  %v3780 = vadd.f32 %v3511, %v3726
  %v3781 = vadd.f32 %v3512, %v3729
  %v3782 = vadd.f32 %v3513, %v3731
  %v3783 = vadd.f32 %v3514, %v3734
  %v3784 = vadd.f32 %v3515, %v3736
  %v3785 = vadd.f32 %v3516, %v3739
  %v3786 = vadd.f32 %v3517, %v3741
  %v3787 = vadd.f32 %v3518, %v3744
  %v3788 = vadd.f32 %v3519, %v3746
  %v3789 = vadd.f32 %v3520, %v3749
  %v3790 = vadd.f32 %v3521, %v3751
  %v3791 = vadd.f32 %v3522, %v3754
  %v3792 = vadd.f32 %v3523, %v3756
  %v3793 = vadd.f32 %v3524, %v3759
  %v3794 = vadd.f32 %v3525, %v3761
  %v3795 = vadd.f32 %v3763, %v603
  %v3796 = vadd.f32 %v3764, %v603
  %v3797 = vadd.f32 %v3765, %v603
  %v3798 = vadd.f32 %v3766, %v603
  %v3799 = vadd.f32 %v3767, %v603
  %v3800 = vadd.f32 %v3768, %v603
  %v3801 = vadd.f32 %v3769, %v603
  %v3802 = vadd.f32 %v3770, %v603
  %v3803 = vadd.f32 %v3771, %v603
  %v3804 = vadd.f32 %v3772, %v603
  %v3805 = vadd.f32 %v3773, %v603
  %v3806 = vadd.f32 %v3774, %v603
  %v3807 = vadd.f32 %v3775, %v603
  %v3808 = vadd.f32 %v3776, %v603
  %v3809 = vadd.f32 %v3777, %v603
  %v3810 = vadd.f32 %v3778, %v603
  %v3811 = vadd.f32 %v3779, %v603
  %v3812 = vadd.f32 %v3780, %v603
  %v3813 = vadd.f32 %v3781, %v603
  %v3814 = vadd.f32 %v3782, %v603
  %v3815 = vadd.f32 %v3783, %v603
  %v3816 = vadd.f32 %v3784, %v603
  %v3817 = vadd.f32 %v3785, %v603
  %v3818 = vadd.f32 %v3786, %v603
  %v3819 = vadd.f32 %v3787, %v603
  %v3820 = vadd.f32 %v3788, %v603
  %v3821 = vadd.f32 %v3789, %v603
  %v3822 = vadd.f32 %v3790, %v603
  %v3823 = vadd.f32 %v3791, %v603
  %v3824 = vadd.f32 %v3792, %v603
  %v3825 = vadd.f32 %v3793, %v603
  %v3826 = vadd.f32 %v3794, %v603
  %v3827 = vmax.f32 %v3795, 0.0
  %v3828 = vmax.f32 %v3796, 0.0
  %v3829 = vmax.f32 %v3797, 0.0
  %v3830 = vmax.f32 %v3798, 0.0
  %v3831 = vmax.f32 %v3799, 0.0
  %v3832 = vmax.f32 %v3800, 0.0
  %v3833 = vmax.f32 %v3801, 0.0
  %v3834 = vmax.f32 %v3802, 0.0
  %v3835 = vmax.f32 %v3803, 0.0
  %v3836 = vmax.f32 %v3804, 0.0
  %v3837 = vmax.f32 %v3805, 0.0
  %v3838 = vmax.f32 %v3806, 0.0
  %v3839 = vmax.f32 %v3807, 0.0
  %v3840 = vmax.f32 %v3808, 0.0
  %v3841 = vmax.f32 %v3809, 0.0
  %v3842 = vmax.f32 %v3810, 0.0
  %v3843 = vmax.f32 %v3811, 0.0
  %v3844 = vmax.f32 %v3812, 0.0
  %v3845 = vmax.f32 %v3813, 0.0
  %v3846 = vmax.f32 %v3814, 0.0
  %v3847 = vmax.f32 %v3815, 0.0
  %v3848 = vmax.f32 %v3816, 0.0
  %v3849 = vmax.f32 %v3817, 0.0
  %v3850 = vmax.f32 %v3818, 0.0
  %v3851 = vmax.f32 %v3819, 0.0
  %v3852 = vmax.f32 %v3820, 0.0
  %v3853 = vmax.f32 %v3821, 0.0
  %v3854 = vmax.f32 %v3822, 0.0
  %v3855 = vmax.f32 %v3823, 0.0
  %v3856 = vmax.f32 %v3824, 0.0
  %v3857 = vmax.f32 %v3825, 0.0
  %v3858 = vmax.f32 %v3826, 0.0
  %v3859 = vpack.c.bf16 %v3828, %v3827
  %v3860 = vpack.c.bf16 %v3830, %v3829
  %v3861 = vpack.c.bf16 %v3832, %v3831
  %v3862 = vpack.c.bf16 %v3834, %v3833
  %v3863 = vpack.c.bf16 %v3836, %v3835
  %v3864 = vpack.c.bf16 %v3838, %v3837
  %v3865 = vpack.c.bf16 %v3840, %v3839
  %v3866 = vpack.c.bf16 %v3842, %v3841
  %v3867 = vpack.c.bf16 %v3844, %v3843
  %v3868 = vpack.c.bf16 %v3846, %v3845
  %v3869 = vpack.c.bf16 %v3848, %v3847
  %v3870 = vpack.c.bf16 %v3850, %v3849
  %v3871 = vpack.c.bf16 %v3852, %v3851
  %v3872 = vpack.c.bf16 %v3854, %v3853
  %v3873 = vpack.c.bf16 %v3856, %v3855
  %v3874 = vpack.c.bf16 %v3858, %v3857
  %v3876 = vperm.slane %v694, 0
  %v3886 = vunpack.c.l.b16 %v686
  %v3887 = vunpack.c.l.b16 %v687
  %v3888 = vunpack.c.l.b16 %v688
  %v3889 = vunpack.c.l.b16 %v689
  %v3890 = vunpack.c.l.b16 %v690
  %v3891 = vunpack.c.l.b16 %v691
  %v3892 = vunpack.c.l.b16 %v692
  %v3893 = vunpack.c.l.b16 %v693
  %v3894 = vpack.c.b16 %v3887, %v3886
  %v3895 = vpack.c.b16 %v3889, %v3888
  %v3896 = vpack.c.b16 %v3891, %v3890
  %v3897 = vpack.c.b16 %v3893, %v3892
  %v3903 = vsel %vm143, %v3859, 0
  %v3906 = vsel %vm143, %v3860, 0
  %v3909 = vsel %vm143, %v3861, 0
  %v3912 = vsel %vm143, %v3862, 0
  %v3915 = vsel %vm143, %v3863, 0
  %v3918 = vsel %vm143, %v3864, 0
  %v3921 = vsel %vm143, %v3865, 0
  %v3924 = vsel %vm143, %v3866, 0
  %v3927 = vsel %vm143, %v3867, 0
  %v3930 = vsel %vm143, %v3868, 0
  %v3933 = vsel %vm143, %v3869, 0
  %v3936 = vsel %vm143, %v3870, 0
  %v3939 = vsel %vm143, %v3871, 0
  %v3942 = vsel %vm143, %v3872, 0
  %v3945 = vsel %vm143, %v3873, 0
  %v3948 = vsel %vm143, %v3874, 0
  %3950 = vmatpush.bf16.msra.mxu0 0
  %3951 = vmatpush.bf16.msra.mxu0 0
  %3952 = vmatpush.bf16.msra.mxu0 0
  %3953 = vmatpush.bf16.msra.mxu0 0
  %3954 = vmatpush.bf16.msra.mxu0 %v3897
  %3955 = vmatpush.bf16.msra.mxu0 %v3896
  %3956 = vmatpush.bf16.msra.mxu0 %v3895
  %3957 = vmatpush.bf16.msra.mxu0 %v3894
  %3958 = vmatmul.bf16.gmra.mxu0 %v3903
  %v3959 = vpop.f32.mrf.mxu0
  %v3960 = vadd.f32 %v3876, %v3959
  %v3961 = vpop.f32.mrf.mxu0
  %v3962 = vadd.f32 %v3876, %v3961
  %3963 = vmatmul.bf16.gmra.mxu0 %v3906
  %v3964 = vpop.f32.mrf.mxu0
  %v3965 = vadd.f32 %v3876, %v3964
  %v3966 = vpop.f32.mrf.mxu0
  %v3967 = vadd.f32 %v3876, %v3966
  %3968 = vmatmul.bf16.gmra.mxu0 %v3909
  %v3969 = vpop.f32.mrf.mxu0
  %v3970 = vadd.f32 %v3876, %v3969
  %v3971 = vpop.f32.mrf.mxu0
  %v3972 = vadd.f32 %v3876, %v3971
  %3973 = vmatmul.bf16.gmra.mxu0 %v3912
  %v3974 = vpop.f32.mrf.mxu0
  %v3975 = vadd.f32 %v3876, %v3974
  %v3976 = vpop.f32.mrf.mxu0
  %v3977 = vadd.f32 %v3876, %v3976
  %3978 = vmatmul.bf16.gmra.mxu0 %v3915
  %v3979 = vpop.f32.mrf.mxu0
  %v3980 = vadd.f32 %v3876, %v3979
  %v3981 = vpop.f32.mrf.mxu0
  %v3982 = vadd.f32 %v3876, %v3981
  %3983 = vmatmul.bf16.gmra.mxu0 %v3918
  %v3984 = vpop.f32.mrf.mxu0
  %v3985 = vadd.f32 %v3876, %v3984
  %v3986 = vpop.f32.mrf.mxu0
  %v3987 = vadd.f32 %v3876, %v3986
  %3988 = vmatmul.bf16.gmra.mxu0 %v3921
  %v3989 = vpop.f32.mrf.mxu0
  %v3990 = vadd.f32 %v3876, %v3989
  %v3991 = vpop.f32.mrf.mxu0
  %v3992 = vadd.f32 %v3876, %v3991
  %3993 = vmatmul.bf16.gmra.mxu0 %v3924
  %v3994 = vpop.f32.mrf.mxu0
  %v3995 = vadd.f32 %v3876, %v3994
  %v3996 = vpop.f32.mrf.mxu0
  %v3997 = vadd.f32 %v3876, %v3996
  %3998 = vmatmul.bf16.gmra.mxu0 %v3927
  %v3999 = vpop.f32.mrf.mxu0
  %v4000 = vadd.f32 %v3876, %v3999
  %v4001 = vpop.f32.mrf.mxu0
  %v4002 = vadd.f32 %v3876, %v4001
  %4003 = vmatmul.bf16.gmra.mxu0 %v3930
  %v4004 = vpop.f32.mrf.mxu0
  %v4005 = vadd.f32 %v3876, %v4004
  %v4006 = vpop.f32.mrf.mxu0
  %v4007 = vadd.f32 %v3876, %v4006
  %4008 = vmatmul.bf16.gmra.mxu0 %v3933
  %v4009 = vpop.f32.mrf.mxu0
  %v4010 = vadd.f32 %v3876, %v4009
  %v4011 = vpop.f32.mrf.mxu0
  %v4012 = vadd.f32 %v3876, %v4011
  %4013 = vmatmul.bf16.gmra.mxu0 %v3936
  %v4014 = vpop.f32.mrf.mxu0
  %v4015 = vadd.f32 %v3876, %v4014
  %v4016 = vpop.f32.mrf.mxu0
  %v4017 = vadd.f32 %v3876, %v4016
  %4018 = vmatmul.bf16.gmra.mxu0 %v3939
  %v4019 = vpop.f32.mrf.mxu0
  %v4020 = vadd.f32 %v3876, %v4019
  %v4021 = vpop.f32.mrf.mxu0
  %v4022 = vadd.f32 %v3876, %v4021
  %4023 = vmatmul.bf16.gmra.mxu0 %v3942
  %v4024 = vpop.f32.mrf.mxu0
  %v4025 = vadd.f32 %v3876, %v4024
  %v4026 = vpop.f32.mrf.mxu0
  %v4027 = vadd.f32 %v3876, %v4026
  %4028 = vmatmul.bf16.gmra.mxu0 %v3945
  %v4029 = vpop.f32.mrf.mxu0
  %v4030 = vadd.f32 %v3876, %v4029
  %v4031 = vpop.f32.mrf.mxu0
  %v4032 = vadd.f32 %v3876, %v4031
  %4033 = vmatmul.bf16.gmra.mxu0 %v3948
  %v4034 = vpop.f32.mrf.mxu0
  %v4035 = vadd.f32 %v3876, %v4034
  %v4036 = vpop.f32.mrf.mxu0
  %v4037 = vadd.f32 %v3876, %v4036
  %4038 = vdwg.mxu0
  %v4039 = vperm.slane %v650, 0
  %v4040 = vmul.f32 %v3960, %v4039
  %v4041 = vmul.f32 %v3962, %v4039
  %v4042 = vmul.f32 %v3965, %v4039
  %v4043 = vmul.f32 %v3967, %v4039
  %v4044 = vmul.f32 %v3970, %v4039
  %v4045 = vmul.f32 %v3972, %v4039
  %v4046 = vmul.f32 %v3975, %v4039
  %v4047 = vmul.f32 %v3977, %v4039
  %v4048 = vmul.f32 %v3980, %v4039
  %v4049 = vmul.f32 %v3982, %v4039
  %v4050 = vmul.f32 %v3985, %v4039
  %v4051 = vmul.f32 %v3987, %v4039
  %v4052 = vmul.f32 %v3990, %v4039
  %v4053 = vmul.f32 %v3992, %v4039
  %v4054 = vmul.f32 %v3995, %v4039
  %v4055 = vmul.f32 %v3997, %v4039
  %v4056 = vmul.f32 %v4000, %v4039
  %v4057 = vmul.f32 %v4002, %v4039
  %v4058 = vmul.f32 %v4005, %v4039
  %v4059 = vmul.f32 %v4007, %v4039
  %v4060 = vmul.f32 %v4010, %v4039
  %v4061 = vmul.f32 %v4012, %v4039
  %v4062 = vmul.f32 %v4015, %v4039
  %v4063 = vmul.f32 %v4017, %v4039
  %v4064 = vmul.f32 %v4020, %v4039
  %v4065 = vmul.f32 %v4022, %v4039
  %v4066 = vadd.f32 %v4040, 0.0
  %v4067 = vadd.f32 %v4041, 0.0
  %v4068 = vadd.f32 %v4042, 0.0
  %v4069 = vadd.f32 %v4043, 0.0
  %v4070 = vadd.f32 %v4044, 0.0
  %v4071 = vadd.f32 %v4045, 0.0
  %v4072 = vadd.f32 %v4046, 0.0
  %v4073 = vadd.f32 %v4047, 0.0
  %v4074 = vadd.f32 %v4048, 0.0
  %v4075 = vadd.f32 %v4049, 0.0
  %v4076 = vadd.f32 %v4050, 0.0
  %v4077 = vadd.f32 %v4051, 0.0
  %v4078 = vadd.f32 %v4052, 0.0
  %v4079 = vadd.f32 %v4053, 0.0
  %v4080 = vadd.f32 %v4054, 0.0
  %v4081 = vadd.f32 %v4055, 0.0
  %v4082 = vadd.f32 %v4056, 0.0
  %v4083 = vadd.f32 %v4057, 0.0
  %v4084 = vadd.f32 %v4058, 0.0
  %v4085 = vadd.f32 %v4059, 0.0
  %v4086 = vadd.f32 %v4060, 0.0
  %v4087 = vadd.f32 %v4061, 0.0
  %v4088 = vadd.f32 %v4062, 0.0
  %v4089 = vadd.f32 %v4063, 0.0
  %v4090 = vadd.f32 %v4064, 0.0
  %v4091 = vadd.f32 %v4065, 0.0
  %v4092 = vperm.slane %v650, 1
  %v4093 = vmul.f32 %v3960, %v4092
  %v4094 = vmul.f32 %v3962, %v4092
  %v4095 = vmul.f32 %v3965, %v4092
  %v4096 = vmul.f32 %v3967, %v4092
  %v4097 = vmul.f32 %v3970, %v4092
  %v4098 = vmul.f32 %v3972, %v4092
  %v4099 = vmul.f32 %v3975, %v4092
  %v4100 = vmul.f32 %v3977, %v4092
  %v4101 = vmul.f32 %v3980, %v4092
  %v4102 = vmul.f32 %v3982, %v4092
  %v4103 = vmul.f32 %v3985, %v4092
  %v4104 = vmul.f32 %v3987, %v4092
  %v4105 = vmul.f32 %v3990, %v4092
  %v4106 = vmul.f32 %v3992, %v4092
  %v4107 = vmul.f32 %v3995, %v4092
  %v4108 = vmul.f32 %v3997, %v4092
  %v4109 = vmul.f32 %v4000, %v4092
  %v4110 = vmul.f32 %v4002, %v4092
  %v4111 = vmul.f32 %v4005, %v4092
  %v4112 = vmul.f32 %v4007, %v4092
  %v4113 = vmul.f32 %v4010, %v4092
  %v4114 = vmul.f32 %v4012, %v4092
  %v4115 = vmul.f32 %v4015, %v4092
  %v4116 = vmul.f32 %v4017, %v4092
  %v4117 = vmul.f32 %v4020, %v4092
  %v4118 = vmul.f32 %v4022, %v4092
  %v4119 = vmul.f32 %v4025, %v4092
  %vm4147 = vcmask 1046528
  %v4148 = vrot.slane %v4093, 1
  %v4149 = vrot.slane %v4094, 1
  %v4150 = vsel %vm4147, %v4148, %v4149
  %v4151 = vrot.slane %v4095, 1
  %v4152 = vsel %vm4147, %v4149, %v4151
  %v4153 = vrot.slane %v4096, 1
  %v4154 = vsel %vm4147, %v4151, %v4153
  %v4155 = vrot.slane %v4097, 1
  %v4156 = vsel %vm4147, %v4153, %v4155
  %v4157 = vrot.slane %v4098, 1
  %v4158 = vsel %vm4147, %v4155, %v4157
  %v4159 = vrot.slane %v4099, 1
  %v4160 = vsel %vm4147, %v4157, %v4159
  %v4161 = vrot.slane %v4100, 1
  %v4162 = vsel %vm4147, %v4159, %v4161
  %v4163 = vrot.slane %v4101, 1
  %v4164 = vsel %vm4147, %v4161, %v4163
  %v4165 = vrot.slane %v4102, 1
  %v4166 = vsel %vm4147, %v4163, %v4165
  %v4167 = vrot.slane %v4103, 1
  %v4168 = vsel %vm4147, %v4165, %v4167
  %v4169 = vrot.slane %v4104, 1
  %v4170 = vsel %vm4147, %v4167, %v4169
  %v4171 = vrot.slane %v4105, 1
  %v4172 = vsel %vm4147, %v4169, %v4171
  %v4173 = vrot.slane %v4106, 1
  %v4174 = vsel %vm4147, %v4171, %v4173
  %v4175 = vrot.slane %v4107, 1
  %v4176 = vsel %vm4147, %v4173, %v4175
  %v4177 = vrot.slane %v4108, 1
  %v4178 = vsel %vm4147, %v4175, %v4177
  %v4179 = vrot.slane %v4109, 1
  %v4180 = vsel %vm4147, %v4177, %v4179
  %v4181 = vrot.slane %v4110, 1
  %v4182 = vsel %vm4147, %v4179, %v4181
  %v4183 = vrot.slane %v4111, 1
  %v4184 = vsel %vm4147, %v4181, %v4183
  %v4185 = vrot.slane %v4112, 1
  %v4186 = vsel %vm4147, %v4183, %v4185
  %v4187 = vrot.slane %v4113, 1
  %v4188 = vsel %vm4147, %v4185, %v4187
  %v4189 = vrot.slane %v4114, 1
  %v4190 = vsel %vm4147, %v4187, %v4189
  %v4191 = vrot.slane %v4115, 1
  %v4192 = vsel %vm4147, %v4189, %v4191
  %v4193 = vrot.slane %v4116, 1
  %v4194 = vsel %vm4147, %v4191, %v4193
  %v4195 = vrot.slane %v4117, 1
  %v4196 = vsel %vm4147, %v4193, %v4195
  %v4197 = vrot.slane %v4118, 1
  %v4198 = vsel %vm4147, %v4195, %v4197
  %v4199 = vrot.slane %v4119, 1
  %v4200 = vsel %vm4147, %v4197, %v4199
  %v4227 = vadd.f32 %v4066, %v4150
  %v4228 = vadd.f32 %v4067, %v4152
  %v4229 = vadd.f32 %v4068, %v4154
  %v4230 = vadd.f32 %v4069, %v4156
  %v4231 = vadd.f32 %v4070, %v4158
  %v4232 = vadd.f32 %v4071, %v4160
  %v4233 = vadd.f32 %v4072, %v4162
  %v4234 = vadd.f32 %v4073, %v4164
  %v4235 = vadd.f32 %v4074, %v4166
  %v4236 = vadd.f32 %v4075, %v4168
  %v4237 = vadd.f32 %v4076, %v4170
  %v4238 = vadd.f32 %v4077, %v4172
  %v4239 = vadd.f32 %v4078, %v4174
  %v4240 = vadd.f32 %v4079, %v4176
  %v4241 = vadd.f32 %v4080, %v4178
  %v4242 = vadd.f32 %v4081, %v4180
  %v4243 = vadd.f32 %v4082, %v4182
  %v4244 = vadd.f32 %v4083, %v4184
  %v4245 = vadd.f32 %v4084, %v4186
  %v4246 = vadd.f32 %v4085, %v4188
  %v4247 = vadd.f32 %v4086, %v4190
  %v4248 = vadd.f32 %v4087, %v4192
  %v4249 = vadd.f32 %v4088, %v4194
  %v4250 = vadd.f32 %v4089, %v4196
  %v4251 = vadd.f32 %v4090, %v4198
  %v4252 = vadd.f32 %v4091, %v4200
  %v4253 = vperm.slane %v650, 2
  %v4254 = vmul.f32 %v3960, %v4253
  %v4255 = vmul.f32 %v3962, %v4253
  %v4256 = vmul.f32 %v3965, %v4253
  %v4257 = vmul.f32 %v3967, %v4253
  %v4258 = vmul.f32 %v3970, %v4253
  %v4259 = vmul.f32 %v3972, %v4253
  %v4260 = vmul.f32 %v3975, %v4253
  %v4261 = vmul.f32 %v3977, %v4253
  %v4262 = vmul.f32 %v3980, %v4253
  %v4263 = vmul.f32 %v3982, %v4253
  %v4264 = vmul.f32 %v3985, %v4253
  %v4265 = vmul.f32 %v3987, %v4253
  %v4266 = vmul.f32 %v3990, %v4253
  %v4267 = vmul.f32 %v3992, %v4253
  %v4268 = vmul.f32 %v3995, %v4253
  %v4269 = vmul.f32 %v3997, %v4253
  %v4270 = vmul.f32 %v4000, %v4253
  %v4271 = vmul.f32 %v4002, %v4253
  %v4272 = vmul.f32 %v4005, %v4253
  %v4273 = vmul.f32 %v4007, %v4253
  %v4274 = vmul.f32 %v4010, %v4253
  %v4275 = vmul.f32 %v4012, %v4253
  %v4276 = vmul.f32 %v4015, %v4253
  %v4277 = vmul.f32 %v4017, %v4253
  %v4278 = vmul.f32 %v4020, %v4253
  %v4279 = vmul.f32 %v4022, %v4253
  %v4280 = vmul.f32 %v4025, %v4253
  %v4308 = vrot.slane %v4254, 2
  %v4309 = vrot.slane %v4255, 2
  %v4310 = vsel %vm433, %v4308, %v4309
  %v4311 = vrot.slane %v4256, 2
  %v4312 = vsel %vm433, %v4309, %v4311
  %v4313 = vrot.slane %v4257, 2
  %v4314 = vsel %vm433, %v4311, %v4313
  %v4315 = vrot.slane %v4258, 2
  %v4316 = vsel %vm433, %v4313, %v4315
  %v4317 = vrot.slane %v4259, 2
  %v4318 = vsel %vm433, %v4315, %v4317
  %v4319 = vrot.slane %v4260, 2
  %v4320 = vsel %vm433, %v4317, %v4319
  %v4321 = vrot.slane %v4261, 2
  %v4322 = vsel %vm433, %v4319, %v4321
  %v4323 = vrot.slane %v4262, 2
  %v4324 = vsel %vm433, %v4321, %v4323
  %v4325 = vrot.slane %v4263, 2
  %v4326 = vsel %vm433, %v4323, %v4325
  %v4327 = vrot.slane %v4264, 2
  %v4328 = vsel %vm433, %v4325, %v4327
  %v4329 = vrot.slane %v4265, 2
  %v4330 = vsel %vm433, %v4327, %v4329
  %v4331 = vrot.slane %v4266, 2
  %v4332 = vsel %vm433, %v4329, %v4331
  %v4333 = vrot.slane %v4267, 2
  %v4334 = vsel %vm433, %v4331, %v4333
  %v4335 = vrot.slane %v4268, 2
  %v4336 = vsel %vm433, %v4333, %v4335
  %v4337 = vrot.slane %v4269, 2
  %v4338 = vsel %vm433, %v4335, %v4337
  %v4339 = vrot.slane %v4270, 2
  %v4340 = vsel %vm433, %v4337, %v4339
  %v4341 = vrot.slane %v4271, 2
  %v4342 = vsel %vm433, %v4339, %v4341
  %v4343 = vrot.slane %v4272, 2
  %v4344 = vsel %vm433, %v4341, %v4343
  %v4345 = vrot.slane %v4273, 2
  %v4346 = vsel %vm433, %v4343, %v4345
  %v4347 = vrot.slane %v4274, 2
  %v4348 = vsel %vm433, %v4345, %v4347
  %v4349 = vrot.slane %v4275, 2
  %v4350 = vsel %vm433, %v4347, %v4349
  %v4351 = vrot.slane %v4276, 2
  %v4352 = vsel %vm433, %v4349, %v4351
  %v4353 = vrot.slane %v4277, 2
  %v4354 = vsel %vm433, %v4351, %v4353
  %v4355 = vrot.slane %v4278, 2
  %v4356 = vsel %vm433, %v4353, %v4355
  %v4357 = vrot.slane %v4279, 2
  %v4358 = vsel %vm433, %v4355, %v4357
  %v4359 = vrot.slane %v4280, 2
  %v4360 = vsel %vm433, %v4357, %v4359
  %v4387 = vadd.f32 %v4227, %v4310
  %v4388 = vadd.f32 %v4228, %v4312
  %v4389 = vadd.f32 %v4229, %v4314
  %v4390 = vadd.f32 %v4230, %v4316
  %v4391 = vadd.f32 %v4231, %v4318
  %v4392 = vadd.f32 %v4232, %v4320
  %v4393 = vadd.f32 %v4233, %v4322
  %v4394 = vadd.f32 %v4234, %v4324
  %v4395 = vadd.f32 %v4235, %v4326
  %v4396 = vadd.f32 %v4236, %v4328
  %v4397 = vadd.f32 %v4237, %v4330
  %v4398 = vadd.f32 %v4238, %v4332
  %v4399 = vadd.f32 %v4239, %v4334
  %v4400 = vadd.f32 %v4240, %v4336
  %v4401 = vadd.f32 %v4241, %v4338
  %v4402 = vadd.f32 %v4242, %v4340
  %v4403 = vadd.f32 %v4243, %v4342
  %v4404 = vadd.f32 %v4244, %v4344
  %v4405 = vadd.f32 %v4245, %v4346
  %v4406 = vadd.f32 %v4246, %v4348
  %v4407 = vadd.f32 %v4247, %v4350
  %v4408 = vadd.f32 %v4248, %v4352
  %v4409 = vadd.f32 %v4249, %v4354
  %v4410 = vadd.f32 %v4250, %v4356
  %v4411 = vadd.f32 %v4251, %v4358
  %v4412 = vadd.f32 %v4252, %v4360
  %v4413 = vperm.slane %v650, 3
  %v4414 = vmul.f32 %v3960, %v4413
  %v4415 = vmul.f32 %v3962, %v4413
  %v4416 = vmul.f32 %v3965, %v4413
  %v4417 = vmul.f32 %v3967, %v4413
  %v4418 = vmul.f32 %v3970, %v4413
  %v4419 = vmul.f32 %v3972, %v4413
  %v4420 = vmul.f32 %v3975, %v4413
  %v4421 = vmul.f32 %v3977, %v4413
  %v4422 = vmul.f32 %v3980, %v4413
  %v4423 = vmul.f32 %v3982, %v4413
  %v4424 = vmul.f32 %v3985, %v4413
  %v4425 = vmul.f32 %v3987, %v4413
  %v4426 = vmul.f32 %v3990, %v4413
  %v4427 = vmul.f32 %v3992, %v4413
  %v4428 = vmul.f32 %v3995, %v4413
  %v4429 = vmul.f32 %v3997, %v4413
  %v4430 = vmul.f32 %v4000, %v4413
  %v4431 = vmul.f32 %v4002, %v4413
  %v4432 = vmul.f32 %v4005, %v4413
  %v4433 = vmul.f32 %v4007, %v4413
  %v4434 = vmul.f32 %v4010, %v4413
  %v4435 = vmul.f32 %v4012, %v4413
  %v4436 = vmul.f32 %v4015, %v4413
  %v4437 = vmul.f32 %v4017, %v4413
  %v4438 = vmul.f32 %v4020, %v4413
  %v4439 = vmul.f32 %v4022, %v4413
  %v4440 = vmul.f32 %v4025, %v4413
  %v4468 = vrot.slane %v4414, 3
  %v4469 = vrot.slane %v4415, 3
  %v4470 = vsel %vm204, %v4468, %v4469
  %v4471 = vrot.slane %v4416, 3
  %v4472 = vsel %vm204, %v4469, %v4471
  %v4473 = vrot.slane %v4417, 3
  %v4474 = vsel %vm204, %v4471, %v4473
  %v4475 = vrot.slane %v4418, 3
  %v4476 = vsel %vm204, %v4473, %v4475
  %v4477 = vrot.slane %v4419, 3
  %v4478 = vsel %vm204, %v4475, %v4477
  %v4479 = vrot.slane %v4420, 3
  %v4480 = vsel %vm204, %v4477, %v4479
  %v4481 = vrot.slane %v4421, 3
  %v4482 = vsel %vm204, %v4479, %v4481
  %v4483 = vrot.slane %v4422, 3
  %v4484 = vsel %vm204, %v4481, %v4483
  %v4485 = vrot.slane %v4423, 3
  %v4486 = vsel %vm204, %v4483, %v4485
  %v4487 = vrot.slane %v4424, 3
  %v4488 = vsel %vm204, %v4485, %v4487
  %v4489 = vrot.slane %v4425, 3
  %v4490 = vsel %vm204, %v4487, %v4489
  %v4491 = vrot.slane %v4426, 3
  %v4492 = vsel %vm204, %v4489, %v4491
  %v4493 = vrot.slane %v4427, 3
  %v4494 = vsel %vm204, %v4491, %v4493
  %v4495 = vrot.slane %v4428, 3
  %v4496 = vsel %vm204, %v4493, %v4495
  %v4497 = vrot.slane %v4429, 3
  %v4498 = vsel %vm204, %v4495, %v4497
  %v4499 = vrot.slane %v4430, 3
  %v4500 = vsel %vm204, %v4497, %v4499
  %v4501 = vrot.slane %v4431, 3
  %v4502 = vsel %vm204, %v4499, %v4501
  %v4503 = vrot.slane %v4432, 3
  %v4504 = vsel %vm204, %v4501, %v4503
  %v4505 = vrot.slane %v4433, 3
  %v4506 = vsel %vm204, %v4503, %v4505
  %v4507 = vrot.slane %v4434, 3
  %v4508 = vsel %vm204, %v4505, %v4507
  %v4509 = vrot.slane %v4435, 3
  %v4510 = vsel %vm204, %v4507, %v4509
  %v4511 = vrot.slane %v4436, 3
  %v4512 = vsel %vm204, %v4509, %v4511
  %v4513 = vrot.slane %v4437, 3
  %v4514 = vsel %vm204, %v4511, %v4513
  %v4515 = vrot.slane %v4438, 3
  %v4516 = vsel %vm204, %v4513, %v4515
  %v4517 = vrot.slane %v4439, 3
  %v4518 = vsel %vm204, %v4515, %v4517
  %v4519 = vrot.slane %v4440, 3
  %v4520 = vsel %vm204, %v4517, %v4519
  %v4547 = vadd.f32 %v4387, %v4470
  %v4548 = vadd.f32 %v4388, %v4472
  %v4549 = vadd.f32 %v4389, %v4474
  %v4550 = vadd.f32 %v4390, %v4476
  %v4551 = vadd.f32 %v4391, %v4478
  %v4552 = vadd.f32 %v4392, %v4480
  %v4553 = vadd.f32 %v4393, %v4482
  %v4554 = vadd.f32 %v4394, %v4484
  %v4555 = vadd.f32 %v4395, %v4486
  %v4556 = vadd.f32 %v4396, %v4488
  %v4557 = vadd.f32 %v4397, %v4490
  %v4558 = vadd.f32 %v4398, %v4492
  %v4559 = vadd.f32 %v4399, %v4494
  %v4560 = vadd.f32 %v4400, %v4496
  %v4561 = vadd.f32 %v4401, %v4498
  %v4562 = vadd.f32 %v4402, %v4500
  %v4563 = vadd.f32 %v4403, %v4502
  %v4564 = vadd.f32 %v4404, %v4504
  %v4565 = vadd.f32 %v4405, %v4506
  %v4566 = vadd.f32 %v4406, %v4508
  %v4567 = vadd.f32 %v4407, %v4510
  %v4568 = vadd.f32 %v4408, %v4512
  %v4569 = vadd.f32 %v4409, %v4514
  %v4570 = vadd.f32 %v4410, %v4516
  %v4571 = vadd.f32 %v4411, %v4518
  %v4572 = vadd.f32 %v4412, %v4520
  %v4573 = vperm.slane %v650, 4
  %v4574 = vmul.f32 %v3965, %v4573
  %v4575 = vmul.f32 %v3967, %v4573
  %v4576 = vmul.f32 %v3970, %v4573
  %v4577 = vmul.f32 %v3972, %v4573
  %v4578 = vmul.f32 %v3975, %v4573
  %v4579 = vmul.f32 %v3977, %v4573
  %v4580 = vmul.f32 %v3980, %v4573
  %v4581 = vmul.f32 %v3982, %v4573
  %v4582 = vmul.f32 %v3985, %v4573
  %v4583 = vmul.f32 %v3987, %v4573
  %v4584 = vmul.f32 %v3990, %v4573
  %v4585 = vmul.f32 %v3992, %v4573
  %v4586 = vmul.f32 %v3995, %v4573
  %v4587 = vmul.f32 %v3997, %v4573
  %v4588 = vmul.f32 %v4000, %v4573
  %v4589 = vmul.f32 %v4002, %v4573
  %v4590 = vmul.f32 %v4005, %v4573
  %v4591 = vmul.f32 %v4007, %v4573
  %v4592 = vmul.f32 %v4010, %v4573
  %v4593 = vmul.f32 %v4012, %v4573
  %v4594 = vmul.f32 %v4015, %v4573
  %v4595 = vmul.f32 %v4017, %v4573
  %v4596 = vmul.f32 %v4020, %v4573
  %v4597 = vmul.f32 %v4022, %v4573
  %v4598 = vmul.f32 %v4025, %v4573
  %v4599 = vmul.f32 %v4027, %v4573
  %v4600 = vadd.f32 %v4547, %v4574
  %v4601 = vadd.f32 %v4548, %v4575
  %v4602 = vadd.f32 %v4549, %v4576
  %v4603 = vadd.f32 %v4550, %v4577
  %v4604 = vadd.f32 %v4551, %v4578
  %v4605 = vadd.f32 %v4552, %v4579
  %v4606 = vadd.f32 %v4553, %v4580
  %v4607 = vadd.f32 %v4554, %v4581
  %v4608 = vadd.f32 %v4555, %v4582
  %v4609 = vadd.f32 %v4556, %v4583
  %v4610 = vadd.f32 %v4557, %v4584
  %v4611 = vadd.f32 %v4558, %v4585
  %v4612 = vadd.f32 %v4559, %v4586
  %v4613 = vadd.f32 %v4560, %v4587
  %v4614 = vadd.f32 %v4561, %v4588
  %v4615 = vadd.f32 %v4562, %v4589
  %v4616 = vadd.f32 %v4563, %v4590
  %v4617 = vadd.f32 %v4564, %v4591
  %v4618 = vadd.f32 %v4565, %v4592
  %v4619 = vadd.f32 %v4566, %v4593
  %v4620 = vadd.f32 %v4567, %v4594
  %v4621 = vadd.f32 %v4568, %v4595
  %v4622 = vadd.f32 %v4569, %v4596
  %v4623 = vadd.f32 %v4570, %v4597
  %v4624 = vadd.f32 %v4571, %v4598
  %v4625 = vadd.f32 %v4572, %v4599
  %v4626 = vperm.slane %v650, 5
  %v4627 = vmul.f32 %v3965, %v4626
  %v4628 = vmul.f32 %v3967, %v4626
  %v4629 = vmul.f32 %v3970, %v4626
  %v4630 = vmul.f32 %v3972, %v4626
  %v4631 = vmul.f32 %v3975, %v4626
  %v4632 = vmul.f32 %v3977, %v4626
  %v4633 = vmul.f32 %v3980, %v4626
  %v4634 = vmul.f32 %v3982, %v4626
  %v4635 = vmul.f32 %v3985, %v4626
  %v4636 = vmul.f32 %v3987, %v4626
  %v4637 = vmul.f32 %v3990, %v4626
  %v4638 = vmul.f32 %v3992, %v4626
  %v4639 = vmul.f32 %v3995, %v4626
  %v4640 = vmul.f32 %v3997, %v4626
  %v4641 = vmul.f32 %v4000, %v4626
  %v4642 = vmul.f32 %v4002, %v4626
  %v4643 = vmul.f32 %v4005, %v4626
  %v4644 = vmul.f32 %v4007, %v4626
  %v4645 = vmul.f32 %v4010, %v4626
  %v4646 = vmul.f32 %v4012, %v4626
  %v4647 = vmul.f32 %v4015, %v4626
  %v4648 = vmul.f32 %v4017, %v4626
  %v4649 = vmul.f32 %v4020, %v4626
  %v4650 = vmul.f32 %v4022, %v4626
  %v4651 = vmul.f32 %v4025, %v4626
  %v4652 = vmul.f32 %v4027, %v4626
  %v4653 = vmul.f32 %v4030, %v4626
  %v4681 = vrot.slane %v4627, 1
  %v4682 = vrot.slane %v4628, 1
  %v4683 = vsel %vm4147, %v4681, %v4682
  %v4684 = vrot.slane %v4629, 1
  %v4685 = vsel %vm4147, %v4682, %v4684
  %v4686 = vrot.slane %v4630, 1
  %v4687 = vsel %vm4147, %v4684, %v4686
  %v4688 = vrot.slane %v4631, 1
  %v4689 = vsel %vm4147, %v4686, %v4688
  %v4690 = vrot.slane %v4632, 1
  %v4691 = vsel %vm4147, %v4688, %v4690
  %v4692 = vrot.slane %v4633, 1
  %v4693 = vsel %vm4147, %v4690, %v4692
  %v4694 = vrot.slane %v4634, 1
  %v4695 = vsel %vm4147, %v4692, %v4694
  %v4696 = vrot.slane %v4635, 1
  %v4697 = vsel %vm4147, %v4694, %v4696
  %v4698 = vrot.slane %v4636, 1
  %v4699 = vsel %vm4147, %v4696, %v4698
  %v4700 = vrot.slane %v4637, 1
  %v4701 = vsel %vm4147, %v4698, %v4700
  %v4702 = vrot.slane %v4638, 1
  %v4703 = vsel %vm4147, %v4700, %v4702
  %v4704 = vrot.slane %v4639, 1
  %v4705 = vsel %vm4147, %v4702, %v4704
  %v4706 = vrot.slane %v4640, 1
  %v4707 = vsel %vm4147, %v4704, %v4706
  %v4708 = vrot.slane %v4641, 1
  %v4709 = vsel %vm4147, %v4706, %v4708
  %v4710 = vrot.slane %v4642, 1
  %v4711 = vsel %vm4147, %v4708, %v4710
  %v4712 = vrot.slane %v4643, 1
  %v4713 = vsel %vm4147, %v4710, %v4712
  %v4714 = vrot.slane %v4644, 1
  %v4715 = vsel %vm4147, %v4712, %v4714
  %v4716 = vrot.slane %v4645, 1
  %v4717 = vsel %vm4147, %v4714, %v4716
  %v4718 = vrot.slane %v4646, 1
  %v4719 = vsel %vm4147, %v4716, %v4718
  %v4720 = vrot.slane %v4647, 1
  %v4721 = vsel %vm4147, %v4718, %v4720
  %v4722 = vrot.slane %v4648, 1
  %v4723 = vsel %vm4147, %v4720, %v4722
  %v4724 = vrot.slane %v4649, 1
  %v4725 = vsel %vm4147, %v4722, %v4724
  %v4726 = vrot.slane %v4650, 1
  %v4727 = vsel %vm4147, %v4724, %v4726
  %v4728 = vrot.slane %v4651, 1
  %v4729 = vsel %vm4147, %v4726, %v4728
  %v4730 = vrot.slane %v4652, 1
  %v4731 = vsel %vm4147, %v4728, %v4730
  %v4732 = vrot.slane %v4653, 1
  %v4733 = vsel %vm4147, %v4730, %v4732
  %v4760 = vadd.f32 %v4600, %v4683
  %v4761 = vadd.f32 %v4601, %v4685
  %v4762 = vadd.f32 %v4602, %v4687
  %v4763 = vadd.f32 %v4603, %v4689
  %v4764 = vadd.f32 %v4604, %v4691
  %v4765 = vadd.f32 %v4605, %v4693
  %v4766 = vadd.f32 %v4606, %v4695
  %v4767 = vadd.f32 %v4607, %v4697
  %v4768 = vadd.f32 %v4608, %v4699
  %v4769 = vadd.f32 %v4609, %v4701
  %v4770 = vadd.f32 %v4610, %v4703
  %v4771 = vadd.f32 %v4611, %v4705
  %v4772 = vadd.f32 %v4612, %v4707
  %v4773 = vadd.f32 %v4613, %v4709
  %v4774 = vadd.f32 %v4614, %v4711
  %v4775 = vadd.f32 %v4615, %v4713
  %v4776 = vadd.f32 %v4616, %v4715
  %v4777 = vadd.f32 %v4617, %v4717
  %v4778 = vadd.f32 %v4618, %v4719
  %v4779 = vadd.f32 %v4619, %v4721
  %v4780 = vadd.f32 %v4620, %v4723
  %v4781 = vadd.f32 %v4621, %v4725
  %v4782 = vadd.f32 %v4622, %v4727
  %v4783 = vadd.f32 %v4623, %v4729
  %v4784 = vadd.f32 %v4624, %v4731
  %v4785 = vadd.f32 %v4625, %v4733
  %v4786 = vperm.slane %v650, 6
  %v4787 = vmul.f32 %v3965, %v4786
  %v4788 = vmul.f32 %v3967, %v4786
  %v4789 = vmul.f32 %v3970, %v4786
  %v4790 = vmul.f32 %v3972, %v4786
  %v4791 = vmul.f32 %v3975, %v4786
  %v4792 = vmul.f32 %v3977, %v4786
  %v4793 = vmul.f32 %v3980, %v4786
  %v4794 = vmul.f32 %v3982, %v4786
  %v4795 = vmul.f32 %v3985, %v4786
  %v4796 = vmul.f32 %v3987, %v4786
  %v4797 = vmul.f32 %v3990, %v4786
  %v4798 = vmul.f32 %v3992, %v4786
  %v4799 = vmul.f32 %v3995, %v4786
  %v4800 = vmul.f32 %v3997, %v4786
  %v4801 = vmul.f32 %v4000, %v4786
  %v4802 = vmul.f32 %v4002, %v4786
  %v4803 = vmul.f32 %v4005, %v4786
  %v4804 = vmul.f32 %v4007, %v4786
  %v4805 = vmul.f32 %v4010, %v4786
  %v4806 = vmul.f32 %v4012, %v4786
  %v4807 = vmul.f32 %v4015, %v4786
  %v4808 = vmul.f32 %v4017, %v4786
  %v4809 = vmul.f32 %v4020, %v4786
  %v4810 = vmul.f32 %v4022, %v4786
  %v4811 = vmul.f32 %v4025, %v4786
  %v4812 = vmul.f32 %v4027, %v4786
  %v4813 = vmul.f32 %v4030, %v4786
  %v4841 = vrot.slane %v4787, 2
  %v4842 = vrot.slane %v4788, 2
  %v4843 = vsel %vm433, %v4841, %v4842
  %v4844 = vrot.slane %v4789, 2
  %v4845 = vsel %vm433, %v4842, %v4844
  %v4846 = vrot.slane %v4790, 2
  %v4847 = vsel %vm433, %v4844, %v4846
  %v4848 = vrot.slane %v4791, 2
  %v4849 = vsel %vm433, %v4846, %v4848
  %v4850 = vrot.slane %v4792, 2
  %v4851 = vsel %vm433, %v4848, %v4850
  %v4852 = vrot.slane %v4793, 2
  %v4853 = vsel %vm433, %v4850, %v4852
  %v4854 = vrot.slane %v4794, 2
  %v4855 = vsel %vm433, %v4852, %v4854
  %v4856 = vrot.slane %v4795, 2
  %v4857 = vsel %vm433, %v4854, %v4856
  %v4858 = vrot.slane %v4796, 2
  %v4859 = vsel %vm433, %v4856, %v4858
  %v4860 = vrot.slane %v4797, 2
  %v4861 = vsel %vm433, %v4858, %v4860
  %v4862 = vrot.slane %v4798, 2
  %v4863 = vsel %vm433, %v4860, %v4862
  %v4864 = vrot.slane %v4799, 2
  %v4865 = vsel %vm433, %v4862, %v4864
  %v4866 = vrot.slane %v4800, 2
  %v4867 = vsel %vm433, %v4864, %v4866
  %v4868 = vrot.slane %v4801, 2
  %v4869 = vsel %vm433, %v4866, %v4868
  %v4870 = vrot.slane %v4802, 2
  %v4871 = vsel %vm433, %v4868, %v4870
  %v4872 = vrot.slane %v4803, 2
  %v4873 = vsel %vm433, %v4870, %v4872
  %v4874 = vrot.slane %v4804, 2
  %v4875 = vsel %vm433, %v4872, %v4874
  %v4876 = vrot.slane %v4805, 2
  %v4877 = vsel %vm433, %v4874, %v4876
  %v4878 = vrot.slane %v4806, 2
  %v4879 = vsel %vm433, %v4876, %v4878
  %v4880 = vrot.slane %v4807, 2
  %v4881 = vsel %vm433, %v4878, %v4880
  %v4882 = vrot.slane %v4808, 2
  %v4883 = vsel %vm433, %v4880, %v4882
  %v4884 = vrot.slane %v4809, 2
  %v4885 = vsel %vm433, %v4882, %v4884
  %v4886 = vrot.slane %v4810, 2
  %v4887 = vsel %vm433, %v4884, %v4886
  %v4888 = vrot.slane %v4811, 2
  %v4889 = vsel %vm433, %v4886, %v4888
  %v4890 = vrot.slane %v4812, 2
  %v4891 = vsel %vm433, %v4888, %v4890
  %v4892 = vrot.slane %v4813, 2
  %v4893 = vsel %vm433, %v4890, %v4892
  %v4920 = vadd.f32 %v4760, %v4843
  %v4921 = vadd.f32 %v4761, %v4845
  %v4922 = vadd.f32 %v4762, %v4847
  %v4923 = vadd.f32 %v4763, %v4849
  %v4924 = vadd.f32 %v4764, %v4851
  %v4925 = vadd.f32 %v4765, %v4853
  %v4926 = vadd.f32 %v4766, %v4855
  %v4927 = vadd.f32 %v4767, %v4857
  %v4928 = vadd.f32 %v4768, %v4859
  %v4929 = vadd.f32 %v4769, %v4861
  %v4930 = vadd.f32 %v4770, %v4863
  %v4931 = vadd.f32 %v4771, %v4865
  %v4932 = vadd.f32 %v4772, %v4867
  %v4933 = vadd.f32 %v4773, %v4869
  %v4934 = vadd.f32 %v4774, %v4871
  %v4935 = vadd.f32 %v4775, %v4873
  %v4936 = vadd.f32 %v4776, %v4875
  %v4937 = vadd.f32 %v4777, %v4877
  %v4938 = vadd.f32 %v4778, %v4879
  %v4939 = vadd.f32 %v4779, %v4881
  %v4940 = vadd.f32 %v4780, %v4883
  %v4941 = vadd.f32 %v4781, %v4885
  %v4942 = vadd.f32 %v4782, %v4887
  %v4943 = vadd.f32 %v4783, %v4889
  %v4944 = vadd.f32 %v4784, %v4891
  %v4945 = vadd.f32 %v4785, %v4893
  %v4946 = vperm.slane %v650, 7
  %v4947 = vmul.f32 %v3965, %v4946
  %v4948 = vmul.f32 %v3967, %v4946
  %v4949 = vmul.f32 %v3970, %v4946
  %v4950 = vmul.f32 %v3972, %v4946
  %v4951 = vmul.f32 %v3975, %v4946
  %v4952 = vmul.f32 %v3977, %v4946
  %v4953 = vmul.f32 %v3980, %v4946
  %v4954 = vmul.f32 %v3982, %v4946
  %v4955 = vmul.f32 %v3985, %v4946
  %v4956 = vmul.f32 %v3987, %v4946
  %v4957 = vmul.f32 %v3990, %v4946
  %v4958 = vmul.f32 %v3992, %v4946
  %v4959 = vmul.f32 %v3995, %v4946
  %v4960 = vmul.f32 %v3997, %v4946
  %v4961 = vmul.f32 %v4000, %v4946
  %v4962 = vmul.f32 %v4002, %v4946
  %v4963 = vmul.f32 %v4005, %v4946
  %v4964 = vmul.f32 %v4007, %v4946
  %v4965 = vmul.f32 %v4010, %v4946
  %v4966 = vmul.f32 %v4012, %v4946
  %v4967 = vmul.f32 %v4015, %v4946
  %v4968 = vmul.f32 %v4017, %v4946
  %v4969 = vmul.f32 %v4020, %v4946
  %v4970 = vmul.f32 %v4022, %v4946
  %v4971 = vmul.f32 %v4025, %v4946
  %v4972 = vmul.f32 %v4027, %v4946
  %v4973 = vmul.f32 %v4030, %v4946
  %v5001 = vrot.slane %v4947, 3
  %v5002 = vrot.slane %v4948, 3
  %v5003 = vsel %vm204, %v5001, %v5002
  %v5004 = vrot.slane %v4949, 3
  %v5005 = vsel %vm204, %v5002, %v5004
  %v5006 = vrot.slane %v4950, 3
  %v5007 = vsel %vm204, %v5004, %v5006
  %v5008 = vrot.slane %v4951, 3
  %v5009 = vsel %vm204, %v5006, %v5008
  %v5010 = vrot.slane %v4952, 3
  %v5011 = vsel %vm204, %v5008, %v5010
  %v5012 = vrot.slane %v4953, 3
  %v5013 = vsel %vm204, %v5010, %v5012
  %v5014 = vrot.slane %v4954, 3
  %v5015 = vsel %vm204, %v5012, %v5014
  %v5016 = vrot.slane %v4955, 3
  %v5017 = vsel %vm204, %v5014, %v5016
  %v5018 = vrot.slane %v4956, 3
  %v5019 = vsel %vm204, %v5016, %v5018
  %v5020 = vrot.slane %v4957, 3
  %v5021 = vsel %vm204, %v5018, %v5020
  %v5022 = vrot.slane %v4958, 3
  %v5023 = vsel %vm204, %v5020, %v5022
  %v5024 = vrot.slane %v4959, 3
  %v5025 = vsel %vm204, %v5022, %v5024
  %v5026 = vrot.slane %v4960, 3
  %v5027 = vsel %vm204, %v5024, %v5026
  %v5028 = vrot.slane %v4961, 3
  %v5029 = vsel %vm204, %v5026, %v5028
  %v5030 = vrot.slane %v4962, 3
  %v5031 = vsel %vm204, %v5028, %v5030
  %v5032 = vrot.slane %v4963, 3
  %v5033 = vsel %vm204, %v5030, %v5032
  %v5034 = vrot.slane %v4964, 3
  %v5035 = vsel %vm204, %v5032, %v5034
  %v5036 = vrot.slane %v4965, 3
  %v5037 = vsel %vm204, %v5034, %v5036
  %v5038 = vrot.slane %v4966, 3
  %v5039 = vsel %vm204, %v5036, %v5038
  %v5040 = vrot.slane %v4967, 3
  %v5041 = vsel %vm204, %v5038, %v5040
  %v5042 = vrot.slane %v4968, 3
  %v5043 = vsel %vm204, %v5040, %v5042
  %v5044 = vrot.slane %v4969, 3
  %v5045 = vsel %vm204, %v5042, %v5044
  %v5046 = vrot.slane %v4970, 3
  %v5047 = vsel %vm204, %v5044, %v5046
  %v5048 = vrot.slane %v4971, 3
  %v5049 = vsel %vm204, %v5046, %v5048
  %v5050 = vrot.slane %v4972, 3
  %v5051 = vsel %vm204, %v5048, %v5050
  %v5052 = vrot.slane %v4973, 3
  %v5053 = vsel %vm204, %v5050, %v5052
  %v5080 = vadd.f32 %v4920, %v5003
  %v5081 = vadd.f32 %v4921, %v5005
  %v5082 = vadd.f32 %v4922, %v5007
  %v5083 = vadd.f32 %v4923, %v5009
  %v5084 = vadd.f32 %v4924, %v5011
  %v5085 = vadd.f32 %v4925, %v5013
  %v5086 = vadd.f32 %v4926, %v5015
  %v5087 = vadd.f32 %v4927, %v5017
  %v5088 = vadd.f32 %v4928, %v5019
  %v5089 = vadd.f32 %v4929, %v5021
  %v5090 = vadd.f32 %v4930, %v5023
  %v5091 = vadd.f32 %v4931, %v5025
  %v5092 = vadd.f32 %v4932, %v5027
  %v5093 = vadd.f32 %v4933, %v5029
  %v5094 = vadd.f32 %v4934, %v5031
  %v5095 = vadd.f32 %v4935, %v5033
  %v5096 = vadd.f32 %v4936, %v5035
  %v5097 = vadd.f32 %v4937, %v5037
  %v5098 = vadd.f32 %v4938, %v5039
  %v5099 = vadd.f32 %v4939, %v5041
  %v5100 = vadd.f32 %v4940, %v5043
  %v5101 = vadd.f32 %v4941, %v5045
  %v5102 = vadd.f32 %v4942, %v5047
  %v5103 = vadd.f32 %v4943, %v5049
  %v5104 = vadd.f32 %v4944, %v5051
  %v5105 = vadd.f32 %v4945, %v5053
  %v5106 = vperm.slane %v652, 0
  %v5107 = vmul.f32 %v3970, %v5106
  %v5108 = vmul.f32 %v3972, %v5106
  %v5109 = vmul.f32 %v3975, %v5106
  %v5110 = vmul.f32 %v3977, %v5106
  %v5111 = vmul.f32 %v3980, %v5106
  %v5112 = vmul.f32 %v3982, %v5106
  %v5113 = vmul.f32 %v3985, %v5106
  %v5114 = vmul.f32 %v3987, %v5106
  %v5115 = vmul.f32 %v3990, %v5106
  %v5116 = vmul.f32 %v3992, %v5106
  %v5117 = vmul.f32 %v3995, %v5106
  %v5118 = vmul.f32 %v3997, %v5106
  %v5119 = vmul.f32 %v4000, %v5106
  %v5120 = vmul.f32 %v4002, %v5106
  %v5121 = vmul.f32 %v4005, %v5106
  %v5122 = vmul.f32 %v4007, %v5106
  %v5123 = vmul.f32 %v4010, %v5106
  %v5124 = vmul.f32 %v4012, %v5106
  %v5125 = vmul.f32 %v4015, %v5106
  %v5126 = vmul.f32 %v4017, %v5106
  %v5127 = vmul.f32 %v4020, %v5106
  %v5128 = vmul.f32 %v4022, %v5106
  %v5129 = vmul.f32 %v4025, %v5106
  %v5130 = vmul.f32 %v4027, %v5106
  %v5131 = vmul.f32 %v4030, %v5106
  %v5132 = vmul.f32 %v4032, %v5106
  %v5133 = vadd.f32 %v5080, %v5107
  %v5134 = vadd.f32 %v5081, %v5108
  %v5135 = vadd.f32 %v5082, %v5109
  %v5136 = vadd.f32 %v5083, %v5110
  %v5137 = vadd.f32 %v5084, %v5111
  %v5138 = vadd.f32 %v5085, %v5112
  %v5139 = vadd.f32 %v5086, %v5113
  %v5140 = vadd.f32 %v5087, %v5114
  %v5141 = vadd.f32 %v5088, %v5115
  %v5142 = vadd.f32 %v5089, %v5116
  %v5143 = vadd.f32 %v5090, %v5117
  %v5144 = vadd.f32 %v5091, %v5118
  %v5145 = vadd.f32 %v5092, %v5119
  %v5146 = vadd.f32 %v5093, %v5120
  %v5147 = vadd.f32 %v5094, %v5121
  %v5148 = vadd.f32 %v5095, %v5122
  %v5149 = vadd.f32 %v5096, %v5123
  %v5150 = vadd.f32 %v5097, %v5124
  %v5151 = vadd.f32 %v5098, %v5125
  %v5152 = vadd.f32 %v5099, %v5126
  %v5153 = vadd.f32 %v5100, %v5127
  %v5154 = vadd.f32 %v5101, %v5128
  %v5155 = vadd.f32 %v5102, %v5129
  %v5156 = vadd.f32 %v5103, %v5130
  %v5157 = vadd.f32 %v5104, %v5131
  %v5158 = vadd.f32 %v5105, %v5132
  %v5159 = vperm.slane %v652, 1
  %v5160 = vmul.f32 %v3970, %v5159
  %v5161 = vmul.f32 %v3972, %v5159
  %v5162 = vmul.f32 %v3975, %v5159
  %v5163 = vmul.f32 %v3977, %v5159
  %v5164 = vmul.f32 %v3980, %v5159
  %v5165 = vmul.f32 %v3982, %v5159
  %v5166 = vmul.f32 %v3985, %v5159
  %v5167 = vmul.f32 %v3987, %v5159
  %v5168 = vmul.f32 %v3990, %v5159
  %v5169 = vmul.f32 %v3992, %v5159
  %v5170 = vmul.f32 %v3995, %v5159
  %v5171 = vmul.f32 %v3997, %v5159
  %v5172 = vmul.f32 %v4000, %v5159
  %v5173 = vmul.f32 %v4002, %v5159
  %v5174 = vmul.f32 %v4005, %v5159
  %v5175 = vmul.f32 %v4007, %v5159
  %v5176 = vmul.f32 %v4010, %v5159
  %v5177 = vmul.f32 %v4012, %v5159
  %v5178 = vmul.f32 %v4015, %v5159
  %v5179 = vmul.f32 %v4017, %v5159
  %v5180 = vmul.f32 %v4020, %v5159
  %v5181 = vmul.f32 %v4022, %v5159
  %v5182 = vmul.f32 %v4025, %v5159
  %v5183 = vmul.f32 %v4027, %v5159
  %v5184 = vmul.f32 %v4030, %v5159
  %v5185 = vmul.f32 %v4032, %v5159
  %v5186 = vmul.f32 %v4035, %v5159
  %v5214 = vrot.slane %v5160, 1
  %v5215 = vrot.slane %v5161, 1
  %v5216 = vsel %vm4147, %v5214, %v5215
  %v5217 = vrot.slane %v5162, 1
  %v5218 = vsel %vm4147, %v5215, %v5217
  %v5219 = vrot.slane %v5163, 1
  %v5220 = vsel %vm4147, %v5217, %v5219
  %v5221 = vrot.slane %v5164, 1
  %v5222 = vsel %vm4147, %v5219, %v5221
  %v5223 = vrot.slane %v5165, 1
  %v5224 = vsel %vm4147, %v5221, %v5223
  %v5225 = vrot.slane %v5166, 1
  %v5226 = vsel %vm4147, %v5223, %v5225
  %v5227 = vrot.slane %v5167, 1
  %v5228 = vsel %vm4147, %v5225, %v5227
  %v5229 = vrot.slane %v5168, 1
  %v5230 = vsel %vm4147, %v5227, %v5229
  %v5231 = vrot.slane %v5169, 1
  %v5232 = vsel %vm4147, %v5229, %v5231
  %v5233 = vrot.slane %v5170, 1
  %v5234 = vsel %vm4147, %v5231, %v5233
  %v5235 = vrot.slane %v5171, 1
  %v5236 = vsel %vm4147, %v5233, %v5235
  %v5237 = vrot.slane %v5172, 1
  %v5238 = vsel %vm4147, %v5235, %v5237
  %v5239 = vrot.slane %v5173, 1
  %v5240 = vsel %vm4147, %v5237, %v5239
  %v5241 = vrot.slane %v5174, 1
  %v5242 = vsel %vm4147, %v5239, %v5241
  %v5243 = vrot.slane %v5175, 1
  %v5244 = vsel %vm4147, %v5241, %v5243
  %v5245 = vrot.slane %v5176, 1
  %v5246 = vsel %vm4147, %v5243, %v5245
  %v5247 = vrot.slane %v5177, 1
  %v5248 = vsel %vm4147, %v5245, %v5247
  %v5249 = vrot.slane %v5178, 1
  %v5250 = vsel %vm4147, %v5247, %v5249
  %v5251 = vrot.slane %v5179, 1
  %v5252 = vsel %vm4147, %v5249, %v5251
  %v5253 = vrot.slane %v5180, 1
  %v5254 = vsel %vm4147, %v5251, %v5253
  %v5255 = vrot.slane %v5181, 1
  %v5256 = vsel %vm4147, %v5253, %v5255
  %v5257 = vrot.slane %v5182, 1
  %v5258 = vsel %vm4147, %v5255, %v5257
  %v5259 = vrot.slane %v5183, 1
  %v5260 = vsel %vm4147, %v5257, %v5259
  %v5261 = vrot.slane %v5184, 1
  %v5262 = vsel %vm4147, %v5259, %v5261
  %v5263 = vrot.slane %v5185, 1
  %v5264 = vsel %vm4147, %v5261, %v5263
  %v5265 = vrot.slane %v5186, 1
  %v5266 = vsel %vm4147, %v5263, %v5265
  %v5293 = vadd.f32 %v5133, %v5216
  %v5294 = vadd.f32 %v5134, %v5218
  %v5295 = vadd.f32 %v5135, %v5220
  %v5296 = vadd.f32 %v5136, %v5222
  %v5297 = vadd.f32 %v5137, %v5224
  %v5298 = vadd.f32 %v5138, %v5226
  %v5299 = vadd.f32 %v5139, %v5228
  %v5300 = vadd.f32 %v5140, %v5230
  %v5301 = vadd.f32 %v5141, %v5232
  %v5302 = vadd.f32 %v5142, %v5234
  %v5303 = vadd.f32 %v5143, %v5236
  %v5304 = vadd.f32 %v5144, %v5238
  %v5305 = vadd.f32 %v5145, %v5240
  %v5306 = vadd.f32 %v5146, %v5242
  %v5307 = vadd.f32 %v5147, %v5244
  %v5308 = vadd.f32 %v5148, %v5246
  %v5309 = vadd.f32 %v5149, %v5248
  %v5310 = vadd.f32 %v5150, %v5250
  %v5311 = vadd.f32 %v5151, %v5252
  %v5312 = vadd.f32 %v5152, %v5254
  %v5313 = vadd.f32 %v5153, %v5256
  %v5314 = vadd.f32 %v5154, %v5258
  %v5315 = vadd.f32 %v5155, %v5260
  %v5316 = vadd.f32 %v5156, %v5262
  %v5317 = vadd.f32 %v5157, %v5264
  %v5318 = vadd.f32 %v5158, %v5266
  %v5319 = vperm.slane %v652, 2
  %v5320 = vmul.f32 %v3970, %v5319
  %v5321 = vmul.f32 %v3972, %v5319
  %v5322 = vmul.f32 %v3975, %v5319
  %v5323 = vmul.f32 %v3977, %v5319
  %v5324 = vmul.f32 %v3980, %v5319
  %v5325 = vmul.f32 %v3982, %v5319
  %v5326 = vmul.f32 %v3985, %v5319
  %v5327 = vmul.f32 %v3987, %v5319
  %v5328 = vmul.f32 %v3990, %v5319
  %v5329 = vmul.f32 %v3992, %v5319
  %v5330 = vmul.f32 %v3995, %v5319
  %v5331 = vmul.f32 %v3997, %v5319
  %v5332 = vmul.f32 %v4000, %v5319
  %v5333 = vmul.f32 %v4002, %v5319
  %v5334 = vmul.f32 %v4005, %v5319
  %v5335 = vmul.f32 %v4007, %v5319
  %v5336 = vmul.f32 %v4010, %v5319
  %v5337 = vmul.f32 %v4012, %v5319
  %v5338 = vmul.f32 %v4015, %v5319
  %v5339 = vmul.f32 %v4017, %v5319
  %v5340 = vmul.f32 %v4020, %v5319
  %v5341 = vmul.f32 %v4022, %v5319
  %v5342 = vmul.f32 %v4025, %v5319
  %v5343 = vmul.f32 %v4027, %v5319
  %v5344 = vmul.f32 %v4030, %v5319
  %v5345 = vmul.f32 %v4032, %v5319
  %v5346 = vmul.f32 %v4035, %v5319
  %v5374 = vrot.slane %v5320, 2
  %v5375 = vrot.slane %v5321, 2
  %v5376 = vsel %vm433, %v5374, %v5375
  %v5377 = vrot.slane %v5322, 2
  %v5378 = vsel %vm433, %v5375, %v5377
  %v5379 = vrot.slane %v5323, 2
  %v5380 = vsel %vm433, %v5377, %v5379
  %v5381 = vrot.slane %v5324, 2
  %v5382 = vsel %vm433, %v5379, %v5381
  %v5383 = vrot.slane %v5325, 2
  %v5384 = vsel %vm433, %v5381, %v5383
  %v5385 = vrot.slane %v5326, 2
  %v5386 = vsel %vm433, %v5383, %v5385
  %v5387 = vrot.slane %v5327, 2
  %v5388 = vsel %vm433, %v5385, %v5387
  %v5389 = vrot.slane %v5328, 2
  %v5390 = vsel %vm433, %v5387, %v5389
  %v5391 = vrot.slane %v5329, 2
  %v5392 = vsel %vm433, %v5389, %v5391
  %v5393 = vrot.slane %v5330, 2
  %v5394 = vsel %vm433, %v5391, %v5393
  %v5395 = vrot.slane %v5331, 2
  %v5396 = vsel %vm433, %v5393, %v5395
  %v5397 = vrot.slane %v5332, 2
  %v5398 = vsel %vm433, %v5395, %v5397
  %v5399 = vrot.slane %v5333, 2
  %v5400 = vsel %vm433, %v5397, %v5399
  %v5401 = vrot.slane %v5334, 2
  %v5402 = vsel %vm433, %v5399, %v5401
  %v5403 = vrot.slane %v5335, 2
  %v5404 = vsel %vm433, %v5401, %v5403
  %v5405 = vrot.slane %v5336, 2
  %v5406 = vsel %vm433, %v5403, %v5405
  %v5407 = vrot.slane %v5337, 2
  %v5408 = vsel %vm433, %v5405, %v5407
  %v5409 = vrot.slane %v5338, 2
  %v5410 = vsel %vm433, %v5407, %v5409
  %v5411 = vrot.slane %v5339, 2
  %v5412 = vsel %vm433, %v5409, %v5411
  %v5413 = vrot.slane %v5340, 2
  %v5414 = vsel %vm433, %v5411, %v5413
  %v5415 = vrot.slane %v5341, 2
  %v5416 = vsel %vm433, %v5413, %v5415
  %v5417 = vrot.slane %v5342, 2
  %v5418 = vsel %vm433, %v5415, %v5417
  %v5419 = vrot.slane %v5343, 2
  %v5420 = vsel %vm433, %v5417, %v5419
  %v5421 = vrot.slane %v5344, 2
  %v5422 = vsel %vm433, %v5419, %v5421
  %v5423 = vrot.slane %v5345, 2
  %v5424 = vsel %vm433, %v5421, %v5423
  %v5425 = vrot.slane %v5346, 2
  %v5426 = vsel %vm433, %v5423, %v5425
  %v5453 = vadd.f32 %v5293, %v5376
  %v5454 = vadd.f32 %v5294, %v5378
  %v5455 = vadd.f32 %v5295, %v5380
  %v5456 = vadd.f32 %v5296, %v5382
  %v5457 = vadd.f32 %v5297, %v5384
  %v5458 = vadd.f32 %v5298, %v5386
  %v5459 = vadd.f32 %v5299, %v5388
  %v5460 = vadd.f32 %v5300, %v5390
  %v5461 = vadd.f32 %v5301, %v5392
  %v5462 = vadd.f32 %v5302, %v5394
  %v5463 = vadd.f32 %v5303, %v5396
  %v5464 = vadd.f32 %v5304, %v5398
  %v5465 = vadd.f32 %v5305, %v5400
  %v5466 = vadd.f32 %v5306, %v5402
  %v5467 = vadd.f32 %v5307, %v5404
  %v5468 = vadd.f32 %v5308, %v5406
  %v5469 = vadd.f32 %v5309, %v5408
  %v5470 = vadd.f32 %v5310, %v5410
  %v5471 = vadd.f32 %v5311, %v5412
  %v5472 = vadd.f32 %v5312, %v5414
  %v5473 = vadd.f32 %v5313, %v5416
  %v5474 = vadd.f32 %v5314, %v5418
  %v5475 = vadd.f32 %v5315, %v5420
  %v5476 = vadd.f32 %v5316, %v5422
  %v5477 = vadd.f32 %v5317, %v5424
  %v5478 = vadd.f32 %v5318, %v5426
  %v5479 = vperm.slane %v652, 3
  %v5480 = vmul.f32 %v3970, %v5479
  %v5481 = vmul.f32 %v3972, %v5479
  %v5482 = vmul.f32 %v3975, %v5479
  %v5483 = vmul.f32 %v3977, %v5479
  %v5484 = vmul.f32 %v3980, %v5479
  %v5485 = vmul.f32 %v3982, %v5479
  %v5486 = vmul.f32 %v3985, %v5479
  %v5487 = vmul.f32 %v3987, %v5479
  %v5488 = vmul.f32 %v3990, %v5479
  %v5489 = vmul.f32 %v3992, %v5479
  %v5490 = vmul.f32 %v3995, %v5479
  %v5491 = vmul.f32 %v3997, %v5479
  %v5492 = vmul.f32 %v4000, %v5479
  %v5493 = vmul.f32 %v4002, %v5479
  %v5494 = vmul.f32 %v4005, %v5479
  %v5495 = vmul.f32 %v4007, %v5479
  %v5496 = vmul.f32 %v4010, %v5479
  %v5497 = vmul.f32 %v4012, %v5479
  %v5498 = vmul.f32 %v4015, %v5479
  %v5499 = vmul.f32 %v4017, %v5479
  %v5500 = vmul.f32 %v4020, %v5479
  %v5501 = vmul.f32 %v4022, %v5479
  %v5502 = vmul.f32 %v4025, %v5479
  %v5503 = vmul.f32 %v4027, %v5479
  %v5504 = vmul.f32 %v4030, %v5479
  %v5505 = vmul.f32 %v4032, %v5479
  %v5506 = vmul.f32 %v4035, %v5479
  %v5534 = vrot.slane %v5480, 3
  %v5535 = vrot.slane %v5481, 3
  %v5536 = vsel %vm204, %v5534, %v5535
  %v5537 = vrot.slane %v5482, 3
  %v5538 = vsel %vm204, %v5535, %v5537
  %v5539 = vrot.slane %v5483, 3
  %v5540 = vsel %vm204, %v5537, %v5539
  %v5541 = vrot.slane %v5484, 3
  %v5542 = vsel %vm204, %v5539, %v5541
  %v5543 = vrot.slane %v5485, 3
  %v5544 = vsel %vm204, %v5541, %v5543
  %v5545 = vrot.slane %v5486, 3
  %v5546 = vsel %vm204, %v5543, %v5545
  %v5547 = vrot.slane %v5487, 3
  %v5548 = vsel %vm204, %v5545, %v5547
  %v5549 = vrot.slane %v5488, 3
  %v5550 = vsel %vm204, %v5547, %v5549
  %v5551 = vrot.slane %v5489, 3
  %v5552 = vsel %vm204, %v5549, %v5551
  %v5553 = vrot.slane %v5490, 3
  %v5554 = vsel %vm204, %v5551, %v5553
  %v5555 = vrot.slane %v5491, 3
  %v5556 = vsel %vm204, %v5553, %v5555
  %v5557 = vrot.slane %v5492, 3
  %v5558 = vsel %vm204, %v5555, %v5557
  %v5559 = vrot.slane %v5493, 3
  %v5560 = vsel %vm204, %v5557, %v5559
  %v5561 = vrot.slane %v5494, 3
  %v5562 = vsel %vm204, %v5559, %v5561
  %v5563 = vrot.slane %v5495, 3
  %v5564 = vsel %vm204, %v5561, %v5563
  %v5565 = vrot.slane %v5496, 3
  %v5566 = vsel %vm204, %v5563, %v5565
  %v5567 = vrot.slane %v5497, 3
  %v5568 = vsel %vm204, %v5565, %v5567
  %v5569 = vrot.slane %v5498, 3
  %v5570 = vsel %vm204, %v5567, %v5569
  %v5571 = vrot.slane %v5499, 3
  %v5572 = vsel %vm204, %v5569, %v5571
  %v5573 = vrot.slane %v5500, 3
  %v5574 = vsel %vm204, %v5571, %v5573
  %v5575 = vrot.slane %v5501, 3
  %v5576 = vsel %vm204, %v5573, %v5575
  %v5577 = vrot.slane %v5502, 3
  %v5578 = vsel %vm204, %v5575, %v5577
  %v5579 = vrot.slane %v5503, 3
  %v5580 = vsel %vm204, %v5577, %v5579
  %v5581 = vrot.slane %v5504, 3
  %v5582 = vsel %vm204, %v5579, %v5581
  %v5583 = vrot.slane %v5505, 3
  %v5584 = vsel %vm204, %v5581, %v5583
  %v5585 = vrot.slane %v5506, 3
  %v5586 = vsel %vm204, %v5583, %v5585
  %v5613 = vadd.f32 %v5453, %v5536
  %v5614 = vadd.f32 %v5454, %v5538
  %v5615 = vadd.f32 %v5455, %v5540
  %v5616 = vadd.f32 %v5456, %v5542
  %v5617 = vadd.f32 %v5457, %v5544
  %v5618 = vadd.f32 %v5458, %v5546
  %v5619 = vadd.f32 %v5459, %v5548
  %v5620 = vadd.f32 %v5460, %v5550
  %v5621 = vadd.f32 %v5461, %v5552
  %v5622 = vadd.f32 %v5462, %v5554
  %v5623 = vadd.f32 %v5463, %v5556
  %v5624 = vadd.f32 %v5464, %v5558
  %v5625 = vadd.f32 %v5465, %v5560
  %v5626 = vadd.f32 %v5466, %v5562
  %v5627 = vadd.f32 %v5467, %v5564
  %v5628 = vadd.f32 %v5468, %v5566
  %v5629 = vadd.f32 %v5469, %v5568
  %v5630 = vadd.f32 %v5470, %v5570
  %v5631 = vadd.f32 %v5471, %v5572
  %v5632 = vadd.f32 %v5472, %v5574
  %v5633 = vadd.f32 %v5473, %v5576
  %v5634 = vadd.f32 %v5474, %v5578
  %v5635 = vadd.f32 %v5475, %v5580
  %v5636 = vadd.f32 %v5476, %v5582
  %v5637 = vadd.f32 %v5477, %v5584
  %v5638 = vadd.f32 %v5478, %v5586
  %v5639 = vperm.slane %v652, 4
  %v5640 = vmul.f32 %v3975, %v5639
  %v5641 = vmul.f32 %v3977, %v5639
  %v5642 = vmul.f32 %v3980, %v5639
  %v5643 = vmul.f32 %v3982, %v5639
  %v5644 = vmul.f32 %v3985, %v5639
  %v5645 = vmul.f32 %v3987, %v5639
  %v5646 = vmul.f32 %v3990, %v5639
  %v5647 = vmul.f32 %v3992, %v5639
  %v5648 = vmul.f32 %v3995, %v5639
  %v5649 = vmul.f32 %v3997, %v5639
  %v5650 = vmul.f32 %v4000, %v5639
  %v5651 = vmul.f32 %v4002, %v5639
  %v5652 = vmul.f32 %v4005, %v5639
  %v5653 = vmul.f32 %v4007, %v5639
  %v5654 = vmul.f32 %v4010, %v5639
  %v5655 = vmul.f32 %v4012, %v5639
  %v5656 = vmul.f32 %v4015, %v5639
  %v5657 = vmul.f32 %v4017, %v5639
  %v5658 = vmul.f32 %v4020, %v5639
  %v5659 = vmul.f32 %v4022, %v5639
  %v5660 = vmul.f32 %v4025, %v5639
  %v5661 = vmul.f32 %v4027, %v5639
  %v5662 = vmul.f32 %v4030, %v5639
  %v5663 = vmul.f32 %v4032, %v5639
  %v5664 = vmul.f32 %v4035, %v5639
  %v5665 = vmul.f32 %v4037, %v5639
  %v5666 = vadd.f32 %v5613, %v5640
  %v5667 = vadd.f32 %v5614, %v5641
  %v5668 = vadd.f32 %v5615, %v5642
  %v5669 = vadd.f32 %v5616, %v5643
  %v5670 = vadd.f32 %v5617, %v5644
  %v5671 = vadd.f32 %v5618, %v5645
  %v5672 = vadd.f32 %v5619, %v5646
  %v5673 = vadd.f32 %v5620, %v5647
  %v5674 = vadd.f32 %v5621, %v5648
  %v5675 = vadd.f32 %v5622, %v5649
  %v5676 = vadd.f32 %v5623, %v5650
  %v5677 = vadd.f32 %v5624, %v5651
  %v5678 = vadd.f32 %v5625, %v5652
  %v5679 = vadd.f32 %v5626, %v5653
  %v5680 = vadd.f32 %v5627, %v5654
  %v5681 = vadd.f32 %v5628, %v5655
  %v5682 = vadd.f32 %v5629, %v5656
  %v5683 = vadd.f32 %v5630, %v5657
  %v5684 = vadd.f32 %v5631, %v5658
  %v5685 = vadd.f32 %v5632, %v5659
  %v5686 = vadd.f32 %v5633, %v5660
  %v5687 = vadd.f32 %v5634, %v5661
  %v5688 = vadd.f32 %v5635, %v5662
  %v5689 = vadd.f32 %v5636, %v5663
  %v5690 = vadd.f32 %v5637, %v5664
  %v5691 = vadd.f32 %v5638, %v5665
  %v5692 = vperm.slane %v652, 5
  %v5693 = vmul.f32 %v3975, %v5692
  %v5694 = vmul.f32 %v3977, %v5692
  %v5695 = vmul.f32 %v3980, %v5692
  %v5696 = vmul.f32 %v3982, %v5692
  %v5697 = vmul.f32 %v3985, %v5692
  %v5698 = vmul.f32 %v3987, %v5692
  %v5699 = vmul.f32 %v3990, %v5692
  %v5700 = vmul.f32 %v3992, %v5692
  %v5701 = vmul.f32 %v3995, %v5692
  %v5702 = vmul.f32 %v3997, %v5692
  %v5703 = vmul.f32 %v4000, %v5692
  %v5704 = vmul.f32 %v4002, %v5692
  %v5705 = vmul.f32 %v4005, %v5692
  %v5706 = vmul.f32 %v4007, %v5692
  %v5707 = vmul.f32 %v4010, %v5692
  %v5708 = vmul.f32 %v4012, %v5692
  %v5709 = vmul.f32 %v4015, %v5692
  %v5710 = vmul.f32 %v4017, %v5692
  %v5711 = vmul.f32 %v4020, %v5692
  %v5712 = vmul.f32 %v4022, %v5692
  %v5713 = vmul.f32 %v4025, %v5692
  %v5714 = vmul.f32 %v4027, %v5692
  %v5715 = vmul.f32 %v4030, %v5692
  %v5716 = vmul.f32 %v4032, %v5692
  %v5717 = vmul.f32 %v4035, %v5692
  %v5718 = vmul.f32 %v4037, %v5692
  %v5719 = vmul.f32 %v5692, 0.0
  %v5747 = vrot.slane %v5693, 1
  %v5748 = vrot.slane %v5694, 1
  %v5749 = vsel %vm4147, %v5747, %v5748
  %v5750 = vrot.slane %v5695, 1
  %v5751 = vsel %vm4147, %v5748, %v5750
  %v5752 = vrot.slane %v5696, 1
  %v5753 = vsel %vm4147, %v5750, %v5752
  %v5754 = vrot.slane %v5697, 1
  %v5755 = vsel %vm4147, %v5752, %v5754
  %v5756 = vrot.slane %v5698, 1
  %v5757 = vsel %vm4147, %v5754, %v5756
  %v5758 = vrot.slane %v5699, 1
  %v5759 = vsel %vm4147, %v5756, %v5758
  %v5760 = vrot.slane %v5700, 1
  %v5761 = vsel %vm4147, %v5758, %v5760
  %v5762 = vrot.slane %v5701, 1
  %v5763 = vsel %vm4147, %v5760, %v5762
  %v5764 = vrot.slane %v5702, 1
  %v5765 = vsel %vm4147, %v5762, %v5764
  %v5766 = vrot.slane %v5703, 1
  %v5767 = vsel %vm4147, %v5764, %v5766
  %v5768 = vrot.slane %v5704, 1
  %v5769 = vsel %vm4147, %v5766, %v5768
  %v5770 = vrot.slane %v5705, 1
  %v5771 = vsel %vm4147, %v5768, %v5770
  %v5772 = vrot.slane %v5706, 1
  %v5773 = vsel %vm4147, %v5770, %v5772
  %v5774 = vrot.slane %v5707, 1
  %v5775 = vsel %vm4147, %v5772, %v5774
  %v5776 = vrot.slane %v5708, 1
  %v5777 = vsel %vm4147, %v5774, %v5776
  %v5778 = vrot.slane %v5709, 1
  %v5779 = vsel %vm4147, %v5776, %v5778
  %v5780 = vrot.slane %v5710, 1
  %v5781 = vsel %vm4147, %v5778, %v5780
  %v5782 = vrot.slane %v5711, 1
  %v5783 = vsel %vm4147, %v5780, %v5782
  %v5784 = vrot.slane %v5712, 1
  %v5785 = vsel %vm4147, %v5782, %v5784
  %v5786 = vrot.slane %v5713, 1
  %v5787 = vsel %vm4147, %v5784, %v5786
  %v5788 = vrot.slane %v5714, 1
  %v5789 = vsel %vm4147, %v5786, %v5788
  %v5790 = vrot.slane %v5715, 1
  %v5791 = vsel %vm4147, %v5788, %v5790
  %v5792 = vrot.slane %v5716, 1
  %v5793 = vsel %vm4147, %v5790, %v5792
  %v5794 = vrot.slane %v5717, 1
  %v5795 = vsel %vm4147, %v5792, %v5794
  %v5796 = vrot.slane %v5718, 1
  %v5797 = vsel %vm4147, %v5794, %v5796
  %v5798 = vrot.slane %v5719, 1
  %v5799 = vsel %vm4147, %v5796, %v5798
  %v5826 = vadd.f32 %v5666, %v5749
  %v5827 = vadd.f32 %v5667, %v5751
  %v5828 = vadd.f32 %v5668, %v5753
  %v5829 = vadd.f32 %v5669, %v5755
  %v5830 = vadd.f32 %v5670, %v5757
  %v5831 = vadd.f32 %v5671, %v5759
  %v5832 = vadd.f32 %v5672, %v5761
  %v5833 = vadd.f32 %v5673, %v5763
  %v5834 = vadd.f32 %v5674, %v5765
  %v5835 = vadd.f32 %v5675, %v5767
  %v5836 = vadd.f32 %v5676, %v5769
  %v5837 = vadd.f32 %v5677, %v5771
  %v5838 = vadd.f32 %v5678, %v5773
  %v5839 = vadd.f32 %v5679, %v5775
  %v5840 = vadd.f32 %v5680, %v5777
  %v5841 = vadd.f32 %v5681, %v5779
  %v5842 = vadd.f32 %v5682, %v5781
  %v5843 = vadd.f32 %v5683, %v5783
  %v5844 = vadd.f32 %v5684, %v5785
  %v5845 = vadd.f32 %v5685, %v5787
  %v5846 = vadd.f32 %v5686, %v5789
  %v5847 = vadd.f32 %v5687, %v5791
  %v5848 = vadd.f32 %v5688, %v5793
  %v5849 = vadd.f32 %v5689, %v5795
  %v5850 = vadd.f32 %v5690, %v5797
  %v5851 = vadd.f32 %v5691, %v5799
  %v5852 = vperm.slane %v652, 6
  %v5853 = vmul.f32 %v3975, %v5852
  %v5854 = vmul.f32 %v3977, %v5852
  %v5855 = vmul.f32 %v3980, %v5852
  %v5856 = vmul.f32 %v3982, %v5852
  %v5857 = vmul.f32 %v3985, %v5852
  %v5858 = vmul.f32 %v3987, %v5852
  %v5859 = vmul.f32 %v3990, %v5852
  %v5860 = vmul.f32 %v3992, %v5852
  %v5861 = vmul.f32 %v3995, %v5852
  %v5862 = vmul.f32 %v3997, %v5852
  %v5863 = vmul.f32 %v4000, %v5852
  %v5864 = vmul.f32 %v4002, %v5852
  %v5865 = vmul.f32 %v4005, %v5852
  %v5866 = vmul.f32 %v4007, %v5852
  %v5867 = vmul.f32 %v4010, %v5852
  %v5868 = vmul.f32 %v4012, %v5852
  %v5869 = vmul.f32 %v4015, %v5852
  %v5870 = vmul.f32 %v4017, %v5852
  %v5871 = vmul.f32 %v4020, %v5852
  %v5872 = vmul.f32 %v4022, %v5852
  %v5873 = vmul.f32 %v4025, %v5852
  %v5874 = vmul.f32 %v4027, %v5852
  %v5875 = vmul.f32 %v4030, %v5852
  %v5876 = vmul.f32 %v4032, %v5852
  %v5877 = vmul.f32 %v4035, %v5852
  %v5878 = vmul.f32 %v4037, %v5852
  %v5879 = vmul.f32 %v5852, 0.0
  %v5907 = vrot.slane %v5853, 2
  %v5908 = vrot.slane %v5854, 2
  %v5909 = vsel %vm433, %v5907, %v5908
  %v5910 = vrot.slane %v5855, 2
  %v5911 = vsel %vm433, %v5908, %v5910
  %v5912 = vrot.slane %v5856, 2
  %v5913 = vsel %vm433, %v5910, %v5912
  %v5914 = vrot.slane %v5857, 2
  %v5915 = vsel %vm433, %v5912, %v5914
  %v5916 = vrot.slane %v5858, 2
  %v5917 = vsel %vm433, %v5914, %v5916
  %v5918 = vrot.slane %v5859, 2
  %v5919 = vsel %vm433, %v5916, %v5918
  %v5920 = vrot.slane %v5860, 2
  %v5921 = vsel %vm433, %v5918, %v5920
  %v5922 = vrot.slane %v5861, 2
  %v5923 = vsel %vm433, %v5920, %v5922
  %v5924 = vrot.slane %v5862, 2
  %v5925 = vsel %vm433, %v5922, %v5924
  %v5926 = vrot.slane %v5863, 2
  %v5927 = vsel %vm433, %v5924, %v5926
  %v5928 = vrot.slane %v5864, 2
  %v5929 = vsel %vm433, %v5926, %v5928
  %v5930 = vrot.slane %v5865, 2
  %v5931 = vsel %vm433, %v5928, %v5930
  %v5932 = vrot.slane %v5866, 2
  %v5933 = vsel %vm433, %v5930, %v5932
  %v5934 = vrot.slane %v5867, 2
  %v5935 = vsel %vm433, %v5932, %v5934
  %v5936 = vrot.slane %v5868, 2
  %v5937 = vsel %vm433, %v5934, %v5936
  %v5938 = vrot.slane %v5869, 2
  %v5939 = vsel %vm433, %v5936, %v5938
  %v5940 = vrot.slane %v5870, 2
  %v5941 = vsel %vm433, %v5938, %v5940
  %v5942 = vrot.slane %v5871, 2
  %v5943 = vsel %vm433, %v5940, %v5942
  %v5944 = vrot.slane %v5872, 2
  %v5945 = vsel %vm433, %v5942, %v5944
  %v5946 = vrot.slane %v5873, 2
  %v5947 = vsel %vm433, %v5944, %v5946
  %v5948 = vrot.slane %v5874, 2
  %v5949 = vsel %vm433, %v5946, %v5948
  %v5950 = vrot.slane %v5875, 2
  %v5951 = vsel %vm433, %v5948, %v5950
  %v5952 = vrot.slane %v5876, 2
  %v5953 = vsel %vm433, %v5950, %v5952
  %v5954 = vrot.slane %v5877, 2
  %v5955 = vsel %vm433, %v5952, %v5954
  %v5956 = vrot.slane %v5878, 2
  %v5957 = vsel %vm433, %v5954, %v5956
  %v5958 = vrot.slane %v5879, 2
  %v5959 = vsel %vm433, %v5956, %v5958
  %v5986 = vadd.f32 %v5826, %v5909
  %v5987 = vadd.f32 %v5827, %v5911
  %v5988 = vadd.f32 %v5828, %v5913
  %v5989 = vadd.f32 %v5829, %v5915
  %v5990 = vadd.f32 %v5830, %v5917
  %v5991 = vadd.f32 %v5831, %v5919
  %v5992 = vadd.f32 %v5832, %v5921
  %v5993 = vadd.f32 %v5833, %v5923
  %v5994 = vadd.f32 %v5834, %v5925
  %v5995 = vadd.f32 %v5835, %v5927
  %v5996 = vadd.f32 %v5836, %v5929
  %v5997 = vadd.f32 %v5837, %v5931
  %v5998 = vadd.f32 %v5838, %v5933
  %v5999 = vadd.f32 %v5839, %v5935
  %v6000 = vadd.f32 %v5840, %v5937
  %v6001 = vadd.f32 %v5841, %v5939
  %v6002 = vadd.f32 %v5842, %v5941
  %v6003 = vadd.f32 %v5843, %v5943
  %v6004 = vadd.f32 %v5844, %v5945
  %v6005 = vadd.f32 %v5845, %v5947
  %v6006 = vadd.f32 %v5846, %v5949
  %v6007 = vadd.f32 %v5847, %v5951
  %v6008 = vadd.f32 %v5848, %v5953
  %v6009 = vadd.f32 %v5849, %v5955
  %v6010 = vadd.f32 %v5850, %v5957
  %v6011 = vadd.f32 %v5851, %v5959
  %v6012 = vperm.slane %v652, 7
  %v6013 = vmul.f32 %v3975, %v6012
  %v6014 = vmul.f32 %v3977, %v6012
  %v6015 = vmul.f32 %v3980, %v6012
  %v6016 = vmul.f32 %v3982, %v6012
  %v6017 = vmul.f32 %v3985, %v6012
  %v6018 = vmul.f32 %v3987, %v6012
  %v6019 = vmul.f32 %v3990, %v6012
  %v6020 = vmul.f32 %v3992, %v6012
  %v6021 = vmul.f32 %v3995, %v6012
  %v6022 = vmul.f32 %v3997, %v6012
  %v6023 = vmul.f32 %v4000, %v6012
  %v6024 = vmul.f32 %v4002, %v6012
  %v6025 = vmul.f32 %v4005, %v6012
  %v6026 = vmul.f32 %v4007, %v6012
  %v6027 = vmul.f32 %v4010, %v6012
  %v6028 = vmul.f32 %v4012, %v6012
  %v6029 = vmul.f32 %v4015, %v6012
  %v6030 = vmul.f32 %v4017, %v6012
  %v6031 = vmul.f32 %v4020, %v6012
  %v6032 = vmul.f32 %v4022, %v6012
  %v6033 = vmul.f32 %v4025, %v6012
  %v6034 = vmul.f32 %v4027, %v6012
  %v6035 = vmul.f32 %v4030, %v6012
  %v6036 = vmul.f32 %v4032, %v6012
  %v6037 = vmul.f32 %v4035, %v6012
  %v6038 = vmul.f32 %v4037, %v6012
  %v6039 = vmul.f32 %v6012, 0.0
  %v6067 = vrot.slane %v6013, 3
  %v6068 = vrot.slane %v6014, 3
  %v6069 = vsel %vm204, %v6067, %v6068
  %v6070 = vrot.slane %v6015, 3
  %v6071 = vsel %vm204, %v6068, %v6070
  %v6072 = vrot.slane %v6016, 3
  %v6073 = vsel %vm204, %v6070, %v6072
  %v6074 = vrot.slane %v6017, 3
  %v6075 = vsel %vm204, %v6072, %v6074
  %v6076 = vrot.slane %v6018, 3
  %v6077 = vsel %vm204, %v6074, %v6076
  %v6078 = vrot.slane %v6019, 3
  %v6079 = vsel %vm204, %v6076, %v6078
  %v6080 = vrot.slane %v6020, 3
  %v6081 = vsel %vm204, %v6078, %v6080
  %v6082 = vrot.slane %v6021, 3
  %v6083 = vsel %vm204, %v6080, %v6082
  %v6084 = vrot.slane %v6022, 3
  %v6085 = vsel %vm204, %v6082, %v6084
  %v6086 = vrot.slane %v6023, 3
  %v6087 = vsel %vm204, %v6084, %v6086
  %v6088 = vrot.slane %v6024, 3
  %v6089 = vsel %vm204, %v6086, %v6088
  %v6090 = vrot.slane %v6025, 3
  %v6091 = vsel %vm204, %v6088, %v6090
  %v6092 = vrot.slane %v6026, 3
  %v6093 = vsel %vm204, %v6090, %v6092
  %v6094 = vrot.slane %v6027, 3
  %v6095 = vsel %vm204, %v6092, %v6094
  %v6096 = vrot.slane %v6028, 3
  %v6097 = vsel %vm204, %v6094, %v6096
  %v6098 = vrot.slane %v6029, 3
  %v6099 = vsel %vm204, %v6096, %v6098
  %v6100 = vrot.slane %v6030, 3
  %v6101 = vsel %vm204, %v6098, %v6100
  %v6102 = vrot.slane %v6031, 3
  %v6103 = vsel %vm204, %v6100, %v6102
  %v6104 = vrot.slane %v6032, 3
  %v6105 = vsel %vm204, %v6102, %v6104
  %v6106 = vrot.slane %v6033, 3
  %v6107 = vsel %vm204, %v6104, %v6106
  %v6108 = vrot.slane %v6034, 3
  %v6109 = vsel %vm204, %v6106, %v6108
  %v6110 = vrot.slane %v6035, 3
  %v6111 = vsel %vm204, %v6108, %v6110
  %v6112 = vrot.slane %v6036, 3
  %v6113 = vsel %vm204, %v6110, %v6112
  %v6114 = vrot.slane %v6037, 3
  %v6115 = vsel %vm204, %v6112, %v6114
  %v6116 = vrot.slane %v6038, 3
  %v6117 = vsel %vm204, %v6114, %v6116
  %v6118 = vrot.slane %v6039, 3
  %v6119 = vsel %vm204, %v6116, %v6118
  %v6146 = vadd.f32 %v5986, %v6069
  %v6147 = vadd.f32 %v5987, %v6071
  %v6148 = vadd.f32 %v5988, %v6073
  %v6149 = vadd.f32 %v5989, %v6075
  %v6150 = vadd.f32 %v5990, %v6077
  %v6151 = vadd.f32 %v5991, %v6079
  %v6152 = vadd.f32 %v5992, %v6081
  %v6153 = vadd.f32 %v5993, %v6083
  %v6154 = vadd.f32 %v5994, %v6085
  %v6155 = vadd.f32 %v5995, %v6087
  %v6156 = vadd.f32 %v5996, %v6089
  %v6157 = vadd.f32 %v5997, %v6091
  %v6158 = vadd.f32 %v5998, %v6093
  %v6159 = vadd.f32 %v5999, %v6095
  %v6160 = vadd.f32 %v6000, %v6097
  %v6161 = vadd.f32 %v6001, %v6099
  %v6162 = vadd.f32 %v6002, %v6101
  %v6163 = vadd.f32 %v6003, %v6103
  %v6164 = vadd.f32 %v6004, %v6105
  %v6165 = vadd.f32 %v6005, %v6107
  %v6166 = vadd.f32 %v6006, %v6109
  %v6167 = vadd.f32 %v6007, %v6111
  %v6168 = vadd.f32 %v6008, %v6113
  %v6169 = vadd.f32 %v6009, %v6115
  %v6170 = vadd.f32 %v6010, %v6117
  %v6171 = vadd.f32 %v6011, %v6119
  %v6172 = vpack.c.bf16 %v6147, %v6146
  %v6173 = vpack.c.bf16 %v6149, %v6148
  %v6174 = vpack.c.bf16 %v6151, %v6150
  %v6175 = vpack.c.bf16 %v6153, %v6152
  %v6176 = vpack.c.bf16 %v6155, %v6154
  %v6177 = vpack.c.bf16 %v6157, %v6156
  %v6178 = vpack.c.bf16 %v6159, %v6158
  %v6179 = vpack.c.bf16 %v6161, %v6160
  %v6180 = vpack.c.bf16 %v6163, %v6162
  %v6181 = vpack.c.bf16 %v6165, %v6164
  %v6182 = vpack.c.bf16 %v6167, %v6166
  %v6183 = vpack.c.bf16 %v6169, %v6168
  %v6184 = vpack.c.bf16 %v6171, %v6170
  %v6185 = vld [vmem:[%s10] sm:$0xf]
  %v6186 = vld [vmem:[%s10 + $0x4] sm:$0xf]
  %v6187 = vld [vmem:[%s10 + $0x8] sm:$0xf]
  %v6188 = vld [vmem:[%s10 + $0xc] sm:$0xf]
  %v6189 = vld [vmem:[%s10 + $0x10] sm:$0xf]
  %v6190 = vld [vmem:[%s10 + $0x14] sm:$0xf]
  %v6191 = vld [vmem:[%s10 + $0x18] sm:$0xf]
  %v6192 = vld [vmem:[%s10 + $0x1c] sm:$0xf]
  %v6193 = vld [vmem:[%s10 + $0x20] sm:$0xf]
  %v6194 = vld [vmem:[%s10 + $0x24] sm:$0xf]
  %v6195 = vld [vmem:[%s10 + $0x28] sm:$0xf]
  %v6196 = vld [vmem:[%s10 + $0x2c] sm:$0xf]
  %v6197 = vld [vmem:[%s10 + $0x30] sm:$0xf]
  %v6198 = vld [vmem:[%s10 + $0x34] sm:$0xf]
  %v6199 = vld [vmem:[%s10 + $0x38] sm:$0xf]
  %v6200 = vld [vmem:[%s10 + $0x3c] sm:$0xf]
  %v6201 = vld [vmem:[%s11] sm:$0x1]
  %v6203 = vperm.slane %v6201, 0
  %v6221 = vunpack.c.l.b16 %v6185
  %v6222 = vunpack.c.l.b16 %v6186
  %v6223 = vunpack.c.l.b16 %v6187
  %v6224 = vunpack.c.l.b16 %v6188
  %v6225 = vunpack.c.l.b16 %v6189
  %v6226 = vunpack.c.l.b16 %v6190
  %v6227 = vunpack.c.l.b16 %v6191
  %v6228 = vunpack.c.l.b16 %v6192
  %v6229 = vunpack.c.l.b16 %v6193
  %v6230 = vunpack.c.l.b16 %v6194
  %v6231 = vunpack.c.l.b16 %v6195
  %v6232 = vunpack.c.l.b16 %v6196
  %v6233 = vunpack.c.l.b16 %v6197
  %v6234 = vunpack.c.l.b16 %v6198
  %v6235 = vunpack.c.l.b16 %v6199
  %v6236 = vunpack.c.l.b16 %v6200
  %v6237 = vpack.c.b16 %v6222, %v6221
  %v6238 = vpack.c.b16 %v6224, %v6223
  %v6239 = vpack.c.b16 %v6226, %v6225
  %v6240 = vpack.c.b16 %v6228, %v6227
  %v6241 = vpack.c.b16 %v6230, %v6229
  %v6242 = vpack.c.b16 %v6232, %v6231
  %v6243 = vpack.c.b16 %v6234, %v6233
  %v6244 = vpack.c.b16 %v6236, %v6235
  %6253 = vmatpush.bf16.msra.mxu0 %v6244
  %6254 = vmatpush.bf16.msra.mxu0 %v6243
  %6255 = vmatpush.bf16.msra.mxu0 %v6242
  %6256 = vmatpush.bf16.msra.mxu0 %v6241
  %6257 = vmatpush.bf16.msra.mxu0 %v6240
  %6258 = vmatpush.bf16.msra.mxu0 %v6239
  %6259 = vmatpush.bf16.msra.mxu0 %v6238
  %6260 = vmatpush.bf16.msra.mxu0 %v6237
  %6261 = vmatmul.bf16.gmra.mxu0 %v6172
  %v6262 = vpop.f32.mrf.mxu0
  %v6263 = vadd.f32 %v6203, %v6262
  %v6264 = vpop.f32.mrf.mxu0
  %v6265 = vadd.f32 %v6203, %v6264
  %6266 = vmatmul.bf16.gmra.mxu0 %v6173
  %v6267 = vpop.f32.mrf.mxu0
  %v6268 = vadd.f32 %v6203, %v6267
  %v6269 = vpop.f32.mrf.mxu0
  %v6270 = vadd.f32 %v6203, %v6269
  %6271 = vmatmul.bf16.gmra.mxu0 %v6174
  %v6272 = vpop.f32.mrf.mxu0
  %v6273 = vadd.f32 %v6203, %v6272
  %v6274 = vpop.f32.mrf.mxu0
  %v6275 = vadd.f32 %v6203, %v6274
  %6276 = vmatmul.bf16.gmra.mxu0 %v6175
  %v6277 = vpop.f32.mrf.mxu0
  %v6278 = vadd.f32 %v6203, %v6277
  %v6279 = vpop.f32.mrf.mxu0
  %v6280 = vadd.f32 %v6203, %v6279
  %6281 = vmatmul.bf16.gmra.mxu0 %v6176
  %v6282 = vpop.f32.mrf.mxu0
  %v6283 = vadd.f32 %v6203, %v6282
  %v6284 = vpop.f32.mrf.mxu0
  %v6285 = vadd.f32 %v6203, %v6284
  %6286 = vmatmul.bf16.gmra.mxu0 %v6177
  %v6287 = vpop.f32.mrf.mxu0
  %v6288 = vadd.f32 %v6203, %v6287
  %v6289 = vpop.f32.mrf.mxu0
  %v6290 = vadd.f32 %v6203, %v6289
  %6291 = vmatmul.bf16.gmra.mxu0 %v6178
  %v6292 = vpop.f32.mrf.mxu0
  %v6293 = vadd.f32 %v6203, %v6292
  %v6294 = vpop.f32.mrf.mxu0
  %v6295 = vadd.f32 %v6203, %v6294
  %6296 = vmatmul.bf16.gmra.mxu0 %v6179
  %v6297 = vpop.f32.mrf.mxu0
  %v6298 = vadd.f32 %v6203, %v6297
  %v6299 = vpop.f32.mrf.mxu0
  %v6300 = vadd.f32 %v6203, %v6299
  %6301 = vmatmul.bf16.gmra.mxu0 %v6180
  %v6302 = vpop.f32.mrf.mxu0
  %v6303 = vadd.f32 %v6203, %v6302
  %v6304 = vpop.f32.mrf.mxu0
  %v6305 = vadd.f32 %v6203, %v6304
  %6306 = vmatmul.bf16.gmra.mxu0 %v6181
  %v6307 = vpop.f32.mrf.mxu0
  %v6308 = vadd.f32 %v6203, %v6307
  %v6309 = vpop.f32.mrf.mxu0
  %v6310 = vadd.f32 %v6203, %v6309
  %6311 = vmatmul.bf16.gmra.mxu0 %v6182
  %v6312 = vpop.f32.mrf.mxu0
  %v6313 = vadd.f32 %v6203, %v6312
  %v6314 = vpop.f32.mrf.mxu0
  %v6315 = vadd.f32 %v6203, %v6314
  %6316 = vmatmul.bf16.gmra.mxu0 %v6183
  %v6317 = vpop.f32.mrf.mxu0
  %v6318 = vadd.f32 %v6203, %v6317
  %v6319 = vpop.f32.mrf.mxu0
  %v6320 = vadd.f32 %v6203, %v6319
  %6321 = vmatmul.bf16.gmra.mxu0 %v6184
  %v6322 = vpop.f32.mrf.mxu0
  %v6323 = vadd.f32 %v6203, %v6322
  %v6324 = vpop.f32.mrf.mxu0
  %v6325 = vadd.f32 %v6203, %v6324
  %6326 = vdwg.mxu0
  %v6327 = vmax.f32 %v6263, 0.0
  %v6328 = vmax.f32 %v6265, 0.0
  %v6329 = vmax.f32 %v6268, 0.0
  %v6330 = vmax.f32 %v6270, 0.0
  %v6331 = vmax.f32 %v6273, 0.0
  %v6332 = vmax.f32 %v6275, 0.0
  %v6333 = vmax.f32 %v6278, 0.0
  %v6334 = vmax.f32 %v6280, 0.0
  %v6335 = vmax.f32 %v6283, 0.0
  %v6336 = vmax.f32 %v6285, 0.0
  %v6337 = vmax.f32 %v6288, 0.0
  %v6338 = vmax.f32 %v6290, 0.0
  %v6339 = vmax.f32 %v6293, 0.0
  %v6340 = vmax.f32 %v6295, 0.0
  %v6341 = vmax.f32 %v6298, 0.0
  %v6342 = vmax.f32 %v6300, 0.0
  %v6343 = vmax.f32 %v6303, 0.0
  %v6344 = vmax.f32 %v6305, 0.0
  %v6345 = vmax.f32 %v6308, 0.0
  %v6346 = vmax.f32 %v6310, 0.0
  %v6347 = vmax.f32 %v6313, 0.0
  %v6348 = vmax.f32 %v6315, 0.0
  %v6349 = vmax.f32 %v6318, 0.0
  %v6350 = vmax.f32 %v6320, 0.0
  %v6351 = vmax.f32 %v6323, 0.0
  %v6352 = vmax.f32 %v6325, 0.0
  %v6353 = vpack.c.bf16 %v6328, %v6327
  %v6354 = vpack.c.bf16 %v6330, %v6329
  %v6355 = vpack.c.bf16 %v6332, %v6331
  %v6356 = vpack.c.bf16 %v6334, %v6333
  %v6357 = vpack.c.bf16 %v6336, %v6335
  %v6358 = vpack.c.bf16 %v6338, %v6337
  %v6359 = vpack.c.bf16 %v6340, %v6339
  %v6360 = vpack.c.bf16 %v6342, %v6341
  %v6361 = vpack.c.bf16 %v6344, %v6343
  %v6362 = vpack.c.bf16 %v6346, %v6345
  %v6363 = vpack.c.bf16 %v6348, %v6347
  %v6364 = vpack.c.bf16 %v6350, %v6349
  %v6365 = vpack.c.bf16 %v6352, %v6351
  %v6366 = vld [vmem:[%s12] sm:$0xf]
  %v6367 = vld [vmem:[%s12 + $0x4] sm:$0xf]
  %v6368 = vld [vmem:[%s12 + $0x8] sm:$0xf]
  %v6369 = vld [vmem:[%s12 + $0xc] sm:$0xf]
  %v6370 = vld [vmem:[%s12 + $0x10] sm:$0xf]
  %v6371 = vld [vmem:[%s12 + $0x14] sm:$0xf]
  %v6372 = vld [vmem:[%s12 + $0x18] sm:$0xf]
  %v6373 = vld [vmem:[%s12 + $0x1c] sm:$0xf]
  %v6374 = vld [vmem:[%s12 + $0x20] sm:$0xf]
  %v6375 = vld [vmem:[%s12 + $0x24] sm:$0xf]
  %v6376 = vld [vmem:[%s12 + $0x28] sm:$0xf]
  %v6377 = vld [vmem:[%s12 + $0x2c] sm:$0xf]
  %v6378 = vld [vmem:[%s12 + $0x30] sm:$0xf]
  %v6379 = vld [vmem:[%s12 + $0x34] sm:$0xf]
  %v6380 = vld [vmem:[%s12 + $0x38] sm:$0xf]
  %v6381 = vld [vmem:[%s12 + $0x3c] sm:$0xf]
  %v6382 = vld [vmem:[%s13] sm:$0x1]
  %v6384 = vperm.slane %v6382, 0
  %v6402 = vunpack.c.l.b16 %v6366
  %v6403 = vunpack.c.l.b16 %v6367
  %v6404 = vunpack.c.l.b16 %v6368
  %v6405 = vunpack.c.l.b16 %v6369
  %v6406 = vunpack.c.l.b16 %v6370
  %v6407 = vunpack.c.l.b16 %v6371
  %v6408 = vunpack.c.l.b16 %v6372
  %v6409 = vunpack.c.l.b16 %v6373
  %v6410 = vunpack.c.l.b16 %v6374
  %v6411 = vunpack.c.l.b16 %v6375
  %v6412 = vunpack.c.l.b16 %v6376
  %v6413 = vunpack.c.l.b16 %v6377
  %v6414 = vunpack.c.l.b16 %v6378
  %v6415 = vunpack.c.l.b16 %v6379
  %v6416 = vunpack.c.l.b16 %v6380
  %v6417 = vunpack.c.l.b16 %v6381
  %v6418 = vpack.c.b16 %v6403, %v6402
  %v6419 = vpack.c.b16 %v6405, %v6404
  %v6420 = vpack.c.b16 %v6407, %v6406
  %v6421 = vpack.c.b16 %v6409, %v6408
  %v6422 = vpack.c.b16 %v6411, %v6410
  %v6423 = vpack.c.b16 %v6413, %v6412
  %v6424 = vpack.c.b16 %v6415, %v6414
  %v6425 = vpack.c.b16 %v6417, %v6416
  %6434 = vmatpush.bf16.msra.mxu0 %v6425
  %6435 = vmatpush.bf16.msra.mxu0 %v6424
  %6436 = vmatpush.bf16.msra.mxu0 %v6423
  %6437 = vmatpush.bf16.msra.mxu0 %v6422
  %6438 = vmatpush.bf16.msra.mxu0 %v6421
  %6439 = vmatpush.bf16.msra.mxu0 %v6420
  %6440 = vmatpush.bf16.msra.mxu0 %v6419
  %6441 = vmatpush.bf16.msra.mxu0 %v6418
  %6442 = vmatmul.bf16.gmra.mxu0 %v6353
  %v6443 = vpop.f32.mrf.mxu0
  %v6444 = vadd.f32 %v6384, %v6443
  %v6445 = vpop.f32.mrf.mxu0
  %v6446 = vadd.f32 %v6384, %v6445
  %6447 = vmatmul.bf16.gmra.mxu0 %v6354
  %v6448 = vpop.f32.mrf.mxu0
  %v6449 = vadd.f32 %v6384, %v6448
  %v6450 = vpop.f32.mrf.mxu0
  %v6451 = vadd.f32 %v6384, %v6450
  %6452 = vmatmul.bf16.gmra.mxu0 %v6355
  %v6453 = vpop.f32.mrf.mxu0
  %v6454 = vadd.f32 %v6384, %v6453
  %v6455 = vpop.f32.mrf.mxu0
  %v6456 = vadd.f32 %v6384, %v6455
  %6457 = vmatmul.bf16.gmra.mxu0 %v6356
  %v6458 = vpop.f32.mrf.mxu0
  %v6459 = vadd.f32 %v6384, %v6458
  %v6460 = vpop.f32.mrf.mxu0
  %v6461 = vadd.f32 %v6384, %v6460
  %6462 = vmatmul.bf16.gmra.mxu0 %v6357
  %v6463 = vpop.f32.mrf.mxu0
  %v6464 = vadd.f32 %v6384, %v6463
  %v6465 = vpop.f32.mrf.mxu0
  %v6466 = vadd.f32 %v6384, %v6465
  %6467 = vmatmul.bf16.gmra.mxu0 %v6358
  %v6468 = vpop.f32.mrf.mxu0
  %v6469 = vadd.f32 %v6384, %v6468
  %v6470 = vpop.f32.mrf.mxu0
  %v6471 = vadd.f32 %v6384, %v6470
  %6472 = vmatmul.bf16.gmra.mxu0 %v6359
  %v6473 = vpop.f32.mrf.mxu0
  %v6474 = vadd.f32 %v6384, %v6473
  %v6475 = vpop.f32.mrf.mxu0
  %v6476 = vadd.f32 %v6384, %v6475
  %6477 = vmatmul.bf16.gmra.mxu0 %v6360
  %v6478 = vpop.f32.mrf.mxu0
  %v6479 = vadd.f32 %v6384, %v6478
  %v6480 = vpop.f32.mrf.mxu0
  %v6481 = vadd.f32 %v6384, %v6480
  %6482 = vmatmul.bf16.gmra.mxu0 %v6361
  %v6483 = vpop.f32.mrf.mxu0
  %v6484 = vadd.f32 %v6384, %v6483
  %v6485 = vpop.f32.mrf.mxu0
  %v6486 = vadd.f32 %v6384, %v6485
  %6487 = vmatmul.bf16.gmra.mxu0 %v6362
  %v6488 = vpop.f32.mrf.mxu0
  %v6489 = vadd.f32 %v6384, %v6488
  %v6490 = vpop.f32.mrf.mxu0
  %v6491 = vadd.f32 %v6384, %v6490
  %6492 = vmatmul.bf16.gmra.mxu0 %v6363
  %v6493 = vpop.f32.mrf.mxu0
  %v6494 = vadd.f32 %v6384, %v6493
  %v6495 = vpop.f32.mrf.mxu0
  %v6496 = vadd.f32 %v6384, %v6495
  %6497 = vmatmul.bf16.gmra.mxu0 %v6364
  %v6498 = vpop.f32.mrf.mxu0
  %v6499 = vadd.f32 %v6384, %v6498
  %v6500 = vpop.f32.mrf.mxu0
  %v6501 = vadd.f32 %v6384, %v6500
  %6502 = vmatmul.bf16.gmra.mxu0 %v6365
  %v6503 = vpop.f32.mrf.mxu0
  %v6504 = vadd.f32 %v6384, %v6503
  %v6505 = vpop.f32.mrf.mxu0
  %v6506 = vadd.f32 %v6384, %v6505
  %6507 = vdwg.mxu0
  %v6508 = vld [vmem:[%s14] sm:$0xff]
  %v6509 = vld [vmem:[%s14 + $0x8] sm:$0xff]
  %v6510 = vld [vmem:[%s14 + $0x10] sm:$0xff]
  %v6511 = vld [vmem:[%s14 + $0x18] sm:$0xff]
  %v6512 = vld [vmem:[%s14 + $0x20] sm:$0xff]
  %v6513 = vld [vmem:[%s14 + $0x28] sm:$0xff]
  %v6514 = vld [vmem:[%s14 + $0x30] sm:$0xff]
  %v6515 = vld [vmem:[%s14 + $0x38] sm:$0xff]
  %v6517 = vsel %vm143, %v6444, 0
  %v6520 = vsel %vm143, %v6446, 0
  %v6523 = vsel %vm143, %v6449, 0
  %v6526 = vsel %vm143, %v6451, 0
  %v6529 = vsel %vm143, %v6454, 0
  %v6532 = vsel %vm143, %v6456, 0
  %v6535 = vsel %vm143, %v6459, 0
  %v6538 = vsel %vm143, %v6461, 0
  %v6541 = vsel %vm143, %v6464, 0
  %v6544 = vsel %vm143, %v6466, 0
  %v6547 = vsel %vm143, %v6469, 0
  %v6550 = vsel %vm143, %v6471, 0
  %v6553 = vsel %vm143, %v6474, 0
  %v6556 = vsel %vm143, %v6476, 0
  %v6559 = vsel %vm143, %v6479, 0
  %v6562 = vsel %vm143, %v6481, 0
  %v6565 = vsel %vm143, %v6484, 0
  %v6568 = vsel %vm143, %v6486, 0
  %v6571 = vsel %vm143, %v6489, 0
  %v6574 = vsel %vm143, %v6491, 0
  %v6577 = vsel %vm143, %v6494, 0
  %v6580 = vsel %vm143, %v6496, 0
  %v6583 = vsel %vm143, %v6499, 0
  %v6586 = vsel %vm143, %v6501, 0
  %v6589 = vsel %vm143, %v6504, 0
  %v6592 = vsel %vm143, %v6506, 0
  %6594 = vmatpush.msra.mxu0 0.0
  %6595 = vmatpush.msra.mxu0 0.0
  %6596 = vmatpush.msra.mxu0 0.0
  %6597 = vmatpush.msra.mxu0 0.0
  %6598 = vmatpush.msra.mxu0 0.0
  %6599 = vmatpush.msra.mxu0 0.0
  %6600 = vmatpush.msra.mxu0 0.0
  %6601 = vmatpush.msra.mxu0 0.0
  %6602 = vmatpush.msra.mxu0 %v6515
  %6603 = vmatpush.msra.mxu0 %v6514
  %6604 = vmatpush.msra.mxu0 %v6513
  %6605 = vmatpush.msra.mxu0 %v6512
  %6606 = vmatpush.msra.mxu0 %v6511
  %6607 = vmatpush.msra.mxu0 %v6510
  %6608 = vmatpush.msra.mxu0 %v6509
  %6609 = vmatpush.msra.mxu0 %v6508
  %6610 = vmatmul.f32.gmra.mxu0 %v6517
  %v6611 = vpop.f32.mrf.mxu0
  %v6612 = vadd.f32 0.0, %v6611
  %6613 = vmatmul.f32.gmra.mxu0 %v6520
  %v6614 = vpop.f32.mrf.mxu0
  %v6615 = vadd.f32 0.0, %v6614
  %6616 = vmatmul.f32.gmra.mxu0 %v6523
  %v6617 = vpop.f32.mrf.mxu0
  %v6618 = vadd.f32 0.0, %v6617
  %6619 = vmatmul.f32.gmra.mxu0 %v6526
  %v6620 = vpop.f32.mrf.mxu0
  %v6621 = vadd.f32 0.0, %v6620
  %6622 = vmatmul.f32.gmra.mxu0 %v6529
  %v6623 = vpop.f32.mrf.mxu0
  %v6624 = vadd.f32 0.0, %v6623
  %6625 = vmatmul.f32.gmra.mxu0 %v6532
  %v6626 = vpop.f32.mrf.mxu0
  %v6627 = vadd.f32 0.0, %v6626
  %6628 = vmatmul.f32.gmra.mxu0 %v6535
  %v6629 = vpop.f32.mrf.mxu0
  %v6630 = vadd.f32 0.0, %v6629
  %6631 = vmatmul.f32.gmra.mxu0 %v6538
  %v6632 = vpop.f32.mrf.mxu0
  %v6633 = vadd.f32 0.0, %v6632
  %6634 = vmatmul.f32.gmra.mxu0 %v6541
  %v6635 = vpop.f32.mrf.mxu0
  %v6636 = vadd.f32 0.0, %v6635
  %6637 = vmatmul.f32.gmra.mxu0 %v6544
  %v6638 = vpop.f32.mrf.mxu0
  %v6639 = vadd.f32 0.0, %v6638
  %6640 = vmatmul.f32.gmra.mxu0 %v6547
  %v6641 = vpop.f32.mrf.mxu0
  %v6642 = vadd.f32 0.0, %v6641
  %6643 = vmatmul.f32.gmra.mxu0 %v6550
  %v6644 = vpop.f32.mrf.mxu0
  %v6645 = vadd.f32 0.0, %v6644
  %6646 = vmatmul.f32.gmra.mxu0 %v6553
  %v6647 = vpop.f32.mrf.mxu0
  %v6648 = vadd.f32 0.0, %v6647
  %6649 = vmatmul.f32.gmra.mxu0 %v6556
  %v6650 = vpop.f32.mrf.mxu0
  %v6651 = vadd.f32 0.0, %v6650
  %6652 = vmatmul.f32.gmra.mxu0 %v6559
  %v6653 = vpop.f32.mrf.mxu0
  %v6654 = vadd.f32 0.0, %v6653
  %6655 = vmatmul.f32.gmra.mxu0 %v6562
  %v6656 = vpop.f32.mrf.mxu0
  %v6657 = vadd.f32 0.0, %v6656
  %6658 = vmatmul.f32.gmra.mxu0 %v6565
  %v6659 = vpop.f32.mrf.mxu0
  %v6660 = vadd.f32 0.0, %v6659
  %6661 = vmatmul.f32.gmra.mxu0 %v6568
  %v6662 = vpop.f32.mrf.mxu0
  %v6663 = vadd.f32 0.0, %v6662
  %6664 = vmatmul.f32.gmra.mxu0 %v6571
  %v6665 = vpop.f32.mrf.mxu0
  %v6666 = vadd.f32 0.0, %v6665
  %6667 = vmatmul.f32.gmra.mxu0 %v6574
  %v6668 = vpop.f32.mrf.mxu0
  %v6669 = vadd.f32 0.0, %v6668
  %6670 = vmatmul.f32.gmra.mxu0 %v6577
  %v6671 = vpop.f32.mrf.mxu0
  %v6672 = vadd.f32 0.0, %v6671
  %6673 = vmatmul.f32.gmra.mxu0 %v6580
  %v6674 = vpop.f32.mrf.mxu0
  %v6675 = vadd.f32 0.0, %v6674
  %6676 = vmatmul.f32.gmra.mxu0 %v6583
  %v6677 = vpop.f32.mrf.mxu0
  %v6678 = vadd.f32 0.0, %v6677
  %6679 = vmatmul.f32.gmra.mxu0 %v6586
  %v6680 = vpop.f32.mrf.mxu0
  %v6681 = vadd.f32 0.0, %v6680
  %6682 = vmatmul.f32.gmra.mxu0 %v6589
  %v6683 = vpop.f32.mrf.mxu0
  %v6684 = vadd.f32 0.0, %v6683
  %6685 = vmatmul.f32.gmra.mxu0 %v6592
  %v6686 = vpop.f32.mrf.mxu0
  %v6687 = vadd.f32 0.0, %v6686
  %6688 = vdwg.mxu0
  %v6689 = vsub.f32 %v6444, %v6612
  %v6690 = vsub.f32 %v6446, %v6615
  %v6691 = vsub.f32 %v6449, %v6618
  %v6692 = vsub.f32 %v6451, %v6621
  %v6693 = vsub.f32 %v6454, %v6624
  %v6694 = vsub.f32 %v6456, %v6627
  %v6695 = vsub.f32 %v6459, %v6630
  %v6696 = vsub.f32 %v6461, %v6633
  %v6697 = vsub.f32 %v6464, %v6636
  %v6698 = vsub.f32 %v6466, %v6639
  %v6699 = vsub.f32 %v6469, %v6642
  %v6700 = vsub.f32 %v6471, %v6645
  %v6701 = vsub.f32 %v6474, %v6648
  %v6702 = vsub.f32 %v6476, %v6651
  %v6703 = vsub.f32 %v6479, %v6654
  %v6704 = vsub.f32 %v6481, %v6657
  %v6705 = vsub.f32 %v6484, %v6660
  %v6706 = vsub.f32 %v6486, %v6663
  %v6707 = vsub.f32 %v6489, %v6666
  %v6708 = vsub.f32 %v6491, %v6669
  %v6709 = vsub.f32 %v6494, %v6672
  %v6710 = vsub.f32 %v6496, %v6675
  %v6711 = vsub.f32 %v6499, %v6678
  %v6712 = vsub.f32 %v6501, %v6681
  %v6713 = vsub.f32 %v6504, %v6684
  %v6714 = vsub.f32 %v6506, %v6687
  %v6715 = vmul.f32 %v6689, 1.442695
  %v6716 = vpow.pop %v6715
  %v6717 = vmul.f32 %v6690, 1.442695
  %v6718 = vpow.pop %v6717
  %v6719 = vmul.f32 %v6691, 1.442695
  %v6720 = vpow.pop %v6719
  %v6721 = vmul.f32 %v6692, 1.442695
  %v6722 = vpow.pop %v6721
  %v6723 = vmul.f32 %v6693, 1.442695
  %v6724 = vpow.pop %v6723
  %v6725 = vmul.f32 %v6694, 1.442695
  %v6726 = vpow.pop %v6725
  %v6727 = vmul.f32 %v6695, 1.442695
  %v6728 = vpow.pop %v6727
  %v6729 = vmul.f32 %v6696, 1.442695
  %v6730 = vpow.pop %v6729
  %v6731 = vmul.f32 %v6697, 1.442695
  %v6732 = vpow.pop %v6731
  %v6733 = vmul.f32 %v6698, 1.442695
  %v6734 = vpow.pop %v6733
  %v6735 = vmul.f32 %v6699, 1.442695
  %v6736 = vpow.pop %v6735
  %v6737 = vmul.f32 %v6700, 1.442695
  %v6738 = vpow.pop %v6737
  %v6739 = vmul.f32 %v6701, 1.442695
  %v6740 = vpow.pop %v6739
  %v6741 = vmul.f32 %v6702, 1.442695
  %v6742 = vpow.pop %v6741
  %v6743 = vmul.f32 %v6703, 1.442695
  %v6744 = vpow.pop %v6743
  %v6745 = vmul.f32 %v6704, 1.442695
  %v6746 = vpow.pop %v6745
  %v6747 = vmul.f32 %v6705, 1.442695
  %v6748 = vpow.pop %v6747
  %v6749 = vmul.f32 %v6706, 1.442695
  %v6750 = vpow.pop %v6749
  %v6751 = vmul.f32 %v6707, 1.442695
  %v6752 = vpow.pop %v6751
  %v6753 = vmul.f32 %v6708, 1.442695
  %v6754 = vpow.pop %v6753
  %v6755 = vmul.f32 %v6709, 1.442695
  %v6756 = vpow.pop %v6755
  %v6757 = vmul.f32 %v6710, 1.442695
  %v6758 = vpow.pop %v6757
  %v6759 = vmul.f32 %v6711, 1.442695
  %v6760 = vpow.pop %v6759
  %v6761 = vmul.f32 %v6712, 1.442695
  %v6762 = vpow.pop %v6761
  %v6763 = vmul.f32 %v6713, 1.442695
  %v6764 = vpow.pop %v6763
  %v6765 = vmul.f32 %v6714, 1.442695
  %v6766 = vpow.pop %v6765
  %v6767 = vld [vmem:[%s15] sm:$0xff]
  %v6768 = vld [vmem:[%s15 + $0x8] sm:$0xff]
  %v6769 = vld [vmem:[%s15 + $0x10] sm:$0xff]
  %v6770 = vld [vmem:[%s15 + $0x18] sm:$0xff]
  %v6771 = vld [vmem:[%s15 + $0x20] sm:$0xff]
  %v6772 = vld [vmem:[%s15 + $0x28] sm:$0xff]
  %v6773 = vld [vmem:[%s15 + $0x30] sm:$0xff]
  %v6774 = vld [vmem:[%s15 + $0x38] sm:$0xff]
  %v6776 = vsel %vm143, %v6716, 0
  %v6779 = vsel %vm143, %v6718, 0
  %v6782 = vsel %vm143, %v6720, 0
  %v6785 = vsel %vm143, %v6722, 0
  %v6788 = vsel %vm143, %v6724, 0
  %v6791 = vsel %vm143, %v6726, 0
  %v6794 = vsel %vm143, %v6728, 0
  %v6797 = vsel %vm143, %v6730, 0
  %v6800 = vsel %vm143, %v6732, 0
  %v6803 = vsel %vm143, %v6734, 0
  %v6806 = vsel %vm143, %v6736, 0
  %v6809 = vsel %vm143, %v6738, 0
  %v6812 = vsel %vm143, %v6740, 0
  %v6815 = vsel %vm143, %v6742, 0
  %v6818 = vsel %vm143, %v6744, 0
  %v6821 = vsel %vm143, %v6746, 0
  %v6824 = vsel %vm143, %v6748, 0
  %v6827 = vsel %vm143, %v6750, 0
  %v6830 = vsel %vm143, %v6752, 0
  %v6833 = vsel %vm143, %v6754, 0
  %v6836 = vsel %vm143, %v6756, 0
  %v6839 = vsel %vm143, %v6758, 0
  %v6842 = vsel %vm143, %v6760, 0
  %v6845 = vsel %vm143, %v6762, 0
  %v6848 = vsel %vm143, %v6764, 0
  %v6851 = vsel %vm143, %v6766, 0
  %6853 = vmatpush.msra.mxu0 0.0
  %6854 = vmatpush.msra.mxu0 0.0
  %6855 = vmatpush.msra.mxu0 0.0
  %6856 = vmatpush.msra.mxu0 0.0
  %6857 = vmatpush.msra.mxu0 0.0
  %6858 = vmatpush.msra.mxu0 0.0
  %6859 = vmatpush.msra.mxu0 0.0
  %6860 = vmatpush.msra.mxu0 0.0
  %6861 = vmatpush.msra.mxu0 %v6774
  %6862 = vmatpush.msra.mxu0 %v6773
  %6863 = vmatpush.msra.mxu0 %v6772
  %6864 = vmatpush.msra.mxu0 %v6771
  %6865 = vmatpush.msra.mxu0 %v6770
  %6866 = vmatpush.msra.mxu0 %v6769
  %6867 = vmatpush.msra.mxu0 %v6768
  %6868 = vmatpush.msra.mxu0 %v6767
  %6869 = vmatmul.f32.gmra.mxu0 %v6776
  %v6870 = vpop.f32.mrf.mxu0
  %v6871 = vadd.f32 0.0, %v6870
  %6872 = vmatmul.f32.gmra.mxu0 %v6779
  %v6873 = vpop.f32.mrf.mxu0
  %v6874 = vadd.f32 0.0, %v6873
  %6875 = vmatmul.f32.gmra.mxu0 %v6782
  %v6876 = vpop.f32.mrf.mxu0
  %v6877 = vadd.f32 0.0, %v6876
  %6878 = vmatmul.f32.gmra.mxu0 %v6785
  %v6879 = vpop.f32.mrf.mxu0
  %v6880 = vadd.f32 0.0, %v6879
  %6881 = vmatmul.f32.gmra.mxu0 %v6788
  %v6882 = vpop.f32.mrf.mxu0
  %v6883 = vadd.f32 0.0, %v6882
  %6884 = vmatmul.f32.gmra.mxu0 %v6791
  %v6885 = vpop.f32.mrf.mxu0
  %v6886 = vadd.f32 0.0, %v6885
  %6887 = vmatmul.f32.gmra.mxu0 %v6794
  %v6888 = vpop.f32.mrf.mxu0
  %v6889 = vadd.f32 0.0, %v6888
  %6890 = vmatmul.f32.gmra.mxu0 %v6797
  %v6891 = vpop.f32.mrf.mxu0
  %v6892 = vadd.f32 0.0, %v6891
  %6893 = vmatmul.f32.gmra.mxu0 %v6800
  %v6894 = vpop.f32.mrf.mxu0
  %v6895 = vadd.f32 0.0, %v6894
  %6896 = vmatmul.f32.gmra.mxu0 %v6803
  %v6897 = vpop.f32.mrf.mxu0
  %v6898 = vadd.f32 0.0, %v6897
  %6899 = vmatmul.f32.gmra.mxu0 %v6806
  %v6900 = vpop.f32.mrf.mxu0
  %v6901 = vadd.f32 0.0, %v6900
  %6902 = vmatmul.f32.gmra.mxu0 %v6809
  %v6903 = vpop.f32.mrf.mxu0
  %v6904 = vadd.f32 0.0, %v6903
  %6905 = vmatmul.f32.gmra.mxu0 %v6812
  %v6906 = vpop.f32.mrf.mxu0
  %v6907 = vadd.f32 0.0, %v6906
  %6908 = vmatmul.f32.gmra.mxu0 %v6815
  %v6909 = vpop.f32.mrf.mxu0
  %v6910 = vadd.f32 0.0, %v6909
  %6911 = vmatmul.f32.gmra.mxu0 %v6818
  %v6912 = vpop.f32.mrf.mxu0
  %v6913 = vadd.f32 0.0, %v6912
  %6914 = vmatmul.f32.gmra.mxu0 %v6821
  %v6915 = vpop.f32.mrf.mxu0
  %v6916 = vadd.f32 0.0, %v6915
  %6917 = vmatmul.f32.gmra.mxu0 %v6824
  %v6918 = vpop.f32.mrf.mxu0
  %v6919 = vadd.f32 0.0, %v6918
  %6920 = vmatmul.f32.gmra.mxu0 %v6827
  %v6921 = vpop.f32.mrf.mxu0
  %v6922 = vadd.f32 0.0, %v6921
  %6923 = vmatmul.f32.gmra.mxu0 %v6830
  %v6924 = vpop.f32.mrf.mxu0
  %v6925 = vadd.f32 0.0, %v6924
  %6926 = vmatmul.f32.gmra.mxu0 %v6833
  %v6927 = vpop.f32.mrf.mxu0
  %v6928 = vadd.f32 0.0, %v6927
  %6929 = vmatmul.f32.gmra.mxu0 %v6836
  %v6930 = vpop.f32.mrf.mxu0
  %v6931 = vadd.f32 0.0, %v6930
  %6932 = vmatmul.f32.gmra.mxu0 %v6839
  %v6933 = vpop.f32.mrf.mxu0
  %v6934 = vadd.f32 0.0, %v6933
  %6935 = vmatmul.f32.gmra.mxu0 %v6842
  %v6936 = vpop.f32.mrf.mxu0
  %v6937 = vadd.f32 0.0, %v6936
  %6938 = vmatmul.f32.gmra.mxu0 %v6845
  %v6939 = vpop.f32.mrf.mxu0
  %v6940 = vadd.f32 0.0, %v6939
  %6941 = vmatmul.f32.gmra.mxu0 %v6848
  %v6942 = vpop.f32.mrf.mxu0
  %v6943 = vadd.f32 0.0, %v6942
  %6944 = vmatmul.f32.gmra.mxu0 %v6851
  %v6945 = vpop.f32.mrf.mxu0
  %v6946 = vadd.f32 0.0, %v6945
  %6947 = vdwg.mxu0
  %v6948 = vmax.f32 %v6871, 1e-20
  %v6949 = vmax.f32 %v6874, 1e-20
  %v6950 = vmax.f32 %v6877, 1e-20
  %v6951 = vmax.f32 %v6880, 1e-20
  %v6952 = vmax.f32 %v6883, 1e-20
  %v6953 = vmax.f32 %v6886, 1e-20
  %v6954 = vmax.f32 %v6889, 1e-20
  %v6955 = vmax.f32 %v6892, 1e-20
  %v6956 = vmax.f32 %v6895, 1e-20
  %v6957 = vmax.f32 %v6898, 1e-20
  %v6958 = vmax.f32 %v6901, 1e-20
  %v6959 = vmax.f32 %v6904, 1e-20
  %v6960 = vmax.f32 %v6907, 1e-20
  %v6961 = vmax.f32 %v6910, 1e-20
  %v6962 = vmax.f32 %v6913, 1e-20
  %v6963 = vmax.f32 %v6916, 1e-20
  %v6964 = vmax.f32 %v6919, 1e-20
  %v6965 = vmax.f32 %v6922, 1e-20
  %v6966 = vmax.f32 %v6925, 1e-20
  %v6967 = vmax.f32 %v6928, 1e-20
  %v6968 = vmax.f32 %v6931, 1e-20
  %v6969 = vmax.f32 %v6934, 1e-20
  %v6970 = vmax.f32 %v6937, 1e-20
  %v6971 = vmax.f32 %v6940, 1e-20
  %v6972 = vmax.f32 %v6943, 1e-20
  %v6973 = vmax.f32 %v6946, 1e-20
  %7000 = vrot.lane.b32.xlu0 %v6948, 120
  %v7001 = vpop.permute.xlu0 %7000
  %7002 = vrot.lane.b32.xlu0 %v6949, 120
  %v7003 = vpop.permute.xlu0 %7002
  %7004 = vrot.lane.b32.xlu0 %v6950, 120
  %v7005 = vpop.permute.xlu0 %7004
  %7006 = vrot.lane.b32.xlu0 %v6951, 120
  %v7007 = vpop.permute.xlu0 %7006
  %7008 = vrot.lane.b32.xlu0 %v6952, 120
  %v7009 = vpop.permute.xlu0 %7008
  %7010 = vrot.lane.b32.xlu0 %v6953, 120
  %v7011 = vpop.permute.xlu0 %7010
  %7012 = vrot.lane.b32.xlu0 %v6954, 120
  %v7013 = vpop.permute.xlu0 %7012
  %7014 = vrot.lane.b32.xlu0 %v6955, 120
  %v7015 = vpop.permute.xlu0 %7014
  %7016 = vrot.lane.b32.xlu0 %v6956, 120
  %v7017 = vpop.permute.xlu0 %7016
  %7018 = vrot.lane.b32.xlu0 %v6957, 120
  %v7019 = vpop.permute.xlu0 %7018
  %7020 = vrot.lane.b32.xlu0 %v6958, 120
  %v7021 = vpop.permute.xlu0 %7020
  %7022 = vrot.lane.b32.xlu0 %v6959, 120
  %v7023 = vpop.permute.xlu0 %7022
  %7024 = vrot.lane.b32.xlu0 %v6960, 120
  %v7025 = vpop.permute.xlu0 %7024
  %7026 = vrot.lane.b32.xlu0 %v6961, 120
  %v7027 = vpop.permute.xlu0 %7026
  %7028 = vrot.lane.b32.xlu0 %v6962, 120
  %v7029 = vpop.permute.xlu0 %7028
  %7030 = vrot.lane.b32.xlu0 %v6963, 120
  %v7031 = vpop.permute.xlu0 %7030
  %7032 = vrot.lane.b32.xlu0 %v6964, 120
  %v7033 = vpop.permute.xlu0 %7032
  %7034 = vrot.lane.b32.xlu0 %v6965, 120
  %v7035 = vpop.permute.xlu0 %7034
  %7036 = vrot.lane.b32.xlu0 %v6966, 120
  %v7037 = vpop.permute.xlu0 %7036
  %7038 = vrot.lane.b32.xlu0 %v6967, 120
  %v7039 = vpop.permute.xlu0 %7038
  %7040 = vrot.lane.b32.xlu0 %v6968, 120
  %v7041 = vpop.permute.xlu0 %7040
  %7042 = vrot.lane.b32.xlu0 %v6969, 120
  %v7043 = vpop.permute.xlu0 %7042
  %7044 = vrot.lane.b32.xlu0 %v6970, 120
  %v7045 = vpop.permute.xlu0 %7044
  %7046 = vrot.lane.b32.xlu0 %v6971, 120
  %v7047 = vpop.permute.xlu0 %7046
  %7048 = vrot.lane.b32.xlu0 %v6972, 120
  %v7049 = vpop.permute.xlu0 %7048
  %7050 = vrot.lane.b32.xlu0 %v6973, 120
  %v7051 = vpop.permute.xlu0 %7050
  %v7078 = vrcp.pop %v7001
  %v7079 = vmul.f32 %v7001, %v7078
  %v7080 = vsub.f32 1.0, %v7079
  %v7081 = vmul.f32 %v7078, %v7080
  %v7082 = vadd.f32 %v7078, %v7081
  %vm7083 = vweird.f32 %v7001
  %vm7084 = vweird.f32 %v7078
  %vm7085 = vmor %vm7083, %vm7084
  %v7086 = vsel %vm7085, %v7078, %v7082
  %v7087 = vand.u32 2147483647, %v7001
  %vm7088 = vcmp.eq.f32.partialorder %v7087, 8.507059e+37
  %v7089 = vand.u32 %v7001, 2147483648
  %v7090 = vor.u32 1.1754944e-38, %v7089
  %v7091 = vsel %vm7088, %v7090, %v7086
  %v7092 = vmul.f32 %v6871, %v7091
  %v7093 = vrcp.pop %v7003
  %v7094 = vmul.f32 %v7003, %v7093
  %v7095 = vsub.f32 1.0, %v7094
  %v7096 = vmul.f32 %v7093, %v7095
  %v7097 = vadd.f32 %v7093, %v7096
  %vm7098 = vweird.f32 %v7003
  %vm7099 = vweird.f32 %v7093
  %vm7100 = vmor %vm7098, %vm7099
  %v7101 = vsel %vm7100, %v7093, %v7097
  %v7102 = vand.u32 2147483647, %v7003
  %vm7103 = vcmp.eq.f32.partialorder %v7102, 8.507059e+37
  %v7104 = vand.u32 %v7003, 2147483648
  %v7105 = vor.u32 1.1754944e-38, %v7104
  %v7106 = vsel %vm7103, %v7105, %v7101
  %v7107 = vmul.f32 %v6874, %v7106
  %v7108 = vrcp.pop %v7005
  %v7109 = vmul.f32 %v7005, %v7108
  %v7110 = vsub.f32 1.0, %v7109
  %v7111 = vmul.f32 %v7108, %v7110
  %v7112 = vadd.f32 %v7108, %v7111
  %vm7113 = vweird.f32 %v7005
  %vm7114 = vweird.f32 %v7108
  %vm7115 = vmor %vm7113, %vm7114
  %v7116 = vsel %vm7115, %v7108, %v7112
  %v7117 = vand.u32 2147483647, %v7005
  %vm7118 = vcmp.eq.f32.partialorder %v7117, 8.507059e+37
  %v7119 = vand.u32 %v7005, 2147483648
  %v7120 = vor.u32 1.1754944e-38, %v7119
  %v7121 = vsel %vm7118, %v7120, %v7116
  %v7122 = vmul.f32 %v6877, %v7121
  %v7123 = vrcp.pop %v7007
  %v7124 = vmul.f32 %v7007, %v7123
  %v7125 = vsub.f32 1.0, %v7124
  %v7126 = vmul.f32 %v7123, %v7125
  %v7127 = vadd.f32 %v7123, %v7126
  %vm7128 = vweird.f32 %v7007
  %vm7129 = vweird.f32 %v7123
  %vm7130 = vmor %vm7128, %vm7129
  %v7131 = vsel %vm7130, %v7123, %v7127
  %v7132 = vand.u32 2147483647, %v7007
  %vm7133 = vcmp.eq.f32.partialorder %v7132, 8.507059e+37
  %v7134 = vand.u32 %v7007, 2147483648
  %v7135 = vor.u32 1.1754944e-38, %v7134
  %v7136 = vsel %vm7133, %v7135, %v7131
  %v7137 = vmul.f32 %v6880, %v7136
  %v7138 = vrcp.pop %v7009
  %v7139 = vmul.f32 %v7009, %v7138
  %v7140 = vsub.f32 1.0, %v7139
  %v7141 = vmul.f32 %v7138, %v7140
  %v7142 = vadd.f32 %v7138, %v7141
  %vm7143 = vweird.f32 %v7009
  %vm7144 = vweird.f32 %v7138
  %vm7145 = vmor %vm7143, %vm7144
  %v7146 = vsel %vm7145, %v7138, %v7142
  %v7147 = vand.u32 2147483647, %v7009
  %vm7148 = vcmp.eq.f32.partialorder %v7147, 8.507059e+37
  %v7149 = vand.u32 %v7009, 2147483648
  %v7150 = vor.u32 1.1754944e-38, %v7149
  %v7151 = vsel %vm7148, %v7150, %v7146
  %v7152 = vmul.f32 %v6883, %v7151
  %v7153 = vrcp.pop %v7011
  %v7154 = vmul.f32 %v7011, %v7153
  %v7155 = vsub.f32 1.0, %v7154
  %v7156 = vmul.f32 %v7153, %v7155
  %v7157 = vadd.f32 %v7153, %v7156
  %vm7158 = vweird.f32 %v7011
  %vm7159 = vweird.f32 %v7153
  %vm7160 = vmor %vm7158, %vm7159
  %v7161 = vsel %vm7160, %v7153, %v7157
  %v7162 = vand.u32 2147483647, %v7011
  %vm7163 = vcmp.eq.f32.partialorder %v7162, 8.507059e+37
  %v7164 = vand.u32 %v7011, 2147483648
  %v7165 = vor.u32 1.1754944e-38, %v7164
  %v7166 = vsel %vm7163, %v7165, %v7161
  %v7167 = vmul.f32 %v6886, %v7166
  %v7168 = vrcp.pop %v7013
  %v7169 = vmul.f32 %v7013, %v7168
  %v7170 = vsub.f32 1.0, %v7169
  %v7171 = vmul.f32 %v7168, %v7170
  %v7172 = vadd.f32 %v7168, %v7171
  %vm7173 = vweird.f32 %v7013
  %vm7174 = vweird.f32 %v7168
  %vm7175 = vmor %vm7173, %vm7174
  %v7176 = vsel %vm7175, %v7168, %v7172
  %v7177 = vand.u32 2147483647, %v7013
  %vm7178 = vcmp.eq.f32.partialorder %v7177, 8.507059e+37
  %v7179 = vand.u32 %v7013, 2147483648
  %v7180 = vor.u32 1.1754944e-38, %v7179
  %v7181 = vsel %vm7178, %v7180, %v7176
  %v7182 = vmul.f32 %v6889, %v7181
  %v7183 = vrcp.pop %v7015
  %v7184 = vmul.f32 %v7015, %v7183
  %v7185 = vsub.f32 1.0, %v7184
  %v7186 = vmul.f32 %v7183, %v7185
  %v7187 = vadd.f32 %v7183, %v7186
  %vm7188 = vweird.f32 %v7015
  %vm7189 = vweird.f32 %v7183
  %vm7190 = vmor %vm7188, %vm7189
  %v7191 = vsel %vm7190, %v7183, %v7187
  %v7192 = vand.u32 2147483647, %v7015
  %vm7193 = vcmp.eq.f32.partialorder %v7192, 8.507059e+37
  %v7194 = vand.u32 %v7015, 2147483648
  %v7195 = vor.u32 1.1754944e-38, %v7194
  %v7196 = vsel %vm7193, %v7195, %v7191
  %v7197 = vmul.f32 %v6892, %v7196
  %v7198 = vrcp.pop %v7017
  %v7199 = vmul.f32 %v7017, %v7198
  %v7200 = vsub.f32 1.0, %v7199
  %v7201 = vmul.f32 %v7198, %v7200
  %v7202 = vadd.f32 %v7198, %v7201
  %vm7203 = vweird.f32 %v7017
  %vm7204 = vweird.f32 %v7198
  %vm7205 = vmor %vm7203, %vm7204
  %v7206 = vsel %vm7205, %v7198, %v7202
  %v7207 = vand.u32 2147483647, %v7017
  %vm7208 = vcmp.eq.f32.partialorder %v7207, 8.507059e+37
  %v7209 = vand.u32 %v7017, 2147483648
  %v7210 = vor.u32 1.1754944e-38, %v7209
  %v7211 = vsel %vm7208, %v7210, %v7206
  %v7212 = vmul.f32 %v6895, %v7211
  %v7213 = vrcp.pop %v7019
  %v7214 = vmul.f32 %v7019, %v7213
  %v7215 = vsub.f32 1.0, %v7214
  %v7216 = vmul.f32 %v7213, %v7215
  %v7217 = vadd.f32 %v7213, %v7216
  %vm7218 = vweird.f32 %v7019
  %vm7219 = vweird.f32 %v7213
  %vm7220 = vmor %vm7218, %vm7219
  %v7221 = vsel %vm7220, %v7213, %v7217
  %v7222 = vand.u32 2147483647, %v7019
  %vm7223 = vcmp.eq.f32.partialorder %v7222, 8.507059e+37
  %v7224 = vand.u32 %v7019, 2147483648
  %v7225 = vor.u32 1.1754944e-38, %v7224
  %v7226 = vsel %vm7223, %v7225, %v7221
  %v7227 = vmul.f32 %v6898, %v7226
  %v7228 = vrcp.pop %v7021
  %v7229 = vmul.f32 %v7021, %v7228
  %v7230 = vsub.f32 1.0, %v7229
  %v7231 = vmul.f32 %v7228, %v7230
  %v7232 = vadd.f32 %v7228, %v7231
  %vm7233 = vweird.f32 %v7021
  %vm7234 = vweird.f32 %v7228
  %vm7235 = vmor %vm7233, %vm7234
  %v7236 = vsel %vm7235, %v7228, %v7232
  %v7237 = vand.u32 2147483647, %v7021
  %vm7238 = vcmp.eq.f32.partialorder %v7237, 8.507059e+37
  %v7239 = vand.u32 %v7021, 2147483648
  %v7240 = vor.u32 1.1754944e-38, %v7239
  %v7241 = vsel %vm7238, %v7240, %v7236
  %v7242 = vmul.f32 %v6901, %v7241
  %v7243 = vrcp.pop %v7023
  %v7244 = vmul.f32 %v7023, %v7243
  %v7245 = vsub.f32 1.0, %v7244
  %v7246 = vmul.f32 %v7243, %v7245
  %v7247 = vadd.f32 %v7243, %v7246
  %vm7248 = vweird.f32 %v7023
  %vm7249 = vweird.f32 %v7243
  %vm7250 = vmor %vm7248, %vm7249
  %v7251 = vsel %vm7250, %v7243, %v7247
  %v7252 = vand.u32 2147483647, %v7023
  %vm7253 = vcmp.eq.f32.partialorder %v7252, 8.507059e+37
  %v7254 = vand.u32 %v7023, 2147483648
  %v7255 = vor.u32 1.1754944e-38, %v7254
  %v7256 = vsel %vm7253, %v7255, %v7251
  %v7257 = vmul.f32 %v6904, %v7256
  %v7258 = vrcp.pop %v7025
  %v7259 = vmul.f32 %v7025, %v7258
  %v7260 = vsub.f32 1.0, %v7259
  %v7261 = vmul.f32 %v7258, %v7260
  %v7262 = vadd.f32 %v7258, %v7261
  %vm7263 = vweird.f32 %v7025
  %vm7264 = vweird.f32 %v7258
  %vm7265 = vmor %vm7263, %vm7264
  %v7266 = vsel %vm7265, %v7258, %v7262
  %v7267 = vand.u32 2147483647, %v7025
  %vm7268 = vcmp.eq.f32.partialorder %v7267, 8.507059e+37
  %v7269 = vand.u32 %v7025, 2147483648
  %v7270 = vor.u32 1.1754944e-38, %v7269
  %v7271 = vsel %vm7268, %v7270, %v7266
  %v7272 = vmul.f32 %v6907, %v7271
  %v7273 = vrcp.pop %v7027
  %v7274 = vmul.f32 %v7027, %v7273
  %v7275 = vsub.f32 1.0, %v7274
  %v7276 = vmul.f32 %v7273, %v7275
  %v7277 = vadd.f32 %v7273, %v7276
  %vm7278 = vweird.f32 %v7027
  %vm7279 = vweird.f32 %v7273
  %vm7280 = vmor %vm7278, %vm7279
  %v7281 = vsel %vm7280, %v7273, %v7277
  %v7282 = vand.u32 2147483647, %v7027
  %vm7283 = vcmp.eq.f32.partialorder %v7282, 8.507059e+37
  %v7284 = vand.u32 %v7027, 2147483648
  %v7285 = vor.u32 1.1754944e-38, %v7284
  %v7286 = vsel %vm7283, %v7285, %v7281
  %v7287 = vmul.f32 %v6910, %v7286
  %v7288 = vrcp.pop %v7029
  %v7289 = vmul.f32 %v7029, %v7288
  %v7290 = vsub.f32 1.0, %v7289
  %v7291 = vmul.f32 %v7288, %v7290
  %v7292 = vadd.f32 %v7288, %v7291
  %vm7293 = vweird.f32 %v7029
  %vm7294 = vweird.f32 %v7288
  %vm7295 = vmor %vm7293, %vm7294
  %v7296 = vsel %vm7295, %v7288, %v7292
  %v7297 = vand.u32 2147483647, %v7029
  %vm7298 = vcmp.eq.f32.partialorder %v7297, 8.507059e+37
  %v7299 = vand.u32 %v7029, 2147483648
  %v7300 = vor.u32 1.1754944e-38, %v7299
  %v7301 = vsel %vm7298, %v7300, %v7296
  %v7302 = vmul.f32 %v6913, %v7301
  %v7303 = vrcp.pop %v7031
  %v7304 = vmul.f32 %v7031, %v7303
  %v7305 = vsub.f32 1.0, %v7304
  %v7306 = vmul.f32 %v7303, %v7305
  %v7307 = vadd.f32 %v7303, %v7306
  %vm7308 = vweird.f32 %v7031
  %vm7309 = vweird.f32 %v7303
  %vm7310 = vmor %vm7308, %vm7309
  %v7311 = vsel %vm7310, %v7303, %v7307
  %v7312 = vand.u32 2147483647, %v7031
  %vm7313 = vcmp.eq.f32.partialorder %v7312, 8.507059e+37
  %v7314 = vand.u32 %v7031, 2147483648
  %v7315 = vor.u32 1.1754944e-38, %v7314
  %v7316 = vsel %vm7313, %v7315, %v7311
  %v7317 = vmul.f32 %v6916, %v7316
  %v7318 = vrcp.pop %v7033
  %v7319 = vmul.f32 %v7033, %v7318
  %v7320 = vsub.f32 1.0, %v7319
  %v7321 = vmul.f32 %v7318, %v7320
  %v7322 = vadd.f32 %v7318, %v7321
  %vm7323 = vweird.f32 %v7033
  %vm7324 = vweird.f32 %v7318
  %vm7325 = vmor %vm7323, %vm7324
  %v7326 = vsel %vm7325, %v7318, %v7322
  %v7327 = vand.u32 2147483647, %v7033
  %vm7328 = vcmp.eq.f32.partialorder %v7327, 8.507059e+37
  %v7329 = vand.u32 %v7033, 2147483648
  %v7330 = vor.u32 1.1754944e-38, %v7329
  %v7331 = vsel %vm7328, %v7330, %v7326
  %v7332 = vmul.f32 %v6919, %v7331
  %v7333 = vrcp.pop %v7035
  %v7334 = vmul.f32 %v7035, %v7333
  %v7335 = vsub.f32 1.0, %v7334
  %v7336 = vmul.f32 %v7333, %v7335
  %v7337 = vadd.f32 %v7333, %v7336
  %vm7338 = vweird.f32 %v7035
  %vm7339 = vweird.f32 %v7333
  %vm7340 = vmor %vm7338, %vm7339
  %v7341 = vsel %vm7340, %v7333, %v7337
  %v7342 = vand.u32 2147483647, %v7035
  %vm7343 = vcmp.eq.f32.partialorder %v7342, 8.507059e+37
  %v7344 = vand.u32 %v7035, 2147483648
  %v7345 = vor.u32 1.1754944e-38, %v7344
  %v7346 = vsel %vm7343, %v7345, %v7341
  %v7347 = vmul.f32 %v6922, %v7346
  %v7348 = vrcp.pop %v7037
  %v7349 = vmul.f32 %v7037, %v7348
  %v7350 = vsub.f32 1.0, %v7349
  %v7351 = vmul.f32 %v7348, %v7350
  %v7352 = vadd.f32 %v7348, %v7351
  %vm7353 = vweird.f32 %v7037
  %vm7354 = vweird.f32 %v7348
  %vm7355 = vmor %vm7353, %vm7354
  %v7356 = vsel %vm7355, %v7348, %v7352
  %v7357 = vand.u32 2147483647, %v7037
  %vm7358 = vcmp.eq.f32.partialorder %v7357, 8.507059e+37
  %v7359 = vand.u32 %v7037, 2147483648
  %v7360 = vor.u32 1.1754944e-38, %v7359
  %v7361 = vsel %vm7358, %v7360, %v7356
  %v7362 = vmul.f32 %v6925, %v7361
  %v7363 = vrcp.pop %v7039
  %v7364 = vmul.f32 %v7039, %v7363
  %v7365 = vsub.f32 1.0, %v7364
  %v7366 = vmul.f32 %v7363, %v7365
  %v7367 = vadd.f32 %v7363, %v7366
  %vm7368 = vweird.f32 %v7039
  %vm7369 = vweird.f32 %v7363
  %vm7370 = vmor %vm7368, %vm7369
  %v7371 = vsel %vm7370, %v7363, %v7367
  %v7372 = vand.u32 2147483647, %v7039
  %vm7373 = vcmp.eq.f32.partialorder %v7372, 8.507059e+37
  %v7374 = vand.u32 %v7039, 2147483648
  %v7375 = vor.u32 1.1754944e-38, %v7374
  %v7376 = vsel %vm7373, %v7375, %v7371
  %v7377 = vmul.f32 %v6928, %v7376
  %v7378 = vrcp.pop %v7041
  %v7379 = vmul.f32 %v7041, %v7378
  %v7380 = vsub.f32 1.0, %v7379
  %v7381 = vmul.f32 %v7378, %v7380
  %v7382 = vadd.f32 %v7378, %v7381
  %vm7383 = vweird.f32 %v7041
  %vm7384 = vweird.f32 %v7378
  %vm7385 = vmor %vm7383, %vm7384
  %v7386 = vsel %vm7385, %v7378, %v7382
  %v7387 = vand.u32 2147483647, %v7041
  %vm7388 = vcmp.eq.f32.partialorder %v7387, 8.507059e+37
  %v7389 = vand.u32 %v7041, 2147483648
  %v7390 = vor.u32 1.1754944e-38, %v7389
  %v7391 = vsel %vm7388, %v7390, %v7386
  %v7392 = vmul.f32 %v6931, %v7391
  %v7393 = vrcp.pop %v7043
  %v7394 = vmul.f32 %v7043, %v7393
  %v7395 = vsub.f32 1.0, %v7394
  %v7396 = vmul.f32 %v7393, %v7395
  %v7397 = vadd.f32 %v7393, %v7396
  %vm7398 = vweird.f32 %v7043
  %vm7399 = vweird.f32 %v7393
  %vm7400 = vmor %vm7398, %vm7399
  %v7401 = vsel %vm7400, %v7393, %v7397
  %v7402 = vand.u32 2147483647, %v7043
  %vm7403 = vcmp.eq.f32.partialorder %v7402, 8.507059e+37
  %v7404 = vand.u32 %v7043, 2147483648
  %v7405 = vor.u32 1.1754944e-38, %v7404
  %v7406 = vsel %vm7403, %v7405, %v7401
  %v7407 = vmul.f32 %v6934, %v7406
  %v7408 = vrcp.pop %v7045
  %v7409 = vmul.f32 %v7045, %v7408
  %v7410 = vsub.f32 1.0, %v7409
  %v7411 = vmul.f32 %v7408, %v7410
  %v7412 = vadd.f32 %v7408, %v7411
  %vm7413 = vweird.f32 %v7045
  %vm7414 = vweird.f32 %v7408
  %vm7415 = vmor %vm7413, %vm7414
  %v7416 = vsel %vm7415, %v7408, %v7412
  %v7417 = vand.u32 2147483647, %v7045
  %vm7418 = vcmp.eq.f32.partialorder %v7417, 8.507059e+37
  %v7419 = vand.u32 %v7045, 2147483648
  %v7420 = vor.u32 1.1754944e-38, %v7419
  %v7421 = vsel %vm7418, %v7420, %v7416
  %v7422 = vmul.f32 %v6937, %v7421
  %v7423 = vrcp.pop %v7047
  %v7424 = vmul.f32 %v7047, %v7423
  %v7425 = vsub.f32 1.0, %v7424
  %v7426 = vmul.f32 %v7423, %v7425
  %v7427 = vadd.f32 %v7423, %v7426
  %vm7428 = vweird.f32 %v7047
  %vm7429 = vweird.f32 %v7423
  %vm7430 = vmor %vm7428, %vm7429
  %v7431 = vsel %vm7430, %v7423, %v7427
  %v7432 = vand.u32 2147483647, %v7047
  %vm7433 = vcmp.eq.f32.partialorder %v7432, 8.507059e+37
  %v7434 = vand.u32 %v7047, 2147483648
  %v7435 = vor.u32 1.1754944e-38, %v7434
  %v7436 = vsel %vm7433, %v7435, %v7431
  %v7437 = vmul.f32 %v6940, %v7436
  %v7438 = vrcp.pop %v7049
  %v7439 = vmul.f32 %v7049, %v7438
  %v7440 = vsub.f32 1.0, %v7439
  %v7441 = vmul.f32 %v7438, %v7440
  %v7442 = vadd.f32 %v7438, %v7441
  %vm7443 = vweird.f32 %v7049
  %vm7444 = vweird.f32 %v7438
  %vm7445 = vmor %vm7443, %vm7444
  %v7446 = vsel %vm7445, %v7438, %v7442
  %v7447 = vand.u32 2147483647, %v7049
  %vm7448 = vcmp.eq.f32.partialorder %v7447, 8.507059e+37
  %v7449 = vand.u32 %v7049, 2147483648
  %v7450 = vor.u32 1.1754944e-38, %v7449
  %v7451 = vsel %vm7448, %v7450, %v7446
  %v7452 = vmul.f32 %v6943, %v7451
  %v7453 = vrcp.pop %v7051
  %v7454 = vmul.f32 %v7051, %v7453
  %v7455 = vsub.f32 1.0, %v7454
  %v7456 = vmul.f32 %v7453, %v7455
  %v7457 = vadd.f32 %v7453, %v7456
  %vm7458 = vweird.f32 %v7051
  %vm7459 = vweird.f32 %v7453
  %vm7460 = vmor %vm7458, %vm7459
  %v7461 = vsel %vm7460, %v7453, %v7457
  %v7462 = vand.u32 2147483647, %v7051
  %vm7463 = vcmp.eq.f32.partialorder %v7462, 8.507059e+37
  %v7464 = vand.u32 %v7051, 2147483648
  %v7465 = vor.u32 1.1754944e-38, %v7464
  %v7466 = vsel %vm7463, %v7465, %v7461
  %v7467 = vmul.f32 %v6946, %v7466
  %7468 = vrot.lane.b32.xlu0 %v6444, 72
  %v7469 = vpop.permute.xlu0 %7468
  %7470 = vrot.lane.b32.xlu0 %v6446, 72
  %v7471 = vpop.permute.xlu0 %7470
  %7472 = vrot.lane.b32.xlu0 %v6449, 72
  %v7473 = vpop.permute.xlu0 %7472
  %7474 = vrot.lane.b32.xlu0 %v6451, 72
  %v7475 = vpop.permute.xlu0 %7474
  %7476 = vrot.lane.b32.xlu0 %v6454, 72
  %v7477 = vpop.permute.xlu0 %7476
  %7478 = vrot.lane.b32.xlu0 %v6456, 72
  %v7479 = vpop.permute.xlu0 %7478
  %7480 = vrot.lane.b32.xlu0 %v6459, 72
  %v7481 = vpop.permute.xlu0 %7480
  %7482 = vrot.lane.b32.xlu0 %v6461, 72
  %v7483 = vpop.permute.xlu0 %7482
  %7484 = vrot.lane.b32.xlu0 %v6464, 72
  %v7485 = vpop.permute.xlu0 %7484
  %7486 = vrot.lane.b32.xlu0 %v6466, 72
  %v7487 = vpop.permute.xlu0 %7486
  %7488 = vrot.lane.b32.xlu0 %v6469, 72
  %v7489 = vpop.permute.xlu0 %7488
  %7490 = vrot.lane.b32.xlu0 %v6471, 72
  %v7491 = vpop.permute.xlu0 %7490
  %7492 = vrot.lane.b32.xlu0 %v6474, 72
  %v7493 = vpop.permute.xlu0 %7492
  %7494 = vrot.lane.b32.xlu0 %v6476, 72
  %v7495 = vpop.permute.xlu0 %7494
  %7496 = vrot.lane.b32.xlu0 %v6479, 72
  %v7497 = vpop.permute.xlu0 %7496
  %7498 = vrot.lane.b32.xlu0 %v6481, 72
  %v7499 = vpop.permute.xlu0 %7498
  %7500 = vrot.lane.b32.xlu0 %v6484, 72
  %v7501 = vpop.permute.xlu0 %7500
  %7502 = vrot.lane.b32.xlu0 %v6486, 72
  %v7503 = vpop.permute.xlu0 %7502
  %7504 = vrot.lane.b32.xlu0 %v6489, 72
  %v7505 = vpop.permute.xlu0 %7504
  %7506 = vrot.lane.b32.xlu0 %v6491, 72
  %v7507 = vpop.permute.xlu0 %7506
  %7508 = vrot.lane.b32.xlu0 %v6494, 72
  %v7509 = vpop.permute.xlu0 %7508
  %7510 = vrot.lane.b32.xlu0 %v6496, 72
  %v7511 = vpop.permute.xlu0 %7510
  %7512 = vrot.lane.b32.xlu0 %v6499, 72
  %v7513 = vpop.permute.xlu0 %7512
  %7514 = vrot.lane.b32.xlu0 %v6501, 72
  %v7515 = vpop.permute.xlu0 %7514
  %7516 = vrot.lane.b32.xlu0 %v6504, 72
  %v7517 = vpop.permute.xlu0 %7516
  %7518 = vrot.lane.b32.xlu0 %v6506, 72
  %v7519 = vpop.permute.xlu0 %7518
  %vm7546 = vcmask 64512
  %v7547 = vsel %vm7546, %v7092, %v7469
  %v7548 = vsel %vm7546, %v7107, %v7471
  %v7549 = vsel %vm7546, %v7122, %v7473
  %v7550 = vsel %vm7546, %v7137, %v7475
  %v7551 = vsel %vm7546, %v7152, %v7477
  %v7552 = vsel %vm7546, %v7167, %v7479
  %v7553 = vsel %vm7546, %v7182, %v7481
  %v7554 = vsel %vm7546, %v7197, %v7483
  %v7555 = vsel %vm7546, %v7212, %v7485
  %v7556 = vsel %vm7546, %v7227, %v7487
  %v7557 = vsel %vm7546, %v7242, %v7489
  %v7558 = vsel %vm7546, %v7257, %v7491
  %v7559 = vsel %vm7546, %v7272, %v7493
  %v7560 = vsel %vm7546, %v7287, %v7495
  %v7561 = vsel %vm7546, %v7302, %v7497
  %v7562 = vsel %vm7546, %v7317, %v7499
  %v7563 = vsel %vm7546, %v7332, %v7501
  %v7564 = vsel %vm7546, %v7347, %v7503
  %v7565 = vsel %vm7546, %v7362, %v7505
  %v7566 = vsel %vm7546, %v7377, %v7507
  %v7567 = vsel %vm7546, %v7392, %v7509
  %v7568 = vsel %vm7546, %v7407, %v7511
  %v7569 = vsel %vm7546, %v7422, %v7513
  %v7570 = vsel %vm7546, %v7437, %v7515
  %v7571 = vsel %vm7546, %v7452, %v7517
  %v7572 = vsel %vm7546, %v7467, %v7519
  %vm7573 = vcmask 97280
  %7574 = vst.msk [vmem:[%s16] sm:$0xff] %vm7573, %v7547
  %7575 = vst.msk [vmem:[%s16 + $0x8] sm:$0xff] %vm7573, %v7548
  %7576 = vst.msk [vmem:[%s16 + $0x10] sm:$0xff] %vm7573, %v7549
  %7577 = vst.msk [vmem:[%s16 + $0x18] sm:$0xff] %vm7573, %v7550
  %7578 = vst.msk [vmem:[%s16 + $0x20] sm:$0xff] %vm7573, %v7551
  %7579 = vst.msk [vmem:[%s16 + $0x28] sm:$0xff] %vm7573, %v7552
  %7580 = vst.msk [vmem:[%s16 + $0x30] sm:$0xff] %vm7573, %v7553
  %7581 = vst.msk [vmem:[%s16 + $0x38] sm:$0xff] %vm7573, %v7554
  %7582 = vst.msk [vmem:[%s16 + $0x40] sm:$0xff] %vm7573, %v7555
  %7583 = vst.msk [vmem:[%s16 + $0x48] sm:$0xff] %vm7573, %v7556
  %7584 = vst.msk [vmem:[%s16 + $0x50] sm:$0xff] %vm7573, %v7557
  %7585 = vst.msk [vmem:[%s16 + $0x58] sm:$0xff] %vm7573, %v7558
  %7586 = vst.msk [vmem:[%s16 + $0x60] sm:$0xff] %vm7573, %v7559
  %7587 = vst.msk [vmem:[%s16 + $0x68] sm:$0xff] %vm7573, %v7560
  %7588 = vst.msk [vmem:[%s16 + $0x70] sm:$0xff] %vm7573, %v7561
  %7589 = vst.msk [vmem:[%s16 + $0x78] sm:$0xff] %vm7573, %v7562
  %7590 = vst.msk [vmem:[%s16 + $0x80] sm:$0xff] %vm7573, %v7563
  %7591 = vst.msk [vmem:[%s16 + $0x88] sm:$0xff] %vm7573, %v7564
  %7592 = vst.msk [vmem:[%s16 + $0x90] sm:$0xff] %vm7573, %v7565
  %7593 = vst.msk [vmem:[%s16 + $0x98] sm:$0xff] %vm7573, %v7566
  %7594 = vst.msk [vmem:[%s16 + $0xa0] sm:$0xff] %vm7573, %v7567
  %7595 = vst.msk [vmem:[%s16 + $0xa8] sm:$0xff] %vm7573, %v7568
  %7596 = vst.msk [vmem:[%s16 + $0xb0] sm:$0xff] %vm7573, %v7569
  %7597 = vst.msk [vmem:[%s16 + $0xb8] sm:$0xff] %vm7573, %v7570
  %7598 = vst.msk [vmem:[%s16 + $0xc0] sm:$0xff] %vm7573, %v7571
  %7599 = vst.msk [vmem:[%s16 + $0xc8] sm:$0xff] %vm7573, %v7572
  // Predicated region
  $region66: #{siamese_forward.1} parent=0 // pred_check
    _
  $region67: #{siamese_forward.1} parent=0 // pred_check_branch
    %7601 = sbr.rel (0) target = $region69
  $region68: #{siamese_forward.1} parent=0 // pred_region
    _
  $region69: #{siamese_forward.1} parent=0 // pred_fallthru
    _
  // Predicated region
  $region70: #{siamese_forward.1} parent=0 // pred_check
    _
  $region71: #{siamese_forward.1} parent=0 // pred_check_branch
    %7603 = sbr.rel (0) target = $region73
  $region72: #{siamese_forward.1} parent=0 // pred_region
    _
  $region73: #{siamese_forward.1} parent=0 // pred_fallthru
    _

</llo_original>
